<compile_context>
chip_gen: v6e
topology: v6e:2x2x1
jax: 0.10.0
libtpu: 0.0.40
codegen_flags: <defaults>
</compile_context>

<pallas_src>
import math
import jax
import jax.numpy as jnp
from jax.experimental import pallas as pl
from jax.experimental.pallas import tpu as pltpu

D_MODEL = 32
N_HEADS = 4
HEAD_DIM = D_MODEL // N_HEADS
DIM_FFN = 64
N_LAYERS = 3
EPS = 1e-5

# Row offsets inside the packed (256, 128) weight slab. Every weight is stored
# transposed to (in, out) so the kernel can do plain `x @ w` on the MXU.
_R_KV = 0      # [Wk1.T | Wv1.T | Wk2.T | Wv2.T]   (32, 128)  lane-dense
_R_Q1 = 32     # Wq1.T padded to 128 cols           (32, 128)
_R_Q2 = 64     # Wq2.T
_R_O1 = 96     # Wo1.T
_R_O2 = 128    # Wo2.T
_R_F1 = 160    # W1.T (32, 64) padded               (32, 128)
_R_F2 = 192    # W2.T (64, 32) padded               (64, 128)
_W_ROWS = 256

# Row indices inside the packed (16, 128) bias / LayerNorm slab.
_P_BKV, _P_BQ1, _P_BQ2, _P_BO1, _P_BO2, _P_BF1, _P_BF2 = range(7)
_P_LN1G, _P_LN1B, _P_LN2G, _P_LN2B, _P_LN3G, _P_LN3B, _P_LNFG, _P_LNFB = range(7, 15)
_P_ROWS = 16


def _layer_norm(x, g, b):
    mu = jnp.mean(x, axis=-1, keepdims=True)
    var = jnp.mean((x - mu) ** 2, axis=-1, keepdims=True)
    return (x - mu) * jax.lax.rsqrt(var + EPS) * g + b


def make_decoder_kernel(batch, len_q, len_s):
    """Builds the fused 3-layer decoder kernel for static (batch, Lq, Ls)."""
    scale = 1.0 / math.sqrt(HEAD_DIM)
    nq = batch * len_q
    ns = batch * len_s

    def kernel(content_ref, style_ref, w_ref, p_ref, out_ref):
        content = content_ref[...]                    # (nq, 32)
        style = style_ref[...]                        # (ns, 32)

        # ---- weights: static, sublane-aligned slices of the packed slab ----
        w_kv = w_ref[_R_KV:_R_KV + 32, :]             # (32, 128)
        w_q1 = w_ref[_R_Q1:_R_Q1 + 32, 0:D_MODEL]     # (32, 32)
        w_q2 = w_ref[_R_Q2:_R_Q2 + 32, 0:D_MODEL]
        w_o1 = w_ref[_R_O1:_R_O1 + 32, 0:D_MODEL]
        w_o2 = w_ref[_R_O2:_R_O2 + 32, 0:D_MODEL]
        w_f1 = w_ref[_R_F1:_R_F1 + 32, 0:DIM_FFN]     # (32, 64)
        w_f2 = w_ref[_R_F2:_R_F2 + 64, 0:D_MODEL]     # (64, 32)

        # ---- biases / LN params: broadcast ONCE, outside the layer loop ----
        def row(i, width):
            return p_ref[i:i + 1, 0:width]            # (1, width)

        b_kv = jnp.broadcast_to(row(_P_BKV, 4 * D_MODEL), (ns, 4 * D_MODEL))
        b_q1 = jnp.broadcast_to(row(_P_BQ1, D_MODEL), (nq, D_MODEL))
        b_q2 = jnp.broadcast_to(row(_P_BQ2, D_MODEL), (nq, D_MODEL))
        b_o1 = jnp.broadcast_to(row(_P_BO1, D_MODEL), (nq, D_MODEL))
        b_o2 = jnp.broadcast_to(row(_P_BO2, D_MODEL), (nq, D_MODEL))
        b_f1 = jnp.broadcast_to(row(_P_BF1, DIM_FFN), (nq, DIM_FFN))
        b_f2 = jnp.broadcast_to(row(_P_BF2, D_MODEL), (nq, D_MODEL))
        g1 = jnp.broadcast_to(row(_P_LN1G, D_MODEL), (nq, D_MODEL))
        be1 = jnp.broadcast_to(row(_P_LN1B, D_MODEL), (nq, D_MODEL))
        g2 = jnp.broadcast_to(row(_P_LN2G, D_MODEL), (nq, D_MODEL))
        be2 = jnp.broadcast_to(row(_P_LN2B, D_MODEL), (nq, D_MODEL))
        g3 = jnp.broadcast_to(row(_P_LN3G, D_MODEL), (nq, D_MODEL))
        be3 = jnp.broadcast_to(row(_P_LN3B, D_MODEL), (nq, D_MODEL))
        gf = jnp.broadcast_to(row(_P_LNFG, D_MODEL), (nq, D_MODEL))
        bef = jnp.broadcast_to(row(_P_LNFB, D_MODEL), (nq, D_MODEL))

        # ---- style-side K/V projections: loop-invariant -> computed once,
        #      fused into a single lane-dense (ns, 128) matmul. ----
        kv = jnp.dot(style, w_kv, preferred_element_type=jnp.float32) + b_kv
        kv3 = kv.reshape(batch, len_s, 4 * D_MODEL)   # [k1 | v1 | k2 | v2]

        def head_views(col0):
            return [kv3[:, :, col0 + h * HEAD_DIM: col0 + (h + 1) * HEAD_DIM]
                    for h in range(N_HEADS)]          # each (B, Ls, HEAD_DIM)

        k1h = head_views(0 * D_MODEL)
        v1h = head_views(1 * D_MODEL)
        k2h = head_views(2 * D_MODEL)
        v2h = head_views(3 * D_MODEL)

        def mha(x, w_q, b_q, w_o, b_o, kh, vh):
            q = jnp.dot(x, w_q, preferred_element_type=jnp.float32) + b_q
            q3 = (q * scale).reshape(batch, len_q, D_MODEL)
            heads = []
            for h in range(N_HEADS):                  # static head loop (4)
                qh = q3[:, :, h * HEAD_DIM:(h + 1) * HEAD_DIM]  # (B, Lq, hd)
                s = jnp.einsum('bqd,bkd->bqk', qh, kh[h],
                               preferred_element_type=jnp.float32)
                s = s - jnp.max(s, axis=-1, keepdims=True)
                p = jnp.exp(s)
                denom = jnp.sum(p, axis=-1, keepdims=True)
                r = pl.reciprocal(denom, approx=True)
                r = r * (2.0 - denom * r)             # one Newton step -> ~f32
                o_h = jnp.einsum('bqk,bkd->bqd', p, vh[h],
                                 preferred_element_type=jnp.float32) * r
                heads.append(o_h)
            o = jnp.concatenate(heads, axis=-1).reshape(nq, D_MODEL)
            return jnp.dot(o, w_o, preferred_element_type=jnp.float32) + b_o

        # forward_post, repeated N_LAYERS times with shared weights.
        for _ in range(N_LAYERS):
            gx1 = mha(content, w_q1, b_q1, w_o1, b_o1, k1h, v1h)
            content = _layer_norm(content + gx1, g1, be1)
            gx2 = mha(content, w_q2, b_q2, w_o2, b_o2, k2h, v2h)
            mixed = _layer_norm(content + gx2, g2, be2)
            hdn = jnp.dot(mixed, w_f1, preferred_element_type=jnp.float32) + b_f1
            hdn = jnp.maximum(hdn, 0.0)               # ReLU; dropout = identity
            ffn = jnp.dot(hdn, w_f2, preferred_element_type=jnp.float32) + b_f2
            content = _layer_norm(mixed + ffn, g3, be3)

        # final Decoder-level LayerNorm (self.norm)
        out_ref[...] = _layer_norm(content, gf, bef)

    return kernel


def pack_params(params):
    """Packs the 28 parameter tensors into two VMEM-friendly slabs."""
    (a1_wq, a1_wk, a1_wv, a1_bq, a1_bk, a1_bv, a1_wo, a1_bo,
     a2_wq, a2_wk, a2_wv, a2_bq, a2_bk, a2_bv, a2_wo, a2_bo,
     w1, b1, w2, b2,
     ln1_g, ln1_b, ln2_g, ln2_b, ln3_g, ln3_b, lnf_g, lnf_b) = params

    def pad_cols(m, width=128):
        return jnp.pad(m, ((0, 0), (0, width - m.shape[1])))

    w_kv = jnp.concatenate([a1_wk.T, a1_wv.T, a2_wk.T, a2_wv.T], axis=1)  # (32,128)
    w_slab = jnp.concatenate([
        w_kv,
        pad_cols(a1_wq.T), pad_cols(a2_wq.T),
        pad_cols(a1_wo.T), pad_cols(a2_wo.T),
        pad_cols(w1.T), pad_cols(w2.T),
    ], axis=0).astype(jnp.float32)                                        # (256,128)
    assert w_slab.shape == (_W_ROWS, 128), w_slab.shape

    def pad_row(v, width=128):
        v = v.reshape(1, -1)
        return jnp.pad(v, ((0, 0), (0, width - v.shape[1])))

    b_kv = jnp.concatenate([a1_bk, a1_bv, a2_bk, a2_bv], axis=1)          # (1,128)
    p_rows = [b_kv,
              pad_row(a1_bq), pad_row(a2_bq),
              pad_row(a1_bo), pad_row(a2_bo),
              pad_row(b1), pad_row(b2),
              pad_row(ln1_g), pad_row(ln1_b),
              pad_row(ln2_g), pad_row(ln2_b),
              pad_row(ln3_g), pad_row(ln3_b),
              pad_row(lnf_g), pad_row(lnf_b),
              jnp.zeros((1, 128), jnp.float32)]
    p_slab = jnp.concatenate(p_rows, axis=0).astype(jnp.float32)          # (16,128)
    assert p_slab.shape == (_P_ROWS, 128), p_slab.shape
    return w_slab, p_slab


def decoder_forward(content_lne, style_lne, params):
    """content_lne: (Lq, B, D), style_lne: (Ls, B, D) -> (1, Lq, B, D)."""
    Lq, B, D = content_lne.shape
    Ls = style_lne.shape[0]
    content2 = jnp.transpose(content_lne, (1, 0, 2)).reshape(B * Lq, D)
    style2 = jnp.transpose(style_lne, (1, 0, 2)).reshape(B * Ls, D)
    w_slab, p_slab = pack_params(params)

    kernel = make_decoder_kernel(B, Lq, Ls)
    vmem = pl.BlockSpec(memory_space=pltpu.MemorySpace.VMEM)

    out2 = pl.pallas_call(
        kernel,
        out_shape=jax.ShapeDtypeStruct((B * Lq, D), jnp.float32),
        in_specs=[vmem] * 4,
        out_specs=vmem,
    )(content2, style2, w_slab, p_slab)

    out = out2.reshape(B, Lq, D).transpose(1, 0, 2)   # back to (Lq, B, D)
    return out[None]                                  # unsqueeze(0)


def init_params(key):
    keys = jax.random.split(key, 32)
    it = iter(keys)

    def w(shape, scale=0.05):
        return (scale * jax.random.normal(next(it), shape)).astype(jnp.float32)

    def attn_params():
        return [w((D_MODEL, D_MODEL)), w((D_MODEL, D_MODEL)), w((D_MODEL, D_MODEL)),
                w((1, D_MODEL)), w((1, D_MODEL)), w((1, D_MODEL)),
                w((D_MODEL, D_MODEL)), w((1, D_MODEL))]

    params = []
    params += attn_params()                                   # multi_head_attn1
    params += attn_params()                                   # multi_head_attn2
    params += [w((DIM_FFN, D_MODEL)), w((1, DIM_FFN)),        # FFN linear 1
               w((D_MODEL, DIM_FFN)), w((1, D_MODEL))]        # FFN linear 2
    for _ in range(4):                                        # ln1, ln2, ln3, final norm
        params.append(1.0 + w((1, D_MODEL), 0.02))            # gamma
        params.append(w((1, D_MODEL), 0.02))                  # beta
    return params


def reference_forward(content_lne, style_lne, params):
    """Pure-JAX reference mirroring PyTorch semantics ((L, N, E) layout)."""
    (a1_wq, a1_wk, a1_wv, a1_bq, a1_bk, a1_bv, a1_wo, a1_bo,
     a2_wq, a2_wk, a2_wv, a2_bq, a2_bk, a2_bv, a2_wo, a2_bo,
     w1, b1, w2, b2,
     ln1_g, ln1_b, ln2_g, ln2_b, ln3_g, ln3_b, lnf_g, lnf_b) = params

    def ln(x, g, b):
        mu = x.mean(-1, keepdims=True)
        var = ((x - mu) ** 2).mean(-1, keepdims=True)
        return (x - mu) / jnp.sqrt(var + EPS) * g + b

    def mha(q_in, k_in, v_in, wq, wk, wv, bq, bk, bv, wo, bo):
        Lq, B, D = q_in.shape
        Ls = k_in.shape[0]
        q = (q_in @ wq.T + bq[0]).reshape(Lq, B, N_HEADS, HEAD_DIM) / math.sqrt(HEAD_DIM)
        k = (k_in @ wk.T + bk[0]).reshape(Ls, B, N_HEADS, HEAD_DIM)
        v = (v_in @ wv.T + bv[0]).reshape(Ls, B, N_HEADS, HEAD_DIM)
        s = jnp.einsum('qbhd,kbhd->bhqk', q, k)
        p = jax.nn.softmax(s, axis=-1)
        o = jnp.einsum('bhqk,kbhd->qbhd', p, v).reshape(Lq, B, D)
        return o @ wo.T + bo[0]

    content, style = content_lne, style_lne
    for _ in range(N_LAYERS):
        gx1 = mha(content, style, style,
                  a1_wq, a1_wk, a1_wv, a1_bq, a1_bk, a1_bv, a1_wo, a1_bo)
        content = ln(content + gx1, ln1_g[0], ln1_b[0])
        gx2 = mha(content, style, style,
                  a2_wq, a2_wk, a2_wv, a2_bq, a2_bk, a2_bv, a2_wo, a2_bo)
        mixed = ln(content + gx2, ln2_g[0], ln2_b[0])
        ffn = jnp.maximum(mixed @ w1.T + b1[0], 0.0) @ w2.T + b2[0]
        mixed = ln(mixed + ffn, ln3_g[0], ln3_b[0])
        content = mixed
    return ln(content, lnf_g[0], lnf_b[0])[None]


if __name__ == "__main__":
    B, LQ, LS = 2, 8, 16
    key = jax.random.PRNGKey(0)
    kc, ks, kp = jax.random.split(key, 3)
    content = jax.random.normal(kc, (LQ, B, D_MODEL), dtype=jnp.float32)
    style = jax.random.normal(ks, (LS, B, D_MODEL), dtype=jnp.float32)
    params = init_params(kp)

    out = decoder_forward(content, style, params)
    out = jax.block_until_ready(out)
    assert out.shape == (1, LQ, B, D_MODEL), out.shape

    ref = reference_forward(content, style, params)
    max_err = float(jnp.max(jnp.abs(out - ref)))
    assert jnp.allclose(out, ref, atol=1e-3, rtol=1e-3), f"max_err={max_err}"

    print("KERNEL_OK")
</pallas_src>

<mosaic_0001>
module attributes {stable_mosaic.version = 11 : i64} {
  func.func @kernel(%arg0: memref<16x32xf32, #tpu.memory_space<vmem>>, %arg1: memref<32x32xf32, #tpu.memory_space<vmem>>, %arg2: memref<256x128xf32, #tpu.memory_space<vmem>>, %arg3: memref<16x128xf32, #tpu.memory_space<vmem>>, %arg4: memref<16x32xf32, #tpu.memory_space<vmem>>) attributes {dimension_semantics = [], scalar_prefetch = 0 : i64, scratch_operands = 0 : i64, tpu.core_type = #tpu.core_type<tc>} {
    %c0 = arith.constant 0 : index
    %c0_0 = arith.constant 0 : index
    %0 = vector.load %arg0[%c0, %c0_0] : memref<16x32xf32, #tpu.memory_space<vmem>>, vector<16x32xf32>
    %c0_1 = arith.constant 0 : index
    %c0_2 = arith.constant 0 : index
    %1 = vector.load %arg1[%c0_1, %c0_2] : memref<32x32xf32, #tpu.memory_space<vmem>>, vector<32x32xf32>
    %c0_3 = arith.constant 0 : index
    %c0_4 = arith.constant 0 : index
    %2 = vector.load %arg2[%c0_3, %c0_4] : memref<256x128xf32, #tpu.memory_space<vmem>>, vector<32x128xf32>
    %c32 = arith.constant 32 : index
    %c0_5 = arith.constant 0 : index
    %3 = vector.load %arg2[%c32, %c0_5] : memref<256x128xf32, #tpu.memory_space<vmem>>, vector<32x32xf32>
    %c64 = arith.constant 64 : index
    %c0_6 = arith.constant 0 : index
    %4 = vector.load %arg2[%c64, %c0_6] : memref<256x128xf32, #tpu.memory_space<vmem>>, vector<32x32xf32>
    %c96 = arith.constant 96 : index
    %c0_7 = arith.constant 0 : index
    %5 = vector.load %arg2[%c96, %c0_7] : memref<256x128xf32, #tpu.memory_space<vmem>>, vector<32x32xf32>
    %c128 = arith.constant 128 : index
    %c0_8 = arith.constant 0 : index
    %6 = vector.load %arg2[%c128, %c0_8] : memref<256x128xf32, #tpu.memory_space<vmem>>, vector<32x32xf32>
    %c160 = arith.constant 160 : index
    %c0_9 = arith.constant 0 : index
    %7 = vector.load %arg2[%c160, %c0_9] : memref<256x128xf32, #tpu.memory_space<vmem>>, vector<32x64xf32>
    %c192 = arith.constant 192 : index
    %c0_10 = arith.constant 0 : index
    %8 = vector.load %arg2[%c192, %c0_10] : memref<256x128xf32, #tpu.memory_space<vmem>>, vector<64x32xf32>
    %c0_11 = arith.constant 0 : index
    %c0_12 = arith.constant 0 : index
    %9 = vector.load %arg3[%c0_11, %c0_12] : memref<16x128xf32, #tpu.memory_space<vmem>>, vector<1x128xf32>
    %10 = vector.shape_cast %9 : vector<1x128xf32> to vector<1x128xf32>
    %11 = vector.broadcast %10 : vector<1x128xf32> to vector<32x128xf32>
    %c1 = arith.constant 1 : index
    %c0_13 = arith.constant 0 : index
    %12 = vector.load %arg3[%c1, %c0_13] : memref<16x128xf32, #tpu.memory_space<vmem>>, vector<1x32xf32>
    %13 = vector.shape_cast %12 : vector<1x32xf32> to vector<1x32xf32>
    %14 = vector.broadcast %13 : vector<1x32xf32> to vector<16x32xf32>
    %c2 = arith.constant 2 : index
    %c0_14 = arith.constant 0 : index
    %15 = vector.load %arg3[%c2, %c0_14] : memref<16x128xf32, #tpu.memory_space<vmem>>, vector<1x32xf32>
    %16 = vector.shape_cast %15 : vector<1x32xf32> to vector<1x32xf32>
    %17 = vector.broadcast %16 : vector<1x32xf32> to vector<16x32xf32>
    %c3 = arith.constant 3 : index
    %c0_15 = arith.constant 0 : index
    %18 = vector.load %arg3[%c3, %c0_15] : memref<16x128xf32, #tpu.memory_space<vmem>>, vector<1x32xf32>
    %19 = vector.shape_cast %18 : vector<1x32xf32> to vector<1x32xf32>
    %20 = vector.broadcast %19 : vector<1x32xf32> to vector<16x32xf32>
    %c4 = arith.constant 4 : index
    %c0_16 = arith.constant 0 : index
    %21 = vector.load %arg3[%c4, %c0_16] : memref<16x128xf32, #tpu.memory_space<vmem>>, vector<1x32xf32>
    %22 = vector.shape_cast %21 : vector<1x32xf32> to vector<1x32xf32>
    %23 = vector.broadcast %22 : vector<1x32xf32> to vector<16x32xf32>
    %c5 = arith.constant 5 : index
    %c0_17 = arith.constant 0 : index
    %24 = vector.load %arg3[%c5, %c0_17] : memref<16x128xf32, #tpu.memory_space<vmem>>, vector<1x64xf32>
    %25 = vector.shape_cast %24 : vector<1x64xf32> to vector<1x64xf32>
    %26 = vector.broadcast %25 : vector<1x64xf32> to vector<16x64xf32>
    %c6 = arith.constant 6 : index
    %c0_18 = arith.constant 0 : index
    %27 = vector.load %arg3[%c6, %c0_18] : memref<16x128xf32, #tpu.memory_space<vmem>>, vector<1x32xf32>
    %28 = vector.shape_cast %27 : vector<1x32xf32> to vector<1x32xf32>
    %29 = vector.broadcast %28 : vector<1x32xf32> to vector<16x32xf32>
    %c7 = arith.constant 7 : index
    %c0_19 = arith.constant 0 : index
    %30 = vector.load %arg3[%c7, %c0_19] : memref<16x128xf32, #tpu.memory_space<vmem>>, vector<1x32xf32>
    %31 = vector.shape_cast %30 : vector<1x32xf32> to vector<1x32xf32>
    %32 = vector.broadcast %31 : vector<1x32xf32> to vector<16x32xf32>
    %c8 = arith.constant 8 : index
    %c0_20 = arith.constant 0 : index
    %33 = vector.load %arg3[%c8, %c0_20] : memref<16x128xf32, #tpu.memory_space<vmem>>, vector<1x32xf32>
    %34 = vector.shape_cast %33 : vector<1x32xf32> to vector<1x32xf32>
    %35 = vector.broadcast %34 : vector<1x32xf32> to vector<16x32xf32>
    %c9 = arith.constant 9 : index
    %c0_21 = arith.constant 0 : index
    %36 = vector.load %arg3[%c9, %c0_21] : memref<16x128xf32, #tpu.memory_space<vmem>>, vector<1x32xf32>
    %37 = vector.shape_cast %36 : vector<1x32xf32> to vector<1x32xf32>
    %38 = vector.broadcast %37 : vector<1x32xf32> to vector<16x32xf32>
    %c10 = arith.constant 10 : index
    %c0_22 = arith.constant 0 : index
    %39 = vector.load %arg3[%c10, %c0_22] : memref<16x128xf32, #tpu.memory_space<vmem>>, vector<1x32xf32>
    %40 = vector.shape_cast %39 : vector<1x32xf32> to vector<1x32xf32>
    %41 = vector.broadcast %40 : vector<1x32xf32> to vector<16x32xf32>
    %c11 = arith.constant 11 : index
    %c0_23 = arith.constant 0 : index
    %42 = vector.load %arg3[%c11, %c0_23] : memref<16x128xf32, #tpu.memory_space<vmem>>, vector<1x32xf32>
    %43 = vector.shape_cast %42 : vector<1x32xf32> to vector<1x32xf32>
    %44 = vector.broadcast %43 : vector<1x32xf32> to vector<16x32xf32>
    %c12 = arith.constant 12 : index
    %c0_24 = arith.constant 0 : index
    %45 = vector.load %arg3[%c12, %c0_24] : memref<16x128xf32, #tpu.memory_space<vmem>>, vector<1x32xf32>
    %46 = vector.shape_cast %45 : vector<1x32xf32> to vector<1x32xf32>
    %47 = vector.broadcast %46 : vector<1x32xf32> to vector<16x32xf32>
    %c13 = arith.constant 13 : index
    %c0_25 = arith.constant 0 : index
    %48 = vector.load %arg3[%c13, %c0_25] : memref<16x128xf32, #tpu.memory_space<vmem>>, vector<1x32xf32>
    %49 = vector.shape_cast %48 : vector<1x32xf32> to vector<1x32xf32>
    %50 = vector.broadcast %49 : vector<1x32xf32> to vector<16x32xf32>
    %c14 = arith.constant 14 : index
    %c0_26 = arith.constant 0 : index
    %51 = vector.load %arg3[%c14, %c0_26] : memref<16x128xf32, #tpu.memory_space<vmem>>, vector<1x32xf32>
    %52 = vector.shape_cast %51 : vector<1x32xf32> to vector<1x32xf32>
    %53 = vector.broadcast %52 : vector<1x32xf32> to vector<16x32xf32>
    %cst = arith.constant dense<0.000000e+00> : vector<32x128xf32>
    %54 = tpu.matmul %1, %2, %cst {dimension_numbers = #tpu.dot_dimension_numbers<[1], [0], [0], [1], [0, 0, 1, 1], [], []>} : vector<32x32xf32>, vector<32x128xf32>, vector<32x128xf32> -> vector<32x128xf32>
    %55 = arith.addf %54, %11 : vector<32x128xf32>
    %56 = vector.shape_cast %55 : vector<32x128xf32> to vector<2x16x128xf32>
    %57 = vector.extract_strided_slice %56 {offsets = [0, 0, 0], sizes = [2, 16, 8], strides = [1, 1, 1]} : vector<2x16x128xf32> to vector<2x16x8xf32>
    %58 = vector.extract_strided_slice %56 {offsets = [0, 0, 8], sizes = [2, 16, 8], strides = [1, 1, 1]} : vector<2x16x128xf32> to vector<2x16x8xf32>
    %59 = vector.extract_strided_slice %56 {offsets = [0, 0, 16], sizes = [2, 16, 8], strides = [1, 1, 1]} : vector<2x16x128xf32> to vector<2x16x8xf32>
    %60 = vector.extract_strided_slice %56 {offsets = [0, 0, 24], sizes = [2, 16, 8], strides = [1, 1, 1]} : vector<2x16x128xf32> to vector<2x16x8xf32>
    %61 = vector.extract_strided_slice %56 {offsets = [0, 0, 32], sizes = [2, 16, 8], strides = [1, 1, 1]} : vector<2x16x128xf32> to vector<2x16x8xf32>
    %62 = vector.extract_strided_slice %56 {offsets = [0, 0, 40], sizes = [2, 16, 8], strides = [1, 1, 1]} : vector<2x16x128xf32> to vector<2x16x8xf32>
    %63 = vector.extract_strided_slice %56 {offsets = [0, 0, 48], sizes = [2, 16, 8], strides = [1, 1, 1]} : vector<2x16x128xf32> to vector<2x16x8xf32>
    %64 = vector.extract_strided_slice %56 {offsets = [0, 0, 56], sizes = [2, 16, 8], strides = [1, 1, 1]} : vector<2x16x128xf32> to vector<2x16x8xf32>
    %65 = vector.extract_strided_slice %56 {offsets = [0, 0, 64], sizes = [2, 16, 8], strides = [1, 1, 1]} : vector<2x16x128xf32> to vector<2x16x8xf32>
    %66 = vector.extract_strided_slice %56 {offsets = [0, 0, 72], sizes = [2, 16, 8], strides = [1, 1, 1]} : vector<2x16x128xf32> to vector<2x16x8xf32>
    %67 = vector.extract_strided_slice %56 {offsets = [0, 0, 80], sizes = [2, 16, 8], strides = [1, 1, 1]} : vector<2x16x128xf32> to vector<2x16x8xf32>
    %68 = vector.extract_strided_slice %56 {offsets = [0, 0, 88], sizes = [2, 16, 8], strides = [1, 1, 1]} : vector<2x16x128xf32> to vector<2x16x8xf32>
    %69 = vector.extract_strided_slice %56 {offsets = [0, 0, 96], sizes = [2, 16, 8], strides = [1, 1, 1]} : vector<2x16x128xf32> to vector<2x16x8xf32>
    %70 = vector.extract_strided_slice %56 {offsets = [0, 0, 104], sizes = [2, 16, 8], strides = [1, 1, 1]} : vector<2x16x128xf32> to vector<2x16x8xf32>
    %71 = vector.extract_strided_slice %56 {offsets = [0, 0, 112], sizes = [2, 16, 8], strides = [1, 1, 1]} : vector<2x16x128xf32> to vector<2x16x8xf32>
    %72 = vector.extract_strided_slice %56 {offsets = [0, 0, 120], sizes = [2, 16, 8], strides = [1, 1, 1]} : vector<2x16x128xf32> to vector<2x16x8xf32>
    %cst_27 = arith.constant dense<0.000000e+00> : vector<16x32xf32>
    %73 = tpu.matmul %0, %3, %cst_27 {dimension_numbers = #tpu.dot_dimension_numbers<[1], [0], [0], [1], [0, 0, 1, 1], [], []>} : vector<16x32xf32>, vector<32x32xf32>, vector<16x32xf32> -> vector<16x32xf32>
    %74 = arith.addf %73, %14 : vector<16x32xf32>
    %cst_28 = arith.constant 0.353553385 : f32
    %75 = vector.broadcast %cst_28 : f32 to vector<16x32xf32>
    %76 = arith.mulf %74, %75 : vector<16x32xf32>
    %77 = vector.shape_cast %76 : vector<16x32xf32> to vector<2x8x32xf32>
    %78 = vector.extract_strided_slice %77 {offsets = [0, 0, 0], sizes = [2, 8, 8], strides = [1, 1, 1]} : vector<2x8x32xf32> to vector<2x8x8xf32>
    "tpu.trace_start"() <{level = 10 : i32, message = "bqd,bkd->bqk"}> : () -> ()
    %cst_29 = arith.constant dense<0.000000e+00> : vector<2x8x16xf32>
    %79 = tpu.matmul %78, %57, %cst_29 {dimension_numbers = #tpu.dot_dimension_numbers<[2], [2], [1], [1], [0, 0, 0, 1, 1, 1], [0], [0]>} : vector<2x8x8xf32>, vector<2x16x8xf32>, vector<2x8x16xf32> -> vector<2x8x16xf32>
    "tpu.trace_stop"() : () -> ()
    %cst_30 = arith.constant dense<0xFF800000> : vector<2x8xf32>
    %80 = vector.multi_reduction <maximumf>, %79, %cst_30 [2] : vector<2x8x16xf32> to vector<2x8xf32>
    %81 = vector.shape_cast %80 : vector<2x8xf32> to vector<2x8x1xf32>
    %82 = vector.broadcast %81 : vector<2x8x1xf32> to vector<2x8x16xf32>
    %83 = arith.subf %79, %82 : vector<2x8x16xf32>
    %84 = math.exp %83 : vector<2x8x16xf32>
    %cst_31 = arith.constant dense<0.000000e+00> : vector<2x8xf32>
    %85 = vector.multi_reduction <add>, %84, %cst_31 [2] : vector<2x8x16xf32> to vector<2x8xf32>
    %86 = vector.shape_cast %85 : vector<2x8xf32> to vector<2x8x1xf32>
    %87 = tpu.reciprocal %86 {approx = true} : vector<2x8x1xf32> -> vector<2x8x1xf32>
    %88 = arith.mulf %86, %87 : vector<2x8x1xf32>
    %cst_32 = arith.constant 2.000000e+00 : f32
    %89 = vector.broadcast %cst_32 : f32 to vector<2x8x1xf32>
    %90 = arith.subf %89, %88 : vector<2x8x1xf32>
    %91 = arith.mulf %87, %90 : vector<2x8x1xf32>
    "tpu.trace_start"() <{level = 10 : i32, message = "bqk,bkd->bqd"}> : () -> ()
    %cst_33 = arith.constant dense<0.000000e+00> : vector<2x8x8xf32>
    %92 = tpu.matmul %84, %61, %cst_33 {dimension_numbers = #tpu.dot_dimension_numbers<[2], [1], [1], [2], [0, 0, 0, 1, 1, 2], [0], [0]>} : vector<2x8x16xf32>, vector<2x16x8xf32>, vector<2x8x8xf32> -> vector<2x8x8xf32>
    "tpu.trace_stop"() : () -> ()
    %93 = vector.broadcast %91 : vector<2x8x1xf32> to vector<2x8x8xf32>
    %94 = arith.mulf %92, %93 : vector<2x8x8xf32>
    %95 = vector.extract_strided_slice %77 {offsets = [0, 0, 8], sizes = [2, 8, 8], strides = [1, 1, 1]} : vector<2x8x32xf32> to vector<2x8x8xf32>
    "tpu.trace_start"() <{level = 10 : i32, message = "bqd,bkd->bqk"}> : () -> ()
    %cst_34 = arith.constant dense<0.000000e+00> : vector<2x8x16xf32>
    %96 = tpu.matmul %95, %58, %cst_34 {dimension_numbers = #tpu.dot_dimension_numbers<[2], [2], [1], [1], [0, 0, 0, 1, 1, 1], [0], [0]>} : vector<2x8x8xf32>, vector<2x16x8xf32>, vector<2x8x16xf32> -> vector<2x8x16xf32>
    "tpu.trace_stop"() : () -> ()
    %cst_35 = arith.constant dense<0xFF800000> : vector<2x8xf32>
    %97 = vector.multi_reduction <maximumf>, %96, %cst_35 [2] : vector<2x8x16xf32> to vector<2x8xf32>
    %98 = vector.shape_cast %97 : vector<2x8xf32> to vector<2x8x1xf32>
    %99 = vector.broadcast %98 : vector<2x8x1xf32> to vector<2x8x16xf32>
    %100 = arith.subf %96, %99 : vector<2x8x16xf32>
    %101 = math.exp %100 : vector<2x8x16xf32>
    %cst_36 = arith.constant dense<0.000000e+00> : vector<2x8xf32>
    %102 = vector.multi_reduction <add>, %101, %cst_36 [2] : vector<2x8x16xf32> to vector<2x8xf32>
    %103 = vector.shape_cast %102 : vector<2x8xf32> to vector<2x8x1xf32>
    %104 = tpu.reciprocal %103 {approx = true} : vector<2x8x1xf32> -> vector<2x8x1xf32>
    %105 = arith.mulf %103, %104 : vector<2x8x1xf32>
    %cst_37 = arith.constant 2.000000e+00 : f32
    %106 = vector.broadcast %cst_37 : f32 to vector<2x8x1xf32>
    %107 = arith.subf %106, %105 : vector<2x8x1xf32>
    %108 = arith.mulf %104, %107 : vector<2x8x1xf32>
    "tpu.trace_start"() <{level = 10 : i32, message = "bqk,bkd->bqd"}> : () -> ()
    %cst_38 = arith.constant dense<0.000000e+00> : vector<2x8x8xf32>
    %109 = tpu.matmul %101, %62, %cst_38 {dimension_numbers = #tpu.dot_dimension_numbers<[2], [1], [1], [2], [0, 0, 0, 1, 1, 2], [0], [0]>} : vector<2x8x16xf32>, vector<2x16x8xf32>, vector<2x8x8xf32> -> vector<2x8x8xf32>
    "tpu.trace_stop"() : () -> ()
    %110 = vector.broadcast %108 : vector<2x8x1xf32> to vector<2x8x8xf32>
    %111 = arith.mulf %109, %110 : vector<2x8x8xf32>
    %112 = vector.extract_strided_slice %77 {offsets = [0, 0, 16], sizes = [2, 8, 8], strides = [1, 1, 1]} : vector<2x8x32xf32> to vector<2x8x8xf32>
    "tpu.trace_start"() <{level = 10 : i32, message = "bqd,bkd->bqk"}> : () -> ()
    %cst_39 = arith.constant dense<0.000000e+00> : vector<2x8x16xf32>
    %113 = tpu.matmul %112, %59, %cst_39 {dimension_numbers = #tpu.dot_dimension_numbers<[2], [2], [1], [1], [0, 0, 0, 1, 1, 1], [0], [0]>} : vector<2x8x8xf32>, vector<2x16x8xf32>, vector<2x8x16xf32> -> vector<2x8x16xf32>
    "tpu.trace_stop"() : () -> ()
    %cst_40 = arith.constant dense<0xFF800000> : vector<2x8xf32>
    %114 = vector.multi_reduction <maximumf>, %113, %cst_40 [2] : vector<2x8x16xf32> to vector<2x8xf32>
    %115 = vector.shape_cast %114 : vector<2x8xf32> to vector<2x8x1xf32>
    %116 = vector.broadcast %115 : vector<2x8x1xf32> to vector<2x8x16xf32>
    %117 = arith.subf %113, %116 : vector<2x8x16xf32>
    %118 = math.exp %117 : vector<2x8x16xf32>
    %cst_41 = arith.constant dense<0.000000e+00> : vector<2x8xf32>
    %119 = vector.multi_reduction <add>, %118, %cst_41 [2] : vector<2x8x16xf32> to vector<2x8xf32>
    %120 = vector.shape_cast %119 : vector<2x8xf32> to vector<2x8x1xf32>
    %121 = tpu.reciprocal %120 {approx = true} : vector<2x8x1xf32> -> vector<2x8x1xf32>
    %122 = arith.mulf %120, %121 : vector<2x8x1xf32>
    %cst_42 = arith.constant 2.000000e+00 : f32
    %123 = vector.broadcast %cst_42 : f32 to vector<2x8x1xf32>
    %124 = arith.subf %123, %122 : vector<2x8x1xf32>
    %125 = arith.mulf %121, %124 : vector<2x8x1xf32>
    "tpu.trace_start"() <{level = 10 : i32, message = "bqk,bkd->bqd"}> : () -> ()
    %cst_43 = arith.constant dense<0.000000e+00> : vector<2x8x8xf32>
    %126 = tpu.matmul %118, %63, %cst_43 {dimension_numbers = #tpu.dot_dimension_numbers<[2], [1], [1], [2], [0, 0, 0, 1, 1, 2], [0], [0]>} : vector<2x8x16xf32>, vector<2x16x8xf32>, vector<2x8x8xf32> -> vector<2x8x8xf32>
    "tpu.trace_stop"() : () -> ()
    %127 = vector.broadcast %125 : vector<2x8x1xf32> to vector<2x8x8xf32>
    %128 = arith.mulf %126, %127 : vector<2x8x8xf32>
    %129 = vector.extract_strided_slice %77 {offsets = [0, 0, 24], sizes = [2, 8, 8], strides = [1, 1, 1]} : vector<2x8x32xf32> to vector<2x8x8xf32>
    "tpu.trace_start"() <{level = 10 : i32, message = "bqd,bkd->bqk"}> : () -> ()
    %cst_44 = arith.constant dense<0.000000e+00> : vector<2x8x16xf32>
    %130 = tpu.matmul %129, %60, %cst_44 {dimension_numbers = #tpu.dot_dimension_numbers<[2], [2], [1], [1], [0, 0, 0, 1, 1, 1], [0], [0]>} : vector<2x8x8xf32>, vector<2x16x8xf32>, vector<2x8x16xf32> -> vector<2x8x16xf32>
    "tpu.trace_stop"() : () -> ()
    %cst_45 = arith.constant dense<0xFF800000> : vector<2x8xf32>
    %131 = vector.multi_reduction <maximumf>, %130, %cst_45 [2] : vector<2x8x16xf32> to vector<2x8xf32>
    %132 = vector.shape_cast %131 : vector<2x8xf32> to vector<2x8x1xf32>
    %133 = vector.broadcast %132 : vector<2x8x1xf32> to vector<2x8x16xf32>
    %134 = arith.subf %130, %133 : vector<2x8x16xf32>
    %135 = math.exp %134 : vector<2x8x16xf32>
    %cst_46 = arith.constant dense<0.000000e+00> : vector<2x8xf32>
    %136 = vector.multi_reduction <add>, %135, %cst_46 [2] : vector<2x8x16xf32> to vector<2x8xf32>
    %137 = vector.shape_cast %136 : vector<2x8xf32> to vector<2x8x1xf32>
    %138 = tpu.reciprocal %137 {approx = true} : vector<2x8x1xf32> -> vector<2x8x1xf32>
    %139 = arith.mulf %137, %138 : vector<2x8x1xf32>
    %cst_47 = arith.constant 2.000000e+00 : f32
    %140 = vector.broadcast %cst_47 : f32 to vector<2x8x1xf32>
    %141 = arith.subf %140, %139 : vector<2x8x1xf32>
    %142 = arith.mulf %138, %141 : vector<2x8x1xf32>
    "tpu.trace_start"() <{level = 10 : i32, message = "bqk,bkd->bqd"}> : () -> ()
    %cst_48 = arith.constant dense<0.000000e+00> : vector<2x8x8xf32>
    %143 = tpu.matmul %135, %64, %cst_48 {dimension_numbers = #tpu.dot_dimension_numbers<[2], [1], [1], [2], [0, 0, 0, 1, 1, 2], [0], [0]>} : vector<2x8x16xf32>, vector<2x16x8xf32>, vector<2x8x8xf32> -> vector<2x8x8xf32>
    "tpu.trace_stop"() : () -> ()
    %144 = vector.broadcast %142 : vector<2x8x1xf32> to vector<2x8x8xf32>
    %145 = arith.mulf %143, %144 : vector<2x8x8xf32>
    %146 = tpu.concatenate %94, %111, %128, %145 in 2 : vector<2x8x8xf32>, vector<2x8x8xf32>, vector<2x8x8xf32>, vector<2x8x8xf32> -> vector<2x8x32xf32>
    %147 = vector.shape_cast %146 : vector<2x8x32xf32> to vector<16x32xf32>
    %cst_49 = arith.constant dense<0.000000e+00> : vector<16x32xf32>
    %148 = tpu.matmul %147, %5, %cst_49 {dimension_numbers = #tpu.dot_dimension_numbers<[1], [0], [0], [1], [0, 0, 1, 1], [], []>} : vector<16x32xf32>, vector<32x32xf32>, vector<16x32xf32> -> vector<16x32xf32>
    %149 = arith.addf %148, %20 : vector<16x32xf32>
    %150 = arith.addf %0, %149 : vector<16x32xf32>
    %cst_50 = arith.constant dense<0.000000e+00> : vector<16xf32>
    %151 = vector.multi_reduction <add>, %150, %cst_50 [1] : vector<16x32xf32> to vector<16xf32>
    %152 = vector.shape_cast %151 : vector<16xf32> to vector<16x1xf32>
    %cst_51 = arith.constant 3.200000e+01 : f32
    %153 = vector.broadcast %cst_51 : f32 to vector<16x1xf32>
    %154 = arith.divf %152, %153 : vector<16x1xf32>
    %155 = vector.broadcast %154 : vector<16x1xf32> to vector<16x32xf32>
    %156 = arith.subf %150, %155 : vector<16x32xf32>
    %157 = arith.mulf %156, %156 : vector<16x32xf32>
    %cst_52 = arith.constant dense<0.000000e+00> : vector<16xf32>
    %158 = vector.multi_reduction <add>, %157, %cst_52 [1] : vector<16x32xf32> to vector<16xf32>
    %159 = vector.shape_cast %158 : vector<16xf32> to vector<16x1xf32>
    %cst_53 = arith.constant 3.200000e+01 : f32
    %160 = vector.broadcast %cst_53 : f32 to vector<16x1xf32>
    %161 = arith.divf %159, %160 : vector<16x1xf32>
    %162 = vector.broadcast %154 : vector<16x1xf32> to vector<16x32xf32>
    %163 = arith.subf %150, %162 : vector<16x32xf32>
    %cst_54 = arith.constant 9.99999974E-6 : f32
    %164 = vector.broadcast %cst_54 : f32 to vector<16x1xf32>
    %165 = arith.addf %161, %164 : vector<16x1xf32>
    %166 = math.rsqrt %165 : vector<16x1xf32>
    %167 = vector.broadcast %166 : vector<16x1xf32> to vector<16x32xf32>
    %168 = arith.mulf %163, %167 : vector<16x32xf32>
    %169 = arith.mulf %168, %32 : vector<16x32xf32>
    %170 = arith.addf %169, %35 : vector<16x32xf32>
    %cst_55 = arith.constant dense<0.000000e+00> : vector<16x32xf32>
    %171 = tpu.matmul %170, %4, %cst_55 {dimension_numbers = #tpu.dot_dimension_numbers<[1], [0], [0], [1], [0, 0, 1, 1], [], []>} : vector<16x32xf32>, vector<32x32xf32>, vector<16x32xf32> -> vector<16x32xf32>
    %172 = arith.addf %171, %17 : vector<16x32xf32>
    %cst_56 = arith.constant 0.353553385 : f32
    %173 = vector.broadcast %cst_56 : f32 to vector<16x32xf32>
    %174 = arith.mulf %172, %173 : vector<16x32xf32>
    %175 = vector.shape_cast %174 : vector<16x32xf32> to vector<2x8x32xf32>
    %176 = vector.extract_strided_slice %175 {offsets = [0, 0, 0], sizes = [2, 8, 8], strides = [1, 1, 1]} : vector<2x8x32xf32> to vector<2x8x8xf32>
    "tpu.trace_start"() <{level = 10 : i32, message = "bqd,bkd->bqk"}> : () -> ()
    %cst_57 = arith.constant dense<0.000000e+00> : vector<2x8x16xf32>
    %177 = tpu.matmul %176, %65, %cst_57 {dimension_numbers = #tpu.dot_dimension_numbers<[2], [2], [1], [1], [0, 0, 0, 1, 1, 1], [0], [0]>} : vector<2x8x8xf32>, vector<2x16x8xf32>, vector<2x8x16xf32> -> vector<2x8x16xf32>
    "tpu.trace_stop"() : () -> ()
    %cst_58 = arith.constant dense<0xFF800000> : vector<2x8xf32>
    %178 = vector.multi_reduction <maximumf>, %177, %cst_58 [2] : vector<2x8x16xf32> to vector<2x8xf32>
    %179 = vector.shape_cast %178 : vector<2x8xf32> to vector<2x8x1xf32>
    %180 = vector.broadcast %179 : vector<2x8x1xf32> to vector<2x8x16xf32>
    %181 = arith.subf %177, %180 : vector<2x8x16xf32>
    %182 = math.exp %181 : vector<2x8x16xf32>
    %cst_59 = arith.constant dense<0.000000e+00> : vector<2x8xf32>
    %183 = vector.multi_reduction <add>, %182, %cst_59 [2] : vector<2x8x16xf32> to vector<2x8xf32>
    %184 = vector.shape_cast %183 : vector<2x8xf32> to vector<2x8x1xf32>
    %185 = tpu.reciprocal %184 {approx = true} : vector<2x8x1xf32> -> vector<2x8x1xf32>
    %186 = arith.mulf %184, %185 : vector<2x8x1xf32>
    %cst_60 = arith.constant 2.000000e+00 : f32
    %187 = vector.broadcast %cst_60 : f32 to vector<2x8x1xf32>
    %188 = arith.subf %187, %186 : vector<2x8x1xf32>
    %189 = arith.mulf %185, %188 : vector<2x8x1xf32>
    "tpu.trace_start"() <{level = 10 : i32, message = "bqk,bkd->bqd"}> : () -> ()
    %cst_61 = arith.constant dense<0.000000e+00> : vector<2x8x8xf32>
    %190 = tpu.matmul %182, %69, %cst_61 {dimension_numbers = #tpu.dot_dimension_numbers<[2], [1], [1], [2], [0, 0, 0, 1, 1, 2], [0], [0]>} : vector<2x8x16xf32>, vector<2x16x8xf32>, vector<2x8x8xf32> -> vector<2x8x8xf32>
    "tpu.trace_stop"() : () -> ()
    %191 = vector.broadcast %189 : vector<2x8x1xf32> to vector<2x8x8xf32>
    %192 = arith.mulf %190, %191 : vector<2x8x8xf32>
    %193 = vector.extract_strided_slice %175 {offsets = [0, 0, 8], sizes = [2, 8, 8], strides = [1, 1, 1]} : vector<2x8x32xf32> to vector<2x8x8xf32>
    "tpu.trace_start"() <{level = 10 : i32, message = "bqd,bkd->bqk"}> : () -> ()
    %cst_62 = arith.constant dense<0.000000e+00> : vector<2x8x16xf32>
    %194 = tpu.matmul %193, %66, %cst_62 {dimension_numbers = #tpu.dot_dimension_numbers<[2], [2], [1], [1], [0, 0, 0, 1, 1, 1], [0], [0]>} : vector<2x8x8xf32>, vector<2x16x8xf32>, vector<2x8x16xf32> -> vector<2x8x16xf32>
    "tpu.trace_stop"() : () -> ()
    %cst_63 = arith.constant dense<0xFF800000> : vector<2x8xf32>
    %195 = vector.multi_reduction <maximumf>, %194, %cst_63 [2] : vector<2x8x16xf32> to vector<2x8xf32>
    %196 = vector.shape_cast %195 : vector<2x8xf32> to vector<2x8x1xf32>
    %197 = vector.broadcast %196 : vector<2x8x1xf32> to vector<2x8x16xf32>
    %198 = arith.subf %194, %197 : vector<2x8x16xf32>
    %199 = math.exp %198 : vector<2x8x16xf32>
    %cst_64 = arith.constant dense<0.000000e+00> : vector<2x8xf32>
    %200 = vector.multi_reduction <add>, %199, %cst_64 [2] : vector<2x8x16xf32> to vector<2x8xf32>
    %201 = vector.shape_cast %200 : vector<2x8xf32> to vector<2x8x1xf32>
    %202 = tpu.reciprocal %201 {approx = true} : vector<2x8x1xf32> -> vector<2x8x1xf32>
    %203 = arith.mulf %201, %202 : vector<2x8x1xf32>
    %cst_65 = arith.constant 2.000000e+00 : f32
    %204 = vector.broadcast %cst_65 : f32 to vector<2x8x1xf32>
    %205 = arith.subf %204, %203 : vector<2x8x1xf32>
    %206 = arith.mulf %202, %205 : vector<2x8x1xf32>
    "tpu.trace_start"() <{level = 10 : i32, message = "bqk,bkd->bqd"}> : () -> ()
    %cst_66 = arith.constant dense<0.000000e+00> : vector<2x8x8xf32>
    %207 = tpu.matmul %199, %70, %cst_66 {dimension_numbers = #tpu.dot_dimension_numbers<[2], [1], [1], [2], [0, 0, 0, 1, 1, 2], [0], [0]>} : vector<2x8x16xf32>, vector<2x16x8xf32>, vector<2x8x8xf32> -> vector<2x8x8xf32>
    "tpu.trace_stop"() : () -> ()
    %208 = vector.broadcast %206 : vector<2x8x1xf32> to vector<2x8x8xf32>
    %209 = arith.mulf %207, %208 : vector<2x8x8xf32>
    %210 = vector.extract_strided_slice %175 {offsets = [0, 0, 16], sizes = [2, 8, 8], strides = [1, 1, 1]} : vector<2x8x32xf32> to vector<2x8x8xf32>
    "tpu.trace_start"() <{level = 10 : i32, message = "bqd,bkd->bqk"}> : () -> ()
    %cst_67 = arith.constant dense<0.000000e+00> : vector<2x8x16xf32>
    %211 = tpu.matmul %210, %67, %cst_67 {dimension_numbers = #tpu.dot_dimension_numbers<[2], [2], [1], [1], [0, 0, 0, 1, 1, 1], [0], [0]>} : vector<2x8x8xf32>, vector<2x16x8xf32>, vector<2x8x16xf32> -> vector<2x8x16xf32>
    "tpu.trace_stop"() : () -> ()
    %cst_68 = arith.constant dense<0xFF800000> : vector<2x8xf32>
    %212 = vector.multi_reduction <maximumf>, %211, %cst_68 [2] : vector<2x8x16xf32> to vector<2x8xf32>
    %213 = vector.shape_cast %212 : vector<2x8xf32> to vector<2x8x1xf32>
    %214 = vector.broadcast %213 : vector<2x8x1xf32> to vector<2x8x16xf32>
    %215 = arith.subf %211, %214 : vector<2x8x16xf32>
    %216 = math.exp %215 : vector<2x8x16xf32>
    %cst_69 = arith.constant dense<0.000000e+00> : vector<2x8xf32>
    %217 = vector.multi_reduction <add>, %216, %cst_69 [2] : vector<2x8x16xf32> to vector<2x8xf32>
    %218 = vector.shape_cast %217 : vector<2x8xf32> to vector<2x8x1xf32>
    %219 = tpu.reciprocal %218 {approx = true} : vector<2x8x1xf32> -> vector<2x8x1xf32>
    %220 = arith.mulf %218, %219 : vector<2x8x1xf32>
    %cst_70 = arith.constant 2.000000e+00 : f32
    %221 = vector.broadcast %cst_70 : f32 to vector<2x8x1xf32>
    %222 = arith.subf %221, %220 : vector<2x8x1xf32>
    %223 = arith.mulf %219, %222 : vector<2x8x1xf32>
    "tpu.trace_start"() <{level = 10 : i32, message = "bqk,bkd->bqd"}> : () -> ()
    %cst_71 = arith.constant dense<0.000000e+00> : vector<2x8x8xf32>
    %224 = tpu.matmul %216, %71, %cst_71 {dimension_numbers = #tpu.dot_dimension_numbers<[2], [1], [1], [2], [0, 0, 0, 1, 1, 2], [0], [0]>} : vector<2x8x16xf32>, vector<2x16x8xf32>, vector<2x8x8xf32> -> vector<2x8x8xf32>
    "tpu.trace_stop"() : () -> ()
    %225 = vector.broadcast %223 : vector<2x8x1xf32> to vector<2x8x8xf32>
    %226 = arith.mulf %224, %225 : vector<2x8x8xf32>
    %227 = vector.extract_strided_slice %175 {offsets = [0, 0, 24], sizes = [2, 8, 8], strides = [1, 1, 1]} : vector<2x8x32xf32> to vector<2x8x8xf32>
    "tpu.trace_start"() <{level = 10 : i32, message = "bqd,bkd->bqk"}> : () -> ()
    %cst_72 = arith.constant dense<0.000000e+00> : vector<2x8x16xf32>
    %228 = tpu.matmul %227, %68, %cst_72 {dimension_numbers = #tpu.dot_dimension_numbers<[2], [2], [1], [1], [0, 0, 0, 1, 1, 1], [0], [0]>} : vector<2x8x8xf32>, vector<2x16x8xf32>, vector<2x8x16xf32> -> vector<2x8x16xf32>
    "tpu.trace_stop"() : () -> ()
    %cst_73 = arith.constant dense<0xFF800000> : vector<2x8xf32>
    %229 = vector.multi_reduction <maximumf>, %228, %cst_73 [2] : vector<2x8x16xf32> to vector<2x8xf32>
    %230 = vector.shape_cast %229 : vector<2x8xf32> to vector<2x8x1xf32>
    %231 = vector.broadcast %230 : vector<2x8x1xf32> to vector<2x8x16xf32>
    %232 = arith.subf %228, %231 : vector<2x8x16xf32>
    %233 = math.exp %232 : vector<2x8x16xf32>
    %cst_74 = arith.constant dense<0.000000e+00> : vector<2x8xf32>
    %234 = vector.multi_reduction <add>, %233, %cst_74 [2] : vector<2x8x16xf32> to vector<2x8xf32>
    %235 = vector.shape_cast %234 : vector<2x8xf32> to vector<2x8x1xf32>
    %236 = tpu.reciprocal %235 {approx = true} : vector<2x8x1xf32> -> vector<2x8x1xf32>
    %237 = arith.mulf %235, %236 : vector<2x8x1xf32>
    %cst_75 = arith.constant 2.000000e+00 : f32
    %238 = vector.broadcast %cst_75 : f32 to vector<2x8x1xf32>
    %239 = arith.subf %238, %237 : vector<2x8x1xf32>
    %240 = arith.mulf %236, %239 : vector<2x8x1xf32>
    "tpu.trace_start"() <{level = 10 : i32, message = "bqk,bkd->bqd"}> : () -> ()
    %cst_76 = arith.constant dense<0.000000e+00> : vector<2x8x8xf32>
    %241 = tpu.matmul %233, %72, %cst_76 {dimension_numbers = #tpu.dot_dimension_numbers<[2], [1], [1], [2], [0, 0, 0, 1, 1, 2], [0], [0]>} : vector<2x8x16xf32>, vector<2x16x8xf32>, vector<2x8x8xf32> -> vector<2x8x8xf32>
    "tpu.trace_stop"() : () -> ()
    %242 = vector.broadcast %240 : vector<2x8x1xf32> to vector<2x8x8xf32>
    %243 = arith.mulf %241, %242 : vector<2x8x8xf32>
    %244 = tpu.concatenate %192, %209, %226, %243 in 2 : vector<2x8x8xf32>, vector<2x8x8xf32>, vector<2x8x8xf32>, vector<2x8x8xf32> -> vector<2x8x32xf32>
    %245 = vector.shape_cast %244 : vector<2x8x32xf32> to vector<16x32xf32>
    %cst_77 = arith.constant dense<0.000000e+00> : vector<16x32xf32>
    %246 = tpu.matmul %245, %6, %cst_77 {dimension_numbers = #tpu.dot_dimension_numbers<[1], [0], [0], [1], [0, 0, 1, 1], [], []>} : vector<16x32xf32>, vector<32x32xf32>, vector<16x32xf32> -> vector<16x32xf32>
    %247 = arith.addf %246, %23 : vector<16x32xf32>
    %248 = arith.addf %170, %247 : vector<16x32xf32>
    %cst_78 = arith.constant dense<0.000000e+00> : vector<16xf32>
    %249 = vector.multi_reduction <add>, %248, %cst_78 [1] : vector<16x32xf32> to vector<16xf32>
    %250 = vector.shape_cast %249 : vector<16xf32> to vector<16x1xf32>
    %cst_79 = arith.constant 3.200000e+01 : f32
    %251 = vector.broadcast %cst_79 : f32 to vector<16x1xf32>
    %252 = arith.divf %250, %251 : vector<16x1xf32>
    %253 = vector.broadcast %252 : vector<16x1xf32> to vector<16x32xf32>
    %254 = arith.subf %248, %253 : vector<16x32xf32>
    %255 = arith.mulf %254, %254 : vector<16x32xf32>
    %cst_80 = arith.constant dense<0.000000e+00> : vector<16xf32>
    %256 = vector.multi_reduction <add>, %255, %cst_80 [1] : vector<16x32xf32> to vector<16xf32>
    %257 = vector.shape_cast %256 : vector<16xf32> to vector<16x1xf32>
    %cst_81 = arith.constant 3.200000e+01 : f32
    %258 = vector.broadcast %cst_81 : f32 to vector<16x1xf32>
    %259 = arith.divf %257, %258 : vector<16x1xf32>
    %260 = vector.broadcast %252 : vector<16x1xf32> to vector<16x32xf32>
    %261 = arith.subf %248, %260 : vector<16x32xf32>
    %cst_82 = arith.constant 9.99999974E-6 : f32
    %262 = vector.broadcast %cst_82 : f32 to vector<16x1xf32>
    %263 = arith.addf %259, %262 : vector<16x1xf32>
    %264 = math.rsqrt %263 : vector<16x1xf32>
    %265 = vector.broadcast %264 : vector<16x1xf32> to vector<16x32xf32>
    %266 = arith.mulf %261, %265 : vector<16x32xf32>
    %267 = arith.mulf %266, %38 : vector<16x32xf32>
    %268 = arith.addf %267, %41 : vector<16x32xf32>
    %cst_83 = arith.constant dense<0.000000e+00> : vector<16x64xf32>
    %269 = tpu.matmul %268, %7, %cst_83 {dimension_numbers = #tpu.dot_dimension_numbers<[1], [0], [0], [1], [0, 0, 1, 1], [], []>} : vector<16x32xf32>, vector<32x64xf32>, vector<16x64xf32> -> vector<16x64xf32>
    %270 = arith.addf %269, %26 : vector<16x64xf32>
    %cst_84 = arith.constant 0.000000e+00 : f32
    %271 = vector.broadcast %cst_84 : f32 to vector<16x64xf32>
    %272 = arith.maximumf %270, %271 : vector<16x64xf32>
    %cst_85 = arith.constant dense<0.000000e+00> : vector<16x32xf32>
    %273 = tpu.matmul %272, %8, %cst_85 {dimension_numbers = #tpu.dot_dimension_numbers<[1], [0], [0], [1], [0, 0, 1, 1], [], []>} : vector<16x64xf32>, vector<64x32xf32>, vector<16x32xf32> -> vector<16x32xf32>
    %274 = arith.addf %273, %29 : vector<16x32xf32>
    %275 = arith.addf %268, %274 : vector<16x32xf32>
    %cst_86 = arith.constant dense<0.000000e+00> : vector<16xf32>
    %276 = vector.multi_reduction <add>, %275, %cst_86 [1] : vector<16x32xf32> to vector<16xf32>
    %277 = vector.shape_cast %276 : vector<16xf32> to vector<16x1xf32>
    %cst_87 = arith.constant 3.200000e+01 : f32
    %278 = vector.broadcast %cst_87 : f32 to vector<16x1xf32>
    %279 = arith.divf %277, %278 : vector<16x1xf32>
    %280 = vector.broadcast %279 : vector<16x1xf32> to vector<16x32xf32>
    %281 = arith.subf %275, %280 : vector<16x32xf32>
    %282 = arith.mulf %281, %281 : vector<16x32xf32>
    %cst_88 = arith.constant dense<0.000000e+00> : vector<16xf32>
    %283 = vector.multi_reduction <add>, %282, %cst_88 [1] : vector<16x32xf32> to vector<16xf32>
    %284 = vector.shape_cast %283 : vector<16xf32> to vector<16x1xf32>
    %cst_89 = arith.constant 3.200000e+01 : f32
    %285 = vector.broadcast %cst_89 : f32 to vector<16x1xf32>
    %286 = arith.divf %284, %285 : vector<16x1xf32>
    %287 = vector.broadcast %279 : vector<16x1xf32> to vector<16x32xf32>
    %288 = arith.subf %275, %287 : vector<16x32xf32>
    %cst_90 = arith.constant 9.99999974E-6 : f32
    %289 = vector.broadcast %cst_90 : f32 to vector<16x1xf32>
    %290 = arith.addf %286, %289 : vector<16x1xf32>
    %291 = math.rsqrt %290 : vector<16x1xf32>
    %292 = vector.broadcast %291 : vector<16x1xf32> to vector<16x32xf32>
    %293 = arith.mulf %288, %292 : vector<16x32xf32>
    %294 = arith.mulf %293, %44 : vector<16x32xf32>
    %295 = arith.addf %294, %47 : vector<16x32xf32>
    %cst_91 = arith.constant dense<0.000000e+00> : vector<16x32xf32>
    %296 = tpu.matmul %295, %3, %cst_91 {dimension_numbers = #tpu.dot_dimension_numbers<[1], [0], [0], [1], [0, 0, 1, 1], [], []>} : vector<16x32xf32>, vector<32x32xf32>, vector<16x32xf32> -> vector<16x32xf32>
    %297 = arith.addf %296, %14 : vector<16x32xf32>
    %cst_92 = arith.constant 0.353553385 : f32
    %298 = vector.broadcast %cst_92 : f32 to vector<16x32xf32>
    %299 = arith.mulf %297, %298 : vector<16x32xf32>
    %300 = vector.shape_cast %299 : vector<16x32xf32> to vector<2x8x32xf32>
    %301 = vector.extract_strided_slice %300 {offsets = [0, 0, 0], sizes = [2, 8, 8], strides = [1, 1, 1]} : vector<2x8x32xf32> to vector<2x8x8xf32>
    "tpu.trace_start"() <{level = 10 : i32, message = "bqd,bkd->bqk"}> : () -> ()
    %cst_93 = arith.constant dense<0.000000e+00> : vector<2x8x16xf32>
    %302 = tpu.matmul %301, %57, %cst_93 {dimension_numbers = #tpu.dot_dimension_numbers<[2], [2], [1], [1], [0, 0, 0, 1, 1, 1], [0], [0]>} : vector<2x8x8xf32>, vector<2x16x8xf32>, vector<2x8x16xf32> -> vector<2x8x16xf32>
    "tpu.trace_stop"() : () -> ()
    %cst_94 = arith.constant dense<0xFF800000> : vector<2x8xf32>
    %303 = vector.multi_reduction <maximumf>, %302, %cst_94 [2] : vector<2x8x16xf32> to vector<2x8xf32>
    %304 = vector.shape_cast %303 : vector<2x8xf32> to vector<2x8x1xf32>
    %305 = vector.broadcast %304 : vector<2x8x1xf32> to vector<2x8x16xf32>
    %306 = arith.subf %302, %305 : vector<2x8x16xf32>
    %307 = math.exp %306 : vector<2x8x16xf32>
    %cst_95 = arith.constant dense<0.000000e+00> : vector<2x8xf32>
    %308 = vector.multi_reduction <add>, %307, %cst_95 [2] : vector<2x8x16xf32> to vector<2x8xf32>
    %309 = vector.shape_cast %308 : vector<2x8xf32> to vector<2x8x1xf32>
    %310 = tpu.reciprocal %309 {approx = true} : vector<2x8x1xf32> -> vector<2x8x1xf32>
    %311 = arith.mulf %309, %310 : vector<2x8x1xf32>
    %cst_96 = arith.constant 2.000000e+00 : f32
    %312 = vector.broadcast %cst_96 : f32 to vector<2x8x1xf32>
    %313 = arith.subf %312, %311 : vector<2x8x1xf32>
    %314 = arith.mulf %310, %313 : vector<2x8x1xf32>
    "tpu.trace_start"() <{level = 10 : i32, message = "bqk,bkd->bqd"}> : () -> ()
    %cst_97 = arith.constant dense<0.000000e+00> : vector<2x8x8xf32>
    %315 = tpu.matmul %307, %61, %cst_97 {dimension_numbers = #tpu.dot_dimension_numbers<[2], [1], [1], [2], [0, 0, 0, 1, 1, 2], [0], [0]>} : vector<2x8x16xf32>, vector<2x16x8xf32>, vector<2x8x8xf32> -> vector<2x8x8xf32>
    "tpu.trace_stop"() : () -> ()
    %316 = vector.broadcast %314 : vector<2x8x1xf32> to vector<2x8x8xf32>
    %317 = arith.mulf %315, %316 : vector<2x8x8xf32>
    %318 = vector.extract_strided_slice %300 {offsets = [0, 0, 8], sizes = [2, 8, 8], strides = [1, 1, 1]} : vector<2x8x32xf32> to vector<2x8x8xf32>
    "tpu.trace_start"() <{level = 10 : i32, message = "bqd,bkd->bqk"}> : () -> ()
    %cst_98 = arith.constant dense<0.000000e+00> : vector<2x8x16xf32>
    %319 = tpu.matmul %318, %58, %cst_98 {dimension_numbers = #tpu.dot_dimension_numbers<[2], [2], [1], [1], [0, 0, 0, 1, 1, 1], [0], [0]>} : vector<2x8x8xf32>, vector<2x16x8xf32>, vector<2x8x16xf32> -> vector<2x8x16xf32>
    "tpu.trace_stop"() : () -> ()
    %cst_99 = arith.constant dense<0xFF800000> : vector<2x8xf32>
    %320 = vector.multi_reduction <maximumf>, %319, %cst_99 [2] : vector<2x8x16xf32> to vector<2x8xf32>
    %321 = vector.shape_cast %320 : vector<2x8xf32> to vector<2x8x1xf32>
    %322 = vector.broadcast %321 : vector<2x8x1xf32> to vector<2x8x16xf32>
    %323 = arith.subf %319, %322 : vector<2x8x16xf32>
    %324 = math.exp %323 : vector<2x8x16xf32>
    %cst_100 = arith.constant dense<0.000000e+00> : vector<2x8xf32>
    %325 = vector.multi_reduction <add>, %324, %cst_100 [2] : vector<2x8x16xf32> to vector<2x8xf32>
    %326 = vector.shape_cast %325 : vector<2x8xf32> to vector<2x8x1xf32>
    %327 = tpu.reciprocal %326 {approx = true} : vector<2x8x1xf32> -> vector<2x8x1xf32>
    %328 = arith.mulf %326, %327 : vector<2x8x1xf32>
    %cst_101 = arith.constant 2.000000e+00 : f32
    %329 = vector.broadcast %cst_101 : f32 to vector<2x8x1xf32>
    %330 = arith.subf %329, %328 : vector<2x8x1xf32>
    %331 = arith.mulf %327, %330 : vector<2x8x1xf32>
    "tpu.trace_start"() <{level = 10 : i32, message = "bqk,bkd->bqd"}> : () -> ()
    %cst_102 = arith.constant dense<0.000000e+00> : vector<2x8x8xf32>
    %332 = tpu.matmul %324, %62, %cst_102 {dimension_numbers = #tpu.dot_dimension_numbers<[2], [1], [1], [2], [0, 0, 0, 1, 1, 2], [0], [0]>} : vector<2x8x16xf32>, vector<2x16x8xf32>, vector<2x8x8xf32> -> vector<2x8x8xf32>
    "tpu.trace_stop"() : () -> ()
    %333 = vector.broadcast %331 : vector<2x8x1xf32> to vector<2x8x8xf32>
    %334 = arith.mulf %332, %333 : vector<2x8x8xf32>
    %335 = vector.extract_strided_slice %300 {offsets = [0, 0, 16], sizes = [2, 8, 8], strides = [1, 1, 1]} : vector<2x8x32xf32> to vector<2x8x8xf32>
    "tpu.trace_start"() <{level = 10 : i32, message = "bqd,bkd->bqk"}> : () -> ()
    %cst_103 = arith.constant dense<0.000000e+00> : vector<2x8x16xf32>
    %336 = tpu.matmul %335, %59, %cst_103 {dimension_numbers = #tpu.dot_dimension_numbers<[2], [2], [1], [1], [0, 0, 0, 1, 1, 1], [0], [0]>} : vector<2x8x8xf32>, vector<2x16x8xf32>, vector<2x8x16xf32> -> vector<2x8x16xf32>
    "tpu.trace_stop"() : () -> ()
    %cst_104 = arith.constant dense<0xFF800000> : vector<2x8xf32>
    %337 = vector.multi_reduction <maximumf>, %336, %cst_104 [2] : vector<2x8x16xf32> to vector<2x8xf32>
    %338 = vector.shape_cast %337 : vector<2x8xf32> to vector<2x8x1xf32>
    %339 = vector.broadcast %338 : vector<2x8x1xf32> to vector<2x8x16xf32>
    %340 = arith.subf %336, %339 : vector<2x8x16xf32>
    %341 = math.exp %340 : vector<2x8x16xf32>
    %cst_105 = arith.constant dense<0.000000e+00> : vector<2x8xf32>
    %342 = vector.multi_reduction <add>, %341, %cst_105 [2] : vector<2x8x16xf32> to vector<2x8xf32>
    %343 = vector.shape_cast %342 : vector<2x8xf32> to vector<2x8x1xf32>
    %344 = tpu.reciprocal %343 {approx = true} : vector<2x8x1xf32> -> vector<2x8x1xf32>
    %345 = arith.mulf %343, %344 : vector<2x8x1xf32>
    %cst_106 = arith.constant 2.000000e+00 : f32
    %346 = vector.broadcast %cst_106 : f32 to vector<2x8x1xf32>
    %347 = arith.subf %346, %345 : vector<2x8x1xf32>
    %348 = arith.mulf %344, %347 : vector<2x8x1xf32>
    "tpu.trace_start"() <{level = 10 : i32, message = "bqk,bkd->bqd"}> : () -> ()
    %cst_107 = arith.constant dense<0.000000e+00> : vector<2x8x8xf32>
    %349 = tpu.matmul %341, %63, %cst_107 {dimension_numbers = #tpu.dot_dimension_numbers<[2], [1], [1], [2], [0, 0, 0, 1, 1, 2], [0], [0]>} : vector<2x8x16xf32>, vector<2x16x8xf32>, vector<2x8x8xf32> -> vector<2x8x8xf32>
    "tpu.trace_stop"() : () -> ()
    %350 = vector.broadcast %348 : vector<2x8x1xf32> to vector<2x8x8xf32>
    %351 = arith.mulf %349, %350 : vector<2x8x8xf32>
    %352 = vector.extract_strided_slice %300 {offsets = [0, 0, 24], sizes = [2, 8, 8], strides = [1, 1, 1]} : vector<2x8x32xf32> to vector<2x8x8xf32>
    "tpu.trace_start"() <{level = 10 : i32, message = "bqd,bkd->bqk"}> : () -> ()
    %cst_108 = arith.constant dense<0.000000e+00> : vector<2x8x16xf32>
    %353 = tpu.matmul %352, %60, %cst_108 {dimension_numbers = #tpu.dot_dimension_numbers<[2], [2], [1], [1], [0, 0, 0, 1, 1, 1], [0], [0]>} : vector<2x8x8xf32>, vector<2x16x8xf32>, vector<2x8x16xf32> -> vector<2x8x16xf32>
    "tpu.trace_stop"() : () -> ()
    %cst_109 = arith.constant dense<0xFF800000> : vector<2x8xf32>
    %354 = vector.multi_reduction <maximumf>, %353, %cst_109 [2] : vector<2x8x16xf32> to vector<2x8xf32>
    %355 = vector.shape_cast %354 : vector<2x8xf32> to vector<2x8x1xf32>
    %356 = vector.broadcast %355 : vector<2x8x1xf32> to vector<2x8x16xf32>
    %357 = arith.subf %353, %356 : vector<2x8x16xf32>
    %358 = math.exp %357 : vector<2x8x16xf32>
    %cst_110 = arith.constant dense<0.000000e+00> : vector<2x8xf32>
    %359 = vector.multi_reduction <add>, %358, %cst_110 [2] : vector<2x8x16xf32> to vector<2x8xf32>
    %360 = vector.shape_cast %359 : vector<2x8xf32> to vector<2x8x1xf32>
    %361 = tpu.reciprocal %360 {approx = true} : vector<2x8x1xf32> -> vector<2x8x1xf32>
    %362 = arith.mulf %360, %361 : vector<2x8x1xf32>
    %cst_111 = arith.constant 2.000000e+00 : f32
    %363 = vector.broadcast %cst_111 : f32 to vector<2x8x1xf32>
    %364 = arith.subf %363, %362 : vector<2x8x1xf32>
    %365 = arith.mulf %361, %364 : vector<2x8x1xf32>
    "tpu.trace_start"() <{level = 10 : i32, message = "bqk,bkd->bqd"}> : () -> ()
    %cst_112 = arith.constant dense<0.000000e+00> : vector<2x8x8xf32>
    %366 = tpu.matmul %358, %64, %cst_112 {dimension_numbers = #tpu.dot_dimension_numbers<[2], [1], [1], [2], [0, 0, 0, 1, 1, 2], [0], [0]>} : vector<2x8x16xf32>, vector<2x16x8xf32>, vector<2x8x8xf32> -> vector<2x8x8xf32>
    "tpu.trace_stop"() : () -> ()
    %367 = vector.broadcast %365 : vector<2x8x1xf32> to vector<2x8x8xf32>
    %368 = arith.mulf %366, %367 : vector<2x8x8xf32>
    %369 = tpu.concatenate %317, %334, %351, %368 in 2 : vector<2x8x8xf32>, vector<2x8x8xf32>, vector<2x8x8xf32>, vector<2x8x8xf32> -> vector<2x8x32xf32>
    %370 = vector.shape_cast %369 : vector<2x8x32xf32> to vector<16x32xf32>
    %cst_113 = arith.constant dense<0.000000e+00> : vector<16x32xf32>
    %371 = tpu.matmul %370, %5, %cst_113 {dimension_numbers = #tpu.dot_dimension_numbers<[1], [0], [0], [1], [0, 0, 1, 1], [], []>} : vector<16x32xf32>, vector<32x32xf32>, vector<16x32xf32> -> vector<16x32xf32>
    %372 = arith.addf %371, %20 : vector<16x32xf32>
    %373 = arith.addf %295, %372 : vector<16x32xf32>
    %cst_114 = arith.constant dense<0.000000e+00> : vector<16xf32>
    %374 = vector.multi_reduction <add>, %373, %cst_114 [1] : vector<16x32xf32> to vector<16xf32>
    %375 = vector.shape_cast %374 : vector<16xf32> to vector<16x1xf32>
    %cst_115 = arith.constant 3.200000e+01 : f32
    %376 = vector.broadcast %cst_115 : f32 to vector<16x1xf32>
    %377 = arith.divf %375, %376 : vector<16x1xf32>
    %378 = vector.broadcast %377 : vector<16x1xf32> to vector<16x32xf32>
    %379 = arith.subf %373, %378 : vector<16x32xf32>
    %380 = arith.mulf %379, %379 : vector<16x32xf32>
    %cst_116 = arith.constant dense<0.000000e+00> : vector<16xf32>
    %381 = vector.multi_reduction <add>, %380, %cst_116 [1] : vector<16x32xf32> to vector<16xf32>
    %382 = vector.shape_cast %381 : vector<16xf32> to vector<16x1xf32>
    %cst_117 = arith.constant 3.200000e+01 : f32
    %383 = vector.broadcast %cst_117 : f32 to vector<16x1xf32>
    %384 = arith.divf %382, %383 : vector<16x1xf32>
    %385 = vector.broadcast %377 : vector<16x1xf32> to vector<16x32xf32>
    %386 = arith.subf %373, %385 : vector<16x32xf32>
    %cst_118 = arith.constant 9.99999974E-6 : f32
    %387 = vector.broadcast %cst_118 : f32 to vector<16x1xf32>
    %388 = arith.addf %384, %387 : vector<16x1xf32>
    %389 = math.rsqrt %388 : vector<16x1xf32>
    %390 = vector.broadcast %389 : vector<16x1xf32> to vector<16x32xf32>
    %391 = arith.mulf %386, %390 : vector<16x32xf32>
    %392 = arith.mulf %391, %32 : vector<16x32xf32>
    %393 = arith.addf %392, %35 : vector<16x32xf32>
    %cst_119 = arith.constant dense<0.000000e+00> : vector<16x32xf32>
    %394 = tpu.matmul %393, %4, %cst_119 {dimension_numbers = #tpu.dot_dimension_numbers<[1], [0], [0], [1], [0, 0, 1, 1], [], []>} : vector<16x32xf32>, vector<32x32xf32>, vector<16x32xf32> -> vector<16x32xf32>
    %395 = arith.addf %394, %17 : vector<16x32xf32>
    %cst_120 = arith.constant 0.353553385 : f32
    %396 = vector.broadcast %cst_120 : f32 to vector<16x32xf32>
    %397 = arith.mulf %395, %396 : vector<16x32xf32>
    %398 = vector.shape_cast %397 : vector<16x32xf32> to vector<2x8x32xf32>
    %399 = vector.extract_strided_slice %398 {offsets = [0, 0, 0], sizes = [2, 8, 8], strides = [1, 1, 1]} : vector<2x8x32xf32> to vector<2x8x8xf32>
    "tpu.trace_start"() <{level = 10 : i32, message = "bqd,bkd->bqk"}> : () -> ()
    %cst_121 = arith.constant dense<0.000000e+00> : vector<2x8x16xf32>
    %400 = tpu.matmul %399, %65, %cst_121 {dimension_numbers = #tpu.dot_dimension_numbers<[2], [2], [1], [1], [0, 0, 0, 1, 1, 1], [0], [0]>} : vector<2x8x8xf32>, vector<2x16x8xf32>, vector<2x8x16xf32> -> vector<2x8x16xf32>
    "tpu.trace_stop"() : () -> ()
    %cst_122 = arith.constant dense<0xFF800000> : vector<2x8xf32>
    %401 = vector.multi_reduction <maximumf>, %400, %cst_122 [2] : vector<2x8x16xf32> to vector<2x8xf32>
    %402 = vector.shape_cast %401 : vector<2x8xf32> to vector<2x8x1xf32>
    %403 = vector.broadcast %402 : vector<2x8x1xf32> to vector<2x8x16xf32>
    %404 = arith.subf %400, %403 : vector<2x8x16xf32>
    %405 = math.exp %404 : vector<2x8x16xf32>
    %cst_123 = arith.constant dense<0.000000e+00> : vector<2x8xf32>
    %406 = vector.multi_reduction <add>, %405, %cst_123 [2] : vector<2x8x16xf32> to vector<2x8xf32>
    %407 = vector.shape_cast %406 : vector<2x8xf32> to vector<2x8x1xf32>
    %408 = tpu.reciprocal %407 {approx = true} : vector<2x8x1xf32> -> vector<2x8x1xf32>
    %409 = arith.mulf %407, %408 : vector<2x8x1xf32>
    %cst_124 = arith.constant 2.000000e+00 : f32
    %410 = vector.broadcast %cst_124 : f32 to vector<2x8x1xf32>
    %411 = arith.subf %410, %409 : vector<2x8x1xf32>
    %412 = arith.mulf %408, %411 : vector<2x8x1xf32>
    "tpu.trace_start"() <{level = 10 : i32, message = "bqk,bkd->bqd"}> : () -> ()
    %cst_125 = arith.constant dense<0.000000e+00> : vector<2x8x8xf32>
    %413 = tpu.matmul %405, %69, %cst_125 {dimension_numbers = #tpu.dot_dimension_numbers<[2], [1], [1], [2], [0, 0, 0, 1, 1, 2], [0], [0]>} : vector<2x8x16xf32>, vector<2x16x8xf32>, vector<2x8x8xf32> -> vector<2x8x8xf32>
    "tpu.trace_stop"() : () -> ()
    %414 = vector.broadcast %412 : vector<2x8x1xf32> to vector<2x8x8xf32>
    %415 = arith.mulf %413, %414 : vector<2x8x8xf32>
    %416 = vector.extract_strided_slice %398 {offsets = [0, 0, 8], sizes = [2, 8, 8], strides = [1, 1, 1]} : vector<2x8x32xf32> to vector<2x8x8xf32>
    "tpu.trace_start"() <{level = 10 : i32, message = "bqd,bkd->bqk"}> : () -> ()
    %cst_126 = arith.constant dense<0.000000e+00> : vector<2x8x16xf32>
    %417 = tpu.matmul %416, %66, %cst_126 {dimension_numbers = #tpu.dot_dimension_numbers<[2], [2], [1], [1], [0, 0, 0, 1, 1, 1], [0], [0]>} : vector<2x8x8xf32>, vector<2x16x8xf32>, vector<2x8x16xf32> -> vector<2x8x16xf32>
    "tpu.trace_stop"() : () -> ()
    %cst_127 = arith.constant dense<0xFF800000> : vector<2x8xf32>
    %418 = vector.multi_reduction <maximumf>, %417, %cst_127 [2] : vector<2x8x16xf32> to vector<2x8xf32>
    %419 = vector.shape_cast %418 : vector<2x8xf32> to vector<2x8x1xf32>
    %420 = vector.broadcast %419 : vector<2x8x1xf32> to vector<2x8x16xf32>
    %421 = arith.subf %417, %420 : vector<2x8x16xf32>
    %422 = math.exp %421 : vector<2x8x16xf32>
    %cst_128 = arith.constant dense<0.000000e+00> : vector<2x8xf32>
    %423 = vector.multi_reduction <add>, %422, %cst_128 [2] : vector<2x8x16xf32> to vector<2x8xf32>
    %424 = vector.shape_cast %423 : vector<2x8xf32> to vector<2x8x1xf32>
    %425 = tpu.reciprocal %424 {approx = true} : vector<2x8x1xf32> -> vector<2x8x1xf32>
    %426 = arith.mulf %424, %425 : vector<2x8x1xf32>
    %cst_129 = arith.constant 2.000000e+00 : f32
    %427 = vector.broadcast %cst_129 : f32 to vector<2x8x1xf32>
    %428 = arith.subf %427, %426 : vector<2x8x1xf32>
    %429 = arith.mulf %425, %428 : vector<2x8x1xf32>
    "tpu.trace_start"() <{level = 10 : i32, message = "bqk,bkd->bqd"}> : () -> ()
    %cst_130 = arith.constant dense<0.000000e+00> : vector<2x8x8xf32>
    %430 = tpu.matmul %422, %70, %cst_130 {dimension_numbers = #tpu.dot_dimension_numbers<[2], [1], [1], [2], [0, 0, 0, 1, 1, 2], [0], [0]>} : vector<2x8x16xf32>, vector<2x16x8xf32>, vector<2x8x8xf32> -> vector<2x8x8xf32>
    "tpu.trace_stop"() : () -> ()
    %431 = vector.broadcast %429 : vector<2x8x1xf32> to vector<2x8x8xf32>
    %432 = arith.mulf %430, %431 : vector<2x8x8xf32>
    %433 = vector.extract_strided_slice %398 {offsets = [0, 0, 16], sizes = [2, 8, 8], strides = [1, 1, 1]} : vector<2x8x32xf32> to vector<2x8x8xf32>
    "tpu.trace_start"() <{level = 10 : i32, message = "bqd,bkd->bqk"}> : () -> ()
    %cst_131 = arith.constant dense<0.000000e+00> : vector<2x8x16xf32>
    %434 = tpu.matmul %433, %67, %cst_131 {dimension_numbers = #tpu.dot_dimension_numbers<[2], [2], [1], [1], [0, 0, 0, 1, 1, 1], [0], [0]>} : vector<2x8x8xf32>, vector<2x16x8xf32>, vector<2x8x16xf32> -> vector<2x8x16xf32>
    "tpu.trace_stop"() : () -> ()
    %cst_132 = arith.constant dense<0xFF800000> : vector<2x8xf32>
    %435 = vector.multi_reduction <maximumf>, %434, %cst_132 [2] : vector<2x8x16xf32> to vector<2x8xf32>
    %436 = vector.shape_cast %435 : vector<2x8xf32> to vector<2x8x1xf32>
    %437 = vector.broadcast %436 : vector<2x8x1xf32> to vector<2x8x16xf32>
    %438 = arith.subf %434, %437 : vector<2x8x16xf32>
    %439 = math.exp %438 : vector<2x8x16xf32>
    %cst_133 = arith.constant dense<0.000000e+00> : vector<2x8xf32>
    %440 = vector.multi_reduction <add>, %439, %cst_133 [2] : vector<2x8x16xf32> to vector<2x8xf32>
    %441 = vector.shape_cast %440 : vector<2x8xf32> to vector<2x8x1xf32>
    %442 = tpu.reciprocal %441 {approx = true} : vector<2x8x1xf32> -> vector<2x8x1xf32>
    %443 = arith.mulf %441, %442 : vector<2x8x1xf32>
    %cst_134 = arith.constant 2.000000e+00 : f32
    %444 = vector.broadcast %cst_134 : f32 to vector<2x8x1xf32>
    %445 = arith.subf %444, %443 : vector<2x8x1xf32>
    %446 = arith.mulf %442, %445 : vector<2x8x1xf32>
    "tpu.trace_start"() <{level = 10 : i32, message = "bqk,bkd->bqd"}> : () -> ()
    %cst_135 = arith.constant dense<0.000000e+00> : vector<2x8x8xf32>
    %447 = tpu.matmul %439, %71, %cst_135 {dimension_numbers = #tpu.dot_dimension_numbers<[2], [1], [1], [2], [0, 0, 0, 1, 1, 2], [0], [0]>} : vector<2x8x16xf32>, vector<2x16x8xf32>, vector<2x8x8xf32> -> vector<2x8x8xf32>
    "tpu.trace_stop"() : () -> ()
    %448 = vector.broadcast %446 : vector<2x8x1xf32> to vector<2x8x8xf32>
    %449 = arith.mulf %447, %448 : vector<2x8x8xf32>
    %450 = vector.extract_strided_slice %398 {offsets = [0, 0, 24], sizes = [2, 8, 8], strides = [1, 1, 1]} : vector<2x8x32xf32> to vector<2x8x8xf32>
    "tpu.trace_start"() <{level = 10 : i32, message = "bqd,bkd->bqk"}> : () -> ()
    %cst_136 = arith.constant dense<0.000000e+00> : vector<2x8x16xf32>
    %451 = tpu.matmul %450, %68, %cst_136 {dimension_numbers = #tpu.dot_dimension_numbers<[2], [2], [1], [1], [0, 0, 0, 1, 1, 1], [0], [0]>} : vector<2x8x8xf32>, vector<2x16x8xf32>, vector<2x8x16xf32> -> vector<2x8x16xf32>
    "tpu.trace_stop"() : () -> ()
    %cst_137 = arith.constant dense<0xFF800000> : vector<2x8xf32>
    %452 = vector.multi_reduction <maximumf>, %451, %cst_137 [2] : vector<2x8x16xf32> to vector<2x8xf32>
    %453 = vector.shape_cast %452 : vector<2x8xf32> to vector<2x8x1xf32>
    %454 = vector.broadcast %453 : vector<2x8x1xf32> to vector<2x8x16xf32>
    %455 = arith.subf %451, %454 : vector<2x8x16xf32>
    %456 = math.exp %455 : vector<2x8x16xf32>
    %cst_138 = arith.constant dense<0.000000e+00> : vector<2x8xf32>
    %457 = vector.multi_reduction <add>, %456, %cst_138 [2] : vector<2x8x16xf32> to vector<2x8xf32>
    %458 = vector.shape_cast %457 : vector<2x8xf32> to vector<2x8x1xf32>
    %459 = tpu.reciprocal %458 {approx = true} : vector<2x8x1xf32> -> vector<2x8x1xf32>
    %460 = arith.mulf %458, %459 : vector<2x8x1xf32>
    %cst_139 = arith.constant 2.000000e+00 : f32
    %461 = vector.broadcast %cst_139 : f32 to vector<2x8x1xf32>
    %462 = arith.subf %461, %460 : vector<2x8x1xf32>
    %463 = arith.mulf %459, %462 : vector<2x8x1xf32>
    "tpu.trace_start"() <{level = 10 : i32, message = "bqk,bkd->bqd"}> : () -> ()
    %cst_140 = arith.constant dense<0.000000e+00> : vector<2x8x8xf32>
    %464 = tpu.matmul %456, %72, %cst_140 {dimension_numbers = #tpu.dot_dimension_numbers<[2], [1], [1], [2], [0, 0, 0, 1, 1, 2], [0], [0]>} : vector<2x8x16xf32>, vector<2x16x8xf32>, vector<2x8x8xf32> -> vector<2x8x8xf32>
    "tpu.trace_stop"() : () -> ()
    %465 = vector.broadcast %463 : vector<2x8x1xf32> to vector<2x8x8xf32>
    %466 = arith.mulf %464, %465 : vector<2x8x8xf32>
    %467 = tpu.concatenate %415, %432, %449, %466 in 2 : vector<2x8x8xf32>, vector<2x8x8xf32>, vector<2x8x8xf32>, vector<2x8x8xf32> -> vector<2x8x32xf32>
    %468 = vector.shape_cast %467 : vector<2x8x32xf32> to vector<16x32xf32>
    %cst_141 = arith.constant dense<0.000000e+00> : vector<16x32xf32>
    %469 = tpu.matmul %468, %6, %cst_141 {dimension_numbers = #tpu.dot_dimension_numbers<[1], [0], [0], [1], [0, 0, 1, 1], [], []>} : vector<16x32xf32>, vector<32x32xf32>, vector<16x32xf32> -> vector<16x32xf32>
    %470 = arith.addf %469, %23 : vector<16x32xf32>
    %471 = arith.addf %393, %470 : vector<16x32xf32>
    %cst_142 = arith.constant dense<0.000000e+00> : vector<16xf32>
    %472 = vector.multi_reduction <add>, %471, %cst_142 [1] : vector<16x32xf32> to vector<16xf32>
    %473 = vector.shape_cast %472 : vector<16xf32> to vector<16x1xf32>
    %cst_143 = arith.constant 3.200000e+01 : f32
    %474 = vector.broadcast %cst_143 : f32 to vector<16x1xf32>
    %475 = arith.divf %473, %474 : vector<16x1xf32>
    %476 = vector.broadcast %475 : vector<16x1xf32> to vector<16x32xf32>
    %477 = arith.subf %471, %476 : vector<16x32xf32>
    %478 = arith.mulf %477, %477 : vector<16x32xf32>
    %cst_144 = arith.constant dense<0.000000e+00> : vector<16xf32>
    %479 = vector.multi_reduction <add>, %478, %cst_144 [1] : vector<16x32xf32> to vector<16xf32>
    %480 = vector.shape_cast %479 : vector<16xf32> to vector<16x1xf32>
    %cst_145 = arith.constant 3.200000e+01 : f32
    %481 = vector.broadcast %cst_145 : f32 to vector<16x1xf32>
    %482 = arith.divf %480, %481 : vector<16x1xf32>
    %483 = vector.broadcast %475 : vector<16x1xf32> to vector<16x32xf32>
    %484 = arith.subf %471, %483 : vector<16x32xf32>
    %cst_146 = arith.constant 9.99999974E-6 : f32
    %485 = vector.broadcast %cst_146 : f32 to vector<16x1xf32>
    %486 = arith.addf %482, %485 : vector<16x1xf32>
    %487 = math.rsqrt %486 : vector<16x1xf32>
    %488 = vector.broadcast %487 : vector<16x1xf32> to vector<16x32xf32>
    %489 = arith.mulf %484, %488 : vector<16x32xf32>
    %490 = arith.mulf %489, %38 : vector<16x32xf32>
    %491 = arith.addf %490, %41 : vector<16x32xf32>
    %cst_147 = arith.constant dense<0.000000e+00> : vector<16x64xf32>
    %492 = tpu.matmul %491, %7, %cst_147 {dimension_numbers = #tpu.dot_dimension_numbers<[1], [0], [0], [1], [0, 0, 1, 1], [], []>} : vector<16x32xf32>, vector<32x64xf32>, vector<16x64xf32> -> vector<16x64xf32>
    %493 = arith.addf %492, %26 : vector<16x64xf32>
    %cst_148 = arith.constant 0.000000e+00 : f32
    %494 = vector.broadcast %cst_148 : f32 to vector<16x64xf32>
    %495 = arith.maximumf %493, %494 : vector<16x64xf32>
    %cst_149 = arith.constant dense<0.000000e+00> : vector<16x32xf32>
    %496 = tpu.matmul %495, %8, %cst_149 {dimension_numbers = #tpu.dot_dimension_numbers<[1], [0], [0], [1], [0, 0, 1, 1], [], []>} : vector<16x64xf32>, vector<64x32xf32>, vector<16x32xf32> -> vector<16x32xf32>
    %497 = arith.addf %496, %29 : vector<16x32xf32>
    %498 = arith.addf %491, %497 : vector<16x32xf32>
    %cst_150 = arith.constant dense<0.000000e+00> : vector<16xf32>
    %499 = vector.multi_reduction <add>, %498, %cst_150 [1] : vector<16x32xf32> to vector<16xf32>
    %500 = vector.shape_cast %499 : vector<16xf32> to vector<16x1xf32>
    %cst_151 = arith.constant 3.200000e+01 : f32
    %501 = vector.broadcast %cst_151 : f32 to vector<16x1xf32>
    %502 = arith.divf %500, %501 : vector<16x1xf32>
    %503 = vector.broadcast %502 : vector<16x1xf32> to vector<16x32xf32>
    %504 = arith.subf %498, %503 : vector<16x32xf32>
    %505 = arith.mulf %504, %504 : vector<16x32xf32>
    %cst_152 = arith.constant dense<0.000000e+00> : vector<16xf32>
    %506 = vector.multi_reduction <add>, %505, %cst_152 [1] : vector<16x32xf32> to vector<16xf32>
    %507 = vector.shape_cast %506 : vector<16xf32> to vector<16x1xf32>
    %cst_153 = arith.constant 3.200000e+01 : f32
    %508 = vector.broadcast %cst_153 : f32 to vector<16x1xf32>
    %509 = arith.divf %507, %508 : vector<16x1xf32>
    %510 = vector.broadcast %502 : vector<16x1xf32> to vector<16x32xf32>
    %511 = arith.subf %498, %510 : vector<16x32xf32>
    %cst_154 = arith.constant 9.99999974E-6 : f32
    %512 = vector.broadcast %cst_154 : f32 to vector<16x1xf32>
    %513 = arith.addf %509, %512 : vector<16x1xf32>
    %514 = math.rsqrt %513 : vector<16x1xf32>
    %515 = vector.broadcast %514 : vector<16x1xf32> to vector<16x32xf32>
    %516 = arith.mulf %511, %515 : vector<16x32xf32>
    %517 = arith.mulf %516, %44 : vector<16x32xf32>
    %518 = arith.addf %517, %47 : vector<16x32xf32>
    %cst_155 = arith.constant dense<0.000000e+00> : vector<16x32xf32>
    %519 = tpu.matmul %518, %3, %cst_155 {dimension_numbers = #tpu.dot_dimension_numbers<[1], [0], [0], [1], [0, 0, 1, 1], [], []>} : vector<16x32xf32>, vector<32x32xf32>, vector<16x32xf32> -> vector<16x32xf32>
    %520 = arith.addf %519, %14 : vector<16x32xf32>
    %cst_156 = arith.constant 0.353553385 : f32
    %521 = vector.broadcast %cst_156 : f32 to vector<16x32xf32>
    %522 = arith.mulf %520, %521 : vector<16x32xf32>
    %523 = vector.shape_cast %522 : vector<16x32xf32> to vector<2x8x32xf32>
    %524 = vector.extract_strided_slice %523 {offsets = [0, 0, 0], sizes = [2, 8, 8], strides = [1, 1, 1]} : vector<2x8x32xf32> to vector<2x8x8xf32>
    "tpu.trace_start"() <{level = 10 : i32, message = "bqd,bkd->bqk"}> : () -> ()
    %cst_157 = arith.constant dense<0.000000e+00> : vector<2x8x16xf32>
    %525 = tpu.matmul %524, %57, %cst_157 {dimension_numbers = #tpu.dot_dimension_numbers<[2], [2], [1], [1], [0, 0, 0, 1, 1, 1], [0], [0]>} : vector<2x8x8xf32>, vector<2x16x8xf32>, vector<2x8x16xf32> -> vector<2x8x16xf32>
    "tpu.trace_stop"() : () -> ()
    %cst_158 = arith.constant dense<0xFF800000> : vector<2x8xf32>
    %526 = vector.multi_reduction <maximumf>, %525, %cst_158 [2] : vector<2x8x16xf32> to vector<2x8xf32>
    %527 = vector.shape_cast %526 : vector<2x8xf32> to vector<2x8x1xf32>
    %528 = vector.broadcast %527 : vector<2x8x1xf32> to vector<2x8x16xf32>
    %529 = arith.subf %525, %528 : vector<2x8x16xf32>
    %530 = math.exp %529 : vector<2x8x16xf32>
    %cst_159 = arith.constant dense<0.000000e+00> : vector<2x8xf32>
    %531 = vector.multi_reduction <add>, %530, %cst_159 [2] : vector<2x8x16xf32> to vector<2x8xf32>
    %532 = vector.shape_cast %531 : vector<2x8xf32> to vector<2x8x1xf32>
    %533 = tpu.reciprocal %532 {approx = true} : vector<2x8x1xf32> -> vector<2x8x1xf32>
    %534 = arith.mulf %532, %533 : vector<2x8x1xf32>
    %cst_160 = arith.constant 2.000000e+00 : f32
    %535 = vector.broadcast %cst_160 : f32 to vector<2x8x1xf32>
    %536 = arith.subf %535, %534 : vector<2x8x1xf32>
    %537 = arith.mulf %533, %536 : vector<2x8x1xf32>
    "tpu.trace_start"() <{level = 10 : i32, message = "bqk,bkd->bqd"}> : () -> ()
    %cst_161 = arith.constant dense<0.000000e+00> : vector<2x8x8xf32>
    %538 = tpu.matmul %530, %61, %cst_161 {dimension_numbers = #tpu.dot_dimension_numbers<[2], [1], [1], [2], [0, 0, 0, 1, 1, 2], [0], [0]>} : vector<2x8x16xf32>, vector<2x16x8xf32>, vector<2x8x8xf32> -> vector<2x8x8xf32>
    "tpu.trace_stop"() : () -> ()
    %539 = vector.broadcast %537 : vector<2x8x1xf32> to vector<2x8x8xf32>
    %540 = arith.mulf %538, %539 : vector<2x8x8xf32>
    %541 = vector.extract_strided_slice %523 {offsets = [0, 0, 8], sizes = [2, 8, 8], strides = [1, 1, 1]} : vector<2x8x32xf32> to vector<2x8x8xf32>
    "tpu.trace_start"() <{level = 10 : i32, message = "bqd,bkd->bqk"}> : () -> ()
    %cst_162 = arith.constant dense<0.000000e+00> : vector<2x8x16xf32>
    %542 = tpu.matmul %541, %58, %cst_162 {dimension_numbers = #tpu.dot_dimension_numbers<[2], [2], [1], [1], [0, 0, 0, 1, 1, 1], [0], [0]>} : vector<2x8x8xf32>, vector<2x16x8xf32>, vector<2x8x16xf32> -> vector<2x8x16xf32>
    "tpu.trace_stop"() : () -> ()
    %cst_163 = arith.constant dense<0xFF800000> : vector<2x8xf32>
    %543 = vector.multi_reduction <maximumf>, %542, %cst_163 [2] : vector<2x8x16xf32> to vector<2x8xf32>
    %544 = vector.shape_cast %543 : vector<2x8xf32> to vector<2x8x1xf32>
    %545 = vector.broadcast %544 : vector<2x8x1xf32> to vector<2x8x16xf32>
    %546 = arith.subf %542, %545 : vector<2x8x16xf32>
    %547 = math.exp %546 : vector<2x8x16xf32>
    %cst_164 = arith.constant dense<0.000000e+00> : vector<2x8xf32>
    %548 = vector.multi_reduction <add>, %547, %cst_164 [2] : vector<2x8x16xf32> to vector<2x8xf32>
    %549 = vector.shape_cast %548 : vector<2x8xf32> to vector<2x8x1xf32>
    %550 = tpu.reciprocal %549 {approx = true} : vector<2x8x1xf32> -> vector<2x8x1xf32>
    %551 = arith.mulf %549, %550 : vector<2x8x1xf32>
    %cst_165 = arith.constant 2.000000e+00 : f32
    %552 = vector.broadcast %cst_165 : f32 to vector<2x8x1xf32>
    %553 = arith.subf %552, %551 : vector<2x8x1xf32>
    %554 = arith.mulf %550, %553 : vector<2x8x1xf32>
    "tpu.trace_start"() <{level = 10 : i32, message = "bqk,bkd->bqd"}> : () -> ()
    %cst_166 = arith.constant dense<0.000000e+00> : vector<2x8x8xf32>
    %555 = tpu.matmul %547, %62, %cst_166 {dimension_numbers = #tpu.dot_dimension_numbers<[2], [1], [1], [2], [0, 0, 0, 1, 1, 2], [0], [0]>} : vector<2x8x16xf32>, vector<2x16x8xf32>, vector<2x8x8xf32> -> vector<2x8x8xf32>
    "tpu.trace_stop"() : () -> ()
    %556 = vector.broadcast %554 : vector<2x8x1xf32> to vector<2x8x8xf32>
    %557 = arith.mulf %555, %556 : vector<2x8x8xf32>
    %558 = vector.extract_strided_slice %523 {offsets = [0, 0, 16], sizes = [2, 8, 8], strides = [1, 1, 1]} : vector<2x8x32xf32> to vector<2x8x8xf32>
    "tpu.trace_start"() <{level = 10 : i32, message = "bqd,bkd->bqk"}> : () -> ()
    %cst_167 = arith.constant dense<0.000000e+00> : vector<2x8x16xf32>
    %559 = tpu.matmul %558, %59, %cst_167 {dimension_numbers = #tpu.dot_dimension_numbers<[2], [2], [1], [1], [0, 0, 0, 1, 1, 1], [0], [0]>} : vector<2x8x8xf32>, vector<2x16x8xf32>, vector<2x8x16xf32> -> vector<2x8x16xf32>
    "tpu.trace_stop"() : () -> ()
    %cst_168 = arith.constant dense<0xFF800000> : vector<2x8xf32>
    %560 = vector.multi_reduction <maximumf>, %559, %cst_168 [2] : vector<2x8x16xf32> to vector<2x8xf32>
    %561 = vector.shape_cast %560 : vector<2x8xf32> to vector<2x8x1xf32>
    %562 = vector.broadcast %561 : vector<2x8x1xf32> to vector<2x8x16xf32>
    %563 = arith.subf %559, %562 : vector<2x8x16xf32>
    %564 = math.exp %563 : vector<2x8x16xf32>
    %cst_169 = arith.constant dense<0.000000e+00> : vector<2x8xf32>
    %565 = vector.multi_reduction <add>, %564, %cst_169 [2] : vector<2x8x16xf32> to vector<2x8xf32>
    %566 = vector.shape_cast %565 : vector<2x8xf32> to vector<2x8x1xf32>
    %567 = tpu.reciprocal %566 {approx = true} : vector<2x8x1xf32> -> vector<2x8x1xf32>
    %568 = arith.mulf %566, %567 : vector<2x8x1xf32>
    %cst_170 = arith.constant 2.000000e+00 : f32
    %569 = vector.broadcast %cst_170 : f32 to vector<2x8x1xf32>
    %570 = arith.subf %569, %568 : vector<2x8x1xf32>
    %571 = arith.mulf %567, %570 : vector<2x8x1xf32>
    "tpu.trace_start"() <{level = 10 : i32, message = "bqk,bkd->bqd"}> : () -> ()
    %cst_171 = arith.constant dense<0.000000e+00> : vector<2x8x8xf32>
    %572 = tpu.matmul %564, %63, %cst_171 {dimension_numbers = #tpu.dot_dimension_numbers<[2], [1], [1], [2], [0, 0, 0, 1, 1, 2], [0], [0]>} : vector<2x8x16xf32>, vector<2x16x8xf32>, vector<2x8x8xf32> -> vector<2x8x8xf32>
    "tpu.trace_stop"() : () -> ()
    %573 = vector.broadcast %571 : vector<2x8x1xf32> to vector<2x8x8xf32>
    %574 = arith.mulf %572, %573 : vector<2x8x8xf32>
    %575 = vector.extract_strided_slice %523 {offsets = [0, 0, 24], sizes = [2, 8, 8], strides = [1, 1, 1]} : vector<2x8x32xf32> to vector<2x8x8xf32>
    "tpu.trace_start"() <{level = 10 : i32, message = "bqd,bkd->bqk"}> : () -> ()
    %cst_172 = arith.constant dense<0.000000e+00> : vector<2x8x16xf32>
    %576 = tpu.matmul %575, %60, %cst_172 {dimension_numbers = #tpu.dot_dimension_numbers<[2], [2], [1], [1], [0, 0, 0, 1, 1, 1], [0], [0]>} : vector<2x8x8xf32>, vector<2x16x8xf32>, vector<2x8x16xf32> -> vector<2x8x16xf32>
    "tpu.trace_stop"() : () -> ()
    %cst_173 = arith.constant dense<0xFF800000> : vector<2x8xf32>
    %577 = vector.multi_reduction <maximumf>, %576, %cst_173 [2] : vector<2x8x16xf32> to vector<2x8xf32>
    %578 = vector.shape_cast %577 : vector<2x8xf32> to vector<2x8x1xf32>
    %579 = vector.broadcast %578 : vector<2x8x1xf32> to vector<2x8x16xf32>
    %580 = arith.subf %576, %579 : vector<2x8x16xf32>
    %581 = math.exp %580 : vector<2x8x16xf32>
    %cst_174 = arith.constant dense<0.000000e+00> : vector<2x8xf32>
    %582 = vector.multi_reduction <add>, %581, %cst_174 [2] : vector<2x8x16xf32> to vector<2x8xf32>
    %583 = vector.shape_cast %582 : vector<2x8xf32> to vector<2x8x1xf32>
    %584 = tpu.reciprocal %583 {approx = true} : vector<2x8x1xf32> -> vector<2x8x1xf32>
    %585 = arith.mulf %583, %584 : vector<2x8x1xf32>
    %cst_175 = arith.constant 2.000000e+00 : f32
    %586 = vector.broadcast %cst_175 : f32 to vector<2x8x1xf32>
    %587 = arith.subf %586, %585 : vector<2x8x1xf32>
    %588 = arith.mulf %584, %587 : vector<2x8x1xf32>
    "tpu.trace_start"() <{level = 10 : i32, message = "bqk,bkd->bqd"}> : () -> ()
    %cst_176 = arith.constant dense<0.000000e+00> : vector<2x8x8xf32>
    %589 = tpu.matmul %581, %64, %cst_176 {dimension_numbers = #tpu.dot_dimension_numbers<[2], [1], [1], [2], [0, 0, 0, 1, 1, 2], [0], [0]>} : vector<2x8x16xf32>, vector<2x16x8xf32>, vector<2x8x8xf32> -> vector<2x8x8xf32>
    "tpu.trace_stop"() : () -> ()
    %590 = vector.broadcast %588 : vector<2x8x1xf32> to vector<2x8x8xf32>
    %591 = arith.mulf %589, %590 : vector<2x8x8xf32>
    %592 = tpu.concatenate %540, %557, %574, %591 in 2 : vector<2x8x8xf32>, vector<2x8x8xf32>, vector<2x8x8xf32>, vector<2x8x8xf32> -> vector<2x8x32xf32>
    %593 = vector.shape_cast %592 : vector<2x8x32xf32> to vector<16x32xf32>
    %cst_177 = arith.constant dense<0.000000e+00> : vector<16x32xf32>
    %594 = tpu.matmul %593, %5, %cst_177 {dimension_numbers = #tpu.dot_dimension_numbers<[1], [0], [0], [1], [0, 0, 1, 1], [], []>} : vector<16x32xf32>, vector<32x32xf32>, vector<16x32xf32> -> vector<16x32xf32>
    %595 = arith.addf %594, %20 : vector<16x32xf32>
    %596 = arith.addf %518, %595 : vector<16x32xf32>
    %cst_178 = arith.constant dense<0.000000e+00> : vector<16xf32>
    %597 = vector.multi_reduction <add>, %596, %cst_178 [1] : vector<16x32xf32> to vector<16xf32>
    %598 = vector.shape_cast %597 : vector<16xf32> to vector<16x1xf32>
    %cst_179 = arith.constant 3.200000e+01 : f32
    %599 = vector.broadcast %cst_179 : f32 to vector<16x1xf32>
    %600 = arith.divf %598, %599 : vector<16x1xf32>
    %601 = vector.broadcast %600 : vector<16x1xf32> to vector<16x32xf32>
    %602 = arith.subf %596, %601 : vector<16x32xf32>
    %603 = arith.mulf %602, %602 : vector<16x32xf32>
    %cst_180 = arith.constant dense<0.000000e+00> : vector<16xf32>
    %604 = vector.multi_reduction <add>, %603, %cst_180 [1] : vector<16x32xf32> to vector<16xf32>
    %605 = vector.shape_cast %604 : vector<16xf32> to vector<16x1xf32>
    %cst_181 = arith.constant 3.200000e+01 : f32
    %606 = vector.broadcast %cst_181 : f32 to vector<16x1xf32>
    %607 = arith.divf %605, %606 : vector<16x1xf32>
    %608 = vector.broadcast %600 : vector<16x1xf32> to vector<16x32xf32>
    %609 = arith.subf %596, %608 : vector<16x32xf32>
    %cst_182 = arith.constant 9.99999974E-6 : f32
    %610 = vector.broadcast %cst_182 : f32 to vector<16x1xf32>
    %611 = arith.addf %607, %610 : vector<16x1xf32>
    %612 = math.rsqrt %611 : vector<16x1xf32>
    %613 = vector.broadcast %612 : vector<16x1xf32> to vector<16x32xf32>
    %614 = arith.mulf %609, %613 : vector<16x32xf32>
    %615 = arith.mulf %614, %32 : vector<16x32xf32>
    %616 = arith.addf %615, %35 : vector<16x32xf32>
    %cst_183 = arith.constant dense<0.000000e+00> : vector<16x32xf32>
    %617 = tpu.matmul %616, %4, %cst_183 {dimension_numbers = #tpu.dot_dimension_numbers<[1], [0], [0], [1], [0, 0, 1, 1], [], []>} : vector<16x32xf32>, vector<32x32xf32>, vector<16x32xf32> -> vector<16x32xf32>
    %618 = arith.addf %617, %17 : vector<16x32xf32>
    %cst_184 = arith.constant 0.353553385 : f32
    %619 = vector.broadcast %cst_184 : f32 to vector<16x32xf32>
    %620 = arith.mulf %618, %619 : vector<16x32xf32>
    %621 = vector.shape_cast %620 : vector<16x32xf32> to vector<2x8x32xf32>
    %622 = vector.extract_strided_slice %621 {offsets = [0, 0, 0], sizes = [2, 8, 8], strides = [1, 1, 1]} : vector<2x8x32xf32> to vector<2x8x8xf32>
    "tpu.trace_start"() <{level = 10 : i32, message = "bqd,bkd->bqk"}> : () -> ()
    %cst_185 = arith.constant dense<0.000000e+00> : vector<2x8x16xf32>
    %623 = tpu.matmul %622, %65, %cst_185 {dimension_numbers = #tpu.dot_dimension_numbers<[2], [2], [1], [1], [0, 0, 0, 1, 1, 1], [0], [0]>} : vector<2x8x8xf32>, vector<2x16x8xf32>, vector<2x8x16xf32> -> vector<2x8x16xf32>
    "tpu.trace_stop"() : () -> ()
    %cst_186 = arith.constant dense<0xFF800000> : vector<2x8xf32>
    %624 = vector.multi_reduction <maximumf>, %623, %cst_186 [2] : vector<2x8x16xf32> to vector<2x8xf32>
    %625 = vector.shape_cast %624 : vector<2x8xf32> to vector<2x8x1xf32>
    %626 = vector.broadcast %625 : vector<2x8x1xf32> to vector<2x8x16xf32>
    %627 = arith.subf %623, %626 : vector<2x8x16xf32>
    %628 = math.exp %627 : vector<2x8x16xf32>
    %cst_187 = arith.constant dense<0.000000e+00> : vector<2x8xf32>
    %629 = vector.multi_reduction <add>, %628, %cst_187 [2] : vector<2x8x16xf32> to vector<2x8xf32>
    %630 = vector.shape_cast %629 : vector<2x8xf32> to vector<2x8x1xf32>
    %631 = tpu.reciprocal %630 {approx = true} : vector<2x8x1xf32> -> vector<2x8x1xf32>
    %632 = arith.mulf %630, %631 : vector<2x8x1xf32>
    %cst_188 = arith.constant 2.000000e+00 : f32
    %633 = vector.broadcast %cst_188 : f32 to vector<2x8x1xf32>
    %634 = arith.subf %633, %632 : vector<2x8x1xf32>
    %635 = arith.mulf %631, %634 : vector<2x8x1xf32>
    "tpu.trace_start"() <{level = 10 : i32, message = "bqk,bkd->bqd"}> : () -> ()
    %cst_189 = arith.constant dense<0.000000e+00> : vector<2x8x8xf32>
    %636 = tpu.matmul %628, %69, %cst_189 {dimension_numbers = #tpu.dot_dimension_numbers<[2], [1], [1], [2], [0, 0, 0, 1, 1, 2], [0], [0]>} : vector<2x8x16xf32>, vector<2x16x8xf32>, vector<2x8x8xf32> -> vector<2x8x8xf32>
    "tpu.trace_stop"() : () -> ()
    %637 = vector.broadcast %635 : vector<2x8x1xf32> to vector<2x8x8xf32>
    %638 = arith.mulf %636, %637 : vector<2x8x8xf32>
    %639 = vector.extract_strided_slice %621 {offsets = [0, 0, 8], sizes = [2, 8, 8], strides = [1, 1, 1]} : vector<2x8x32xf32> to vector<2x8x8xf32>
    "tpu.trace_start"() <{level = 10 : i32, message = "bqd,bkd->bqk"}> : () -> ()
    %cst_190 = arith.constant dense<0.000000e+00> : vector<2x8x16xf32>
    %640 = tpu.matmul %639, %66, %cst_190 {dimension_numbers = #tpu.dot_dimension_numbers<[2], [2], [1], [1], [0, 0, 0, 1, 1, 1], [0], [0]>} : vector<2x8x8xf32>, vector<2x16x8xf32>, vector<2x8x16xf32> -> vector<2x8x16xf32>
    "tpu.trace_stop"() : () -> ()
    %cst_191 = arith.constant dense<0xFF800000> : vector<2x8xf32>
    %641 = vector.multi_reduction <maximumf>, %640, %cst_191 [2] : vector<2x8x16xf32> to vector<2x8xf32>
    %642 = vector.shape_cast %641 : vector<2x8xf32> to vector<2x8x1xf32>
    %643 = vector.broadcast %642 : vector<2x8x1xf32> to vector<2x8x16xf32>
    %644 = arith.subf %640, %643 : vector<2x8x16xf32>
    %645 = math.exp %644 : vector<2x8x16xf32>
    %cst_192 = arith.constant dense<0.000000e+00> : vector<2x8xf32>
    %646 = vector.multi_reduction <add>, %645, %cst_192 [2] : vector<2x8x16xf32> to vector<2x8xf32>
    %647 = vector.shape_cast %646 : vector<2x8xf32> to vector<2x8x1xf32>
    %648 = tpu.reciprocal %647 {approx = true} : vector<2x8x1xf32> -> vector<2x8x1xf32>
    %649 = arith.mulf %647, %648 : vector<2x8x1xf32>
    %cst_193 = arith.constant 2.000000e+00 : f32
    %650 = vector.broadcast %cst_193 : f32 to vector<2x8x1xf32>
    %651 = arith.subf %650, %649 : vector<2x8x1xf32>
    %652 = arith.mulf %648, %651 : vector<2x8x1xf32>
    "tpu.trace_start"() <{level = 10 : i32, message = "bqk,bkd->bqd"}> : () -> ()
    %cst_194 = arith.constant dense<0.000000e+00> : vector<2x8x8xf32>
    %653 = tpu.matmul %645, %70, %cst_194 {dimension_numbers = #tpu.dot_dimension_numbers<[2], [1], [1], [2], [0, 0, 0, 1, 1, 2], [0], [0]>} : vector<2x8x16xf32>, vector<2x16x8xf32>, vector<2x8x8xf32> -> vector<2x8x8xf32>
    "tpu.trace_stop"() : () -> ()
    %654 = vector.broadcast %652 : vector<2x8x1xf32> to vector<2x8x8xf32>
    %655 = arith.mulf %653, %654 : vector<2x8x8xf32>
    %656 = vector.extract_strided_slice %621 {offsets = [0, 0, 16], sizes = [2, 8, 8], strides = [1, 1, 1]} : vector<2x8x32xf32> to vector<2x8x8xf32>
    "tpu.trace_start"() <{level = 10 : i32, message = "bqd,bkd->bqk"}> : () -> ()
    %cst_195 = arith.constant dense<0.000000e+00> : vector<2x8x16xf32>
    %657 = tpu.matmul %656, %67, %cst_195 {dimension_numbers = #tpu.dot_dimension_numbers<[2], [2], [1], [1], [0, 0, 0, 1, 1, 1], [0], [0]>} : vector<2x8x8xf32>, vector<2x16x8xf32>, vector<2x8x16xf32> -> vector<2x8x16xf32>
    "tpu.trace_stop"() : () -> ()
    %cst_196 = arith.constant dense<0xFF800000> : vector<2x8xf32>
    %658 = vector.multi_reduction <maximumf>, %657, %cst_196 [2] : vector<2x8x16xf32> to vector<2x8xf32>
    %659 = vector.shape_cast %658 : vector<2x8xf32> to vector<2x8x1xf32>
    %660 = vector.broadcast %659 : vector<2x8x1xf32> to vector<2x8x16xf32>
    %661 = arith.subf %657, %660 : vector<2x8x16xf32>
    %662 = math.exp %661 : vector<2x8x16xf32>
    %cst_197 = arith.constant dense<0.000000e+00> : vector<2x8xf32>
    %663 = vector.multi_reduction <add>, %662, %cst_197 [2] : vector<2x8x16xf32> to vector<2x8xf32>
    %664 = vector.shape_cast %663 : vector<2x8xf32> to vector<2x8x1xf32>
    %665 = tpu.reciprocal %664 {approx = true} : vector<2x8x1xf32> -> vector<2x8x1xf32>
    %666 = arith.mulf %664, %665 : vector<2x8x1xf32>
    %cst_198 = arith.constant 2.000000e+00 : f32
    %667 = vector.broadcast %cst_198 : f32 to vector<2x8x1xf32>
    %668 = arith.subf %667, %666 : vector<2x8x1xf32>
    %669 = arith.mulf %665, %668 : vector<2x8x1xf32>
    "tpu.trace_start"() <{level = 10 : i32, message = "bqk,bkd->bqd"}> : () -> ()
    %cst_199 = arith.constant dense<0.000000e+00> : vector<2x8x8xf32>
    %670 = tpu.matmul %662, %71, %cst_199 {dimension_numbers = #tpu.dot_dimension_numbers<[2], [1], [1], [2], [0, 0, 0, 1, 1, 2], [0], [0]>} : vector<2x8x16xf32>, vector<2x16x8xf32>, vector<2x8x8xf32> -> vector<2x8x8xf32>
    "tpu.trace_stop"() : () -> ()
    %671 = vector.broadcast %669 : vector<2x8x1xf32> to vector<2x8x8xf32>
    %672 = arith.mulf %670, %671 : vector<2x8x8xf32>
    %673 = vector.extract_strided_slice %621 {offsets = [0, 0, 24], sizes = [2, 8, 8], strides = [1, 1, 1]} : vector<2x8x32xf32> to vector<2x8x8xf32>
    "tpu.trace_start"() <{level = 10 : i32, message = "bqd,bkd->bqk"}> : () -> ()
    %cst_200 = arith.constant dense<0.000000e+00> : vector<2x8x16xf32>
    %674 = tpu.matmul %673, %68, %cst_200 {dimension_numbers = #tpu.dot_dimension_numbers<[2], [2], [1], [1], [0, 0, 0, 1, 1, 1], [0], [0]>} : vector<2x8x8xf32>, vector<2x16x8xf32>, vector<2x8x16xf32> -> vector<2x8x16xf32>
    "tpu.trace_stop"() : () -> ()
    %cst_201 = arith.constant dense<0xFF800000> : vector<2x8xf32>
    %675 = vector.multi_reduction <maximumf>, %674, %cst_201 [2] : vector<2x8x16xf32> to vector<2x8xf32>
    %676 = vector.shape_cast %675 : vector<2x8xf32> to vector<2x8x1xf32>
    %677 = vector.broadcast %676 : vector<2x8x1xf32> to vector<2x8x16xf32>
    %678 = arith.subf %674, %677 : vector<2x8x16xf32>
    %679 = math.exp %678 : vector<2x8x16xf32>
    %cst_202 = arith.constant dense<0.000000e+00> : vector<2x8xf32>
    %680 = vector.multi_reduction <add>, %679, %cst_202 [2] : vector<2x8x16xf32> to vector<2x8xf32>
    %681 = vector.shape_cast %680 : vector<2x8xf32> to vector<2x8x1xf32>
    %682 = tpu.reciprocal %681 {approx = true} : vector<2x8x1xf32> -> vector<2x8x1xf32>
    %683 = arith.mulf %681, %682 : vector<2x8x1xf32>
    %cst_203 = arith.constant 2.000000e+00 : f32
    %684 = vector.broadcast %cst_203 : f32 to vector<2x8x1xf32>
    %685 = arith.subf %684, %683 : vector<2x8x1xf32>
    %686 = arith.mulf %682, %685 : vector<2x8x1xf32>
    "tpu.trace_start"() <{level = 10 : i32, message = "bqk,bkd->bqd"}> : () -> ()
    %cst_204 = arith.constant dense<0.000000e+00> : vector<2x8x8xf32>
    %687 = tpu.matmul %679, %72, %cst_204 {dimension_numbers = #tpu.dot_dimension_numbers<[2], [1], [1], [2], [0, 0, 0, 1, 1, 2], [0], [0]>} : vector<2x8x16xf32>, vector<2x16x8xf32>, vector<2x8x8xf32> -> vector<2x8x8xf32>
    "tpu.trace_stop"() : () -> ()
    %688 = vector.broadcast %686 : vector<2x8x1xf32> to vector<2x8x8xf32>
    %689 = arith.mulf %687, %688 : vector<2x8x8xf32>
    %690 = tpu.concatenate %638, %655, %672, %689 in 2 : vector<2x8x8xf32>, vector<2x8x8xf32>, vector<2x8x8xf32>, vector<2x8x8xf32> -> vector<2x8x32xf32>
    %691 = vector.shape_cast %690 : vector<2x8x32xf32> to vector<16x32xf32>
    %cst_205 = arith.constant dense<0.000000e+00> : vector<16x32xf32>
    %692 = tpu.matmul %691, %6, %cst_205 {dimension_numbers = #tpu.dot_dimension_numbers<[1], [0], [0], [1], [0, 0, 1, 1], [], []>} : vector<16x32xf32>, vector<32x32xf32>, vector<16x32xf32> -> vector<16x32xf32>
    %693 = arith.addf %692, %23 : vector<16x32xf32>
    %694 = arith.addf %616, %693 : vector<16x32xf32>
    %cst_206 = arith.constant dense<0.000000e+00> : vector<16xf32>
    %695 = vector.multi_reduction <add>, %694, %cst_206 [1] : vector<16x32xf32> to vector<16xf32>
    %696 = vector.shape_cast %695 : vector<16xf32> to vector<16x1xf32>
    %cst_207 = arith.constant 3.200000e+01 : f32
    %697 = vector.broadcast %cst_207 : f32 to vector<16x1xf32>
    %698 = arith.divf %696, %697 : vector<16x1xf32>
    %699 = vector.broadcast %698 : vector<16x1xf32> to vector<16x32xf32>
    %700 = arith.subf %694, %699 : vector<16x32xf32>
    %701 = arith.mulf %700, %700 : vector<16x32xf32>
    %cst_208 = arith.constant dense<0.000000e+00> : vector<16xf32>
    %702 = vector.multi_reduction <add>, %701, %cst_208 [1] : vector<16x32xf32> to vector<16xf32>
    %703 = vector.shape_cast %702 : vector<16xf32> to vector<16x1xf32>
    %cst_209 = arith.constant 3.200000e+01 : f32
    %704 = vector.broadcast %cst_209 : f32 to vector<16x1xf32>
    %705 = arith.divf %703, %704 : vector<16x1xf32>
    %706 = vector.broadcast %698 : vector<16x1xf32> to vector<16x32xf32>
    %707 = arith.subf %694, %706 : vector<16x32xf32>
    %cst_210 = arith.constant 9.99999974E-6 : f32
    %708 = vector.broadcast %cst_210 : f32 to vector<16x1xf32>
    %709 = arith.addf %705, %708 : vector<16x1xf32>
    %710 = math.rsqrt %709 : vector<16x1xf32>
    %711 = vector.broadcast %710 : vector<16x1xf32> to vector<16x32xf32>
    %712 = arith.mulf %707, %711 : vector<16x32xf32>
    %713 = arith.mulf %712, %38 : vector<16x32xf32>
    %714 = arith.addf %713, %41 : vector<16x32xf32>
    %cst_211 = arith.constant dense<0.000000e+00> : vector<16x64xf32>
    %715 = tpu.matmul %714, %7, %cst_211 {dimension_numbers = #tpu.dot_dimension_numbers<[1], [0], [0], [1], [0, 0, 1, 1], [], []>} : vector<16x32xf32>, vector<32x64xf32>, vector<16x64xf32> -> vector<16x64xf32>
    %716 = arith.addf %715, %26 : vector<16x64xf32>
    %cst_212 = arith.constant 0.000000e+00 : f32
    %717 = vector.broadcast %cst_212 : f32 to vector<16x64xf32>
    %718 = arith.maximumf %716, %717 : vector<16x64xf32>
    %cst_213 = arith.constant dense<0.000000e+00> : vector<16x32xf32>
    %719 = tpu.matmul %718, %8, %cst_213 {dimension_numbers = #tpu.dot_dimension_numbers<[1], [0], [0], [1], [0, 0, 1, 1], [], []>} : vector<16x64xf32>, vector<64x32xf32>, vector<16x32xf32> -> vector<16x32xf32>
    %720 = arith.addf %719, %29 : vector<16x32xf32>
    %721 = arith.addf %714, %720 : vector<16x32xf32>
    %cst_214 = arith.constant dense<0.000000e+00> : vector<16xf32>
    %722 = vector.multi_reduction <add>, %721, %cst_214 [1] : vector<16x32xf32> to vector<16xf32>
    %723 = vector.shape_cast %722 : vector<16xf32> to vector<16x1xf32>
    %cst_215 = arith.constant 3.200000e+01 : f32
    %724 = vector.broadcast %cst_215 : f32 to vector<16x1xf32>
    %725 = arith.divf %723, %724 : vector<16x1xf32>
    %726 = vector.broadcast %725 : vector<16x1xf32> to vector<16x32xf32>
    %727 = arith.subf %721, %726 : vector<16x32xf32>
    %728 = arith.mulf %727, %727 : vector<16x32xf32>
    %cst_216 = arith.constant dense<0.000000e+00> : vector<16xf32>
    %729 = vector.multi_reduction <add>, %728, %cst_216 [1] : vector<16x32xf32> to vector<16xf32>
    %730 = vector.shape_cast %729 : vector<16xf32> to vector<16x1xf32>
    %cst_217 = arith.constant 3.200000e+01 : f32
    %731 = vector.broadcast %cst_217 : f32 to vector<16x1xf32>
    %732 = arith.divf %730, %731 : vector<16x1xf32>
    %733 = vector.broadcast %725 : vector<16x1xf32> to vector<16x32xf32>
    %734 = arith.subf %721, %733 : vector<16x32xf32>
    %cst_218 = arith.constant 9.99999974E-6 : f32
    %735 = vector.broadcast %cst_218 : f32 to vector<16x1xf32>
    %736 = arith.addf %732, %735 : vector<16x1xf32>
    %737 = math.rsqrt %736 : vector<16x1xf32>
    %738 = vector.broadcast %737 : vector<16x1xf32> to vector<16x32xf32>
    %739 = arith.mulf %734, %738 : vector<16x32xf32>
    %740 = arith.mulf %739, %44 : vector<16x32xf32>
    %741 = arith.addf %740, %47 : vector<16x32xf32>
    %cst_219 = arith.constant dense<0.000000e+00> : vector<16xf32>
    %742 = vector.multi_reduction <add>, %741, %cst_219 [1] : vector<16x32xf32> to vector<16xf32>
    %743 = vector.shape_cast %742 : vector<16xf32> to vector<16x1xf32>
    %cst_220 = arith.constant 3.200000e+01 : f32
    %744 = vector.broadcast %cst_220 : f32 to vector<16x1xf32>
    %745 = arith.divf %743, %744 : vector<16x1xf32>
    %746 = vector.broadcast %745 : vector<16x1xf32> to vector<16x32xf32>
    %747 = arith.subf %741, %746 : vector<16x32xf32>
    %748 = arith.mulf %747, %747 : vector<16x32xf32>
    %cst_221 = arith.constant dense<0.000000e+00> : vector<16xf32>
    %749 = vector.multi_reduction <add>, %748, %cst_221 [1] : vector<16x32xf32> to vector<16xf32>
    %750 = vector.shape_cast %749 : vector<16xf32> to vector<16x1xf32>
    %cst_222 = arith.constant 3.200000e+01 : f32
    %751 = vector.broadcast %cst_222 : f32 to vector<16x1xf32>
    %752 = arith.divf %750, %751 : vector<16x1xf32>
    %753 = vector.broadcast %745 : vector<16x1xf32> to vector<16x32xf32>
    %754 = arith.subf %741, %753 : vector<16x32xf32>
    %cst_223 = arith.constant 9.99999974E-6 : f32
    %755 = vector.broadcast %cst_223 : f32 to vector<16x1xf32>
    %756 = arith.addf %752, %755 : vector<16x1xf32>
    %757 = math.rsqrt %756 : vector<16x1xf32>
    %758 = vector.broadcast %757 : vector<16x1xf32> to vector<16x32xf32>
    %759 = arith.mulf %754, %758 : vector<16x32xf32>
    %760 = arith.mulf %759, %50 : vector<16x32xf32>
    %761 = arith.addf %760, %53 : vector<16x32xf32>
    %c0_224 = arith.constant 0 : index
    %c0_225 = arith.constant 0 : index
    %762 = vector.load %arg4[%c0_224, %c0_225] : memref<16x32xf32, #tpu.memory_space<vmem>>, vector<16x32xf32>
    tpu.vector_store %arg4[%c0_224, %c0_225], %761 {strides = array<i32>} : memref<16x32xf32, #tpu.memory_space<vmem>>, vector<16x32xf32>,
    return
  }
}

</mosaic_0001>

<llo_original>
// kernel: tpu_custom_call.1
$region0: #{tpu_custom_call.1}
  #allocation0 [shape = 'u32[]', space=smem, size = 0x4, offset = 0x4, fixed_abs, tag = 'smem constant byte address 0x4 - core index']
  #allocation1 [shape = 'u32[144,128]{1,0:T(1,128)}', space=vmem, size = 0x12000, scoped, tag = 'internal scratch']
  %s0 = inlined_call_operand.hbm [shape: f32[16,32], index: 0, kind: input, shape index: {}]
  %s1 = inlined_call_operand.hbm [shape: f32[32,32], index: 1, kind: input, shape index: {}]
  %s2 = inlined_call_operand.hbm [shape: f32[256,128], index: 2, kind: input, shape index: {}]
  %s3 = inlined_call_operand.hbm [shape: f32[16,128], index: 3, kind: input, shape index: {}]
  %s4 = inlined_call_operand.hbm [shape: f32[16,32], index: 4, kind: output, shape index: {}]
  %s5 = sld [smem:[#allocation0]]
  $region42: #{tpu_custom_call.1} parent=0
    _
  %s7 = ssub.s32 1, %s5
  %s8 = scalar_select 0, %s7, %s5
  $region1: #{tpu_custom_call.1} parent=0
    #allocation2 [shape = 'u8[8192]{0}', space=vmem, size = 0x2000, scoped, tag = 'input window, operand 0, single buffered']
    #allocation3 [shape = 's32[1]{0}', space=sflag, size = 0x4, scoped, tag = 'scoped memory for tpu_custom_call.1']
    #allocation4 [shape = 's32[1]{0}', space=sflag, size = 0x4, scoped, tag = 'scoped memory for tpu_custom_call.1']
    #allocation5 [shape = 'u8[16384]{0}', space=vmem, size = 0x4000, scoped, tag = 'input window, operand 1, single buffered']
    #allocation6 [shape = 's32[1]{0}', space=sflag, size = 0x4, scoped, tag = 'scoped memory for tpu_custom_call.1']
    #allocation7 [shape = 'u8[131072]{0}', space=vmem, size = 0x20000, scoped, tag = 'input window, operand 2, single buffered']
    #allocation8 [shape = 'u8[8192]{0}', space=vmem, size = 0x2000, scoped, tag = 'input window, operand 3, single buffered']
    #allocation9 [shape = 's32[1]{0}', space=sflag, size = 0x4, scoped, tag = 'scoped memory for tpu_custom_call.1']
    #allocation10 [shape = 'u8[8192]{0}', space=vmem, size = 0x2000, scoped, tag = 'output window, operand 0, single buffered']
    %9 = vsyncpa [#allocation3], 0
    %10 = vsyncpa [#allocation6], 0
    %11 = vsyncpa [#allocation9], 0
    %12 = vsyncpa [#allocation4], 0
    // Predicated region
    $region2: #{tpu_custom_call.1} parent=1 // pred_check
      _
    $region3: #{tpu_custom_call.1} parent=1 // pred_check_branch
      %14 = sbr.rel (0) target = $region5
    $region4: #{tpu_custom_call.1} parent=1 // pred_region
      %s16 = ssub.s32 256, 256
      %17 = vsyncadd [#allocation3], %s16
      %s18 = sshll.u32 [#allocation2], 4
      %s19 = int_to_ptr.vmem [resolvable:$true] %s18
      %24 = dma.hbm_to_vmem [thread:$0]  %s0, 256, %s19, [#allocation3], 128, 128, 8
    $region5: #{tpu_custom_call.1} parent=1 // pred_fallthru
      _
    // Predicated region
    $region6: #{tpu_custom_call.1} parent=1 // pred_check
      _
    $region7: #{tpu_custom_call.1} parent=1 // pred_check_branch
      %26 = sbr.rel (0) target = $region9
    $region8: #{tpu_custom_call.1} parent=1 // pred_region
      %s28 = ssub.s32 512, 512
      %29 = vsyncadd [#allocation6], %s28
      %s30 = sshll.u32 [#allocation5], 4
      %s31 = int_to_ptr.vmem [resolvable:$true] %s30
      %36 = dma.hbm_to_vmem [thread:$0]  %s1, 512, %s31, [#allocation6], 128, 128, 8
    $region9: #{tpu_custom_call.1} parent=1 // pred_fallthru
      _
    // Predicated region
    $region10: #{tpu_custom_call.1} parent=1 // pred_check
      _
    $region11: #{tpu_custom_call.1} parent=1 // pred_check_branch
      %38 = sbr.rel (0) target = $region13
    $region12: #{tpu_custom_call.1} parent=1 // pred_region
      %s40 = ssub.s32 4096, 4096
      %41 = vsyncadd [#allocation6], %s40
      %s42 = sshll.u32 [#allocation7], 4
      %s43 = int_to_ptr.vmem [resolvable:$true] %s42
      %48 = dma.hbm_to_vmem [thread:$0]  %s2, 4096, %s43, [#allocation6], 128, 128, 8
    $region13: #{tpu_custom_call.1} parent=1 // pred_fallthru
      _
    // Predicated region
    $region14: #{tpu_custom_call.1} parent=1 // pred_check
      _
    $region15: #{tpu_custom_call.1} parent=1 // pred_check_branch
      %50 = sbr.rel (0) target = $region17
    $region16: #{tpu_custom_call.1} parent=1 // pred_region
      %s52 = ssub.s32 256, 256
      %53 = vsyncadd [#allocation9], %s52
      %s54 = sshll.u32 [#allocation8], 4
      %s55 = int_to_ptr.vmem [resolvable:$true] %s54
      %60 = dma.hbm_to_vmem [thread:$0]  %s3, 256, %s55, [#allocation9], 128, 128, 8
    $region17: #{tpu_custom_call.1} parent=1 // pred_fallthru
      _
    // Predicated region
    $region18: #{tpu_custom_call.1} parent=1 // pred_check
      _
    $region19: #{tpu_custom_call.1} parent=1 // pred_check_branch
      %62 = sbr.rel (0) target = $region21
    $region20: #{tpu_custom_call.1} parent=1 // pred_region
      %63 = dma.done [#allocation3], 256
    $region21: #{tpu_custom_call.1} parent=1 // pred_fallthru
      _
    // Predicated region
    $region22: #{tpu_custom_call.1} parent=1 // pred_check
      _
    $region23: #{tpu_custom_call.1} parent=1 // pred_check_branch
      %65 = sbr.rel (0) target = $region25
    $region24: #{tpu_custom_call.1} parent=1 // pred_region
      %66 = dma.done [#allocation6], 512
    $region25: #{tpu_custom_call.1} parent=1 // pred_fallthru
      _
    // Predicated region
    $region26: #{tpu_custom_call.1} parent=1 // pred_check
      _
    $region27: #{tpu_custom_call.1} parent=1 // pred_check_branch
      %68 = sbr.rel (0) target = $region29
    $region28: #{tpu_custom_call.1} parent=1 // pred_region
      %69 = dma.done [#allocation6], 4096
    $region29: #{tpu_custom_call.1} parent=1 // pred_fallthru
      _
    // Predicated region
    $region30: #{tpu_custom_call.1} parent=1 // pred_check
      _
    $region31: #{tpu_custom_call.1} parent=1 // pred_check_branch
      %71 = sbr.rel (0) target = $region33
    $region32: #{tpu_custom_call.1} parent=1 // pred_region
      %72 = dma.done [#allocation9], 256
    $region33: #{tpu_custom_call.1} parent=1 // pred_fallthru
      _
    %v73 = vld [vmem:[#allocation2] sm:$0xff]
    %v74 = vld [vmem:[#allocation2 + $0x8] sm:$0xff]
    %v75 = vld [vmem:[#allocation5] sm:$0xff]
    %v76 = vld [vmem:[#allocation5 + $0x8] sm:$0xff]
    %v77 = vld [vmem:[#allocation5 + $0x10] sm:$0xff]
    %v78 = vld [vmem:[#allocation5 + $0x18] sm:$0xff]
    %v79 = vld [vmem:[#allocation7] sm:$0xff]
    %v80 = vld [vmem:[#allocation7 + $0x8] sm:$0xff]
    %v81 = vld [vmem:[#allocation7 + $0x10] sm:$0xff]
    %v82 = vld [vmem:[#allocation7 + $0x18] sm:$0xff]
    %v83 = vld [vmem:[#allocation7 + $0x20] sm:$0xff]
    %v84 = vld [vmem:[#allocation7 + $0x28] sm:$0xff]
    %v85 = vld [vmem:[#allocation7 + $0x30] sm:$0xff]
    %v86 = vld [vmem:[#allocation7 + $0x38] sm:$0xff]
    %v87 = vld [vmem:[#allocation7 + $0x40] sm:$0xff]
    %v88 = vld [vmem:[#allocation7 + $0x48] sm:$0xff]
    %v89 = vld [vmem:[#allocation7 + $0x50] sm:$0xff]
    %v90 = vld [vmem:[#allocation7 + $0x58] sm:$0xff]
    %v91 = vld [vmem:[#allocation7 + $0x60] sm:$0xff]
    %v92 = vld [vmem:[#allocation7 + $0x68] sm:$0xff]
    %v93 = vld [vmem:[#allocation7 + $0x70] sm:$0xff]
    %v94 = vld [vmem:[#allocation7 + $0x78] sm:$0xff]
    %v95 = vld [vmem:[#allocation7 + $0x80] sm:$0xff]
    %v96 = vld [vmem:[#allocation7 + $0x88] sm:$0xff]
    %v97 = vld [vmem:[#allocation7 + $0x90] sm:$0xff]
    %v98 = vld [vmem:[#allocation7 + $0x98] sm:$0xff]
    %v99 = vld [vmem:[#allocation7 + $0xa0] sm:$0xff]
    %v100 = vld [vmem:[#allocation7 + $0xa8] sm:$0xff]
    %v101 = vld [vmem:[#allocation7 + $0xb0] sm:$0xff]
    %v102 = vld [vmem:[#allocation7 + $0xb8] sm:$0xff]
    %v103 = vld [vmem:[#allocation7 + $0xc0] sm:$0xff]
    %v104 = vld [vmem:[#allocation7 + $0xc8] sm:$0xff]
    %v105 = vld [vmem:[#allocation7 + $0xd0] sm:$0xff]
    %v106 = vld [vmem:[#allocation7 + $0xd8] sm:$0xff]
    %v107 = vld [vmem:[#allocation7 + $0xe0] sm:$0xff]
    %v108 = vld [vmem:[#allocation7 + $0xe8] sm:$0xff]
    %v109 = vld [vmem:[#allocation7 + $0xf0] sm:$0xff]
    %v110 = vld [vmem:[#allocation7 + $0xf8] sm:$0xff]
    %v111 = vld [vmem:[#allocation8] sm:$0x1]
    %v112 = vlaneseq
    %v113 = vshrl.u32 %v112, 7
    %v114 = vsub.s32 0, %v113
    %v115 = vrot.slane %v111, %v114
    %v116 = vld [vmem:[#allocation8 + $0x1] sm:$0x1]
    %v117 = vlaneseq
    %v118 = vshrl.u32 %v117, 7
    %v119 = vsub.s32 0, %v118
    %v120 = vrot.slane %v116, %v119
    %v121 = vld [vmem:[#allocation8 + $0x2] sm:$0x1]
    %v122 = vlaneseq
    %v123 = vshrl.u32 %v122, 7
    %v124 = vsub.s32 0, %v123
    %v125 = vrot.slane %v121, %v124
    %v126 = vld [vmem:[#allocation8 + $0x3] sm:$0x1]
    %v127 = vlaneseq
    %v128 = vshrl.u32 %v127, 7
    %v129 = vsub.s32 0, %v128
    %v130 = vrot.slane %v126, %v129
    %v131 = vld [vmem:[#allocation8 + $0x4] sm:$0x1]
    %v132 = vlaneseq
    %v133 = vshrl.u32 %v132, 7
    %v134 = vsub.s32 0, %v133
    %v135 = vrot.slane %v131, %v134
    %v136 = vld [vmem:[#allocation8 + $0x5] sm:$0x1]
    %v137 = vlaneseq
    %v138 = vshrl.u32 %v137, 7
    %v139 = vsub.s32 0, %v138
    %v140 = vrot.slane %v136, %v139
    %v141 = vld [vmem:[#allocation8 + $0x6] sm:$0x1]
    %v142 = vlaneseq
    %v143 = vshrl.u32 %v142, 7
    %v144 = vsub.s32 0, %v143
    %v145 = vrot.slane %v141, %v144
    %v146 = vld [vmem:[#allocation8 + $0x7] sm:$0x1]
    %v147 = vlaneseq
    %v148 = vshrl.u32 %v147, 7
    %v149 = vsub.s32 0, %v148
    %v150 = vrot.slane %v146, %v149
    %v151 = vld [vmem:[#allocation8 + $0x8] sm:$0x1]
    %v152 = vlaneseq
    %v153 = vshrl.u32 %v152, 7
    %v154 = vsub.s32 0, %v153
    %v155 = vrot.slane %v151, %v154
    %v156 = vld [vmem:[#allocation8 + $0x9] sm:$0x1]
    %v157 = vlaneseq
    %v158 = vshrl.u32 %v157, 7
    %v159 = vsub.s32 0, %v158
    %v160 = vrot.slane %v156, %v159
    %v161 = vld [vmem:[#allocation8 + $0xa] sm:$0x1]
    %v162 = vlaneseq
    %v163 = vshrl.u32 %v162, 7
    %v164 = vsub.s32 0, %v163
    %v165 = vrot.slane %v161, %v164
    %v166 = vld [vmem:[#allocation8 + $0xb] sm:$0x1]
    %v167 = vlaneseq
    %v168 = vshrl.u32 %v167, 7
    %v169 = vsub.s32 0, %v168
    %v170 = vrot.slane %v166, %v169
    %v171 = vld [vmem:[#allocation8 + $0xc] sm:$0x1]
    %v172 = vlaneseq
    %v173 = vshrl.u32 %v172, 7
    %v174 = vsub.s32 0, %v173
    %v175 = vrot.slane %v171, %v174
    %v176 = vld [vmem:[#allocation8 + $0xd] sm:$0x1]
    %v177 = vlaneseq
    %v178 = vshrl.u32 %v177, 7
    %v179 = vsub.s32 0, %v178
    %v180 = vrot.slane %v176, %v179
    %v181 = vld [vmem:[#allocation8 + $0xe] sm:$0x1]
    %v182 = vlaneseq
    %v183 = vshrl.u32 %v182, 7
    %v184 = vsub.s32 0, %v183
    %v185 = vrot.slane %v181, %v184
    %vm186 = vcmask 261120
    %v188 = vsel %vm186, %v75, 0
    %v191 = vsel %vm186, %v76, 0
    %v194 = vsel %vm186, %v77, 0
    %v197 = vsel %vm186, %v78, 0
    %199 = vmatprep.subr.mxu0 0.0
    %200 = vmatpush1.msra.mxu0 0.0
    %201 = vmatprep.subr.mxu0 0.0
    %202 = vmatpush1.msra.mxu0 0.0
    %203 = vmatprep.subr.mxu0 0.0
    %204 = vmatpush1.msra.mxu0 0.0
    %205 = vmatprep.subr.mxu0 0.0
    %206 = vmatpush1.msra.mxu0 0.0
    %207 = vmatprep.subr.mxu0 0.0
    %208 = vmatpush1.msra.mxu0 0.0
    %209 = vmatprep.subr.mxu0 0.0
    %210 = vmatpush1.msra.mxu0 0.0
    %211 = vmatprep.subr.mxu0 0.0
    %212 = vmatpush1.msra.mxu0 0.0
    %213 = vmatprep.subr.mxu0 0.0
    %214 = vmatpush1.msra.mxu0 0.0
    %215 = vmatprep.subr.mxu0 0.0
    %216 = vmatpush1.msra.mxu0 0.0
    %217 = vmatprep.subr.mxu0 0.0
    %218 = vmatpush1.msra.mxu0 0.0
    %219 = vmatprep.subr.mxu0 0.0
    %220 = vmatpush1.msra.mxu0 0.0
    %221 = vmatprep.subr.mxu0 0.0
    %222 = vmatpush1.msra.mxu0 0.0
    %223 = vmatprep.subr.mxu0 0.0
    %224 = vmatpush1.msra.mxu0 %v82
    %225 = vmatprep.subr.mxu0 0.0
    %226 = vmatpush1.msra.mxu0 %v81
    %227 = vmatprep.subr.mxu0 0.0
    %228 = vmatpush1.msra.mxu0 %v80
    %229 = vmatprep.subr.mxu0 0.0
    %230 = vmatpush1.msra.mxu0 %v79
    %231 = vmatprep.subr.mxu0 0.0
    %232 = vmatpush2.msra.mxu0 0.0
    %233 = vmatprep.subr.mxu0 0.0
    %234 = vmatpush2.msra.mxu0 0.0
    %235 = vmatprep.subr.mxu0 0.0
    %236 = vmatpush2.msra.mxu0 0.0
    %237 = vmatprep.subr.mxu0 0.0
    %238 = vmatpush2.msra.mxu0 0.0
    %239 = vmatprep.subr.mxu0 0.0
    %240 = vmatpush2.msra.mxu0 0.0
    %241 = vmatprep.subr.mxu0 0.0
    %242 = vmatpush2.msra.mxu0 0.0
    %243 = vmatprep.subr.mxu0 0.0
    %244 = vmatpush2.msra.mxu0 0.0
    %245 = vmatprep.subr.mxu0 0.0
    %246 = vmatpush2.msra.mxu0 0.0
    %247 = vmatprep.subr.mxu0 0.0
    %248 = vmatpush2.msra.mxu0 0.0
    %249 = vmatprep.subr.mxu0 0.0
    %250 = vmatpush2.msra.mxu0 0.0
    %251 = vmatprep.subr.mxu0 0.0
    %252 = vmatpush2.msra.mxu0 0.0
    %253 = vmatprep.subr.mxu0 0.0
    %254 = vmatpush2.msra.mxu0 0.0
    %255 = vmatprep.subr.mxu0 0.0
    %256 = vmatpush2.msra.mxu0 0.0
    %257 = vmatprep.subr.mxu0 0.0
    %258 = vmatpush2.msra.mxu0 0.0
    %259 = vmatprep.subr.mxu0 0.0
    %260 = vmatpush2.msra.mxu0 0.0
    %261 = vmatprep.subr.mxu0 0.0
    %262 = vmatpush2.msra.mxu0 0.0
    %263 = vmatprep.mubr.f32.mxu0 0.0
    %264 = vmatmul.mubr.f32.gmra.mxu0 %v188
    %v265 = vpop.f32.mrf.mxu0
    %v266 = vadd.f32 %v115, %v265
    %v267 = vpop.f32.mrf.mxu0
    %268 = vmatprep.mubr.f32.mxu0 0.0
    %269 = vmatmul.mubr.f32.gmra.mxu0 %v191
    %v270 = vpop.f32.mrf.mxu0
    %v271 = vadd.f32 %v115, %v270
    %v272 = vpop.f32.mrf.mxu0
    %273 = vmatprep.mubr.f32.mxu0 0.0
    %274 = vmatmul.mubr.f32.gmra.mxu0 %v194
    %v275 = vpop.f32.mrf.mxu0
    %v276 = vadd.f32 %v115, %v275
    %v277 = vpop.f32.mrf.mxu0
    %278 = vmatprep.mubr.f32.mxu0 0.0
    %279 = vmatmul.mubr.f32.gmra.mxu0 %v197
    %v280 = vpop.f32.mrf.mxu0
    %v281 = vadd.f32 %v115, %v280
    %v282 = vpop.f32.mrf.mxu0
    %283 = vdwg.mxu0
    %v285 = vsel %vm186, %v73, 0
    %v288 = vsel %vm186, %v74, 0
    %290 = vmatprep.subr.mxu0 0.0
    %291 = vmatpush1.msra.mxu0 0.0
    %292 = vmatprep.subr.mxu0 0.0
    %293 = vmatpush1.msra.mxu0 0.0
    %294 = vmatprep.subr.mxu0 0.0
    %295 = vmatpush1.msra.mxu0 0.0
    %296 = vmatprep.subr.mxu0 0.0
    %297 = vmatpush1.msra.mxu0 0.0
    %298 = vmatprep.subr.mxu0 0.0
    %299 = vmatpush1.msra.mxu0 0.0
    %300 = vmatprep.subr.mxu0 0.0
    %301 = vmatpush1.msra.mxu0 0.0
    %302 = vmatprep.subr.mxu0 0.0
    %303 = vmatpush1.msra.mxu0 0.0
    %304 = vmatprep.subr.mxu0 0.0
    %305 = vmatpush1.msra.mxu0 0.0
    %306 = vmatprep.subr.mxu0 0.0
    %307 = vmatpush1.msra.mxu0 0.0
    %308 = vmatprep.subr.mxu0 0.0
    %309 = vmatpush1.msra.mxu0 0.0
    %310 = vmatprep.subr.mxu0 0.0
    %311 = vmatpush1.msra.mxu0 0.0
    %312 = vmatprep.subr.mxu0 0.0
    %313 = vmatpush1.msra.mxu0 0.0
    %314 = vmatprep.subr.mxu0 0.0
    %315 = vmatpush1.msra.mxu0 %v86
    %316 = vmatprep.subr.mxu0 0.0
    %317 = vmatpush1.msra.mxu0 %v85
    %318 = vmatprep.subr.mxu0 0.0
    %319 = vmatpush1.msra.mxu0 %v84
    %320 = vmatprep.subr.mxu0 0.0
    %321 = vmatpush1.msra.mxu0 %v83
    %322 = vmatprep.subr.mxu0 0.0
    %323 = vmatpush2.msra.mxu0 0.0
    %324 = vmatprep.subr.mxu0 0.0
    %325 = vmatpush2.msra.mxu0 0.0
    %326 = vmatprep.subr.mxu0 0.0
    %327 = vmatpush2.msra.mxu0 0.0
    %328 = vmatprep.subr.mxu0 0.0
    %329 = vmatpush2.msra.mxu0 0.0
    %330 = vmatprep.subr.mxu0 0.0
    %331 = vmatpush2.msra.mxu0 0.0
    %332 = vmatprep.subr.mxu0 0.0
    %333 = vmatpush2.msra.mxu0 0.0
    %334 = vmatprep.subr.mxu0 0.0
    %335 = vmatpush2.msra.mxu0 0.0
    %336 = vmatprep.subr.mxu0 0.0
    %337 = vmatpush2.msra.mxu0 0.0
    %338 = vmatprep.subr.mxu0 0.0
    %339 = vmatpush2.msra.mxu0 0.0
    %340 = vmatprep.subr.mxu0 0.0
    %341 = vmatpush2.msra.mxu0 0.0
    %342 = vmatprep.subr.mxu0 0.0
    %343 = vmatpush2.msra.mxu0 0.0
    %344 = vmatprep.subr.mxu0 0.0
    %345 = vmatpush2.msra.mxu0 0.0
    %346 = vmatprep.subr.mxu0 0.0
    %347 = vmatpush2.msra.mxu0 0.0
    %348 = vmatprep.subr.mxu0 0.0
    %349 = vmatpush2.msra.mxu0 0.0
    %350 = vmatprep.subr.mxu0 0.0
    %351 = vmatpush2.msra.mxu0 0.0
    %352 = vmatprep.subr.mxu0 0.0
    %353 = vmatpush2.msra.mxu0 0.0
    %354 = vmatprep.mubr.f32.mxu0 0.0
    %355 = vmatmul.mubr.f32.gmra.mxu0 %v285
    %v356 = vpop.f32.mrf.mxu0
    %v357 = vadd.f32 %v120, %v356
    %v358 = vpop.f32.mrf.mxu0
    %359 = vmatprep.mubr.f32.mxu0 0.0
    %360 = vmatmul.mubr.f32.gmra.mxu0 %v288
    %v361 = vpop.f32.mrf.mxu0
    %v362 = vadd.f32 %v120, %v361
    %v363 = vpop.f32.mrf.mxu0
    %364 = vdwg.mxu0
    %v365 = vmul.f32 %v357, 0.35355338
    %v366 = vmul.f32 %v362, 0.35355338
    %vm367 = vcmask 64512
    %v369 = vsel %vm367, %v365, 0
    %v372 = vsel %vm367, %v266, 0
    %v375 = vsel %vm367, %v271, 0
    %377 = vmatprep.subr.mxu0 0.0
    %378 = vmatpush1.xpose.msra.mxu0 0.0
    %379 = vmatprep.subr.mxu0 0.0
    %380 = vmatpush1.xpose.msra.mxu0 0.0
    %381 = vmatprep.subr.mxu0 0.0
    %382 = vmatpush1.xpose.msra.mxu0 0.0
    %383 = vmatprep.subr.mxu0 0.0
    %384 = vmatpush1.xpose.msra.mxu0 0.0
    %385 = vmatprep.subr.mxu0 0.0
    %386 = vmatpush1.xpose.msra.mxu0 0.0
    %387 = vmatprep.subr.mxu0 0.0
    %388 = vmatpush1.xpose.msra.mxu0 0.0
    %389 = vmatprep.subr.mxu0 0.0
    %390 = vmatpush1.xpose.msra.mxu0 0.0
    %391 = vmatprep.subr.mxu0 0.0
    %392 = vmatpush1.xpose.msra.mxu0 0.0
    %393 = vmatprep.subr.mxu0 0.0
    %394 = vmatpush1.xpose.msra.mxu0 0.0
    %395 = vmatprep.subr.mxu0 0.0
    %396 = vmatpush1.xpose.msra.mxu0 0.0
    %397 = vmatprep.subr.mxu0 0.0
    %398 = vmatpush1.xpose.msra.mxu0 0.0
    %399 = vmatprep.subr.mxu0 0.0
    %400 = vmatpush1.xpose.msra.mxu0 0.0
    %401 = vmatprep.subr.mxu0 0.0
    %402 = vmatpush1.xpose.msra.mxu0 0.0
    %403 = vmatprep.subr.mxu0 0.0
    %404 = vmatpush1.xpose.msra.mxu0 0.0
    %405 = vmatprep.subr.mxu0 0.0
    %406 = vmatpush1.xpose.msra.mxu0 %v375
    %407 = vmatprep.subr.mxu0 0.0
    %408 = vmatpush1.xpose.msra.mxu0 %v372
    %409 = vmatprep.subr.mxu0 0.0
    %410 = vmatpush2.xpose.msra.mxu0 0.0
    %411 = vmatprep.subr.mxu0 0.0
    %412 = vmatpush2.xpose.msra.mxu0 0.0
    %413 = vmatprep.subr.mxu0 0.0
    %414 = vmatpush2.xpose.msra.mxu0 0.0
    %415 = vmatprep.subr.mxu0 0.0
    %416 = vmatpush2.xpose.msra.mxu0 0.0
    %417 = vmatprep.subr.mxu0 0.0
    %418 = vmatpush2.xpose.msra.mxu0 0.0
    %419 = vmatprep.subr.mxu0 0.0
    %420 = vmatpush2.xpose.msra.mxu0 0.0
    %421 = vmatprep.subr.mxu0 0.0
    %422 = vmatpush2.xpose.msra.mxu0 0.0
    %423 = vmatprep.subr.mxu0 0.0
    %424 = vmatpush2.xpose.msra.mxu0 0.0
    %425 = vmatprep.subr.mxu0 0.0
    %426 = vmatpush2.xpose.msra.mxu0 0.0
    %427 = vmatprep.subr.mxu0 0.0
    %428 = vmatpush2.xpose.msra.mxu0 0.0
    %429 = vmatprep.subr.mxu0 0.0
    %430 = vmatpush2.xpose.msra.mxu0 0.0
    %431 = vmatprep.subr.mxu0 0.0
    %432 = vmatpush2.xpose.msra.mxu0 0.0
    %433 = vmatprep.subr.mxu0 0.0
    %434 = vmatpush2.xpose.msra.mxu0 0.0
    %435 = vmatprep.subr.mxu0 0.0
    %436 = vmatpush2.xpose.msra.mxu0 0.0
    %437 = vmatprep.subr.mxu0 0.0
    %438 = vmatpush2.xpose.msra.mxu0 0.0
    %439 = vmatprep.subr.mxu0 0.0
    %440 = vmatpush2.xpose.msra.mxu0 0.0
    %441 = vmatprep.mubr.f32.mxu0 0.0
    %442 = vmatmul.mubr.f32.gmra.mxu0 %v369
    %v443 = vpop.f32.mrf.mxu0
    %v444 = vadd.f32 0.0, %v443
    %v445 = vpop.f32.mrf.mxu0
    %446 = vdwg.mxu0
    %v448 = vsel %vm367, %v366, 0
    %v451 = vsel %vm367, %v276, 0
    %v454 = vsel %vm367, %v281, 0
    %456 = vmatprep.subr.mxu0 0.0
    %457 = vmatpush1.xpose.msra.mxu0 0.0
    %458 = vmatprep.subr.mxu0 0.0
    %459 = vmatpush1.xpose.msra.mxu0 0.0
    %460 = vmatprep.subr.mxu0 0.0
    %461 = vmatpush1.xpose.msra.mxu0 0.0
    %462 = vmatprep.subr.mxu0 0.0
    %463 = vmatpush1.xpose.msra.mxu0 0.0
    %464 = vmatprep.subr.mxu0 0.0
    %465 = vmatpush1.xpose.msra.mxu0 0.0
    %466 = vmatprep.subr.mxu0 0.0
    %467 = vmatpush1.xpose.msra.mxu0 0.0
    %468 = vmatprep.subr.mxu0 0.0
    %469 = vmatpush1.xpose.msra.mxu0 0.0
    %470 = vmatprep.subr.mxu0 0.0
    %471 = vmatpush1.xpose.msra.mxu0 0.0
    %472 = vmatprep.subr.mxu0 0.0
    %473 = vmatpush1.xpose.msra.mxu0 0.0
    %474 = vmatprep.subr.mxu0 0.0
    %475 = vmatpush1.xpose.msra.mxu0 0.0
    %476 = vmatprep.subr.mxu0 0.0
    %477 = vmatpush1.xpose.msra.mxu0 0.0
    %478 = vmatprep.subr.mxu0 0.0
    %479 = vmatpush1.xpose.msra.mxu0 0.0
    %480 = vmatprep.subr.mxu0 0.0
    %481 = vmatpush1.xpose.msra.mxu0 0.0
    %482 = vmatprep.subr.mxu0 0.0
    %483 = vmatpush1.xpose.msra.mxu0 0.0
    %484 = vmatprep.subr.mxu0 0.0
    %485 = vmatpush1.xpose.msra.mxu0 %v454
    %486 = vmatprep.subr.mxu0 0.0
    %487 = vmatpush1.xpose.msra.mxu0 %v451
    %488 = vmatprep.subr.mxu0 0.0
    %489 = vmatpush2.xpose.msra.mxu0 0.0
    %490 = vmatprep.subr.mxu0 0.0
    %491 = vmatpush2.xpose.msra.mxu0 0.0
    %492 = vmatprep.subr.mxu0 0.0
    %493 = vmatpush2.xpose.msra.mxu0 0.0
    %494 = vmatprep.subr.mxu0 0.0
    %495 = vmatpush2.xpose.msra.mxu0 0.0
    %496 = vmatprep.subr.mxu0 0.0
    %497 = vmatpush2.xpose.msra.mxu0 0.0
    %498 = vmatprep.subr.mxu0 0.0
    %499 = vmatpush2.xpose.msra.mxu0 0.0
    %500 = vmatprep.subr.mxu0 0.0
    %501 = vmatpush2.xpose.msra.mxu0 0.0
    %502 = vmatprep.subr.mxu0 0.0
    %503 = vmatpush2.xpose.msra.mxu0 0.0
    %504 = vmatprep.subr.mxu0 0.0
    %505 = vmatpush2.xpose.msra.mxu0 0.0
    %506 = vmatprep.subr.mxu0 0.0
    %507 = vmatpush2.xpose.msra.mxu0 0.0
    %508 = vmatprep.subr.mxu0 0.0
    %509 = vmatpush2.xpose.msra.mxu0 0.0
    %510 = vmatprep.subr.mxu0 0.0
    %511 = vmatpush2.xpose.msra.mxu0 0.0
    %512 = vmatprep.subr.mxu0 0.0
    %513 = vmatpush2.xpose.msra.mxu0 0.0
    %514 = vmatprep.subr.mxu0 0.0
    %515 = vmatpush2.xpose.msra.mxu0 0.0
    %516 = vmatprep.subr.mxu0 0.0
    %517 = vmatpush2.xpose.msra.mxu0 0.0
    %518 = vmatprep.subr.mxu0 0.0
    %519 = vmatpush2.xpose.msra.mxu0 0.0
    %520 = vmatprep.mubr.f32.mxu0 0.0
    %521 = vmatmul.mubr.f32.gmra.mxu0 %v448
    %v522 = vpop.f32.mrf.mxu0
    %v523 = vadd.f32 0.0, %v522
    %v524 = vpop.f32.mrf.mxu0
    %525 = vdwg.mxu0
    %vm526 = vcmask 130048
    %v527 = vsel %vm526, %v444, -inf
    %528 = vmax.xlane.f32.xlu0 %v527
    %v529 = vpop.xlane.xlu0 %528
    %v530 = vsel %vm526, %v523, -inf
    %531 = vmax.xlane.f32.xlu0 %v530
    %v532 = vpop.xlane.xlu0 %531
    %v533 = vsub.f32 %v444, %v529
    %v534 = vsub.f32 %v523, %v532
    %v535 = vmul.f32 %v533, 1.442695
    %v536 = vpow.pop %v535
    %v537 = vmul.f32 %v534, 1.442695
    %v538 = vpow.pop %v537
    %v539 = vsel %vm526, %v536, 0.0
    %540 = vadd.xlane.f32.xlu0 %v539
    %v541 = vpop.xlane.xlu0 %540
    %v542 = vsel %vm526, %v538, 0.0
    %543 = vadd.xlane.f32.xlu0 %v542
    %v544 = vpop.xlane.xlu0 %543
    %v545 = vrcp.pop %v541
    %v546 = vrcp.pop %v544
    %v547 = vmul.f32 %v541, %v545
    %v548 = vmul.f32 %v544, %v546
    %v549 = vsub.f32 2.0, %v547
    %v550 = vsub.f32 2.0, %v548
    %v551 = vmul.f32 %v545, %v549
    %v552 = vmul.f32 %v546, %v550
    %553 = vrot.lane.b32.xlu0 %v266, 96
    %v554 = vpop.permute.xlu0 %553
    %555 = vrot.lane.b32.xlu0 %v271, 96
    %v556 = vpop.permute.xlu0 %555
    %v560 = vsel %vm526, %v536, 0
    %562 = vmatprep.subr.mxu0 0.0
    %563 = vmatpush1.msra.mxu0 0.0
    %564 = vmatprep.subr.mxu0 0.0
    %565 = vmatpush1.msra.mxu0 0.0
    %566 = vmatprep.subr.mxu0 0.0
    %567 = vmatpush1.msra.mxu0 0.0
    %568 = vmatprep.subr.mxu0 0.0
    %569 = vmatpush1.msra.mxu0 0.0
    %570 = vmatprep.subr.mxu0 0.0
    %571 = vmatpush1.msra.mxu0 0.0
    %572 = vmatprep.subr.mxu0 0.0
    %573 = vmatpush1.msra.mxu0 0.0
    %574 = vmatprep.subr.mxu0 0.0
    %575 = vmatpush1.msra.mxu0 0.0
    %576 = vmatprep.subr.mxu0 0.0
    %577 = vmatpush1.msra.mxu0 0.0
    %578 = vmatprep.subr.mxu0 0.0
    %579 = vmatpush1.msra.mxu0 0.0
    %580 = vmatprep.subr.mxu0 0.0
    %581 = vmatpush1.msra.mxu0 0.0
    %582 = vmatprep.subr.mxu0 0.0
    %583 = vmatpush1.msra.mxu0 0.0
    %584 = vmatprep.subr.mxu0 0.0
    %585 = vmatpush1.msra.mxu0 0.0
    %586 = vmatprep.subr.mxu0 0.0
    %587 = vmatpush1.msra.mxu0 0.0
    %588 = vmatprep.subr.mxu0 0.0
    %589 = vmatpush1.msra.mxu0 0.0
    %590 = vmatprep.subr.mxu0 0.0
    %591 = vmatpush1.msra.mxu0 %v556
    %592 = vmatprep.subr.mxu0 0.0
    %593 = vmatpush1.msra.mxu0 %v554
    %594 = vmatprep.subr.mxu0 0.0
    %595 = vmatpush2.msra.mxu0 0.0
    %596 = vmatprep.subr.mxu0 0.0
    %597 = vmatpush2.msra.mxu0 0.0
    %598 = vmatprep.subr.mxu0 0.0
    %599 = vmatpush2.msra.mxu0 0.0
    %600 = vmatprep.subr.mxu0 0.0
    %601 = vmatpush2.msra.mxu0 0.0
    %602 = vmatprep.subr.mxu0 0.0
    %603 = vmatpush2.msra.mxu0 0.0
    %604 = vmatprep.subr.mxu0 0.0
    %605 = vmatpush2.msra.mxu0 0.0
    %606 = vmatprep.subr.mxu0 0.0
    %607 = vmatpush2.msra.mxu0 0.0
    %608 = vmatprep.subr.mxu0 0.0
    %609 = vmatpush2.msra.mxu0 0.0
    %610 = vmatprep.subr.mxu0 0.0
    %611 = vmatpush2.msra.mxu0 0.0
    %612 = vmatprep.subr.mxu0 0.0
    %613 = vmatpush2.msra.mxu0 0.0
    %614 = vmatprep.subr.mxu0 0.0
    %615 = vmatpush2.msra.mxu0 0.0
    %616 = vmatprep.subr.mxu0 0.0
    %617 = vmatpush2.msra.mxu0 0.0
    %618 = vmatprep.subr.mxu0 0.0
    %619 = vmatpush2.msra.mxu0 0.0
    %620 = vmatprep.subr.mxu0 0.0
    %621 = vmatpush2.msra.mxu0 0.0
    %622 = vmatprep.subr.mxu0 0.0
    %623 = vmatpush2.msra.mxu0 0.0
    %624 = vmatprep.subr.mxu0 0.0
    %625 = vmatpush2.msra.mxu0 0.0
    %626 = vmatprep.mubr.f32.mxu0 0.0
    %627 = vmatmul.mubr.f32.gmra.mxu0 %v560
    %v628 = vpop.f32.mrf.mxu0
    %v629 = vadd.f32 0.0, %v628
    %v630 = vpop.f32.mrf.mxu0
    %631 = vdwg.mxu0
    %632 = vrot.lane.b32.xlu0 %v276, 96
    %v633 = vpop.permute.xlu0 %632
    %634 = vrot.lane.b32.xlu0 %v281, 96
    %v635 = vpop.permute.xlu0 %634
    %v639 = vsel %vm526, %v538, 0
    %641 = vmatprep.subr.mxu0 0.0
    %642 = vmatpush1.msra.mxu0 0.0
    %643 = vmatprep.subr.mxu0 0.0
    %644 = vmatpush1.msra.mxu0 0.0
    %645 = vmatprep.subr.mxu0 0.0
    %646 = vmatpush1.msra.mxu0 0.0
    %647 = vmatprep.subr.mxu0 0.0
    %648 = vmatpush1.msra.mxu0 0.0
    %649 = vmatprep.subr.mxu0 0.0
    %650 = vmatpush1.msra.mxu0 0.0
    %651 = vmatprep.subr.mxu0 0.0
    %652 = vmatpush1.msra.mxu0 0.0
    %653 = vmatprep.subr.mxu0 0.0
    %654 = vmatpush1.msra.mxu0 0.0
    %655 = vmatprep.subr.mxu0 0.0
    %656 = vmatpush1.msra.mxu0 0.0
    %657 = vmatprep.subr.mxu0 0.0
    %658 = vmatpush1.msra.mxu0 0.0
    %659 = vmatprep.subr.mxu0 0.0
    %660 = vmatpush1.msra.mxu0 0.0
    %661 = vmatprep.subr.mxu0 0.0
    %662 = vmatpush1.msra.mxu0 0.0
    %663 = vmatprep.subr.mxu0 0.0
    %664 = vmatpush1.msra.mxu0 0.0
    %665 = vmatprep.subr.mxu0 0.0
    %666 = vmatpush1.msra.mxu0 0.0
    %667 = vmatprep.subr.mxu0 0.0
    %668 = vmatpush1.msra.mxu0 0.0
    %669 = vmatprep.subr.mxu0 0.0
    %670 = vmatpush1.msra.mxu0 %v635
    %671 = vmatprep.subr.mxu0 0.0
    %672 = vmatpush1.msra.mxu0 %v633
    %673 = vmatprep.subr.mxu0 0.0
    %674 = vmatpush2.msra.mxu0 0.0
    %675 = vmatprep.subr.mxu0 0.0
    %676 = vmatpush2.msra.mxu0 0.0
    %677 = vmatprep.subr.mxu0 0.0
    %678 = vmatpush2.msra.mxu0 0.0
    %679 = vmatprep.subr.mxu0 0.0
    %680 = vmatpush2.msra.mxu0 0.0
    %681 = vmatprep.subr.mxu0 0.0
    %682 = vmatpush2.msra.mxu0 0.0
    %683 = vmatprep.subr.mxu0 0.0
    %684 = vmatpush2.msra.mxu0 0.0
    %685 = vmatprep.subr.mxu0 0.0
    %686 = vmatpush2.msra.mxu0 0.0
    %687 = vmatprep.subr.mxu0 0.0
    %688 = vmatpush2.msra.mxu0 0.0
    %689 = vmatprep.subr.mxu0 0.0
    %690 = vmatpush2.msra.mxu0 0.0
    %691 = vmatprep.subr.mxu0 0.0
    %692 = vmatpush2.msra.mxu0 0.0
    %693 = vmatprep.subr.mxu0 0.0
    %694 = vmatpush2.msra.mxu0 0.0
    %695 = vmatprep.subr.mxu0 0.0
    %696 = vmatpush2.msra.mxu0 0.0
    %697 = vmatprep.subr.mxu0 0.0
    %698 = vmatpush2.msra.mxu0 0.0
    %699 = vmatprep.subr.mxu0 0.0
    %700 = vmatpush2.msra.mxu0 0.0
    %701 = vmatprep.subr.mxu0 0.0
    %702 = vmatpush2.msra.mxu0 0.0
    %703 = vmatprep.subr.mxu0 0.0
    %704 = vmatpush2.msra.mxu0 0.0
    %705 = vmatprep.mubr.f32.mxu0 0.0
    %706 = vmatmul.mubr.f32.gmra.mxu0 %v639
    %v707 = vpop.f32.mrf.mxu0
    %v708 = vadd.f32 0.0, %v707
    %v709 = vpop.f32.mrf.mxu0
    %710 = vdwg.mxu0
    %v711 = vmul.f32 %v629, %v551
    %v712 = vmul.f32 %v708, %v552
    %713 = vrot.lane.b32.xlu0 %v365, 120
    %v714 = vpop.permute.xlu0 %713
    %715 = vrot.lane.b32.xlu0 %v266, 120
    %v716 = vpop.permute.xlu0 %715
    %717 = vrot.lane.b32.xlu0 %v271, 120
    %v718 = vpop.permute.xlu0 %717
    %v719 = vsel %vm367, %v714, 0
    %v721 = vsel %vm367, %v716, 0
    %v723 = vsel %vm367, %v718, 0
    %725 = vmatprep.subr.mxu0 0.0
    %726 = vmatpush1.xpose.msra.mxu0 0.0
    %727 = vmatprep.subr.mxu0 0.0
    %728 = vmatpush1.xpose.msra.mxu0 0.0
    %729 = vmatprep.subr.mxu0 0.0
    %730 = vmatpush1.xpose.msra.mxu0 0.0
    %731 = vmatprep.subr.mxu0 0.0
    %732 = vmatpush1.xpose.msra.mxu0 0.0
    %733 = vmatprep.subr.mxu0 0.0
    %734 = vmatpush1.xpose.msra.mxu0 0.0
    %735 = vmatprep.subr.mxu0 0.0
    %736 = vmatpush1.xpose.msra.mxu0 0.0
    %737 = vmatprep.subr.mxu0 0.0
    %738 = vmatpush1.xpose.msra.mxu0 0.0
    %739 = vmatprep.subr.mxu0 0.0
    %740 = vmatpush1.xpose.msra.mxu0 0.0
    %741 = vmatprep.subr.mxu0 0.0
    %742 = vmatpush1.xpose.msra.mxu0 0.0
    %743 = vmatprep.subr.mxu0 0.0
    %744 = vmatpush1.xpose.msra.mxu0 0.0
    %745 = vmatprep.subr.mxu0 0.0
    %746 = vmatpush1.xpose.msra.mxu0 0.0
    %747 = vmatprep.subr.mxu0 0.0
    %748 = vmatpush1.xpose.msra.mxu0 0.0
    %749 = vmatprep.subr.mxu0 0.0
    %750 = vmatpush1.xpose.msra.mxu0 0.0
    %751 = vmatprep.subr.mxu0 0.0
    %752 = vmatpush1.xpose.msra.mxu0 0.0
    %753 = vmatprep.subr.mxu0 0.0
    %754 = vmatpush1.xpose.msra.mxu0 %v723
    %755 = vmatprep.subr.mxu0 0.0
    %756 = vmatpush1.xpose.msra.mxu0 %v721
    %757 = vmatprep.subr.mxu0 0.0
    %758 = vmatpush2.xpose.msra.mxu0 0.0
    %759 = vmatprep.subr.mxu0 0.0
    %760 = vmatpush2.xpose.msra.mxu0 0.0
    %761 = vmatprep.subr.mxu0 0.0
    %762 = vmatpush2.xpose.msra.mxu0 0.0
    %763 = vmatprep.subr.mxu0 0.0
    %764 = vmatpush2.xpose.msra.mxu0 0.0
    %765 = vmatprep.subr.mxu0 0.0
    %766 = vmatpush2.xpose.msra.mxu0 0.0
    %767 = vmatprep.subr.mxu0 0.0
    %768 = vmatpush2.xpose.msra.mxu0 0.0
    %769 = vmatprep.subr.mxu0 0.0
    %770 = vmatpush2.xpose.msra.mxu0 0.0
    %771 = vmatprep.subr.mxu0 0.0
    %772 = vmatpush2.xpose.msra.mxu0 0.0
    %773 = vmatprep.subr.mxu0 0.0
    %774 = vmatpush2.xpose.msra.mxu0 0.0
    %775 = vmatprep.subr.mxu0 0.0
    %776 = vmatpush2.xpose.msra.mxu0 0.0
    %777 = vmatprep.subr.mxu0 0.0
    %778 = vmatpush2.xpose.msra.mxu0 0.0
    %779 = vmatprep.subr.mxu0 0.0
    %780 = vmatpush2.xpose.msra.mxu0 0.0
    %781 = vmatprep.subr.mxu0 0.0
    %782 = vmatpush2.xpose.msra.mxu0 0.0
    %783 = vmatprep.subr.mxu0 0.0
    %784 = vmatpush2.xpose.msra.mxu0 0.0
    %785 = vmatprep.subr.mxu0 0.0
    %786 = vmatpush2.xpose.msra.mxu0 0.0
    %787 = vmatprep.subr.mxu0 0.0
    %788 = vmatpush2.xpose.msra.mxu0 0.0
    %789 = vmatprep.mubr.f32.mxu0 0.0
    %790 = vmatmul.mubr.f32.gmra.mxu0 %v719
    %v791 = vpop.f32.mrf.mxu0
    %v792 = vadd.f32 0.0, %v791
    %v793 = vpop.f32.mrf.mxu0
    %794 = vdwg.mxu0
    %795 = vrot.lane.b32.xlu0 %v366, 120
    %v796 = vpop.permute.xlu0 %795
    %797 = vrot.lane.b32.xlu0 %v276, 120
    %v798 = vpop.permute.xlu0 %797
    %799 = vrot.lane.b32.xlu0 %v281, 120
    %v800 = vpop.permute.xlu0 %799
    %v801 = vsel %vm367, %v796, 0
    %v803 = vsel %vm367, %v798, 0
    %v805 = vsel %vm367, %v800, 0
    %807 = vmatprep.subr.mxu0 0.0
    %808 = vmatpush1.xpose.msra.mxu0 0.0
    %809 = vmatprep.subr.mxu0 0.0
    %810 = vmatpush1.xpose.msra.mxu0 0.0
    %811 = vmatprep.subr.mxu0 0.0
    %812 = vmatpush1.xpose.msra.mxu0 0.0
    %813 = vmatprep.subr.mxu0 0.0
    %814 = vmatpush1.xpose.msra.mxu0 0.0
    %815 = vmatprep.subr.mxu0 0.0
    %816 = vmatpush1.xpose.msra.mxu0 0.0
    %817 = vmatprep.subr.mxu0 0.0
    %818 = vmatpush1.xpose.msra.mxu0 0.0
    %819 = vmatprep.subr.mxu0 0.0
    %820 = vmatpush1.xpose.msra.mxu0 0.0
    %821 = vmatprep.subr.mxu0 0.0
    %822 = vmatpush1.xpose.msra.mxu0 0.0
    %823 = vmatprep.subr.mxu0 0.0
    %824 = vmatpush1.xpose.msra.mxu0 0.0
    %825 = vmatprep.subr.mxu0 0.0
    %826 = vmatpush1.xpose.msra.mxu0 0.0
    %827 = vmatprep.subr.mxu0 0.0
    %828 = vmatpush1.xpose.msra.mxu0 0.0
    %829 = vmatprep.subr.mxu0 0.0
    %830 = vmatpush1.xpose.msra.mxu0 0.0
    %831 = vmatprep.subr.mxu0 0.0
    %832 = vmatpush1.xpose.msra.mxu0 0.0
    %833 = vmatprep.subr.mxu0 0.0
    %834 = vmatpush1.xpose.msra.mxu0 0.0
    %835 = vmatprep.subr.mxu0 0.0
    %836 = vmatpush1.xpose.msra.mxu0 %v805
    %837 = vmatprep.subr.mxu0 0.0
    %838 = vmatpush1.xpose.msra.mxu0 %v803
    %839 = vmatprep.subr.mxu0 0.0
    %840 = vmatpush2.xpose.msra.mxu0 0.0
    %841 = vmatprep.subr.mxu0 0.0
    %842 = vmatpush2.xpose.msra.mxu0 0.0
    %843 = vmatprep.subr.mxu0 0.0
    %844 = vmatpush2.xpose.msra.mxu0 0.0
    %845 = vmatprep.subr.mxu0 0.0
    %846 = vmatpush2.xpose.msra.mxu0 0.0
    %847 = vmatprep.subr.mxu0 0.0
    %848 = vmatpush2.xpose.msra.mxu0 0.0
    %849 = vmatprep.subr.mxu0 0.0
    %850 = vmatpush2.xpose.msra.mxu0 0.0
    %851 = vmatprep.subr.mxu0 0.0
    %852 = vmatpush2.xpose.msra.mxu0 0.0
    %853 = vmatprep.subr.mxu0 0.0
    %854 = vmatpush2.xpose.msra.mxu0 0.0
    %855 = vmatprep.subr.mxu0 0.0
    %856 = vmatpush2.xpose.msra.mxu0 0.0
    %857 = vmatprep.subr.mxu0 0.0
    %858 = vmatpush2.xpose.msra.mxu0 0.0
    %859 = vmatprep.subr.mxu0 0.0
    %860 = vmatpush2.xpose.msra.mxu0 0.0
    %861 = vmatprep.subr.mxu0 0.0
    %862 = vmatpush2.xpose.msra.mxu0 0.0
    %863 = vmatprep.subr.mxu0 0.0
    %864 = vmatpush2.xpose.msra.mxu0 0.0
    %865 = vmatprep.subr.mxu0 0.0
    %866 = vmatpush2.xpose.msra.mxu0 0.0
    %867 = vmatprep.subr.mxu0 0.0
    %868 = vmatpush2.xpose.msra.mxu0 0.0
    %869 = vmatprep.subr.mxu0 0.0
    %870 = vmatpush2.xpose.msra.mxu0 0.0
    %871 = vmatprep.mubr.f32.mxu0 0.0
    %872 = vmatmul.mubr.f32.gmra.mxu0 %v801
    %v873 = vpop.f32.mrf.mxu0
    %v874 = vadd.f32 0.0, %v873
    %v875 = vpop.f32.mrf.mxu0
    %876 = vdwg.mxu0
    %v877 = vsel %vm526, %v792, -inf
    %878 = vmax.xlane.f32.xlu0 %v877
    %v879 = vpop.xlane.xlu0 %878
    %v880 = vsel %vm526, %v874, -inf
    %881 = vmax.xlane.f32.xlu0 %v880
    %v882 = vpop.xlane.xlu0 %881
    %v883 = vsub.f32 %v792, %v879
    %v884 = vsub.f32 %v874, %v882
    %v885 = vmul.f32 %v883, 1.442695
    %v886 = vpow.pop %v885
    %v887 = vmul.f32 %v884, 1.442695
    %v888 = vpow.pop %v887
    %v889 = vsel %vm526, %v886, 0.0
    %890 = vadd.xlane.f32.xlu0 %v889
    %v891 = vpop.xlane.xlu0 %890
    %v892 = vsel %vm526, %v888, 0.0
    %893 = vadd.xlane.f32.xlu0 %v892
    %v894 = vpop.xlane.xlu0 %893
    %v895 = vrcp.pop %v891
    %v896 = vrcp.pop %v894
    %v897 = vmul.f32 %v891, %v895
    %v898 = vmul.f32 %v894, %v896
    %v899 = vsub.f32 2.0, %v897
    %v900 = vsub.f32 2.0, %v898
    %v901 = vmul.f32 %v895, %v899
    %v902 = vmul.f32 %v896, %v900
    %903 = vrot.lane.b32.xlu0 %v266, 88
    %v904 = vpop.permute.xlu0 %903
    %905 = vrot.lane.b32.xlu0 %v271, 88
    %v906 = vpop.permute.xlu0 %905
    %v910 = vsel %vm526, %v886, 0
    %912 = vmatprep.subr.mxu0 0.0
    %913 = vmatpush1.msra.mxu0 0.0
    %914 = vmatprep.subr.mxu0 0.0
    %915 = vmatpush1.msra.mxu0 0.0
    %916 = vmatprep.subr.mxu0 0.0
    %917 = vmatpush1.msra.mxu0 0.0
    %918 = vmatprep.subr.mxu0 0.0
    %919 = vmatpush1.msra.mxu0 0.0
    %920 = vmatprep.subr.mxu0 0.0
    %921 = vmatpush1.msra.mxu0 0.0
    %922 = vmatprep.subr.mxu0 0.0
    %923 = vmatpush1.msra.mxu0 0.0
    %924 = vmatprep.subr.mxu0 0.0
    %925 = vmatpush1.msra.mxu0 0.0
    %926 = vmatprep.subr.mxu0 0.0
    %927 = vmatpush1.msra.mxu0 0.0
    %928 = vmatprep.subr.mxu0 0.0
    %929 = vmatpush1.msra.mxu0 0.0
    %930 = vmatprep.subr.mxu0 0.0
    %931 = vmatpush1.msra.mxu0 0.0
    %932 = vmatprep.subr.mxu0 0.0
    %933 = vmatpush1.msra.mxu0 0.0
    %934 = vmatprep.subr.mxu0 0.0
    %935 = vmatpush1.msra.mxu0 0.0
    %936 = vmatprep.subr.mxu0 0.0
    %937 = vmatpush1.msra.mxu0 0.0
    %938 = vmatprep.subr.mxu0 0.0
    %939 = vmatpush1.msra.mxu0 0.0
    %940 = vmatprep.subr.mxu0 0.0
    %941 = vmatpush1.msra.mxu0 %v906
    %942 = vmatprep.subr.mxu0 0.0
    %943 = vmatpush1.msra.mxu0 %v904
    %944 = vmatprep.subr.mxu0 0.0
    %945 = vmatpush2.msra.mxu0 0.0
    %946 = vmatprep.subr.mxu0 0.0
    %947 = vmatpush2.msra.mxu0 0.0
    %948 = vmatprep.subr.mxu0 0.0
    %949 = vmatpush2.msra.mxu0 0.0
    %950 = vmatprep.subr.mxu0 0.0
    %951 = vmatpush2.msra.mxu0 0.0
    %952 = vmatprep.subr.mxu0 0.0
    %953 = vmatpush2.msra.mxu0 0.0
    %954 = vmatprep.subr.mxu0 0.0
    %955 = vmatpush2.msra.mxu0 0.0
    %956 = vmatprep.subr.mxu0 0.0
    %957 = vmatpush2.msra.mxu0 0.0
    %958 = vmatprep.subr.mxu0 0.0
    %959 = vmatpush2.msra.mxu0 0.0
    %960 = vmatprep.subr.mxu0 0.0
    %961 = vmatpush2.msra.mxu0 0.0
    %962 = vmatprep.subr.mxu0 0.0
    %963 = vmatpush2.msra.mxu0 0.0
    %964 = vmatprep.subr.mxu0 0.0
    %965 = vmatpush2.msra.mxu0 0.0
    %966 = vmatprep.subr.mxu0 0.0
    %967 = vmatpush2.msra.mxu0 0.0
    %968 = vmatprep.subr.mxu0 0.0
    %969 = vmatpush2.msra.mxu0 0.0
    %970 = vmatprep.subr.mxu0 0.0
    %971 = vmatpush2.msra.mxu0 0.0
    %972 = vmatprep.subr.mxu0 0.0
    %973 = vmatpush2.msra.mxu0 0.0
    %974 = vmatprep.subr.mxu0 0.0
    %975 = vmatpush2.msra.mxu0 0.0
    %976 = vmatprep.mubr.f32.mxu0 0.0
    %977 = vmatmul.mubr.f32.gmra.mxu0 %v910
    %v978 = vpop.f32.mrf.mxu0
    %v979 = vadd.f32 0.0, %v978
    %v980 = vpop.f32.mrf.mxu0
    %981 = vdwg.mxu0
    %982 = vrot.lane.b32.xlu0 %v276, 88
    %v983 = vpop.permute.xlu0 %982
    %984 = vrot.lane.b32.xlu0 %v281, 88
    %v985 = vpop.permute.xlu0 %984
    %v989 = vsel %vm526, %v888, 0
    %991 = vmatprep.subr.mxu0 0.0
    %992 = vmatpush1.msra.mxu0 0.0
    %993 = vmatprep.subr.mxu0 0.0
    %994 = vmatpush1.msra.mxu0 0.0
    %995 = vmatprep.subr.mxu0 0.0
    %996 = vmatpush1.msra.mxu0 0.0
    %997 = vmatprep.subr.mxu0 0.0
    %998 = vmatpush1.msra.mxu0 0.0
    %999 = vmatprep.subr.mxu0 0.0
    %1000 = vmatpush1.msra.mxu0 0.0
    %1001 = vmatprep.subr.mxu0 0.0
    %1002 = vmatpush1.msra.mxu0 0.0
    %1003 = vmatprep.subr.mxu0 0.0
    %1004 = vmatpush1.msra.mxu0 0.0
    %1005 = vmatprep.subr.mxu0 0.0
    %1006 = vmatpush1.msra.mxu0 0.0
    %1007 = vmatprep.subr.mxu0 0.0
    %1008 = vmatpush1.msra.mxu0 0.0
    %1009 = vmatprep.subr.mxu0 0.0
    %1010 = vmatpush1.msra.mxu0 0.0
    %1011 = vmatprep.subr.mxu0 0.0
    %1012 = vmatpush1.msra.mxu0 0.0
    %1013 = vmatprep.subr.mxu0 0.0
    %1014 = vmatpush1.msra.mxu0 0.0
    %1015 = vmatprep.subr.mxu0 0.0
    %1016 = vmatpush1.msra.mxu0 0.0
    %1017 = vmatprep.subr.mxu0 0.0
    %1018 = vmatpush1.msra.mxu0 0.0
    %1019 = vmatprep.subr.mxu0 0.0
    %1020 = vmatpush1.msra.mxu0 %v985
    %1021 = vmatprep.subr.mxu0 0.0
    %1022 = vmatpush1.msra.mxu0 %v983
    %1023 = vmatprep.subr.mxu0 0.0
    %1024 = vmatpush2.msra.mxu0 0.0
    %1025 = vmatprep.subr.mxu0 0.0
    %1026 = vmatpush2.msra.mxu0 0.0
    %1027 = vmatprep.subr.mxu0 0.0
    %1028 = vmatpush2.msra.mxu0 0.0
    %1029 = vmatprep.subr.mxu0 0.0
    %1030 = vmatpush2.msra.mxu0 0.0
    %1031 = vmatprep.subr.mxu0 0.0
    %1032 = vmatpush2.msra.mxu0 0.0
    %1033 = vmatprep.subr.mxu0 0.0
    %1034 = vmatpush2.msra.mxu0 0.0
    %1035 = vmatprep.subr.mxu0 0.0
    %1036 = vmatpush2.msra.mxu0 0.0
    %1037 = vmatprep.subr.mxu0 0.0
    %1038 = vmatpush2.msra.mxu0 0.0
    %1039 = vmatprep.subr.mxu0 0.0
    %1040 = vmatpush2.msra.mxu0 0.0
    %1041 = vmatprep.subr.mxu0 0.0
    %1042 = vmatpush2.msra.mxu0 0.0
    %1043 = vmatprep.subr.mxu0 0.0
    %1044 = vmatpush2.msra.mxu0 0.0
    %1045 = vmatprep.subr.mxu0 0.0
    %1046 = vmatpush2.msra.mxu0 0.0
    %1047 = vmatprep.subr.mxu0 0.0
    %1048 = vmatpush2.msra.mxu0 0.0
    %1049 = vmatprep.subr.mxu0 0.0
    %1050 = vmatpush2.msra.mxu0 0.0
    %1051 = vmatprep.subr.mxu0 0.0
    %1052 = vmatpush2.msra.mxu0 0.0
    %1053 = vmatprep.subr.mxu0 0.0
    %1054 = vmatpush2.msra.mxu0 0.0
    %1055 = vmatprep.mubr.f32.mxu0 0.0
    %1056 = vmatmul.mubr.f32.gmra.mxu0 %v989
    %v1057 = vpop.f32.mrf.mxu0
    %v1058 = vadd.f32 0.0, %v1057
    %v1059 = vpop.f32.mrf.mxu0
    %1060 = vdwg.mxu0
    %v1061 = vmul.f32 %v979, %v901
    %v1062 = vmul.f32 %v1058, %v902
    %1063 = vrot.lane.b32.xlu0 %v365, 112
    %v1064 = vpop.permute.xlu0 %1063
    %1065 = vrot.lane.b32.xlu0 %v266, 112
    %v1066 = vpop.permute.xlu0 %1065
    %1067 = vrot.lane.b32.xlu0 %v271, 112
    %v1068 = vpop.permute.xlu0 %1067
    %v1069 = vsel %vm367, %v1064, 0
    %v1071 = vsel %vm367, %v1066, 0
    %v1073 = vsel %vm367, %v1068, 0
    %1075 = vmatprep.subr.mxu0 0.0
    %1076 = vmatpush1.xpose.msra.mxu0 0.0
    %1077 = vmatprep.subr.mxu0 0.0
    %1078 = vmatpush1.xpose.msra.mxu0 0.0
    %1079 = vmatprep.subr.mxu0 0.0
    %1080 = vmatpush1.xpose.msra.mxu0 0.0
    %1081 = vmatprep.subr.mxu0 0.0
    %1082 = vmatpush1.xpose.msra.mxu0 0.0
    %1083 = vmatprep.subr.mxu0 0.0
    %1084 = vmatpush1.xpose.msra.mxu0 0.0
    %1085 = vmatprep.subr.mxu0 0.0
    %1086 = vmatpush1.xpose.msra.mxu0 0.0
    %1087 = vmatprep.subr.mxu0 0.0
    %1088 = vmatpush1.xpose.msra.mxu0 0.0
    %1089 = vmatprep.subr.mxu0 0.0
    %1090 = vmatpush1.xpose.msra.mxu0 0.0
    %1091 = vmatprep.subr.mxu0 0.0
    %1092 = vmatpush1.xpose.msra.mxu0 0.0
    %1093 = vmatprep.subr.mxu0 0.0
    %1094 = vmatpush1.xpose.msra.mxu0 0.0
    %1095 = vmatprep.subr.mxu0 0.0
    %1096 = vmatpush1.xpose.msra.mxu0 0.0
    %1097 = vmatprep.subr.mxu0 0.0
    %1098 = vmatpush1.xpose.msra.mxu0 0.0
    %1099 = vmatprep.subr.mxu0 0.0
    %1100 = vmatpush1.xpose.msra.mxu0 0.0
    %1101 = vmatprep.subr.mxu0 0.0
    %1102 = vmatpush1.xpose.msra.mxu0 0.0
    %1103 = vmatprep.subr.mxu0 0.0
    %1104 = vmatpush1.xpose.msra.mxu0 %v1073
    %1105 = vmatprep.subr.mxu0 0.0
    %1106 = vmatpush1.xpose.msra.mxu0 %v1071
    %1107 = vmatprep.subr.mxu0 0.0
    %1108 = vmatpush2.xpose.msra.mxu0 0.0
    %1109 = vmatprep.subr.mxu0 0.0
    %1110 = vmatpush2.xpose.msra.mxu0 0.0
    %1111 = vmatprep.subr.mxu0 0.0
    %1112 = vmatpush2.xpose.msra.mxu0 0.0
    %1113 = vmatprep.subr.mxu0 0.0
    %1114 = vmatpush2.xpose.msra.mxu0 0.0
    %1115 = vmatprep.subr.mxu0 0.0
    %1116 = vmatpush2.xpose.msra.mxu0 0.0
    %1117 = vmatprep.subr.mxu0 0.0
    %1118 = vmatpush2.xpose.msra.mxu0 0.0
    %1119 = vmatprep.subr.mxu0 0.0
    %1120 = vmatpush2.xpose.msra.mxu0 0.0
    %1121 = vmatprep.subr.mxu0 0.0
    %1122 = vmatpush2.xpose.msra.mxu0 0.0
    %1123 = vmatprep.subr.mxu0 0.0
    %1124 = vmatpush2.xpose.msra.mxu0 0.0
    %1125 = vmatprep.subr.mxu0 0.0
    %1126 = vmatpush2.xpose.msra.mxu0 0.0
    %1127 = vmatprep.subr.mxu0 0.0
    %1128 = vmatpush2.xpose.msra.mxu0 0.0
    %1129 = vmatprep.subr.mxu0 0.0
    %1130 = vmatpush2.xpose.msra.mxu0 0.0
    %1131 = vmatprep.subr.mxu0 0.0
    %1132 = vmatpush2.xpose.msra.mxu0 0.0
    %1133 = vmatprep.subr.mxu0 0.0
    %1134 = vmatpush2.xpose.msra.mxu0 0.0
    %1135 = vmatprep.subr.mxu0 0.0
    %1136 = vmatpush2.xpose.msra.mxu0 0.0
    %1137 = vmatprep.subr.mxu0 0.0
    %1138 = vmatpush2.xpose.msra.mxu0 0.0
    %1139 = vmatprep.mubr.f32.mxu0 0.0
    %1140 = vmatmul.mubr.f32.gmra.mxu0 %v1069
    %v1141 = vpop.f32.mrf.mxu0
    %v1142 = vadd.f32 0.0, %v1141
    %v1143 = vpop.f32.mrf.mxu0
    %1144 = vdwg.mxu0
    %1145 = vrot.lane.b32.xlu0 %v366, 112
    %v1146 = vpop.permute.xlu0 %1145
    %1147 = vrot.lane.b32.xlu0 %v276, 112
    %v1148 = vpop.permute.xlu0 %1147
    %1149 = vrot.lane.b32.xlu0 %v281, 112
    %v1150 = vpop.permute.xlu0 %1149
    %v1151 = vsel %vm367, %v1146, 0
    %v1153 = vsel %vm367, %v1148, 0
    %v1155 = vsel %vm367, %v1150, 0
    %1157 = vmatprep.subr.mxu0 0.0
    %1158 = vmatpush1.xpose.msra.mxu0 0.0
    %1159 = vmatprep.subr.mxu0 0.0
    %1160 = vmatpush1.xpose.msra.mxu0 0.0
    %1161 = vmatprep.subr.mxu0 0.0
    %1162 = vmatpush1.xpose.msra.mxu0 0.0
    %1163 = vmatprep.subr.mxu0 0.0
    %1164 = vmatpush1.xpose.msra.mxu0 0.0
    %1165 = vmatprep.subr.mxu0 0.0
    %1166 = vmatpush1.xpose.msra.mxu0 0.0
    %1167 = vmatprep.subr.mxu0 0.0
    %1168 = vmatpush1.xpose.msra.mxu0 0.0
    %1169 = vmatprep.subr.mxu0 0.0
    %1170 = vmatpush1.xpose.msra.mxu0 0.0
    %1171 = vmatprep.subr.mxu0 0.0
    %1172 = vmatpush1.xpose.msra.mxu0 0.0
    %1173 = vmatprep.subr.mxu0 0.0
    %1174 = vmatpush1.xpose.msra.mxu0 0.0
    %1175 = vmatprep.subr.mxu0 0.0
    %1176 = vmatpush1.xpose.msra.mxu0 0.0
    %1177 = vmatprep.subr.mxu0 0.0
    %1178 = vmatpush1.xpose.msra.mxu0 0.0
    %1179 = vmatprep.subr.mxu0 0.0
    %1180 = vmatpush1.xpose.msra.mxu0 0.0
    %1181 = vmatprep.subr.mxu0 0.0
    %1182 = vmatpush1.xpose.msra.mxu0 0.0
    %1183 = vmatprep.subr.mxu0 0.0
    %1184 = vmatpush1.xpose.msra.mxu0 0.0
    %1185 = vmatprep.subr.mxu0 0.0
    %1186 = vmatpush1.xpose.msra.mxu0 %v1155
    %1187 = vmatprep.subr.mxu0 0.0
    %1188 = vmatpush1.xpose.msra.mxu0 %v1153
    %1189 = vmatprep.subr.mxu0 0.0
    %1190 = vmatpush2.xpose.msra.mxu0 0.0
    %1191 = vmatprep.subr.mxu0 0.0
    %1192 = vmatpush2.xpose.msra.mxu0 0.0
    %1193 = vmatprep.subr.mxu0 0.0
    %1194 = vmatpush2.xpose.msra.mxu0 0.0
    %1195 = vmatprep.subr.mxu0 0.0
    %1196 = vmatpush2.xpose.msra.mxu0 0.0
    %1197 = vmatprep.subr.mxu0 0.0
    %1198 = vmatpush2.xpose.msra.mxu0 0.0
    %1199 = vmatprep.subr.mxu0 0.0
    %1200 = vmatpush2.xpose.msra.mxu0 0.0
    %1201 = vmatprep.subr.mxu0 0.0
    %1202 = vmatpush2.xpose.msra.mxu0 0.0
    %1203 = vmatprep.subr.mxu0 0.0
    %1204 = vmatpush2.xpose.msra.mxu0 0.0
    %1205 = vmatprep.subr.mxu0 0.0
    %1206 = vmatpush2.xpose.msra.mxu0 0.0
    %1207 = vmatprep.subr.mxu0 0.0
    %1208 = vmatpush2.xpose.msra.mxu0 0.0
    %1209 = vmatprep.subr.mxu0 0.0
    %1210 = vmatpush2.xpose.msra.mxu0 0.0
    %1211 = vmatprep.subr.mxu0 0.0
    %1212 = vmatpush2.xpose.msra.mxu0 0.0
    %1213 = vmatprep.subr.mxu0 0.0
    %1214 = vmatpush2.xpose.msra.mxu0 0.0
    %1215 = vmatprep.subr.mxu0 0.0
    %1216 = vmatpush2.xpose.msra.mxu0 0.0
    %1217 = vmatprep.subr.mxu0 0.0
    %1218 = vmatpush2.xpose.msra.mxu0 0.0
    %1219 = vmatprep.subr.mxu0 0.0
    %1220 = vmatpush2.xpose.msra.mxu0 0.0
    %1221 = vmatprep.mubr.f32.mxu0 0.0
    %1222 = vmatmul.mubr.f32.gmra.mxu0 %v1151
    %v1223 = vpop.f32.mrf.mxu0
    %v1224 = vadd.f32 0.0, %v1223
    %v1225 = vpop.f32.mrf.mxu0
    %1226 = vdwg.mxu0
    %v1227 = vsel %vm526, %v1142, -inf
    %1228 = vmax.xlane.f32.xlu0 %v1227
    %v1229 = vpop.xlane.xlu0 %1228
    %v1230 = vsel %vm526, %v1224, -inf
    %1231 = vmax.xlane.f32.xlu0 %v1230
    %v1232 = vpop.xlane.xlu0 %1231
    %v1233 = vsub.f32 %v1142, %v1229
    %v1234 = vsub.f32 %v1224, %v1232
    %v1235 = vmul.f32 %v1233, 1.442695
    %v1236 = vpow.pop %v1235
    %v1237 = vmul.f32 %v1234, 1.442695
    %v1238 = vpow.pop %v1237
    %v1239 = vsel %vm526, %v1236, 0.0
    %1240 = vadd.xlane.f32.xlu0 %v1239
    %v1241 = vpop.xlane.xlu0 %1240
    %v1242 = vsel %vm526, %v1238, 0.0
    %1243 = vadd.xlane.f32.xlu0 %v1242
    %v1244 = vpop.xlane.xlu0 %1243
    %v1245 = vrcp.pop %v1241
    %v1246 = vrcp.pop %v1244
    %v1247 = vmul.f32 %v1241, %v1245
    %v1248 = vmul.f32 %v1244, %v1246
    %v1249 = vsub.f32 2.0, %v1247
    %v1250 = vsub.f32 2.0, %v1248
    %v1251 = vmul.f32 %v1245, %v1249
    %v1252 = vmul.f32 %v1246, %v1250
    %1253 = vrot.lane.b32.xlu0 %v266, 80
    %v1254 = vpop.permute.xlu0 %1253
    %1255 = vrot.lane.b32.xlu0 %v271, 80
    %v1256 = vpop.permute.xlu0 %1255
    %v1260 = vsel %vm526, %v1236, 0
    %1262 = vmatprep.subr.mxu0 0.0
    %1263 = vmatpush1.msra.mxu0 0.0
    %1264 = vmatprep.subr.mxu0 0.0
    %1265 = vmatpush1.msra.mxu0 0.0
    %1266 = vmatprep.subr.mxu0 0.0
    %1267 = vmatpush1.msra.mxu0 0.0
    %1268 = vmatprep.subr.mxu0 0.0
    %1269 = vmatpush1.msra.mxu0 0.0
    %1270 = vmatprep.subr.mxu0 0.0
    %1271 = vmatpush1.msra.mxu0 0.0
    %1272 = vmatprep.subr.mxu0 0.0
    %1273 = vmatpush1.msra.mxu0 0.0
    %1274 = vmatprep.subr.mxu0 0.0
    %1275 = vmatpush1.msra.mxu0 0.0
    %1276 = vmatprep.subr.mxu0 0.0
    %1277 = vmatpush1.msra.mxu0 0.0
    %1278 = vmatprep.subr.mxu0 0.0
    %1279 = vmatpush1.msra.mxu0 0.0
    %1280 = vmatprep.subr.mxu0 0.0
    %1281 = vmatpush1.msra.mxu0 0.0
    %1282 = vmatprep.subr.mxu0 0.0
    %1283 = vmatpush1.msra.mxu0 0.0
    %1284 = vmatprep.subr.mxu0 0.0
    %1285 = vmatpush1.msra.mxu0 0.0
    %1286 = vmatprep.subr.mxu0 0.0
    %1287 = vmatpush1.msra.mxu0 0.0
    %1288 = vmatprep.subr.mxu0 0.0
    %1289 = vmatpush1.msra.mxu0 0.0
    %1290 = vmatprep.subr.mxu0 0.0
    %1291 = vmatpush1.msra.mxu0 %v1256
    %1292 = vmatprep.subr.mxu0 0.0
    %1293 = vmatpush1.msra.mxu0 %v1254
    %1294 = vmatprep.subr.mxu0 0.0
    %1295 = vmatpush2.msra.mxu0 0.0
    %1296 = vmatprep.subr.mxu0 0.0
    %1297 = vmatpush2.msra.mxu0 0.0
    %1298 = vmatprep.subr.mxu0 0.0
    %1299 = vmatpush2.msra.mxu0 0.0
    %1300 = vmatprep.subr.mxu0 0.0
    %1301 = vmatpush2.msra.mxu0 0.0
    %1302 = vmatprep.subr.mxu0 0.0
    %1303 = vmatpush2.msra.mxu0 0.0
    %1304 = vmatprep.subr.mxu0 0.0
    %1305 = vmatpush2.msra.mxu0 0.0
    %1306 = vmatprep.subr.mxu0 0.0
    %1307 = vmatpush2.msra.mxu0 0.0
    %1308 = vmatprep.subr.mxu0 0.0
    %1309 = vmatpush2.msra.mxu0 0.0
    %1310 = vmatprep.subr.mxu0 0.0
    %1311 = vmatpush2.msra.mxu0 0.0
    %1312 = vmatprep.subr.mxu0 0.0
    %1313 = vmatpush2.msra.mxu0 0.0
    %1314 = vmatprep.subr.mxu0 0.0
    %1315 = vmatpush2.msra.mxu0 0.0
    %1316 = vmatprep.subr.mxu0 0.0
    %1317 = vmatpush2.msra.mxu0 0.0
    %1318 = vmatprep.subr.mxu0 0.0
    %1319 = vmatpush2.msra.mxu0 0.0
    %1320 = vmatprep.subr.mxu0 0.0
    %1321 = vmatpush2.msra.mxu0 0.0
    %1322 = vmatprep.subr.mxu0 0.0
    %1323 = vmatpush2.msra.mxu0 0.0
    %1324 = vmatprep.subr.mxu0 0.0
    %1325 = vmatpush2.msra.mxu0 0.0
    %1326 = vmatprep.mubr.f32.mxu0 0.0
    %1327 = vmatmul.mubr.f32.gmra.mxu0 %v1260
    %v1328 = vpop.f32.mrf.mxu0
    %v1329 = vadd.f32 0.0, %v1328
    %v1330 = vpop.f32.mrf.mxu0
    %1331 = vdwg.mxu0
    %1332 = vrot.lane.b32.xlu0 %v276, 80
    %v1333 = vpop.permute.xlu0 %1332
    %1334 = vrot.lane.b32.xlu0 %v281, 80
    %v1335 = vpop.permute.xlu0 %1334
    %v1339 = vsel %vm526, %v1238, 0
    %1341 = vmatprep.subr.mxu0 0.0
    %1342 = vmatpush1.msra.mxu0 0.0
    %1343 = vmatprep.subr.mxu0 0.0
    %1344 = vmatpush1.msra.mxu0 0.0
    %1345 = vmatprep.subr.mxu0 0.0
    %1346 = vmatpush1.msra.mxu0 0.0
    %1347 = vmatprep.subr.mxu0 0.0
    %1348 = vmatpush1.msra.mxu0 0.0
    %1349 = vmatprep.subr.mxu0 0.0
    %1350 = vmatpush1.msra.mxu0 0.0
    %1351 = vmatprep.subr.mxu0 0.0
    %1352 = vmatpush1.msra.mxu0 0.0
    %1353 = vmatprep.subr.mxu0 0.0
    %1354 = vmatpush1.msra.mxu0 0.0
    %1355 = vmatprep.subr.mxu0 0.0
    %1356 = vmatpush1.msra.mxu0 0.0
    %1357 = vmatprep.subr.mxu0 0.0
    %1358 = vmatpush1.msra.mxu0 0.0
    %1359 = vmatprep.subr.mxu0 0.0
    %1360 = vmatpush1.msra.mxu0 0.0
    %1361 = vmatprep.subr.mxu0 0.0
    %1362 = vmatpush1.msra.mxu0 0.0
    %1363 = vmatprep.subr.mxu0 0.0
    %1364 = vmatpush1.msra.mxu0 0.0
    %1365 = vmatprep.subr.mxu0 0.0
    %1366 = vmatpush1.msra.mxu0 0.0
    %1367 = vmatprep.subr.mxu0 0.0
    %1368 = vmatpush1.msra.mxu0 0.0
    %1369 = vmatprep.subr.mxu0 0.0
    %1370 = vmatpush1.msra.mxu0 %v1335
    %1371 = vmatprep.subr.mxu0 0.0
    %1372 = vmatpush1.msra.mxu0 %v1333
    %1373 = vmatprep.subr.mxu0 0.0
    %1374 = vmatpush2.msra.mxu0 0.0
    %1375 = vmatprep.subr.mxu0 0.0
    %1376 = vmatpush2.msra.mxu0 0.0
    %1377 = vmatprep.subr.mxu0 0.0
    %1378 = vmatpush2.msra.mxu0 0.0
    %1379 = vmatprep.subr.mxu0 0.0
    %1380 = vmatpush2.msra.mxu0 0.0
    %1381 = vmatprep.subr.mxu0 0.0
    %1382 = vmatpush2.msra.mxu0 0.0
    %1383 = vmatprep.subr.mxu0 0.0
    %1384 = vmatpush2.msra.mxu0 0.0
    %1385 = vmatprep.subr.mxu0 0.0
    %1386 = vmatpush2.msra.mxu0 0.0
    %1387 = vmatprep.subr.mxu0 0.0
    %1388 = vmatpush2.msra.mxu0 0.0
    %1389 = vmatprep.subr.mxu0 0.0
    %1390 = vmatpush2.msra.mxu0 0.0
    %1391 = vmatprep.subr.mxu0 0.0
    %1392 = vmatpush2.msra.mxu0 0.0
    %1393 = vmatprep.subr.mxu0 0.0
    %1394 = vmatpush2.msra.mxu0 0.0
    %1395 = vmatprep.subr.mxu0 0.0
    %1396 = vmatpush2.msra.mxu0 0.0
    %1397 = vmatprep.subr.mxu0 0.0
    %1398 = vmatpush2.msra.mxu0 0.0
    %1399 = vmatprep.subr.mxu0 0.0
    %1400 = vmatpush2.msra.mxu0 0.0
    %1401 = vmatprep.subr.mxu0 0.0
    %1402 = vmatpush2.msra.mxu0 0.0
    %1403 = vmatprep.subr.mxu0 0.0
    %1404 = vmatpush2.msra.mxu0 0.0
    %1405 = vmatprep.mubr.f32.mxu0 0.0
    %1406 = vmatmul.mubr.f32.gmra.mxu0 %v1339
    %v1407 = vpop.f32.mrf.mxu0
    %v1408 = vadd.f32 0.0, %v1407
    %v1409 = vpop.f32.mrf.mxu0
    %1410 = vdwg.mxu0
    %v1411 = vmul.f32 %v1329, %v1251
    %v1412 = vmul.f32 %v1408, %v1252
    %1413 = vrot.lane.b32.xlu0 %v365, 104
    %v1414 = vpop.permute.xlu0 %1413
    %1415 = vrot.lane.b32.xlu0 %v266, 104
    %v1416 = vpop.permute.xlu0 %1415
    %1417 = vrot.lane.b32.xlu0 %v271, 104
    %v1418 = vpop.permute.xlu0 %1417
    %v1419 = vsel %vm367, %v1414, 0
    %v1421 = vsel %vm367, %v1416, 0
    %v1423 = vsel %vm367, %v1418, 0
    %1425 = vmatprep.subr.mxu0 0.0
    %1426 = vmatpush1.xpose.msra.mxu0 0.0
    %1427 = vmatprep.subr.mxu0 0.0
    %1428 = vmatpush1.xpose.msra.mxu0 0.0
    %1429 = vmatprep.subr.mxu0 0.0
    %1430 = vmatpush1.xpose.msra.mxu0 0.0
    %1431 = vmatprep.subr.mxu0 0.0
    %1432 = vmatpush1.xpose.msra.mxu0 0.0
    %1433 = vmatprep.subr.mxu0 0.0
    %1434 = vmatpush1.xpose.msra.mxu0 0.0
    %1435 = vmatprep.subr.mxu0 0.0
    %1436 = vmatpush1.xpose.msra.mxu0 0.0
    %1437 = vmatprep.subr.mxu0 0.0
    %1438 = vmatpush1.xpose.msra.mxu0 0.0
    %1439 = vmatprep.subr.mxu0 0.0
    %1440 = vmatpush1.xpose.msra.mxu0 0.0
    %1441 = vmatprep.subr.mxu0 0.0
    %1442 = vmatpush1.xpose.msra.mxu0 0.0
    %1443 = vmatprep.subr.mxu0 0.0
    %1444 = vmatpush1.xpose.msra.mxu0 0.0
    %1445 = vmatprep.subr.mxu0 0.0
    %1446 = vmatpush1.xpose.msra.mxu0 0.0
    %1447 = vmatprep.subr.mxu0 0.0
    %1448 = vmatpush1.xpose.msra.mxu0 0.0
    %1449 = vmatprep.subr.mxu0 0.0
    %1450 = vmatpush1.xpose.msra.mxu0 0.0
    %1451 = vmatprep.subr.mxu0 0.0
    %1452 = vmatpush1.xpose.msra.mxu0 0.0
    %1453 = vmatprep.subr.mxu0 0.0
    %1454 = vmatpush1.xpose.msra.mxu0 %v1423
    %1455 = vmatprep.subr.mxu0 0.0
    %1456 = vmatpush1.xpose.msra.mxu0 %v1421
    %1457 = vmatprep.subr.mxu0 0.0
    %1458 = vmatpush2.xpose.msra.mxu0 0.0
    %1459 = vmatprep.subr.mxu0 0.0
    %1460 = vmatpush2.xpose.msra.mxu0 0.0
    %1461 = vmatprep.subr.mxu0 0.0
    %1462 = vmatpush2.xpose.msra.mxu0 0.0
    %1463 = vmatprep.subr.mxu0 0.0
    %1464 = vmatpush2.xpose.msra.mxu0 0.0
    %1465 = vmatprep.subr.mxu0 0.0
    %1466 = vmatpush2.xpose.msra.mxu0 0.0
    %1467 = vmatprep.subr.mxu0 0.0
    %1468 = vmatpush2.xpose.msra.mxu0 0.0
    %1469 = vmatprep.subr.mxu0 0.0
    %1470 = vmatpush2.xpose.msra.mxu0 0.0
    %1471 = vmatprep.subr.mxu0 0.0
    %1472 = vmatpush2.xpose.msra.mxu0 0.0
    %1473 = vmatprep.subr.mxu0 0.0
    %1474 = vmatpush2.xpose.msra.mxu0 0.0
    %1475 = vmatprep.subr.mxu0 0.0
    %1476 = vmatpush2.xpose.msra.mxu0 0.0
    %1477 = vmatprep.subr.mxu0 0.0
    %1478 = vmatpush2.xpose.msra.mxu0 0.0
    %1479 = vmatprep.subr.mxu0 0.0
    %1480 = vmatpush2.xpose.msra.mxu0 0.0
    %1481 = vmatprep.subr.mxu0 0.0
    %1482 = vmatpush2.xpose.msra.mxu0 0.0
    %1483 = vmatprep.subr.mxu0 0.0
    %1484 = vmatpush2.xpose.msra.mxu0 0.0
    %1485 = vmatprep.subr.mxu0 0.0
    %1486 = vmatpush2.xpose.msra.mxu0 0.0
    %1487 = vmatprep.subr.mxu0 0.0
    %1488 = vmatpush2.xpose.msra.mxu0 0.0
    %1489 = vmatprep.mubr.f32.mxu0 0.0
    %1490 = vmatmul.mubr.f32.gmra.mxu0 %v1419
    %v1491 = vpop.f32.mrf.mxu0
    %v1492 = vadd.f32 0.0, %v1491
    %v1493 = vpop.f32.mrf.mxu0
    %1494 = vdwg.mxu0
    %1495 = vrot.lane.b32.xlu0 %v366, 104
    %v1496 = vpop.permute.xlu0 %1495
    %1497 = vrot.lane.b32.xlu0 %v276, 104
    %v1498 = vpop.permute.xlu0 %1497
    %1499 = vrot.lane.b32.xlu0 %v281, 104
    %v1500 = vpop.permute.xlu0 %1499
    %v1501 = vsel %vm367, %v1496, 0
    %v1503 = vsel %vm367, %v1498, 0
    %v1505 = vsel %vm367, %v1500, 0
    %1507 = vmatprep.subr.mxu0 0.0
    %1508 = vmatpush1.xpose.msra.mxu0 0.0
    %1509 = vmatprep.subr.mxu0 0.0
    %1510 = vmatpush1.xpose.msra.mxu0 0.0
    %1511 = vmatprep.subr.mxu0 0.0
    %1512 = vmatpush1.xpose.msra.mxu0 0.0
    %1513 = vmatprep.subr.mxu0 0.0
    %1514 = vmatpush1.xpose.msra.mxu0 0.0
    %1515 = vmatprep.subr.mxu0 0.0
    %1516 = vmatpush1.xpose.msra.mxu0 0.0
    %1517 = vmatprep.subr.mxu0 0.0
    %1518 = vmatpush1.xpose.msra.mxu0 0.0
    %1519 = vmatprep.subr.mxu0 0.0
    %1520 = vmatpush1.xpose.msra.mxu0 0.0
    %1521 = vmatprep.subr.mxu0 0.0
    %1522 = vmatpush1.xpose.msra.mxu0 0.0
    %1523 = vmatprep.subr.mxu0 0.0
    %1524 = vmatpush1.xpose.msra.mxu0 0.0
    %1525 = vmatprep.subr.mxu0 0.0
    %1526 = vmatpush1.xpose.msra.mxu0 0.0
    %1527 = vmatprep.subr.mxu0 0.0
    %1528 = vmatpush1.xpose.msra.mxu0 0.0
    %1529 = vmatprep.subr.mxu0 0.0
    %1530 = vmatpush1.xpose.msra.mxu0 0.0
    %1531 = vmatprep.subr.mxu0 0.0
    %1532 = vmatpush1.xpose.msra.mxu0 0.0
    %1533 = vmatprep.subr.mxu0 0.0
    %1534 = vmatpush1.xpose.msra.mxu0 0.0
    %1535 = vmatprep.subr.mxu0 0.0
    %1536 = vmatpush1.xpose.msra.mxu0 %v1505
    %1537 = vmatprep.subr.mxu0 0.0
    %1538 = vmatpush1.xpose.msra.mxu0 %v1503
    %1539 = vmatprep.subr.mxu0 0.0
    %1540 = vmatpush2.xpose.msra.mxu0 0.0
    %1541 = vmatprep.subr.mxu0 0.0
    %1542 = vmatpush2.xpose.msra.mxu0 0.0
    %1543 = vmatprep.subr.mxu0 0.0
    %1544 = vmatpush2.xpose.msra.mxu0 0.0
    %1545 = vmatprep.subr.mxu0 0.0
    %1546 = vmatpush2.xpose.msra.mxu0 0.0
    %1547 = vmatprep.subr.mxu0 0.0
    %1548 = vmatpush2.xpose.msra.mxu0 0.0
    %1549 = vmatprep.subr.mxu0 0.0
    %1550 = vmatpush2.xpose.msra.mxu0 0.0
    %1551 = vmatprep.subr.mxu0 0.0
    %1552 = vmatpush2.xpose.msra.mxu0 0.0
    %1553 = vmatprep.subr.mxu0 0.0
    %1554 = vmatpush2.xpose.msra.mxu0 0.0
    %1555 = vmatprep.subr.mxu0 0.0
    %1556 = vmatpush2.xpose.msra.mxu0 0.0
    %1557 = vmatprep.subr.mxu0 0.0
    %1558 = vmatpush2.xpose.msra.mxu0 0.0
    %1559 = vmatprep.subr.mxu0 0.0
    %1560 = vmatpush2.xpose.msra.mxu0 0.0
    %1561 = vmatprep.subr.mxu0 0.0
    %1562 = vmatpush2.xpose.msra.mxu0 0.0
    %1563 = vmatprep.subr.mxu0 0.0
    %1564 = vmatpush2.xpose.msra.mxu0 0.0
    %1565 = vmatprep.subr.mxu0 0.0
    %1566 = vmatpush2.xpose.msra.mxu0 0.0
    %1567 = vmatprep.subr.mxu0 0.0
    %1568 = vmatpush2.xpose.msra.mxu0 0.0
    %1569 = vmatprep.subr.mxu0 0.0
    %1570 = vmatpush2.xpose.msra.mxu0 0.0
    %1571 = vmatprep.mubr.f32.mxu0 0.0
    %1572 = vmatmul.mubr.f32.gmra.mxu0 %v1501
    %v1573 = vpop.f32.mrf.mxu0
    %v1574 = vadd.f32 0.0, %v1573
    %v1575 = vpop.f32.mrf.mxu0
    %1576 = vdwg.mxu0
    %v1577 = vsel %vm526, %v1492, -inf
    %1578 = vmax.xlane.f32.xlu0 %v1577
    %v1579 = vpop.xlane.xlu0 %1578
    %v1580 = vsel %vm526, %v1574, -inf
    %1581 = vmax.xlane.f32.xlu0 %v1580
    %v1582 = vpop.xlane.xlu0 %1581
    %v1583 = vsub.f32 %v1492, %v1579
    %v1584 = vsub.f32 %v1574, %v1582
    %v1585 = vmul.f32 %v1583, 1.442695
    %v1586 = vpow.pop %v1585
    %v1587 = vmul.f32 %v1584, 1.442695
    %v1588 = vpow.pop %v1587
    %v1589 = vsel %vm526, %v1586, 0.0
    %1590 = vadd.xlane.f32.xlu0 %v1589
    %v1591 = vpop.xlane.xlu0 %1590
    %v1592 = vsel %vm526, %v1588, 0.0
    %1593 = vadd.xlane.f32.xlu0 %v1592
    %v1594 = vpop.xlane.xlu0 %1593
    %v1595 = vrcp.pop %v1591
    %v1596 = vrcp.pop %v1594
    %v1597 = vmul.f32 %v1591, %v1595
    %v1598 = vmul.f32 %v1594, %v1596
    %v1599 = vsub.f32 2.0, %v1597
    %v1600 = vsub.f32 2.0, %v1598
    %v1601 = vmul.f32 %v1595, %v1599
    %v1602 = vmul.f32 %v1596, %v1600
    %1603 = vrot.lane.b32.xlu0 %v266, 72
    %v1604 = vpop.permute.xlu0 %1603
    %1605 = vrot.lane.b32.xlu0 %v271, 72
    %v1606 = vpop.permute.xlu0 %1605
    %v1610 = vsel %vm526, %v1586, 0
    %1612 = vmatprep.subr.mxu0 0.0
    %1613 = vmatpush1.msra.mxu0 0.0
    %1614 = vmatprep.subr.mxu0 0.0
    %1615 = vmatpush1.msra.mxu0 0.0
    %1616 = vmatprep.subr.mxu0 0.0
    %1617 = vmatpush1.msra.mxu0 0.0
    %1618 = vmatprep.subr.mxu0 0.0
    %1619 = vmatpush1.msra.mxu0 0.0
    %1620 = vmatprep.subr.mxu0 0.0
    %1621 = vmatpush1.msra.mxu0 0.0
    %1622 = vmatprep.subr.mxu0 0.0
    %1623 = vmatpush1.msra.mxu0 0.0
    %1624 = vmatprep.subr.mxu0 0.0
    %1625 = vmatpush1.msra.mxu0 0.0
    %1626 = vmatprep.subr.mxu0 0.0
    %1627 = vmatpush1.msra.mxu0 0.0
    %1628 = vmatprep.subr.mxu0 0.0
    %1629 = vmatpush1.msra.mxu0 0.0
    %1630 = vmatprep.subr.mxu0 0.0
    %1631 = vmatpush1.msra.mxu0 0.0
    %1632 = vmatprep.subr.mxu0 0.0
    %1633 = vmatpush1.msra.mxu0 0.0
    %1634 = vmatprep.subr.mxu0 0.0
    %1635 = vmatpush1.msra.mxu0 0.0
    %1636 = vmatprep.subr.mxu0 0.0
    %1637 = vmatpush1.msra.mxu0 0.0
    %1638 = vmatprep.subr.mxu0 0.0
    %1639 = vmatpush1.msra.mxu0 0.0
    %1640 = vmatprep.subr.mxu0 0.0
    %1641 = vmatpush1.msra.mxu0 %v1606
    %1642 = vmatprep.subr.mxu0 0.0
    %1643 = vmatpush1.msra.mxu0 %v1604
    %1644 = vmatprep.subr.mxu0 0.0
    %1645 = vmatpush2.msra.mxu0 0.0
    %1646 = vmatprep.subr.mxu0 0.0
    %1647 = vmatpush2.msra.mxu0 0.0
    %1648 = vmatprep.subr.mxu0 0.0
    %1649 = vmatpush2.msra.mxu0 0.0
    %1650 = vmatprep.subr.mxu0 0.0
    %1651 = vmatpush2.msra.mxu0 0.0
    %1652 = vmatprep.subr.mxu0 0.0
    %1653 = vmatpush2.msra.mxu0 0.0
    %1654 = vmatprep.subr.mxu0 0.0
    %1655 = vmatpush2.msra.mxu0 0.0
    %1656 = vmatprep.subr.mxu0 0.0
    %1657 = vmatpush2.msra.mxu0 0.0
    %1658 = vmatprep.subr.mxu0 0.0
    %1659 = vmatpush2.msra.mxu0 0.0
    %1660 = vmatprep.subr.mxu0 0.0
    %1661 = vmatpush2.msra.mxu0 0.0
    %1662 = vmatprep.subr.mxu0 0.0
    %1663 = vmatpush2.msra.mxu0 0.0
    %1664 = vmatprep.subr.mxu0 0.0
    %1665 = vmatpush2.msra.mxu0 0.0
    %1666 = vmatprep.subr.mxu0 0.0
    %1667 = vmatpush2.msra.mxu0 0.0
    %1668 = vmatprep.subr.mxu0 0.0
    %1669 = vmatpush2.msra.mxu0 0.0
    %1670 = vmatprep.subr.mxu0 0.0
    %1671 = vmatpush2.msra.mxu0 0.0
    %1672 = vmatprep.subr.mxu0 0.0
    %1673 = vmatpush2.msra.mxu0 0.0
    %1674 = vmatprep.subr.mxu0 0.0
    %1675 = vmatpush2.msra.mxu0 0.0
    %1676 = vmatprep.mubr.f32.mxu0 0.0
    %1677 = vmatmul.mubr.f32.gmra.mxu0 %v1610
    %v1678 = vpop.f32.mrf.mxu0
    %v1679 = vadd.f32 0.0, %v1678
    %v1680 = vpop.f32.mrf.mxu0
    %1681 = vdwg.mxu0
    %1682 = vrot.lane.b32.xlu0 %v276, 72
    %v1683 = vpop.permute.xlu0 %1682
    %1684 = vrot.lane.b32.xlu0 %v281, 72
    %v1685 = vpop.permute.xlu0 %1684
    %v1689 = vsel %vm526, %v1588, 0
    %1691 = vmatprep.subr.mxu0 0.0
    %1692 = vmatpush1.msra.mxu0 0.0
    %1693 = vmatprep.subr.mxu0 0.0
    %1694 = vmatpush1.msra.mxu0 0.0
    %1695 = vmatprep.subr.mxu0 0.0
    %1696 = vmatpush1.msra.mxu0 0.0
    %1697 = vmatprep.subr.mxu0 0.0
    %1698 = vmatpush1.msra.mxu0 0.0
    %1699 = vmatprep.subr.mxu0 0.0
    %1700 = vmatpush1.msra.mxu0 0.0
    %1701 = vmatprep.subr.mxu0 0.0
    %1702 = vmatpush1.msra.mxu0 0.0
    %1703 = vmatprep.subr.mxu0 0.0
    %1704 = vmatpush1.msra.mxu0 0.0
    %1705 = vmatprep.subr.mxu0 0.0
    %1706 = vmatpush1.msra.mxu0 0.0
    %1707 = vmatprep.subr.mxu0 0.0
    %1708 = vmatpush1.msra.mxu0 0.0
    %1709 = vmatprep.subr.mxu0 0.0
    %1710 = vmatpush1.msra.mxu0 0.0
    %1711 = vmatprep.subr.mxu0 0.0
    %1712 = vmatpush1.msra.mxu0 0.0
    %1713 = vmatprep.subr.mxu0 0.0
    %1714 = vmatpush1.msra.mxu0 0.0
    %1715 = vmatprep.subr.mxu0 0.0
    %1716 = vmatpush1.msra.mxu0 0.0
    %1717 = vmatprep.subr.mxu0 0.0
    %1718 = vmatpush1.msra.mxu0 0.0
    %1719 = vmatprep.subr.mxu0 0.0
    %1720 = vmatpush1.msra.mxu0 %v1685
    %1721 = vmatprep.subr.mxu0 0.0
    %1722 = vmatpush1.msra.mxu0 %v1683
    %1723 = vmatprep.subr.mxu0 0.0
    %1724 = vmatpush2.msra.mxu0 0.0
    %1725 = vmatprep.subr.mxu0 0.0
    %1726 = vmatpush2.msra.mxu0 0.0
    %1727 = vmatprep.subr.mxu0 0.0
    %1728 = vmatpush2.msra.mxu0 0.0
    %1729 = vmatprep.subr.mxu0 0.0
    %1730 = vmatpush2.msra.mxu0 0.0
    %1731 = vmatprep.subr.mxu0 0.0
    %1732 = vmatpush2.msra.mxu0 0.0
    %1733 = vmatprep.subr.mxu0 0.0
    %1734 = vmatpush2.msra.mxu0 0.0
    %1735 = vmatprep.subr.mxu0 0.0
    %1736 = vmatpush2.msra.mxu0 0.0
    %1737 = vmatprep.subr.mxu0 0.0
    %1738 = vmatpush2.msra.mxu0 0.0
    %1739 = vmatprep.subr.mxu0 0.0
    %1740 = vmatpush2.msra.mxu0 0.0
    %1741 = vmatprep.subr.mxu0 0.0
    %1742 = vmatpush2.msra.mxu0 0.0
    %1743 = vmatprep.subr.mxu0 0.0
    %1744 = vmatpush2.msra.mxu0 0.0
    %1745 = vmatprep.subr.mxu0 0.0
    %1746 = vmatpush2.msra.mxu0 0.0
    %1747 = vmatprep.subr.mxu0 0.0
    %1748 = vmatpush2.msra.mxu0 0.0
    %1749 = vmatprep.subr.mxu0 0.0
    %1750 = vmatpush2.msra.mxu0 0.0
    %1751 = vmatprep.subr.mxu0 0.0
    %1752 = vmatpush2.msra.mxu0 0.0
    %1753 = vmatprep.subr.mxu0 0.0
    %1754 = vmatpush2.msra.mxu0 0.0
    %1755 = vmatprep.mubr.f32.mxu0 0.0
    %1756 = vmatmul.mubr.f32.gmra.mxu0 %v1689
    %v1757 = vpop.f32.mrf.mxu0
    %v1758 = vadd.f32 0.0, %v1757
    %v1759 = vpop.f32.mrf.mxu0
    %1760 = vdwg.mxu0
    %v1761 = vmul.f32 %v1679, %v1601
    %v1762 = vmul.f32 %v1758, %v1602
    %1765 = vrot.lane.b32.xlu0 %v1061, 8
    %v1766 = vpop.permute.xlu0 %1765
    %1767 = vrot.lane.b32.xlu0 %v1062, 8
    %v1768 = vpop.permute.xlu0 %1767
    %1773 = vrot.lane.b32.xlu0 %v1411, 16
    %v1774 = vpop.permute.xlu0 %1773
    %1775 = vrot.lane.b32.xlu0 %v1412, 16
    %v1776 = vpop.permute.xlu0 %1775
    %1781 = vrot.lane.b32.xlu0 %v1761, 24
    %v1782 = vpop.permute.xlu0 %1781
    %1783 = vrot.lane.b32.xlu0 %v1762, 24
    %v1784 = vpop.permute.xlu0 %1783
    %v1787 = vsel %vm367, %v711, %v1766
    %v1788 = vsel %vm367, %v712, %v1768
    %v1789 = vsel %vm526, %v1787, %v1774
    %v1790 = vsel %vm526, %v1788, %v1776
    %vm1791 = vcmask 195584
    %v1792 = vsel %vm1791, %v1789, %v1782
    %v1793 = vsel %vm1791, %v1790, %v1784
    %v1795 = vsel %vm186, %v1792, 0
    %v1798 = vsel %vm186, %v1793, 0
    %1800 = vmatprep.subr.mxu0 0.0
    %1801 = vmatpush1.msra.mxu0 0.0
    %1802 = vmatprep.subr.mxu0 0.0
    %1803 = vmatpush1.msra.mxu0 0.0
    %1804 = vmatprep.subr.mxu0 0.0
    %1805 = vmatpush1.msra.mxu0 0.0
    %1806 = vmatprep.subr.mxu0 0.0
    %1807 = vmatpush1.msra.mxu0 0.0
    %1808 = vmatprep.subr.mxu0 0.0
    %1809 = vmatpush1.msra.mxu0 0.0
    %1810 = vmatprep.subr.mxu0 0.0
    %1811 = vmatpush1.msra.mxu0 0.0
    %1812 = vmatprep.subr.mxu0 0.0
    %1813 = vmatpush1.msra.mxu0 0.0
    %1814 = vmatprep.subr.mxu0 0.0
    %1815 = vmatpush1.msra.mxu0 0.0
    %1816 = vmatprep.subr.mxu0 0.0
    %1817 = vmatpush1.msra.mxu0 0.0
    %1818 = vmatprep.subr.mxu0 0.0
    %1819 = vmatpush1.msra.mxu0 0.0
    %1820 = vmatprep.subr.mxu0 0.0
    %1821 = vmatpush1.msra.mxu0 0.0
    %1822 = vmatprep.subr.mxu0 0.0
    %1823 = vmatpush1.msra.mxu0 0.0
    %1824 = vmatprep.subr.mxu0 0.0
    %1825 = vmatpush1.msra.mxu0 %v94
    %1826 = vmatprep.subr.mxu0 0.0
    %1827 = vmatpush1.msra.mxu0 %v93
    %1828 = vmatprep.subr.mxu0 0.0
    %1829 = vmatpush1.msra.mxu0 %v92
    %1830 = vmatprep.subr.mxu0 0.0
    %1831 = vmatpush1.msra.mxu0 %v91
    %1832 = vmatprep.subr.mxu0 0.0
    %1833 = vmatpush2.msra.mxu0 0.0
    %1834 = vmatprep.subr.mxu0 0.0
    %1835 = vmatpush2.msra.mxu0 0.0
    %1836 = vmatprep.subr.mxu0 0.0
    %1837 = vmatpush2.msra.mxu0 0.0
    %1838 = vmatprep.subr.mxu0 0.0
    %1839 = vmatpush2.msra.mxu0 0.0
    %1840 = vmatprep.subr.mxu0 0.0
    %1841 = vmatpush2.msra.mxu0 0.0
    %1842 = vmatprep.subr.mxu0 0.0
    %1843 = vmatpush2.msra.mxu0 0.0
    %1844 = vmatprep.subr.mxu0 0.0
    %1845 = vmatpush2.msra.mxu0 0.0
    %1846 = vmatprep.subr.mxu0 0.0
    %1847 = vmatpush2.msra.mxu0 0.0
    %1848 = vmatprep.subr.mxu0 0.0
    %1849 = vmatpush2.msra.mxu0 0.0
    %1850 = vmatprep.subr.mxu0 0.0
    %1851 = vmatpush2.msra.mxu0 0.0
    %1852 = vmatprep.subr.mxu0 0.0
    %1853 = vmatpush2.msra.mxu0 0.0
    %1854 = vmatprep.subr.mxu0 0.0
    %1855 = vmatpush2.msra.mxu0 0.0
    %1856 = vmatprep.subr.mxu0 0.0
    %1857 = vmatpush2.msra.mxu0 0.0
    %1858 = vmatprep.subr.mxu0 0.0
    %1859 = vmatpush2.msra.mxu0 0.0
    %1860 = vmatprep.subr.mxu0 0.0
    %1861 = vmatpush2.msra.mxu0 0.0
    %1862 = vmatprep.subr.mxu0 0.0
    %1863 = vmatpush2.msra.mxu0 0.0
    %1864 = vmatprep.mubr.f32.mxu0 0.0
    %1865 = vmatmul.mubr.f32.gmra.mxu0 %v1795
    %v1866 = vpop.f32.mrf.mxu0
    %v1867 = vadd.f32 %v130, %v1866
    %v1868 = vpop.f32.mrf.mxu0
    %1869 = vmatprep.mubr.f32.mxu0 0.0
    %1870 = vmatmul.mubr.f32.gmra.mxu0 %v1798
    %v1871 = vpop.f32.mrf.mxu0
    %v1872 = vadd.f32 %v130, %v1871
    %v1873 = vpop.f32.mrf.mxu0
    %1874 = vdwg.mxu0
    %v1875 = vadd.f32 %v73, %v1867
    %v1876 = vadd.f32 %v74, %v1872
    %v1877 = vsel %vm186, %v1875, 0.0
    %1878 = vadd.xlane.f32.xlu0 %v1877
    %v1879 = vpop.xlane.xlu0 %1878
    %v1880 = vsel %vm186, %v1876, 0.0
    %1881 = vadd.xlane.f32.xlu0 %v1880
    %v1882 = vpop.xlane.xlu0 %1881
    %v1883 = vrcp.pop 32.0
    %v1884 = vmul.f32 %v1879, %v1883
    %v1885 = vmul.f32 %v1882, %v1883
    %v1886 = vsub.f32 %v1875, %v1884
    %v1887 = vsub.f32 %v1876, %v1885
    %v1888 = vmul.f32 %v1886, %v1886
    %v1889 = vmul.f32 %v1887, %v1887
    %v1890 = vsel %vm186, %v1888, 0.0
    %1891 = vadd.xlane.f32.xlu0 %v1890
    %v1892 = vpop.xlane.xlu0 %1891
    %v1893 = vsel %vm186, %v1889, 0.0
    %1894 = vadd.xlane.f32.xlu0 %v1893
    %v1895 = vpop.xlane.xlu0 %1894
    %v1896 = vmul.f32 %v1892, %v1883
    %v1897 = vmul.f32 %v1895, %v1883
    %v1898 = vadd.f32 %v1896, 1e-05
    %v1899 = vadd.f32 %v1897, 1e-05
    %v1900 = vrsqrt.pop %v1898
    %v1901 = vrsqrt.pop %v1899
    %v1902 = vmul.f32 %v1886, %v1900
    %v1903 = vmul.f32 %v1887, %v1901
    %v1904 = vmul.f32 %v1902, %v150
    %v1905 = vmul.f32 %v1903, %v150
    %v1906 = vadd.f32 %v1904, %v155
    %v1907 = vadd.f32 %v1905, %v155
    %v1909 = vsel %vm186, %v1906, 0
    %v1912 = vsel %vm186, %v1907, 0
    %1914 = vmatprep.subr.mxu0 0.0
    %1915 = vmatpush1.msra.mxu0 0.0
    %1916 = vmatprep.subr.mxu0 0.0
    %1917 = vmatpush1.msra.mxu0 0.0
    %1918 = vmatprep.subr.mxu0 0.0
    %1919 = vmatpush1.msra.mxu0 0.0
    %1920 = vmatprep.subr.mxu0 0.0
    %1921 = vmatpush1.msra.mxu0 0.0
    %1922 = vmatprep.subr.mxu0 0.0
    %1923 = vmatpush1.msra.mxu0 0.0
    %1924 = vmatprep.subr.mxu0 0.0
    %1925 = vmatpush1.msra.mxu0 0.0
    %1926 = vmatprep.subr.mxu0 0.0
    %1927 = vmatpush1.msra.mxu0 0.0
    %1928 = vmatprep.subr.mxu0 0.0
    %1929 = vmatpush1.msra.mxu0 0.0
    %1930 = vmatprep.subr.mxu0 0.0
    %1931 = vmatpush1.msra.mxu0 0.0
    %1932 = vmatprep.subr.mxu0 0.0
    %1933 = vmatpush1.msra.mxu0 0.0
    %1934 = vmatprep.subr.mxu0 0.0
    %1935 = vmatpush1.msra.mxu0 0.0
    %1936 = vmatprep.subr.mxu0 0.0
    %1937 = vmatpush1.msra.mxu0 0.0
    %1938 = vmatprep.subr.mxu0 0.0
    %1939 = vmatpush1.msra.mxu0 %v90
    %1940 = vmatprep.subr.mxu0 0.0
    %1941 = vmatpush1.msra.mxu0 %v89
    %1942 = vmatprep.subr.mxu0 0.0
    %1943 = vmatpush1.msra.mxu0 %v88
    %1944 = vmatprep.subr.mxu0 0.0
    %1945 = vmatpush1.msra.mxu0 %v87
    %1946 = vmatprep.subr.mxu0 0.0
    %1947 = vmatpush2.msra.mxu0 0.0
    %1948 = vmatprep.subr.mxu0 0.0
    %1949 = vmatpush2.msra.mxu0 0.0
    %1950 = vmatprep.subr.mxu0 0.0
    %1951 = vmatpush2.msra.mxu0 0.0
    %1952 = vmatprep.subr.mxu0 0.0
    %1953 = vmatpush2.msra.mxu0 0.0
    %1954 = vmatprep.subr.mxu0 0.0
    %1955 = vmatpush2.msra.mxu0 0.0
    %1956 = vmatprep.subr.mxu0 0.0
    %1957 = vmatpush2.msra.mxu0 0.0
    %1958 = vmatprep.subr.mxu0 0.0
    %1959 = vmatpush2.msra.mxu0 0.0
    %1960 = vmatprep.subr.mxu0 0.0
    %1961 = vmatpush2.msra.mxu0 0.0
    %1962 = vmatprep.subr.mxu0 0.0
    %1963 = vmatpush2.msra.mxu0 0.0
    %1964 = vmatprep.subr.mxu0 0.0
    %1965 = vmatpush2.msra.mxu0 0.0
    %1966 = vmatprep.subr.mxu0 0.0
    %1967 = vmatpush2.msra.mxu0 0.0
    %1968 = vmatprep.subr.mxu0 0.0
    %1969 = vmatpush2.msra.mxu0 0.0
    %1970 = vmatprep.subr.mxu0 0.0
    %1971 = vmatpush2.msra.mxu0 0.0
    %1972 = vmatprep.subr.mxu0 0.0
    %1973 = vmatpush2.msra.mxu0 0.0
    %1974 = vmatprep.subr.mxu0 0.0
    %1975 = vmatpush2.msra.mxu0 0.0
    %1976 = vmatprep.subr.mxu0 0.0
    %1977 = vmatpush2.msra.mxu0 0.0
    %1978 = vmatprep.mubr.f32.mxu0 0.0
    %1979 = vmatmul.mubr.f32.gmra.mxu0 %v1909
    %v1980 = vpop.f32.mrf.mxu0
    %v1981 = vadd.f32 %v125, %v1980
    %v1982 = vpop.f32.mrf.mxu0
    %1983 = vmatprep.mubr.f32.mxu0 0.0
    %1984 = vmatmul.mubr.f32.gmra.mxu0 %v1912
    %v1985 = vpop.f32.mrf.mxu0
    %v1986 = vadd.f32 %v125, %v1985
    %v1987 = vpop.f32.mrf.mxu0
    %1988 = vdwg.mxu0
    %v1989 = vmul.f32 %v1981, 0.35355338
    %v1990 = vmul.f32 %v1986, 0.35355338
    %1991 = vrot.lane.b32.xlu0 %v266, 64
    %v1992 = vpop.permute.xlu0 %1991
    %1993 = vrot.lane.b32.xlu0 %v271, 64
    %v1994 = vpop.permute.xlu0 %1993
    %v1996 = vsel %vm367, %v1989, 0
    %v1998 = vsel %vm367, %v1992, 0
    %v2000 = vsel %vm367, %v1994, 0
    %2002 = vmatprep.subr.mxu0 0.0
    %2003 = vmatpush1.xpose.msra.mxu0 0.0
    %2004 = vmatprep.subr.mxu0 0.0
    %2005 = vmatpush1.xpose.msra.mxu0 0.0
    %2006 = vmatprep.subr.mxu0 0.0
    %2007 = vmatpush1.xpose.msra.mxu0 0.0
    %2008 = vmatprep.subr.mxu0 0.0
    %2009 = vmatpush1.xpose.msra.mxu0 0.0
    %2010 = vmatprep.subr.mxu0 0.0
    %2011 = vmatpush1.xpose.msra.mxu0 0.0
    %2012 = vmatprep.subr.mxu0 0.0
    %2013 = vmatpush1.xpose.msra.mxu0 0.0
    %2014 = vmatprep.subr.mxu0 0.0
    %2015 = vmatpush1.xpose.msra.mxu0 0.0
    %2016 = vmatprep.subr.mxu0 0.0
    %2017 = vmatpush1.xpose.msra.mxu0 0.0
    %2018 = vmatprep.subr.mxu0 0.0
    %2019 = vmatpush1.xpose.msra.mxu0 0.0
    %2020 = vmatprep.subr.mxu0 0.0
    %2021 = vmatpush1.xpose.msra.mxu0 0.0
    %2022 = vmatprep.subr.mxu0 0.0
    %2023 = vmatpush1.xpose.msra.mxu0 0.0
    %2024 = vmatprep.subr.mxu0 0.0
    %2025 = vmatpush1.xpose.msra.mxu0 0.0
    %2026 = vmatprep.subr.mxu0 0.0
    %2027 = vmatpush1.xpose.msra.mxu0 0.0
    %2028 = vmatprep.subr.mxu0 0.0
    %2029 = vmatpush1.xpose.msra.mxu0 0.0
    %2030 = vmatprep.subr.mxu0 0.0
    %2031 = vmatpush1.xpose.msra.mxu0 %v2000
    %2032 = vmatprep.subr.mxu0 0.0
    %2033 = vmatpush1.xpose.msra.mxu0 %v1998
    %2034 = vmatprep.subr.mxu0 0.0
    %2035 = vmatpush2.xpose.msra.mxu0 0.0
    %2036 = vmatprep.subr.mxu0 0.0
    %2037 = vmatpush2.xpose.msra.mxu0 0.0
    %2038 = vmatprep.subr.mxu0 0.0
    %2039 = vmatpush2.xpose.msra.mxu0 0.0
    %2040 = vmatprep.subr.mxu0 0.0
    %2041 = vmatpush2.xpose.msra.mxu0 0.0
    %2042 = vmatprep.subr.mxu0 0.0
    %2043 = vmatpush2.xpose.msra.mxu0 0.0
    %2044 = vmatprep.subr.mxu0 0.0
    %2045 = vmatpush2.xpose.msra.mxu0 0.0
    %2046 = vmatprep.subr.mxu0 0.0
    %2047 = vmatpush2.xpose.msra.mxu0 0.0
    %2048 = vmatprep.subr.mxu0 0.0
    %2049 = vmatpush2.xpose.msra.mxu0 0.0
    %2050 = vmatprep.subr.mxu0 0.0
    %2051 = vmatpush2.xpose.msra.mxu0 0.0
    %2052 = vmatprep.subr.mxu0 0.0
    %2053 = vmatpush2.xpose.msra.mxu0 0.0
    %2054 = vmatprep.subr.mxu0 0.0
    %2055 = vmatpush2.xpose.msra.mxu0 0.0
    %2056 = vmatprep.subr.mxu0 0.0
    %2057 = vmatpush2.xpose.msra.mxu0 0.0
    %2058 = vmatprep.subr.mxu0 0.0
    %2059 = vmatpush2.xpose.msra.mxu0 0.0
    %2060 = vmatprep.subr.mxu0 0.0
    %2061 = vmatpush2.xpose.msra.mxu0 0.0
    %2062 = vmatprep.subr.mxu0 0.0
    %2063 = vmatpush2.xpose.msra.mxu0 0.0
    %2064 = vmatprep.subr.mxu0 0.0
    %2065 = vmatpush2.xpose.msra.mxu0 0.0
    %2066 = vmatprep.mubr.f32.mxu0 0.0
    %2067 = vmatmul.mubr.f32.gmra.mxu0 %v1996
    %v2068 = vpop.f32.mrf.mxu0
    %v2069 = vadd.f32 0.0, %v2068
    %v2070 = vpop.f32.mrf.mxu0
    %2071 = vdwg.mxu0
    %2072 = vrot.lane.b32.xlu0 %v276, 64
    %v2073 = vpop.permute.xlu0 %2072
    %2074 = vrot.lane.b32.xlu0 %v281, 64
    %v2075 = vpop.permute.xlu0 %2074
    %v2077 = vsel %vm367, %v1990, 0
    %v2079 = vsel %vm367, %v2073, 0
    %v2081 = vsel %vm367, %v2075, 0
    %2083 = vmatprep.subr.mxu0 0.0
    %2084 = vmatpush1.xpose.msra.mxu0 0.0
    %2085 = vmatprep.subr.mxu0 0.0
    %2086 = vmatpush1.xpose.msra.mxu0 0.0
    %2087 = vmatprep.subr.mxu0 0.0
    %2088 = vmatpush1.xpose.msra.mxu0 0.0
    %2089 = vmatprep.subr.mxu0 0.0
    %2090 = vmatpush1.xpose.msra.mxu0 0.0
    %2091 = vmatprep.subr.mxu0 0.0
    %2092 = vmatpush1.xpose.msra.mxu0 0.0
    %2093 = vmatprep.subr.mxu0 0.0
    %2094 = vmatpush1.xpose.msra.mxu0 0.0
    %2095 = vmatprep.subr.mxu0 0.0
    %2096 = vmatpush1.xpose.msra.mxu0 0.0
    %2097 = vmatprep.subr.mxu0 0.0
    %2098 = vmatpush1.xpose.msra.mxu0 0.0
    %2099 = vmatprep.subr.mxu0 0.0
    %2100 = vmatpush1.xpose.msra.mxu0 0.0
    %2101 = vmatprep.subr.mxu0 0.0
    %2102 = vmatpush1.xpose.msra.mxu0 0.0
    %2103 = vmatprep.subr.mxu0 0.0
    %2104 = vmatpush1.xpose.msra.mxu0 0.0
    %2105 = vmatprep.subr.mxu0 0.0
    %2106 = vmatpush1.xpose.msra.mxu0 0.0
    %2107 = vmatprep.subr.mxu0 0.0
    %2108 = vmatpush1.xpose.msra.mxu0 0.0
    %2109 = vmatprep.subr.mxu0 0.0
    %2110 = vmatpush1.xpose.msra.mxu0 0.0
    %2111 = vmatprep.subr.mxu0 0.0
    %2112 = vmatpush1.xpose.msra.mxu0 %v2081
    %2113 = vmatprep.subr.mxu0 0.0
    %2114 = vmatpush1.xpose.msra.mxu0 %v2079
    %2115 = vmatprep.subr.mxu0 0.0
    %2116 = vmatpush2.xpose.msra.mxu0 0.0
    %2117 = vmatprep.subr.mxu0 0.0
    %2118 = vmatpush2.xpose.msra.mxu0 0.0
    %2119 = vmatprep.subr.mxu0 0.0
    %2120 = vmatpush2.xpose.msra.mxu0 0.0
    %2121 = vmatprep.subr.mxu0 0.0
    %2122 = vmatpush2.xpose.msra.mxu0 0.0
    %2123 = vmatprep.subr.mxu0 0.0
    %2124 = vmatpush2.xpose.msra.mxu0 0.0
    %2125 = vmatprep.subr.mxu0 0.0
    %2126 = vmatpush2.xpose.msra.mxu0 0.0
    %2127 = vmatprep.subr.mxu0 0.0
    %2128 = vmatpush2.xpose.msra.mxu0 0.0
    %2129 = vmatprep.subr.mxu0 0.0
    %2130 = vmatpush2.xpose.msra.mxu0 0.0
    %2131 = vmatprep.subr.mxu0 0.0
    %2132 = vmatpush2.xpose.msra.mxu0 0.0
    %2133 = vmatprep.subr.mxu0 0.0
    %2134 = vmatpush2.xpose.msra.mxu0 0.0
    %2135 = vmatprep.subr.mxu0 0.0
    %2136 = vmatpush2.xpose.msra.mxu0 0.0
    %2137 = vmatprep.subr.mxu0 0.0
    %2138 = vmatpush2.xpose.msra.mxu0 0.0
    %2139 = vmatprep.subr.mxu0 0.0
    %2140 = vmatpush2.xpose.msra.mxu0 0.0
    %2141 = vmatprep.subr.mxu0 0.0
    %2142 = vmatpush2.xpose.msra.mxu0 0.0
    %2143 = vmatprep.subr.mxu0 0.0
    %2144 = vmatpush2.xpose.msra.mxu0 0.0
    %2145 = vmatprep.subr.mxu0 0.0
    %2146 = vmatpush2.xpose.msra.mxu0 0.0
    %2147 = vmatprep.mubr.f32.mxu0 0.0
    %2148 = vmatmul.mubr.f32.gmra.mxu0 %v2077
    %v2149 = vpop.f32.mrf.mxu0
    %v2150 = vadd.f32 0.0, %v2149
    %v2151 = vpop.f32.mrf.mxu0
    %2152 = vdwg.mxu0
    %v2153 = vsel %vm526, %v2069, -inf
    %2154 = vmax.xlane.f32.xlu0 %v2153
    %v2155 = vpop.xlane.xlu0 %2154
    %v2156 = vsel %vm526, %v2150, -inf
    %2157 = vmax.xlane.f32.xlu0 %v2156
    %v2158 = vpop.xlane.xlu0 %2157
    %v2159 = vsub.f32 %v2069, %v2155
    %v2160 = vsub.f32 %v2150, %v2158
    %v2161 = vmul.f32 %v2159, 1.442695
    %v2162 = vpow.pop %v2161
    %v2163 = vmul.f32 %v2160, 1.442695
    %v2164 = vpow.pop %v2163
    %v2165 = vsel %vm526, %v2162, 0.0
    %2166 = vadd.xlane.f32.xlu0 %v2165
    %v2167 = vpop.xlane.xlu0 %2166
    %v2168 = vsel %vm526, %v2164, 0.0
    %2169 = vadd.xlane.f32.xlu0 %v2168
    %v2170 = vpop.xlane.xlu0 %2169
    %v2171 = vrcp.pop %v2167
    %v2172 = vrcp.pop %v2170
    %v2173 = vmul.f32 %v2167, %v2171
    %v2174 = vmul.f32 %v2170, %v2172
    %v2175 = vsub.f32 2.0, %v2173
    %v2176 = vsub.f32 2.0, %v2174
    %v2177 = vmul.f32 %v2171, %v2175
    %v2178 = vmul.f32 %v2172, %v2176
    %2179 = vrot.lane.b32.xlu0 %v266, 32
    %v2180 = vpop.permute.xlu0 %2179
    %2181 = vrot.lane.b32.xlu0 %v271, 32
    %v2182 = vpop.permute.xlu0 %2181
    %v2186 = vsel %vm526, %v2162, 0
    %2188 = vmatprep.subr.mxu0 0.0
    %2189 = vmatpush1.msra.mxu0 0.0
    %2190 = vmatprep.subr.mxu0 0.0
    %2191 = vmatpush1.msra.mxu0 0.0
    %2192 = vmatprep.subr.mxu0 0.0
    %2193 = vmatpush1.msra.mxu0 0.0
    %2194 = vmatprep.subr.mxu0 0.0
    %2195 = vmatpush1.msra.mxu0 0.0
    %2196 = vmatprep.subr.mxu0 0.0
    %2197 = vmatpush1.msra.mxu0 0.0
    %2198 = vmatprep.subr.mxu0 0.0
    %2199 = vmatpush1.msra.mxu0 0.0
    %2200 = vmatprep.subr.mxu0 0.0
    %2201 = vmatpush1.msra.mxu0 0.0
    %2202 = vmatprep.subr.mxu0 0.0
    %2203 = vmatpush1.msra.mxu0 0.0
    %2204 = vmatprep.subr.mxu0 0.0
    %2205 = vmatpush1.msra.mxu0 0.0
    %2206 = vmatprep.subr.mxu0 0.0
    %2207 = vmatpush1.msra.mxu0 0.0
    %2208 = vmatprep.subr.mxu0 0.0
    %2209 = vmatpush1.msra.mxu0 0.0
    %2210 = vmatprep.subr.mxu0 0.0
    %2211 = vmatpush1.msra.mxu0 0.0
    %2212 = vmatprep.subr.mxu0 0.0
    %2213 = vmatpush1.msra.mxu0 0.0
    %2214 = vmatprep.subr.mxu0 0.0
    %2215 = vmatpush1.msra.mxu0 0.0
    %2216 = vmatprep.subr.mxu0 0.0
    %2217 = vmatpush1.msra.mxu0 %v2182
    %2218 = vmatprep.subr.mxu0 0.0
    %2219 = vmatpush1.msra.mxu0 %v2180
    %2220 = vmatprep.subr.mxu0 0.0
    %2221 = vmatpush2.msra.mxu0 0.0
    %2222 = vmatprep.subr.mxu0 0.0
    %2223 = vmatpush2.msra.mxu0 0.0
    %2224 = vmatprep.subr.mxu0 0.0
    %2225 = vmatpush2.msra.mxu0 0.0
    %2226 = vmatprep.subr.mxu0 0.0
    %2227 = vmatpush2.msra.mxu0 0.0
    %2228 = vmatprep.subr.mxu0 0.0
    %2229 = vmatpush2.msra.mxu0 0.0
    %2230 = vmatprep.subr.mxu0 0.0
    %2231 = vmatpush2.msra.mxu0 0.0
    %2232 = vmatprep.subr.mxu0 0.0
    %2233 = vmatpush2.msra.mxu0 0.0
    %2234 = vmatprep.subr.mxu0 0.0
    %2235 = vmatpush2.msra.mxu0 0.0
    %2236 = vmatprep.subr.mxu0 0.0
    %2237 = vmatpush2.msra.mxu0 0.0
    %2238 = vmatprep.subr.mxu0 0.0
    %2239 = vmatpush2.msra.mxu0 0.0
    %2240 = vmatprep.subr.mxu0 0.0
    %2241 = vmatpush2.msra.mxu0 0.0
    %2242 = vmatprep.subr.mxu0 0.0
    %2243 = vmatpush2.msra.mxu0 0.0
    %2244 = vmatprep.subr.mxu0 0.0
    %2245 = vmatpush2.msra.mxu0 0.0
    %2246 = vmatprep.subr.mxu0 0.0
    %2247 = vmatpush2.msra.mxu0 0.0
    %2248 = vmatprep.subr.mxu0 0.0
    %2249 = vmatpush2.msra.mxu0 0.0
    %2250 = vmatprep.subr.mxu0 0.0
    %2251 = vmatpush2.msra.mxu0 0.0
    %2252 = vmatprep.mubr.f32.mxu0 0.0
    %2253 = vmatmul.mubr.f32.gmra.mxu0 %v2186
    %v2254 = vpop.f32.mrf.mxu0
    %v2255 = vadd.f32 0.0, %v2254
    %v2256 = vpop.f32.mrf.mxu0
    %2257 = vdwg.mxu0
    %2258 = vrot.lane.b32.xlu0 %v276, 32
    %v2259 = vpop.permute.xlu0 %2258
    %2260 = vrot.lane.b32.xlu0 %v281, 32
    %v2261 = vpop.permute.xlu0 %2260
    %v2265 = vsel %vm526, %v2164, 0
    %2267 = vmatprep.subr.mxu0 0.0
    %2268 = vmatpush1.msra.mxu0 0.0
    %2269 = vmatprep.subr.mxu0 0.0
    %2270 = vmatpush1.msra.mxu0 0.0
    %2271 = vmatprep.subr.mxu0 0.0
    %2272 = vmatpush1.msra.mxu0 0.0
    %2273 = vmatprep.subr.mxu0 0.0
    %2274 = vmatpush1.msra.mxu0 0.0
    %2275 = vmatprep.subr.mxu0 0.0
    %2276 = vmatpush1.msra.mxu0 0.0
    %2277 = vmatprep.subr.mxu0 0.0
    %2278 = vmatpush1.msra.mxu0 0.0
    %2279 = vmatprep.subr.mxu0 0.0
    %2280 = vmatpush1.msra.mxu0 0.0
    %2281 = vmatprep.subr.mxu0 0.0
    %2282 = vmatpush1.msra.mxu0 0.0
    %2283 = vmatprep.subr.mxu0 0.0
    %2284 = vmatpush1.msra.mxu0 0.0
    %2285 = vmatprep.subr.mxu0 0.0
    %2286 = vmatpush1.msra.mxu0 0.0
    %2287 = vmatprep.subr.mxu0 0.0
    %2288 = vmatpush1.msra.mxu0 0.0
    %2289 = vmatprep.subr.mxu0 0.0
    %2290 = vmatpush1.msra.mxu0 0.0
    %2291 = vmatprep.subr.mxu0 0.0
    %2292 = vmatpush1.msra.mxu0 0.0
    %2293 = vmatprep.subr.mxu0 0.0
    %2294 = vmatpush1.msra.mxu0 0.0
    %2295 = vmatprep.subr.mxu0 0.0
    %2296 = vmatpush1.msra.mxu0 %v2261
    %2297 = vmatprep.subr.mxu0 0.0
    %2298 = vmatpush1.msra.mxu0 %v2259
    %2299 = vmatprep.subr.mxu0 0.0
    %2300 = vmatpush2.msra.mxu0 0.0
    %2301 = vmatprep.subr.mxu0 0.0
    %2302 = vmatpush2.msra.mxu0 0.0
    %2303 = vmatprep.subr.mxu0 0.0
    %2304 = vmatpush2.msra.mxu0 0.0
    %2305 = vmatprep.subr.mxu0 0.0
    %2306 = vmatpush2.msra.mxu0 0.0
    %2307 = vmatprep.subr.mxu0 0.0
    %2308 = vmatpush2.msra.mxu0 0.0
    %2309 = vmatprep.subr.mxu0 0.0
    %2310 = vmatpush2.msra.mxu0 0.0
    %2311 = vmatprep.subr.mxu0 0.0
    %2312 = vmatpush2.msra.mxu0 0.0
    %2313 = vmatprep.subr.mxu0 0.0
    %2314 = vmatpush2.msra.mxu0 0.0
    %2315 = vmatprep.subr.mxu0 0.0
    %2316 = vmatpush2.msra.mxu0 0.0
    %2317 = vmatprep.subr.mxu0 0.0
    %2318 = vmatpush2.msra.mxu0 0.0
    %2319 = vmatprep.subr.mxu0 0.0
    %2320 = vmatpush2.msra.mxu0 0.0
    %2321 = vmatprep.subr.mxu0 0.0
    %2322 = vmatpush2.msra.mxu0 0.0
    %2323 = vmatprep.subr.mxu0 0.0
    %2324 = vmatpush2.msra.mxu0 0.0
    %2325 = vmatprep.subr.mxu0 0.0
    %2326 = vmatpush2.msra.mxu0 0.0
    %2327 = vmatprep.subr.mxu0 0.0
    %2328 = vmatpush2.msra.mxu0 0.0
    %2329 = vmatprep.subr.mxu0 0.0
    %2330 = vmatpush2.msra.mxu0 0.0
    %2331 = vmatprep.mubr.f32.mxu0 0.0
    %2332 = vmatmul.mubr.f32.gmra.mxu0 %v2265
    %v2333 = vpop.f32.mrf.mxu0
    %v2334 = vadd.f32 0.0, %v2333
    %v2335 = vpop.f32.mrf.mxu0
    %2336 = vdwg.mxu0
    %v2337 = vmul.f32 %v2255, %v2177
    %v2338 = vmul.f32 %v2334, %v2178
    %2339 = vrot.lane.b32.xlu0 %v1989, 120
    %v2340 = vpop.permute.xlu0 %2339
    %2341 = vrot.lane.b32.xlu0 %v266, 56
    %v2342 = vpop.permute.xlu0 %2341
    %2343 = vrot.lane.b32.xlu0 %v271, 56
    %v2344 = vpop.permute.xlu0 %2343
    %v2345 = vsel %vm367, %v2340, 0
    %v2347 = vsel %vm367, %v2342, 0
    %v2349 = vsel %vm367, %v2344, 0
    %2351 = vmatprep.subr.mxu0 0.0
    %2352 = vmatpush1.xpose.msra.mxu0 0.0
    %2353 = vmatprep.subr.mxu0 0.0
    %2354 = vmatpush1.xpose.msra.mxu0 0.0
    %2355 = vmatprep.subr.mxu0 0.0
    %2356 = vmatpush1.xpose.msra.mxu0 0.0
    %2357 = vmatprep.subr.mxu0 0.0
    %2358 = vmatpush1.xpose.msra.mxu0 0.0
    %2359 = vmatprep.subr.mxu0 0.0
    %2360 = vmatpush1.xpose.msra.mxu0 0.0
    %2361 = vmatprep.subr.mxu0 0.0
    %2362 = vmatpush1.xpose.msra.mxu0 0.0
    %2363 = vmatprep.subr.mxu0 0.0
    %2364 = vmatpush1.xpose.msra.mxu0 0.0
    %2365 = vmatprep.subr.mxu0 0.0
    %2366 = vmatpush1.xpose.msra.mxu0 0.0
    %2367 = vmatprep.subr.mxu0 0.0
    %2368 = vmatpush1.xpose.msra.mxu0 0.0
    %2369 = vmatprep.subr.mxu0 0.0
    %2370 = vmatpush1.xpose.msra.mxu0 0.0
    %2371 = vmatprep.subr.mxu0 0.0
    %2372 = vmatpush1.xpose.msra.mxu0 0.0
    %2373 = vmatprep.subr.mxu0 0.0
    %2374 = vmatpush1.xpose.msra.mxu0 0.0
    %2375 = vmatprep.subr.mxu0 0.0
    %2376 = vmatpush1.xpose.msra.mxu0 0.0
    %2377 = vmatprep.subr.mxu0 0.0
    %2378 = vmatpush1.xpose.msra.mxu0 0.0
    %2379 = vmatprep.subr.mxu0 0.0
    %2380 = vmatpush1.xpose.msra.mxu0 %v2349
    %2381 = vmatprep.subr.mxu0 0.0
    %2382 = vmatpush1.xpose.msra.mxu0 %v2347
    %2383 = vmatprep.subr.mxu0 0.0
    %2384 = vmatpush2.xpose.msra.mxu0 0.0
    %2385 = vmatprep.subr.mxu0 0.0
    %2386 = vmatpush2.xpose.msra.mxu0 0.0
    %2387 = vmatprep.subr.mxu0 0.0
    %2388 = vmatpush2.xpose.msra.mxu0 0.0
    %2389 = vmatprep.subr.mxu0 0.0
    %2390 = vmatpush2.xpose.msra.mxu0 0.0
    %2391 = vmatprep.subr.mxu0 0.0
    %2392 = vmatpush2.xpose.msra.mxu0 0.0
    %2393 = vmatprep.subr.mxu0 0.0
    %2394 = vmatpush2.xpose.msra.mxu0 0.0
    %2395 = vmatprep.subr.mxu0 0.0
    %2396 = vmatpush2.xpose.msra.mxu0 0.0
    %2397 = vmatprep.subr.mxu0 0.0
    %2398 = vmatpush2.xpose.msra.mxu0 0.0
    %2399 = vmatprep.subr.mxu0 0.0
    %2400 = vmatpush2.xpose.msra.mxu0 0.0
    %2401 = vmatprep.subr.mxu0 0.0
    %2402 = vmatpush2.xpose.msra.mxu0 0.0
    %2403 = vmatprep.subr.mxu0 0.0
    %2404 = vmatpush2.xpose.msra.mxu0 0.0
    %2405 = vmatprep.subr.mxu0 0.0
    %2406 = vmatpush2.xpose.msra.mxu0 0.0
    %2407 = vmatprep.subr.mxu0 0.0
    %2408 = vmatpush2.xpose.msra.mxu0 0.0
    %2409 = vmatprep.subr.mxu0 0.0
    %2410 = vmatpush2.xpose.msra.mxu0 0.0
    %2411 = vmatprep.subr.mxu0 0.0
    %2412 = vmatpush2.xpose.msra.mxu0 0.0
    %2413 = vmatprep.subr.mxu0 0.0
    %2414 = vmatpush2.xpose.msra.mxu0 0.0
    %2415 = vmatprep.mubr.f32.mxu0 0.0
    %2416 = vmatmul.mubr.f32.gmra.mxu0 %v2345
    %v2417 = vpop.f32.mrf.mxu0
    %v2418 = vadd.f32 0.0, %v2417
    %v2419 = vpop.f32.mrf.mxu0
    %2420 = vdwg.mxu0
    %2421 = vrot.lane.b32.xlu0 %v1990, 120
    %v2422 = vpop.permute.xlu0 %2421
    %2423 = vrot.lane.b32.xlu0 %v276, 56
    %v2424 = vpop.permute.xlu0 %2423
    %2425 = vrot.lane.b32.xlu0 %v281, 56
    %v2426 = vpop.permute.xlu0 %2425
    %v2427 = vsel %vm367, %v2422, 0
    %v2429 = vsel %vm367, %v2424, 0
    %v2431 = vsel %vm367, %v2426, 0
    %2433 = vmatprep.subr.mxu0 0.0
    %2434 = vmatpush1.xpose.msra.mxu0 0.0
    %2435 = vmatprep.subr.mxu0 0.0
    %2436 = vmatpush1.xpose.msra.mxu0 0.0
    %2437 = vmatprep.subr.mxu0 0.0
    %2438 = vmatpush1.xpose.msra.mxu0 0.0
    %2439 = vmatprep.subr.mxu0 0.0
    %2440 = vmatpush1.xpose.msra.mxu0 0.0
    %2441 = vmatprep.subr.mxu0 0.0
    %2442 = vmatpush1.xpose.msra.mxu0 0.0
    %2443 = vmatprep.subr.mxu0 0.0
    %2444 = vmatpush1.xpose.msra.mxu0 0.0
    %2445 = vmatprep.subr.mxu0 0.0
    %2446 = vmatpush1.xpose.msra.mxu0 0.0
    %2447 = vmatprep.subr.mxu0 0.0
    %2448 = vmatpush1.xpose.msra.mxu0 0.0
    %2449 = vmatprep.subr.mxu0 0.0
    %2450 = vmatpush1.xpose.msra.mxu0 0.0
    %2451 = vmatprep.subr.mxu0 0.0
    %2452 = vmatpush1.xpose.msra.mxu0 0.0
    %2453 = vmatprep.subr.mxu0 0.0
    %2454 = vmatpush1.xpose.msra.mxu0 0.0
    %2455 = vmatprep.subr.mxu0 0.0
    %2456 = vmatpush1.xpose.msra.mxu0 0.0
    %2457 = vmatprep.subr.mxu0 0.0
    %2458 = vmatpush1.xpose.msra.mxu0 0.0
    %2459 = vmatprep.subr.mxu0 0.0
    %2460 = vmatpush1.xpose.msra.mxu0 0.0
    %2461 = vmatprep.subr.mxu0 0.0
    %2462 = vmatpush1.xpose.msra.mxu0 %v2431
    %2463 = vmatprep.subr.mxu0 0.0
    %2464 = vmatpush1.xpose.msra.mxu0 %v2429
    %2465 = vmatprep.subr.mxu0 0.0
    %2466 = vmatpush2.xpose.msra.mxu0 0.0
    %2467 = vmatprep.subr.mxu0 0.0
    %2468 = vmatpush2.xpose.msra.mxu0 0.0
    %2469 = vmatprep.subr.mxu0 0.0
    %2470 = vmatpush2.xpose.msra.mxu0 0.0
    %2471 = vmatprep.subr.mxu0 0.0
    %2472 = vmatpush2.xpose.msra.mxu0 0.0
    %2473 = vmatprep.subr.mxu0 0.0
    %2474 = vmatpush2.xpose.msra.mxu0 0.0
    %2475 = vmatprep.subr.mxu0 0.0
    %2476 = vmatpush2.xpose.msra.mxu0 0.0
    %2477 = vmatprep.subr.mxu0 0.0
    %2478 = vmatpush2.xpose.msra.mxu0 0.0
    %2479 = vmatprep.subr.mxu0 0.0
    %2480 = vmatpush2.xpose.msra.mxu0 0.0
    %2481 = vmatprep.subr.mxu0 0.0
    %2482 = vmatpush2.xpose.msra.mxu0 0.0
    %2483 = vmatprep.subr.mxu0 0.0
    %2484 = vmatpush2.xpose.msra.mxu0 0.0
    %2485 = vmatprep.subr.mxu0 0.0
    %2486 = vmatpush2.xpose.msra.mxu0 0.0
    %2487 = vmatprep.subr.mxu0 0.0
    %2488 = vmatpush2.xpose.msra.mxu0 0.0
    %2489 = vmatprep.subr.mxu0 0.0
    %2490 = vmatpush2.xpose.msra.mxu0 0.0
    %2491 = vmatprep.subr.mxu0 0.0
    %2492 = vmatpush2.xpose.msra.mxu0 0.0
    %2493 = vmatprep.subr.mxu0 0.0
    %2494 = vmatpush2.xpose.msra.mxu0 0.0
    %2495 = vmatprep.subr.mxu0 0.0
    %2496 = vmatpush2.xpose.msra.mxu0 0.0
    %2497 = vmatprep.mubr.f32.mxu0 0.0
    %2498 = vmatmul.mubr.f32.gmra.mxu0 %v2427
    %v2499 = vpop.f32.mrf.mxu0
    %v2500 = vadd.f32 0.0, %v2499
    %v2501 = vpop.f32.mrf.mxu0
    %2502 = vdwg.mxu0
    %v2503 = vsel %vm526, %v2418, -inf
    %2504 = vmax.xlane.f32.xlu0 %v2503
    %v2505 = vpop.xlane.xlu0 %2504
    %v2506 = vsel %vm526, %v2500, -inf
    %2507 = vmax.xlane.f32.xlu0 %v2506
    %v2508 = vpop.xlane.xlu0 %2507
    %v2509 = vsub.f32 %v2418, %v2505
    %v2510 = vsub.f32 %v2500, %v2508
    %v2511 = vmul.f32 %v2509, 1.442695
    %v2512 = vpow.pop %v2511
    %v2513 = vmul.f32 %v2510, 1.442695
    %v2514 = vpow.pop %v2513
    %v2515 = vsel %vm526, %v2512, 0.0
    %2516 = vadd.xlane.f32.xlu0 %v2515
    %v2517 = vpop.xlane.xlu0 %2516
    %v2518 = vsel %vm526, %v2514, 0.0
    %2519 = vadd.xlane.f32.xlu0 %v2518
    %v2520 = vpop.xlane.xlu0 %2519
    %v2521 = vrcp.pop %v2517
    %v2522 = vrcp.pop %v2520
    %v2523 = vmul.f32 %v2517, %v2521
    %v2524 = vmul.f32 %v2520, %v2522
    %v2525 = vsub.f32 2.0, %v2523
    %v2526 = vsub.f32 2.0, %v2524
    %v2527 = vmul.f32 %v2521, %v2525
    %v2528 = vmul.f32 %v2522, %v2526
    %2529 = vrot.lane.b32.xlu0 %v266, 24
    %v2530 = vpop.permute.xlu0 %2529
    %2531 = vrot.lane.b32.xlu0 %v271, 24
    %v2532 = vpop.permute.xlu0 %2531
    %v2536 = vsel %vm526, %v2512, 0
    %2538 = vmatprep.subr.mxu0 0.0
    %2539 = vmatpush1.msra.mxu0 0.0
    %2540 = vmatprep.subr.mxu0 0.0
    %2541 = vmatpush1.msra.mxu0 0.0
    %2542 = vmatprep.subr.mxu0 0.0
    %2543 = vmatpush1.msra.mxu0 0.0
    %2544 = vmatprep.subr.mxu0 0.0
    %2545 = vmatpush1.msra.mxu0 0.0
    %2546 = vmatprep.subr.mxu0 0.0
    %2547 = vmatpush1.msra.mxu0 0.0
    %2548 = vmatprep.subr.mxu0 0.0
    %2549 = vmatpush1.msra.mxu0 0.0
    %2550 = vmatprep.subr.mxu0 0.0
    %2551 = vmatpush1.msra.mxu0 0.0
    %2552 = vmatprep.subr.mxu0 0.0
    %2553 = vmatpush1.msra.mxu0 0.0
    %2554 = vmatprep.subr.mxu0 0.0
    %2555 = vmatpush1.msra.mxu0 0.0
    %2556 = vmatprep.subr.mxu0 0.0
    %2557 = vmatpush1.msra.mxu0 0.0
    %2558 = vmatprep.subr.mxu0 0.0
    %2559 = vmatpush1.msra.mxu0 0.0
    %2560 = vmatprep.subr.mxu0 0.0
    %2561 = vmatpush1.msra.mxu0 0.0
    %2562 = vmatprep.subr.mxu0 0.0
    %2563 = vmatpush1.msra.mxu0 0.0
    %2564 = vmatprep.subr.mxu0 0.0
    %2565 = vmatpush1.msra.mxu0 0.0
    %2566 = vmatprep.subr.mxu0 0.0
    %2567 = vmatpush1.msra.mxu0 %v2532
    %2568 = vmatprep.subr.mxu0 0.0
    %2569 = vmatpush1.msra.mxu0 %v2530
    %2570 = vmatprep.subr.mxu0 0.0
    %2571 = vmatpush2.msra.mxu0 0.0
    %2572 = vmatprep.subr.mxu0 0.0
    %2573 = vmatpush2.msra.mxu0 0.0
    %2574 = vmatprep.subr.mxu0 0.0
    %2575 = vmatpush2.msra.mxu0 0.0
    %2576 = vmatprep.subr.mxu0 0.0
    %2577 = vmatpush2.msra.mxu0 0.0
    %2578 = vmatprep.subr.mxu0 0.0
    %2579 = vmatpush2.msra.mxu0 0.0
    %2580 = vmatprep.subr.mxu0 0.0
    %2581 = vmatpush2.msra.mxu0 0.0
    %2582 = vmatprep.subr.mxu0 0.0
    %2583 = vmatpush2.msra.mxu0 0.0
    %2584 = vmatprep.subr.mxu0 0.0
    %2585 = vmatpush2.msra.mxu0 0.0
    %2586 = vmatprep.subr.mxu0 0.0
    %2587 = vmatpush2.msra.mxu0 0.0
    %2588 = vmatprep.subr.mxu0 0.0
    %2589 = vmatpush2.msra.mxu0 0.0
    %2590 = vmatprep.subr.mxu0 0.0
    %2591 = vmatpush2.msra.mxu0 0.0
    %2592 = vmatprep.subr.mxu0 0.0
    %2593 = vmatpush2.msra.mxu0 0.0
    %2594 = vmatprep.subr.mxu0 0.0
    %2595 = vmatpush2.msra.mxu0 0.0
    %2596 = vmatprep.subr.mxu0 0.0
    %2597 = vmatpush2.msra.mxu0 0.0
    %2598 = vmatprep.subr.mxu0 0.0
    %2599 = vmatpush2.msra.mxu0 0.0
    %2600 = vmatprep.subr.mxu0 0.0
    %2601 = vmatpush2.msra.mxu0 0.0
    %2602 = vmatprep.mubr.f32.mxu0 0.0
    %2603 = vmatmul.mubr.f32.gmra.mxu0 %v2536
    %v2604 = vpop.f32.mrf.mxu0
    %v2605 = vadd.f32 0.0, %v2604
    %v2606 = vpop.f32.mrf.mxu0
    %2607 = vdwg.mxu0
    %2608 = vrot.lane.b32.xlu0 %v276, 24
    %v2609 = vpop.permute.xlu0 %2608
    %2610 = vrot.lane.b32.xlu0 %v281, 24
    %v2611 = vpop.permute.xlu0 %2610
    %v2615 = vsel %vm526, %v2514, 0
    %2617 = vmatprep.subr.mxu0 0.0
    %2618 = vmatpush1.msra.mxu0 0.0
    %2619 = vmatprep.subr.mxu0 0.0
    %2620 = vmatpush1.msra.mxu0 0.0
    %2621 = vmatprep.subr.mxu0 0.0
    %2622 = vmatpush1.msra.mxu0 0.0
    %2623 = vmatprep.subr.mxu0 0.0
    %2624 = vmatpush1.msra.mxu0 0.0
    %2625 = vmatprep.subr.mxu0 0.0
    %2626 = vmatpush1.msra.mxu0 0.0
    %2627 = vmatprep.subr.mxu0 0.0
    %2628 = vmatpush1.msra.mxu0 0.0
    %2629 = vmatprep.subr.mxu0 0.0
    %2630 = vmatpush1.msra.mxu0 0.0
    %2631 = vmatprep.subr.mxu0 0.0
    %2632 = vmatpush1.msra.mxu0 0.0
    %2633 = vmatprep.subr.mxu0 0.0
    %2634 = vmatpush1.msra.mxu0 0.0
    %2635 = vmatprep.subr.mxu0 0.0
    %2636 = vmatpush1.msra.mxu0 0.0
    %2637 = vmatprep.subr.mxu0 0.0
    %2638 = vmatpush1.msra.mxu0 0.0
    %2639 = vmatprep.subr.mxu0 0.0
    %2640 = vmatpush1.msra.mxu0 0.0
    %2641 = vmatprep.subr.mxu0 0.0
    %2642 = vmatpush1.msra.mxu0 0.0
    %2643 = vmatprep.subr.mxu0 0.0
    %2644 = vmatpush1.msra.mxu0 0.0
    %2645 = vmatprep.subr.mxu0 0.0
    %2646 = vmatpush1.msra.mxu0 %v2611
    %2647 = vmatprep.subr.mxu0 0.0
    %2648 = vmatpush1.msra.mxu0 %v2609
    %2649 = vmatprep.subr.mxu0 0.0
    %2650 = vmatpush2.msra.mxu0 0.0
    %2651 = vmatprep.subr.mxu0 0.0
    %2652 = vmatpush2.msra.mxu0 0.0
    %2653 = vmatprep.subr.mxu0 0.0
    %2654 = vmatpush2.msra.mxu0 0.0
    %2655 = vmatprep.subr.mxu0 0.0
    %2656 = vmatpush2.msra.mxu0 0.0
    %2657 = vmatprep.subr.mxu0 0.0
    %2658 = vmatpush2.msra.mxu0 0.0
    %2659 = vmatprep.subr.mxu0 0.0
    %2660 = vmatpush2.msra.mxu0 0.0
    %2661 = vmatprep.subr.mxu0 0.0
    %2662 = vmatpush2.msra.mxu0 0.0
    %2663 = vmatprep.subr.mxu0 0.0
    %2664 = vmatpush2.msra.mxu0 0.0
    %2665 = vmatprep.subr.mxu0 0.0
    %2666 = vmatpush2.msra.mxu0 0.0
    %2667 = vmatprep.subr.mxu0 0.0
    %2668 = vmatpush2.msra.mxu0 0.0
    %2669 = vmatprep.subr.mxu0 0.0
    %2670 = vmatpush2.msra.mxu0 0.0
    %2671 = vmatprep.subr.mxu0 0.0
    %2672 = vmatpush2.msra.mxu0 0.0
    %2673 = vmatprep.subr.mxu0 0.0
    %2674 = vmatpush2.msra.mxu0 0.0
    %2675 = vmatprep.subr.mxu0 0.0
    %2676 = vmatpush2.msra.mxu0 0.0
    %2677 = vmatprep.subr.mxu0 0.0
    %2678 = vmatpush2.msra.mxu0 0.0
    %2679 = vmatprep.subr.mxu0 0.0
    %2680 = vmatpush2.msra.mxu0 0.0
    %2681 = vmatprep.mubr.f32.mxu0 0.0
    %2682 = vmatmul.mubr.f32.gmra.mxu0 %v2615
    %v2683 = vpop.f32.mrf.mxu0
    %v2684 = vadd.f32 0.0, %v2683
    %v2685 = vpop.f32.mrf.mxu0
    %2686 = vdwg.mxu0
    %v2687 = vmul.f32 %v2605, %v2527
    %v2688 = vmul.f32 %v2684, %v2528
    %2689 = vrot.lane.b32.xlu0 %v1989, 112
    %v2690 = vpop.permute.xlu0 %2689
    %2691 = vrot.lane.b32.xlu0 %v266, 48
    %v2692 = vpop.permute.xlu0 %2691
    %2693 = vrot.lane.b32.xlu0 %v271, 48
    %v2694 = vpop.permute.xlu0 %2693
    %v2695 = vsel %vm367, %v2690, 0
    %v2697 = vsel %vm367, %v2692, 0
    %v2699 = vsel %vm367, %v2694, 0
    %2701 = vmatprep.subr.mxu0 0.0
    %2702 = vmatpush1.xpose.msra.mxu0 0.0
    %2703 = vmatprep.subr.mxu0 0.0
    %2704 = vmatpush1.xpose.msra.mxu0 0.0
    %2705 = vmatprep.subr.mxu0 0.0
    %2706 = vmatpush1.xpose.msra.mxu0 0.0
    %2707 = vmatprep.subr.mxu0 0.0
    %2708 = vmatpush1.xpose.msra.mxu0 0.0
    %2709 = vmatprep.subr.mxu0 0.0
    %2710 = vmatpush1.xpose.msra.mxu0 0.0
    %2711 = vmatprep.subr.mxu0 0.0
    %2712 = vmatpush1.xpose.msra.mxu0 0.0
    %2713 = vmatprep.subr.mxu0 0.0
    %2714 = vmatpush1.xpose.msra.mxu0 0.0
    %2715 = vmatprep.subr.mxu0 0.0
    %2716 = vmatpush1.xpose.msra.mxu0 0.0
    %2717 = vmatprep.subr.mxu0 0.0
    %2718 = vmatpush1.xpose.msra.mxu0 0.0
    %2719 = vmatprep.subr.mxu0 0.0
    %2720 = vmatpush1.xpose.msra.mxu0 0.0
    %2721 = vmatprep.subr.mxu0 0.0
    %2722 = vmatpush1.xpose.msra.mxu0 0.0
    %2723 = vmatprep.subr.mxu0 0.0
    %2724 = vmatpush1.xpose.msra.mxu0 0.0
    %2725 = vmatprep.subr.mxu0 0.0
    %2726 = vmatpush1.xpose.msra.mxu0 0.0
    %2727 = vmatprep.subr.mxu0 0.0
    %2728 = vmatpush1.xpose.msra.mxu0 0.0
    %2729 = vmatprep.subr.mxu0 0.0
    %2730 = vmatpush1.xpose.msra.mxu0 %v2699
    %2731 = vmatprep.subr.mxu0 0.0
    %2732 = vmatpush1.xpose.msra.mxu0 %v2697
    %2733 = vmatprep.subr.mxu0 0.0
    %2734 = vmatpush2.xpose.msra.mxu0 0.0
    %2735 = vmatprep.subr.mxu0 0.0
    %2736 = vmatpush2.xpose.msra.mxu0 0.0
    %2737 = vmatprep.subr.mxu0 0.0
    %2738 = vmatpush2.xpose.msra.mxu0 0.0
    %2739 = vmatprep.subr.mxu0 0.0
    %2740 = vmatpush2.xpose.msra.mxu0 0.0
    %2741 = vmatprep.subr.mxu0 0.0
    %2742 = vmatpush2.xpose.msra.mxu0 0.0
    %2743 = vmatprep.subr.mxu0 0.0
    %2744 = vmatpush2.xpose.msra.mxu0 0.0
    %2745 = vmatprep.subr.mxu0 0.0
    %2746 = vmatpush2.xpose.msra.mxu0 0.0
    %2747 = vmatprep.subr.mxu0 0.0
    %2748 = vmatpush2.xpose.msra.mxu0 0.0
    %2749 = vmatprep.subr.mxu0 0.0
    %2750 = vmatpush2.xpose.msra.mxu0 0.0
    %2751 = vmatprep.subr.mxu0 0.0
    %2752 = vmatpush2.xpose.msra.mxu0 0.0
    %2753 = vmatprep.subr.mxu0 0.0
    %2754 = vmatpush2.xpose.msra.mxu0 0.0
    %2755 = vmatprep.subr.mxu0 0.0
    %2756 = vmatpush2.xpose.msra.mxu0 0.0
    %2757 = vmatprep.subr.mxu0 0.0
    %2758 = vmatpush2.xpose.msra.mxu0 0.0
    %2759 = vmatprep.subr.mxu0 0.0
    %2760 = vmatpush2.xpose.msra.mxu0 0.0
    %2761 = vmatprep.subr.mxu0 0.0
    %2762 = vmatpush2.xpose.msra.mxu0 0.0
    %2763 = vmatprep.subr.mxu0 0.0
    %2764 = vmatpush2.xpose.msra.mxu0 0.0
    %2765 = vmatprep.mubr.f32.mxu0 0.0
    %2766 = vmatmul.mubr.f32.gmra.mxu0 %v2695
    %v2767 = vpop.f32.mrf.mxu0
    %v2768 = vadd.f32 0.0, %v2767
    %v2769 = vpop.f32.mrf.mxu0
    %2770 = vdwg.mxu0
    %2771 = vrot.lane.b32.xlu0 %v1990, 112
    %v2772 = vpop.permute.xlu0 %2771
    %2773 = vrot.lane.b32.xlu0 %v276, 48
    %v2774 = vpop.permute.xlu0 %2773
    %2775 = vrot.lane.b32.xlu0 %v281, 48
    %v2776 = vpop.permute.xlu0 %2775
    %v2777 = vsel %vm367, %v2772, 0
    %v2779 = vsel %vm367, %v2774, 0
    %v2781 = vsel %vm367, %v2776, 0
    %2783 = vmatprep.subr.mxu0 0.0
    %2784 = vmatpush1.xpose.msra.mxu0 0.0
    %2785 = vmatprep.subr.mxu0 0.0
    %2786 = vmatpush1.xpose.msra.mxu0 0.0
    %2787 = vmatprep.subr.mxu0 0.0
    %2788 = vmatpush1.xpose.msra.mxu0 0.0
    %2789 = vmatprep.subr.mxu0 0.0
    %2790 = vmatpush1.xpose.msra.mxu0 0.0
    %2791 = vmatprep.subr.mxu0 0.0
    %2792 = vmatpush1.xpose.msra.mxu0 0.0
    %2793 = vmatprep.subr.mxu0 0.0
    %2794 = vmatpush1.xpose.msra.mxu0 0.0
    %2795 = vmatprep.subr.mxu0 0.0
    %2796 = vmatpush1.xpose.msra.mxu0 0.0
    %2797 = vmatprep.subr.mxu0 0.0
    %2798 = vmatpush1.xpose.msra.mxu0 0.0
    %2799 = vmatprep.subr.mxu0 0.0
    %2800 = vmatpush1.xpose.msra.mxu0 0.0
    %2801 = vmatprep.subr.mxu0 0.0
    %2802 = vmatpush1.xpose.msra.mxu0 0.0
    %2803 = vmatprep.subr.mxu0 0.0
    %2804 = vmatpush1.xpose.msra.mxu0 0.0
    %2805 = vmatprep.subr.mxu0 0.0
    %2806 = vmatpush1.xpose.msra.mxu0 0.0
    %2807 = vmatprep.subr.mxu0 0.0
    %2808 = vmatpush1.xpose.msra.mxu0 0.0
    %2809 = vmatprep.subr.mxu0 0.0
    %2810 = vmatpush1.xpose.msra.mxu0 0.0
    %2811 = vmatprep.subr.mxu0 0.0
    %2812 = vmatpush1.xpose.msra.mxu0 %v2781
    %2813 = vmatprep.subr.mxu0 0.0
    %2814 = vmatpush1.xpose.msra.mxu0 %v2779
    %2815 = vmatprep.subr.mxu0 0.0
    %2816 = vmatpush2.xpose.msra.mxu0 0.0
    %2817 = vmatprep.subr.mxu0 0.0
    %2818 = vmatpush2.xpose.msra.mxu0 0.0
    %2819 = vmatprep.subr.mxu0 0.0
    %2820 = vmatpush2.xpose.msra.mxu0 0.0
    %2821 = vmatprep.subr.mxu0 0.0
    %2822 = vmatpush2.xpose.msra.mxu0 0.0
    %2823 = vmatprep.subr.mxu0 0.0
    %2824 = vmatpush2.xpose.msra.mxu0 0.0
    %2825 = vmatprep.subr.mxu0 0.0
    %2826 = vmatpush2.xpose.msra.mxu0 0.0
    %2827 = vmatprep.subr.mxu0 0.0
    %2828 = vmatpush2.xpose.msra.mxu0 0.0
    %2829 = vmatprep.subr.mxu0 0.0
    %2830 = vmatpush2.xpose.msra.mxu0 0.0
    %2831 = vmatprep.subr.mxu0 0.0
    %2832 = vmatpush2.xpose.msra.mxu0 0.0
    %2833 = vmatprep.subr.mxu0 0.0
    %2834 = vmatpush2.xpose.msra.mxu0 0.0
    %2835 = vmatprep.subr.mxu0 0.0
    %2836 = vmatpush2.xpose.msra.mxu0 0.0
    %2837 = vmatprep.subr.mxu0 0.0
    %2838 = vmatpush2.xpose.msra.mxu0 0.0
    %2839 = vmatprep.subr.mxu0 0.0
    %2840 = vmatpush2.xpose.msra.mxu0 0.0
    %2841 = vmatprep.subr.mxu0 0.0
    %2842 = vmatpush2.xpose.msra.mxu0 0.0
    %2843 = vmatprep.subr.mxu0 0.0
    %2844 = vmatpush2.xpose.msra.mxu0 0.0
    %2845 = vmatprep.subr.mxu0 0.0
    %2846 = vmatpush2.xpose.msra.mxu0 0.0
    %2847 = vmatprep.mubr.f32.mxu0 0.0
    %2848 = vmatmul.mubr.f32.gmra.mxu0 %v2777
    %v2849 = vpop.f32.mrf.mxu0
    %v2850 = vadd.f32 0.0, %v2849
    %v2851 = vpop.f32.mrf.mxu0
    %2852 = vdwg.mxu0
    %v2853 = vsel %vm526, %v2768, -inf
    %2854 = vmax.xlane.f32.xlu0 %v2853
    %v2855 = vpop.xlane.xlu0 %2854
    %v2856 = vsel %vm526, %v2850, -inf
    %2857 = vmax.xlane.f32.xlu0 %v2856
    %v2858 = vpop.xlane.xlu0 %2857
    %v2859 = vsub.f32 %v2768, %v2855
    %v2860 = vsub.f32 %v2850, %v2858
    %v2861 = vmul.f32 %v2859, 1.442695
    %v2862 = vpow.pop %v2861
    %v2863 = vmul.f32 %v2860, 1.442695
    %v2864 = vpow.pop %v2863
    %v2865 = vsel %vm526, %v2862, 0.0
    %2866 = vadd.xlane.f32.xlu0 %v2865
    %v2867 = vpop.xlane.xlu0 %2866
    %v2868 = vsel %vm526, %v2864, 0.0
    %2869 = vadd.xlane.f32.xlu0 %v2868
    %v2870 = vpop.xlane.xlu0 %2869
    %v2871 = vrcp.pop %v2867
    %v2872 = vrcp.pop %v2870
    %v2873 = vmul.f32 %v2867, %v2871
    %v2874 = vmul.f32 %v2870, %v2872
    %v2875 = vsub.f32 2.0, %v2873
    %v2876 = vsub.f32 2.0, %v2874
    %v2877 = vmul.f32 %v2871, %v2875
    %v2878 = vmul.f32 %v2872, %v2876
    %2879 = vrot.lane.b32.xlu0 %v266, 16
    %v2880 = vpop.permute.xlu0 %2879
    %2881 = vrot.lane.b32.xlu0 %v271, 16
    %v2882 = vpop.permute.xlu0 %2881
    %v2886 = vsel %vm526, %v2862, 0
    %2888 = vmatprep.subr.mxu0 0.0
    %2889 = vmatpush1.msra.mxu0 0.0
    %2890 = vmatprep.subr.mxu0 0.0
    %2891 = vmatpush1.msra.mxu0 0.0
    %2892 = vmatprep.subr.mxu0 0.0
    %2893 = vmatpush1.msra.mxu0 0.0
    %2894 = vmatprep.subr.mxu0 0.0
    %2895 = vmatpush1.msra.mxu0 0.0
    %2896 = vmatprep.subr.mxu0 0.0
    %2897 = vmatpush1.msra.mxu0 0.0
    %2898 = vmatprep.subr.mxu0 0.0
    %2899 = vmatpush1.msra.mxu0 0.0
    %2900 = vmatprep.subr.mxu0 0.0
    %2901 = vmatpush1.msra.mxu0 0.0
    %2902 = vmatprep.subr.mxu0 0.0
    %2903 = vmatpush1.msra.mxu0 0.0
    %2904 = vmatprep.subr.mxu0 0.0
    %2905 = vmatpush1.msra.mxu0 0.0
    %2906 = vmatprep.subr.mxu0 0.0
    %2907 = vmatpush1.msra.mxu0 0.0
    %2908 = vmatprep.subr.mxu0 0.0
    %2909 = vmatpush1.msra.mxu0 0.0
    %2910 = vmatprep.subr.mxu0 0.0
    %2911 = vmatpush1.msra.mxu0 0.0
    %2912 = vmatprep.subr.mxu0 0.0
    %2913 = vmatpush1.msra.mxu0 0.0
    %2914 = vmatprep.subr.mxu0 0.0
    %2915 = vmatpush1.msra.mxu0 0.0
    %2916 = vmatprep.subr.mxu0 0.0
    %2917 = vmatpush1.msra.mxu0 %v2882
    %2918 = vmatprep.subr.mxu0 0.0
    %2919 = vmatpush1.msra.mxu0 %v2880
    %2920 = vmatprep.subr.mxu0 0.0
    %2921 = vmatpush2.msra.mxu0 0.0
    %2922 = vmatprep.subr.mxu0 0.0
    %2923 = vmatpush2.msra.mxu0 0.0
    %2924 = vmatprep.subr.mxu0 0.0
    %2925 = vmatpush2.msra.mxu0 0.0
    %2926 = vmatprep.subr.mxu0 0.0
    %2927 = vmatpush2.msra.mxu0 0.0
    %2928 = vmatprep.subr.mxu0 0.0
    %2929 = vmatpush2.msra.mxu0 0.0
    %2930 = vmatprep.subr.mxu0 0.0
    %2931 = vmatpush2.msra.mxu0 0.0
    %2932 = vmatprep.subr.mxu0 0.0
    %2933 = vmatpush2.msra.mxu0 0.0
    %2934 = vmatprep.subr.mxu0 0.0
    %2935 = vmatpush2.msra.mxu0 0.0
    %2936 = vmatprep.subr.mxu0 0.0
    %2937 = vmatpush2.msra.mxu0 0.0
    %2938 = vmatprep.subr.mxu0 0.0
    %2939 = vmatpush2.msra.mxu0 0.0
    %2940 = vmatprep.subr.mxu0 0.0
    %2941 = vmatpush2.msra.mxu0 0.0
    %2942 = vmatprep.subr.mxu0 0.0
    %2943 = vmatpush2.msra.mxu0 0.0
    %2944 = vmatprep.subr.mxu0 0.0
    %2945 = vmatpush2.msra.mxu0 0.0
    %2946 = vmatprep.subr.mxu0 0.0
    %2947 = vmatpush2.msra.mxu0 0.0
    %2948 = vmatprep.subr.mxu0 0.0
    %2949 = vmatpush2.msra.mxu0 0.0
    %2950 = vmatprep.subr.mxu0 0.0
    %2951 = vmatpush2.msra.mxu0 0.0
    %2952 = vmatprep.mubr.f32.mxu0 0.0
    %2953 = vmatmul.mubr.f32.gmra.mxu0 %v2886
    %v2954 = vpop.f32.mrf.mxu0
    %v2955 = vadd.f32 0.0, %v2954
    %v2956 = vpop.f32.mrf.mxu0
    %2957 = vdwg.mxu0
    %2958 = vrot.lane.b32.xlu0 %v276, 16
    %v2959 = vpop.permute.xlu0 %2958
    %2960 = vrot.lane.b32.xlu0 %v281, 16
    %v2961 = vpop.permute.xlu0 %2960
    %v2965 = vsel %vm526, %v2864, 0
    %2967 = vmatprep.subr.mxu0 0.0
    %2968 = vmatpush1.msra.mxu0 0.0
    %2969 = vmatprep.subr.mxu0 0.0
    %2970 = vmatpush1.msra.mxu0 0.0
    %2971 = vmatprep.subr.mxu0 0.0
    %2972 = vmatpush1.msra.mxu0 0.0
    %2973 = vmatprep.subr.mxu0 0.0
    %2974 = vmatpush1.msra.mxu0 0.0
    %2975 = vmatprep.subr.mxu0 0.0
    %2976 = vmatpush1.msra.mxu0 0.0
    %2977 = vmatprep.subr.mxu0 0.0
    %2978 = vmatpush1.msra.mxu0 0.0
    %2979 = vmatprep.subr.mxu0 0.0
    %2980 = vmatpush1.msra.mxu0 0.0
    %2981 = vmatprep.subr.mxu0 0.0
    %2982 = vmatpush1.msra.mxu0 0.0
    %2983 = vmatprep.subr.mxu0 0.0
    %2984 = vmatpush1.msra.mxu0 0.0
    %2985 = vmatprep.subr.mxu0 0.0
    %2986 = vmatpush1.msra.mxu0 0.0
    %2987 = vmatprep.subr.mxu0 0.0
    %2988 = vmatpush1.msra.mxu0 0.0
    %2989 = vmatprep.subr.mxu0 0.0
    %2990 = vmatpush1.msra.mxu0 0.0
    %2991 = vmatprep.subr.mxu0 0.0
    %2992 = vmatpush1.msra.mxu0 0.0
    %2993 = vmatprep.subr.mxu0 0.0
    %2994 = vmatpush1.msra.mxu0 0.0
    %2995 = vmatprep.subr.mxu0 0.0
    %2996 = vmatpush1.msra.mxu0 %v2961
    %2997 = vmatprep.subr.mxu0 0.0
    %2998 = vmatpush1.msra.mxu0 %v2959
    %2999 = vmatprep.subr.mxu0 0.0
    %3000 = vmatpush2.msra.mxu0 0.0
    %3001 = vmatprep.subr.mxu0 0.0
    %3002 = vmatpush2.msra.mxu0 0.0
    %3003 = vmatprep.subr.mxu0 0.0
    %3004 = vmatpush2.msra.mxu0 0.0
    %3005 = vmatprep.subr.mxu0 0.0
    %3006 = vmatpush2.msra.mxu0 0.0
    %3007 = vmatprep.subr.mxu0 0.0
    %3008 = vmatpush2.msra.mxu0 0.0
    %3009 = vmatprep.subr.mxu0 0.0
    %3010 = vmatpush2.msra.mxu0 0.0
    %3011 = vmatprep.subr.mxu0 0.0
    %3012 = vmatpush2.msra.mxu0 0.0
    %3013 = vmatprep.subr.mxu0 0.0
    %3014 = vmatpush2.msra.mxu0 0.0
    %3015 = vmatprep.subr.mxu0 0.0
    %3016 = vmatpush2.msra.mxu0 0.0
    %3017 = vmatprep.subr.mxu0 0.0
    %3018 = vmatpush2.msra.mxu0 0.0
    %3019 = vmatprep.subr.mxu0 0.0
    %3020 = vmatpush2.msra.mxu0 0.0
    %3021 = vmatprep.subr.mxu0 0.0
    %3022 = vmatpush2.msra.mxu0 0.0
    %3023 = vmatprep.subr.mxu0 0.0
    %3024 = vmatpush2.msra.mxu0 0.0
    %3025 = vmatprep.subr.mxu0 0.0
    %3026 = vmatpush2.msra.mxu0 0.0
    %3027 = vmatprep.subr.mxu0 0.0
    %3028 = vmatpush2.msra.mxu0 0.0
    %3029 = vmatprep.subr.mxu0 0.0
    %3030 = vmatpush2.msra.mxu0 0.0
    %3031 = vmatprep.mubr.f32.mxu0 0.0
    %3032 = vmatmul.mubr.f32.gmra.mxu0 %v2965
    %v3033 = vpop.f32.mrf.mxu0
    %v3034 = vadd.f32 0.0, %v3033
    %v3035 = vpop.f32.mrf.mxu0
    %3036 = vdwg.mxu0
    %v3037 = vmul.f32 %v2955, %v2877
    %v3038 = vmul.f32 %v3034, %v2878
    %3039 = vrot.lane.b32.xlu0 %v1989, 104
    %v3040 = vpop.permute.xlu0 %3039
    %3041 = vrot.lane.b32.xlu0 %v266, 40
    %v3042 = vpop.permute.xlu0 %3041
    %3043 = vrot.lane.b32.xlu0 %v271, 40
    %v3044 = vpop.permute.xlu0 %3043
    %v3045 = vsel %vm367, %v3040, 0
    %v3047 = vsel %vm367, %v3042, 0
    %v3049 = vsel %vm367, %v3044, 0
    %3051 = vmatprep.subr.mxu0 0.0
    %3052 = vmatpush1.xpose.msra.mxu0 0.0
    %3053 = vmatprep.subr.mxu0 0.0
    %3054 = vmatpush1.xpose.msra.mxu0 0.0
    %3055 = vmatprep.subr.mxu0 0.0
    %3056 = vmatpush1.xpose.msra.mxu0 0.0
    %3057 = vmatprep.subr.mxu0 0.0
    %3058 = vmatpush1.xpose.msra.mxu0 0.0
    %3059 = vmatprep.subr.mxu0 0.0
    %3060 = vmatpush1.xpose.msra.mxu0 0.0
    %3061 = vmatprep.subr.mxu0 0.0
    %3062 = vmatpush1.xpose.msra.mxu0 0.0
    %3063 = vmatprep.subr.mxu0 0.0
    %3064 = vmatpush1.xpose.msra.mxu0 0.0
    %3065 = vmatprep.subr.mxu0 0.0
    %3066 = vmatpush1.xpose.msra.mxu0 0.0
    %3067 = vmatprep.subr.mxu0 0.0
    %3068 = vmatpush1.xpose.msra.mxu0 0.0
    %3069 = vmatprep.subr.mxu0 0.0
    %3070 = vmatpush1.xpose.msra.mxu0 0.0
    %3071 = vmatprep.subr.mxu0 0.0
    %3072 = vmatpush1.xpose.msra.mxu0 0.0
    %3073 = vmatprep.subr.mxu0 0.0
    %3074 = vmatpush1.xpose.msra.mxu0 0.0
    %3075 = vmatprep.subr.mxu0 0.0
    %3076 = vmatpush1.xpose.msra.mxu0 0.0
    %3077 = vmatprep.subr.mxu0 0.0
    %3078 = vmatpush1.xpose.msra.mxu0 0.0
    %3079 = vmatprep.subr.mxu0 0.0
    %3080 = vmatpush1.xpose.msra.mxu0 %v3049
    %3081 = vmatprep.subr.mxu0 0.0
    %3082 = vmatpush1.xpose.msra.mxu0 %v3047
    %3083 = vmatprep.subr.mxu0 0.0
    %3084 = vmatpush2.xpose.msra.mxu0 0.0
    %3085 = vmatprep.subr.mxu0 0.0
    %3086 = vmatpush2.xpose.msra.mxu0 0.0
    %3087 = vmatprep.subr.mxu0 0.0
    %3088 = vmatpush2.xpose.msra.mxu0 0.0
    %3089 = vmatprep.subr.mxu0 0.0
    %3090 = vmatpush2.xpose.msra.mxu0 0.0
    %3091 = vmatprep.subr.mxu0 0.0
    %3092 = vmatpush2.xpose.msra.mxu0 0.0
    %3093 = vmatprep.subr.mxu0 0.0
    %3094 = vmatpush2.xpose.msra.mxu0 0.0
    %3095 = vmatprep.subr.mxu0 0.0
    %3096 = vmatpush2.xpose.msra.mxu0 0.0
    %3097 = vmatprep.subr.mxu0 0.0
    %3098 = vmatpush2.xpose.msra.mxu0 0.0
    %3099 = vmatprep.subr.mxu0 0.0
    %3100 = vmatpush2.xpose.msra.mxu0 0.0
    %3101 = vmatprep.subr.mxu0 0.0
    %3102 = vmatpush2.xpose.msra.mxu0 0.0
    %3103 = vmatprep.subr.mxu0 0.0
    %3104 = vmatpush2.xpose.msra.mxu0 0.0
    %3105 = vmatprep.subr.mxu0 0.0
    %3106 = vmatpush2.xpose.msra.mxu0 0.0
    %3107 = vmatprep.subr.mxu0 0.0
    %3108 = vmatpush2.xpose.msra.mxu0 0.0
    %3109 = vmatprep.subr.mxu0 0.0
    %3110 = vmatpush2.xpose.msra.mxu0 0.0
    %3111 = vmatprep.subr.mxu0 0.0
    %3112 = vmatpush2.xpose.msra.mxu0 0.0
    %3113 = vmatprep.subr.mxu0 0.0
    %3114 = vmatpush2.xpose.msra.mxu0 0.0
    %3115 = vmatprep.mubr.f32.mxu0 0.0
    %3116 = vmatmul.mubr.f32.gmra.mxu0 %v3045
    %v3117 = vpop.f32.mrf.mxu0
    %v3118 = vadd.f32 0.0, %v3117
    %v3119 = vpop.f32.mrf.mxu0
    %3120 = vdwg.mxu0
    %3121 = vrot.lane.b32.xlu0 %v1990, 104
    %v3122 = vpop.permute.xlu0 %3121
    %3123 = vrot.lane.b32.xlu0 %v276, 40
    %v3124 = vpop.permute.xlu0 %3123
    %3125 = vrot.lane.b32.xlu0 %v281, 40
    %v3126 = vpop.permute.xlu0 %3125
    %v3127 = vsel %vm367, %v3122, 0
    %v3129 = vsel %vm367, %v3124, 0
    %v3131 = vsel %vm367, %v3126, 0
    %3133 = vmatprep.subr.mxu0 0.0
    %3134 = vmatpush1.xpose.msra.mxu0 0.0
    %3135 = vmatprep.subr.mxu0 0.0
    %3136 = vmatpush1.xpose.msra.mxu0 0.0
    %3137 = vmatprep.subr.mxu0 0.0
    %3138 = vmatpush1.xpose.msra.mxu0 0.0
    %3139 = vmatprep.subr.mxu0 0.0
    %3140 = vmatpush1.xpose.msra.mxu0 0.0
    %3141 = vmatprep.subr.mxu0 0.0
    %3142 = vmatpush1.xpose.msra.mxu0 0.0
    %3143 = vmatprep.subr.mxu0 0.0
    %3144 = vmatpush1.xpose.msra.mxu0 0.0
    %3145 = vmatprep.subr.mxu0 0.0
    %3146 = vmatpush1.xpose.msra.mxu0 0.0
    %3147 = vmatprep.subr.mxu0 0.0
    %3148 = vmatpush1.xpose.msra.mxu0 0.0
    %3149 = vmatprep.subr.mxu0 0.0
    %3150 = vmatpush1.xpose.msra.mxu0 0.0
    %3151 = vmatprep.subr.mxu0 0.0
    %3152 = vmatpush1.xpose.msra.mxu0 0.0
    %3153 = vmatprep.subr.mxu0 0.0
    %3154 = vmatpush1.xpose.msra.mxu0 0.0
    %3155 = vmatprep.subr.mxu0 0.0
    %3156 = vmatpush1.xpose.msra.mxu0 0.0
    %3157 = vmatprep.subr.mxu0 0.0
    %3158 = vmatpush1.xpose.msra.mxu0 0.0
    %3159 = vmatprep.subr.mxu0 0.0
    %3160 = vmatpush1.xpose.msra.mxu0 0.0
    %3161 = vmatprep.subr.mxu0 0.0
    %3162 = vmatpush1.xpose.msra.mxu0 %v3131
    %3163 = vmatprep.subr.mxu0 0.0
    %3164 = vmatpush1.xpose.msra.mxu0 %v3129
    %3165 = vmatprep.subr.mxu0 0.0
    %3166 = vmatpush2.xpose.msra.mxu0 0.0
    %3167 = vmatprep.subr.mxu0 0.0
    %3168 = vmatpush2.xpose.msra.mxu0 0.0
    %3169 = vmatprep.subr.mxu0 0.0
    %3170 = vmatpush2.xpose.msra.mxu0 0.0
    %3171 = vmatprep.subr.mxu0 0.0
    %3172 = vmatpush2.xpose.msra.mxu0 0.0
    %3173 = vmatprep.subr.mxu0 0.0
    %3174 = vmatpush2.xpose.msra.mxu0 0.0
    %3175 = vmatprep.subr.mxu0 0.0
    %3176 = vmatpush2.xpose.msra.mxu0 0.0
    %3177 = vmatprep.subr.mxu0 0.0
    %3178 = vmatpush2.xpose.msra.mxu0 0.0
    %3179 = vmatprep.subr.mxu0 0.0
    %3180 = vmatpush2.xpose.msra.mxu0 0.0
    %3181 = vmatprep.subr.mxu0 0.0
    %3182 = vmatpush2.xpose.msra.mxu0 0.0
    %3183 = vmatprep.subr.mxu0 0.0
    %3184 = vmatpush2.xpose.msra.mxu0 0.0
    %3185 = vmatprep.subr.mxu0 0.0
    %3186 = vmatpush2.xpose.msra.mxu0 0.0
    %3187 = vmatprep.subr.mxu0 0.0
    %3188 = vmatpush2.xpose.msra.mxu0 0.0
    %3189 = vmatprep.subr.mxu0 0.0
    %3190 = vmatpush2.xpose.msra.mxu0 0.0
    %3191 = vmatprep.subr.mxu0 0.0
    %3192 = vmatpush2.xpose.msra.mxu0 0.0
    %3193 = vmatprep.subr.mxu0 0.0
    %3194 = vmatpush2.xpose.msra.mxu0 0.0
    %3195 = vmatprep.subr.mxu0 0.0
    %3196 = vmatpush2.xpose.msra.mxu0 0.0
    %3197 = vmatprep.mubr.f32.mxu0 0.0
    %3198 = vmatmul.mubr.f32.gmra.mxu0 %v3127
    %v3199 = vpop.f32.mrf.mxu0
    %v3200 = vadd.f32 0.0, %v3199
    %v3201 = vpop.f32.mrf.mxu0
    %3202 = vdwg.mxu0
    %v3203 = vsel %vm526, %v3118, -inf
    %3204 = vmax.xlane.f32.xlu0 %v3203
    %v3205 = vpop.xlane.xlu0 %3204
    %v3206 = vsel %vm526, %v3200, -inf
    %3207 = vmax.xlane.f32.xlu0 %v3206
    %v3208 = vpop.xlane.xlu0 %3207
    %v3209 = vsub.f32 %v3118, %v3205
    %v3210 = vsub.f32 %v3200, %v3208
    %v3211 = vmul.f32 %v3209, 1.442695
    %v3212 = vpow.pop %v3211
    %v3213 = vmul.f32 %v3210, 1.442695
    %v3214 = vpow.pop %v3213
    %v3215 = vsel %vm526, %v3212, 0.0
    %3216 = vadd.xlane.f32.xlu0 %v3215
    %v3217 = vpop.xlane.xlu0 %3216
    %v3218 = vsel %vm526, %v3214, 0.0
    %3219 = vadd.xlane.f32.xlu0 %v3218
    %v3220 = vpop.xlane.xlu0 %3219
    %v3221 = vrcp.pop %v3217
    %v3222 = vrcp.pop %v3220
    %v3223 = vmul.f32 %v3217, %v3221
    %v3224 = vmul.f32 %v3220, %v3222
    %v3225 = vsub.f32 2.0, %v3223
    %v3226 = vsub.f32 2.0, %v3224
    %v3227 = vmul.f32 %v3221, %v3225
    %v3228 = vmul.f32 %v3222, %v3226
    %3229 = vrot.lane.b32.xlu0 %v266, 8
    %v3230 = vpop.permute.xlu0 %3229
    %3231 = vrot.lane.b32.xlu0 %v271, 8
    %v3232 = vpop.permute.xlu0 %3231
    %v3236 = vsel %vm526, %v3212, 0
    %3238 = vmatprep.subr.mxu0 0.0
    %3239 = vmatpush1.msra.mxu0 0.0
    %3240 = vmatprep.subr.mxu0 0.0
    %3241 = vmatpush1.msra.mxu0 0.0
    %3242 = vmatprep.subr.mxu0 0.0
    %3243 = vmatpush1.msra.mxu0 0.0
    %3244 = vmatprep.subr.mxu0 0.0
    %3245 = vmatpush1.msra.mxu0 0.0
    %3246 = vmatprep.subr.mxu0 0.0
    %3247 = vmatpush1.msra.mxu0 0.0
    %3248 = vmatprep.subr.mxu0 0.0
    %3249 = vmatpush1.msra.mxu0 0.0
    %3250 = vmatprep.subr.mxu0 0.0
    %3251 = vmatpush1.msra.mxu0 0.0
    %3252 = vmatprep.subr.mxu0 0.0
    %3253 = vmatpush1.msra.mxu0 0.0
    %3254 = vmatprep.subr.mxu0 0.0
    %3255 = vmatpush1.msra.mxu0 0.0
    %3256 = vmatprep.subr.mxu0 0.0
    %3257 = vmatpush1.msra.mxu0 0.0
    %3258 = vmatprep.subr.mxu0 0.0
    %3259 = vmatpush1.msra.mxu0 0.0
    %3260 = vmatprep.subr.mxu0 0.0
    %3261 = vmatpush1.msra.mxu0 0.0
    %3262 = vmatprep.subr.mxu0 0.0
    %3263 = vmatpush1.msra.mxu0 0.0
    %3264 = vmatprep.subr.mxu0 0.0
    %3265 = vmatpush1.msra.mxu0 0.0
    %3266 = vmatprep.subr.mxu0 0.0
    %3267 = vmatpush1.msra.mxu0 %v3232
    %3268 = vmatprep.subr.mxu0 0.0
    %3269 = vmatpush1.msra.mxu0 %v3230
    %3270 = vmatprep.subr.mxu0 0.0
    %3271 = vmatpush2.msra.mxu0 0.0
    %3272 = vmatprep.subr.mxu0 0.0
    %3273 = vmatpush2.msra.mxu0 0.0
    %3274 = vmatprep.subr.mxu0 0.0
    %3275 = vmatpush2.msra.mxu0 0.0
    %3276 = vmatprep.subr.mxu0 0.0
    %3277 = vmatpush2.msra.mxu0 0.0
    %3278 = vmatprep.subr.mxu0 0.0
    %3279 = vmatpush2.msra.mxu0 0.0
    %3280 = vmatprep.subr.mxu0 0.0
    %3281 = vmatpush2.msra.mxu0 0.0
    %3282 = vmatprep.subr.mxu0 0.0
    %3283 = vmatpush2.msra.mxu0 0.0
    %3284 = vmatprep.subr.mxu0 0.0
    %3285 = vmatpush2.msra.mxu0 0.0
    %3286 = vmatprep.subr.mxu0 0.0
    %3287 = vmatpush2.msra.mxu0 0.0
    %3288 = vmatprep.subr.mxu0 0.0
    %3289 = vmatpush2.msra.mxu0 0.0
    %3290 = vmatprep.subr.mxu0 0.0
    %3291 = vmatpush2.msra.mxu0 0.0
    %3292 = vmatprep.subr.mxu0 0.0
    %3293 = vmatpush2.msra.mxu0 0.0
    %3294 = vmatprep.subr.mxu0 0.0
    %3295 = vmatpush2.msra.mxu0 0.0
    %3296 = vmatprep.subr.mxu0 0.0
    %3297 = vmatpush2.msra.mxu0 0.0
    %3298 = vmatprep.subr.mxu0 0.0
    %3299 = vmatpush2.msra.mxu0 0.0
    %3300 = vmatprep.subr.mxu0 0.0
    %3301 = vmatpush2.msra.mxu0 0.0
    %3302 = vmatprep.mubr.f32.mxu0 0.0
    %3303 = vmatmul.mubr.f32.gmra.mxu0 %v3236
    %v3304 = vpop.f32.mrf.mxu0
    %v3305 = vadd.f32 0.0, %v3304
    %v3306 = vpop.f32.mrf.mxu0
    %3307 = vdwg.mxu0
    %3308 = vrot.lane.b32.xlu0 %v276, 8
    %v3309 = vpop.permute.xlu0 %3308
    %3310 = vrot.lane.b32.xlu0 %v281, 8
    %v3311 = vpop.permute.xlu0 %3310
    %v3315 = vsel %vm526, %v3214, 0
    %3317 = vmatprep.subr.mxu0 0.0
    %3318 = vmatpush1.msra.mxu0 0.0
    %3319 = vmatprep.subr.mxu0 0.0
    %3320 = vmatpush1.msra.mxu0 0.0
    %3321 = vmatprep.subr.mxu0 0.0
    %3322 = vmatpush1.msra.mxu0 0.0
    %3323 = vmatprep.subr.mxu0 0.0
    %3324 = vmatpush1.msra.mxu0 0.0
    %3325 = vmatprep.subr.mxu0 0.0
    %3326 = vmatpush1.msra.mxu0 0.0
    %3327 = vmatprep.subr.mxu0 0.0
    %3328 = vmatpush1.msra.mxu0 0.0
    %3329 = vmatprep.subr.mxu0 0.0
    %3330 = vmatpush1.msra.mxu0 0.0
    %3331 = vmatprep.subr.mxu0 0.0
    %3332 = vmatpush1.msra.mxu0 0.0
    %3333 = vmatprep.subr.mxu0 0.0
    %3334 = vmatpush1.msra.mxu0 0.0
    %3335 = vmatprep.subr.mxu0 0.0
    %3336 = vmatpush1.msra.mxu0 0.0
    %3337 = vmatprep.subr.mxu0 0.0
    %3338 = vmatpush1.msra.mxu0 0.0
    %3339 = vmatprep.subr.mxu0 0.0
    %3340 = vmatpush1.msra.mxu0 0.0
    %3341 = vmatprep.subr.mxu0 0.0
    %3342 = vmatpush1.msra.mxu0 0.0
    %3343 = vmatprep.subr.mxu0 0.0
    %3344 = vmatpush1.msra.mxu0 0.0
    %3345 = vmatprep.subr.mxu0 0.0
    %3346 = vmatpush1.msra.mxu0 %v3311
    %3347 = vmatprep.subr.mxu0 0.0
    %3348 = vmatpush1.msra.mxu0 %v3309
    %3349 = vmatprep.subr.mxu0 0.0
    %3350 = vmatpush2.msra.mxu0 0.0
    %3351 = vmatprep.subr.mxu0 0.0
    %3352 = vmatpush2.msra.mxu0 0.0
    %3353 = vmatprep.subr.mxu0 0.0
    %3354 = vmatpush2.msra.mxu0 0.0
    %3355 = vmatprep.subr.mxu0 0.0
    %3356 = vmatpush2.msra.mxu0 0.0
    %3357 = vmatprep.subr.mxu0 0.0
    %3358 = vmatpush2.msra.mxu0 0.0
    %3359 = vmatprep.subr.mxu0 0.0
    %3360 = vmatpush2.msra.mxu0 0.0
    %3361 = vmatprep.subr.mxu0 0.0
    %3362 = vmatpush2.msra.mxu0 0.0
    %3363 = vmatprep.subr.mxu0 0.0
    %3364 = vmatpush2.msra.mxu0 0.0
    %3365 = vmatprep.subr.mxu0 0.0
    %3366 = vmatpush2.msra.mxu0 0.0
    %3367 = vmatprep.subr.mxu0 0.0
    %3368 = vmatpush2.msra.mxu0 0.0
    %3369 = vmatprep.subr.mxu0 0.0
    %3370 = vmatpush2.msra.mxu0 0.0
    %3371 = vmatprep.subr.mxu0 0.0
    %3372 = vmatpush2.msra.mxu0 0.0
    %3373 = vmatprep.subr.mxu0 0.0
    %3374 = vmatpush2.msra.mxu0 0.0
    %3375 = vmatprep.subr.mxu0 0.0
    %3376 = vmatpush2.msra.mxu0 0.0
    %3377 = vmatprep.subr.mxu0 0.0
    %3378 = vmatpush2.msra.mxu0 0.0
    %3379 = vmatprep.subr.mxu0 0.0
    %3380 = vmatpush2.msra.mxu0 0.0
    %3381 = vmatprep.mubr.f32.mxu0 0.0
    %3382 = vmatmul.mubr.f32.gmra.mxu0 %v3315
    %v3383 = vpop.f32.mrf.mxu0
    %v3384 = vadd.f32 0.0, %v3383
    %v3385 = vpop.f32.mrf.mxu0
    %3386 = vdwg.mxu0
    %v3387 = vmul.f32 %v3305, %v3227
    %v3388 = vmul.f32 %v3384, %v3228
    %3391 = vrot.lane.b32.xlu0 %v2687, 8
    %v3392 = vpop.permute.xlu0 %3391
    %3393 = vrot.lane.b32.xlu0 %v2688, 8
    %v3394 = vpop.permute.xlu0 %3393
    %3399 = vrot.lane.b32.xlu0 %v3037, 16
    %v3400 = vpop.permute.xlu0 %3399
    %3401 = vrot.lane.b32.xlu0 %v3038, 16
    %v3402 = vpop.permute.xlu0 %3401
    %3407 = vrot.lane.b32.xlu0 %v3387, 24
    %v3408 = vpop.permute.xlu0 %3407
    %3409 = vrot.lane.b32.xlu0 %v3388, 24
    %v3410 = vpop.permute.xlu0 %3409
    %v3413 = vsel %vm367, %v2337, %v3392
    %v3414 = vsel %vm367, %v2338, %v3394
    %v3415 = vsel %vm526, %v3413, %v3400
    %v3416 = vsel %vm526, %v3414, %v3402
    %v3417 = vsel %vm1791, %v3415, %v3408
    %v3418 = vsel %vm1791, %v3416, %v3410
    %v3420 = vsel %vm186, %v3417, 0
    %v3423 = vsel %vm186, %v3418, 0
    %3425 = vmatprep.subr.mxu0 0.0
    %3426 = vmatpush1.msra.mxu0 0.0
    %3427 = vmatprep.subr.mxu0 0.0
    %3428 = vmatpush1.msra.mxu0 0.0
    %3429 = vmatprep.subr.mxu0 0.0
    %3430 = vmatpush1.msra.mxu0 0.0
    %3431 = vmatprep.subr.mxu0 0.0
    %3432 = vmatpush1.msra.mxu0 0.0
    %3433 = vmatprep.subr.mxu0 0.0
    %3434 = vmatpush1.msra.mxu0 0.0
    %3435 = vmatprep.subr.mxu0 0.0
    %3436 = vmatpush1.msra.mxu0 0.0
    %3437 = vmatprep.subr.mxu0 0.0
    %3438 = vmatpush1.msra.mxu0 0.0
    %3439 = vmatprep.subr.mxu0 0.0
    %3440 = vmatpush1.msra.mxu0 0.0
    %3441 = vmatprep.subr.mxu0 0.0
    %3442 = vmatpush1.msra.mxu0 0.0
    %3443 = vmatprep.subr.mxu0 0.0
    %3444 = vmatpush1.msra.mxu0 0.0
    %3445 = vmatprep.subr.mxu0 0.0
    %3446 = vmatpush1.msra.mxu0 0.0
    %3447 = vmatprep.subr.mxu0 0.0
    %3448 = vmatpush1.msra.mxu0 0.0
    %3449 = vmatprep.subr.mxu0 0.0
    %3450 = vmatpush1.msra.mxu0 %v98
    %3451 = vmatprep.subr.mxu0 0.0
    %3452 = vmatpush1.msra.mxu0 %v97
    %3453 = vmatprep.subr.mxu0 0.0
    %3454 = vmatpush1.msra.mxu0 %v96
    %3455 = vmatprep.subr.mxu0 0.0
    %3456 = vmatpush1.msra.mxu0 %v95
    %3457 = vmatprep.subr.mxu0 0.0
    %3458 = vmatpush2.msra.mxu0 0.0
    %3459 = vmatprep.subr.mxu0 0.0
    %3460 = vmatpush2.msra.mxu0 0.0
    %3461 = vmatprep.subr.mxu0 0.0
    %3462 = vmatpush2.msra.mxu0 0.0
    %3463 = vmatprep.subr.mxu0 0.0
    %3464 = vmatpush2.msra.mxu0 0.0
    %3465 = vmatprep.subr.mxu0 0.0
    %3466 = vmatpush2.msra.mxu0 0.0
    %3467 = vmatprep.subr.mxu0 0.0
    %3468 = vmatpush2.msra.mxu0 0.0
    %3469 = vmatprep.subr.mxu0 0.0
    %3470 = vmatpush2.msra.mxu0 0.0
    %3471 = vmatprep.subr.mxu0 0.0
    %3472 = vmatpush2.msra.mxu0 0.0
    %3473 = vmatprep.subr.mxu0 0.0
    %3474 = vmatpush2.msra.mxu0 0.0
    %3475 = vmatprep.subr.mxu0 0.0
    %3476 = vmatpush2.msra.mxu0 0.0
    %3477 = vmatprep.subr.mxu0 0.0
    %3478 = vmatpush2.msra.mxu0 0.0
    %3479 = vmatprep.subr.mxu0 0.0
    %3480 = vmatpush2.msra.mxu0 0.0
    %3481 = vmatprep.subr.mxu0 0.0
    %3482 = vmatpush2.msra.mxu0 0.0
    %3483 = vmatprep.subr.mxu0 0.0
    %3484 = vmatpush2.msra.mxu0 0.0
    %3485 = vmatprep.subr.mxu0 0.0
    %3486 = vmatpush2.msra.mxu0 0.0
    %3487 = vmatprep.subr.mxu0 0.0
    %3488 = vmatpush2.msra.mxu0 0.0
    %3489 = vmatprep.mubr.f32.mxu0 0.0
    %3490 = vmatmul.mubr.f32.gmra.mxu0 %v3420
    %v3491 = vpop.f32.mrf.mxu0
    %v3492 = vadd.f32 %v135, %v3491
    %v3493 = vpop.f32.mrf.mxu0
    %3494 = vmatprep.mubr.f32.mxu0 0.0
    %3495 = vmatmul.mubr.f32.gmra.mxu0 %v3423
    %v3496 = vpop.f32.mrf.mxu0
    %v3497 = vadd.f32 %v135, %v3496
    %v3498 = vpop.f32.mrf.mxu0
    %3499 = vdwg.mxu0
    %v3500 = vadd.f32 %v1906, %v3492
    %v3501 = vadd.f32 %v1907, %v3497
    %v3502 = vsel %vm186, %v3500, 0.0
    %3503 = vadd.xlane.f32.xlu0 %v3502
    %v3504 = vpop.xlane.xlu0 %3503
    %v3505 = vsel %vm186, %v3501, 0.0
    %3506 = vadd.xlane.f32.xlu0 %v3505
    %v3507 = vpop.xlane.xlu0 %3506
    %v3508 = vmul.f32 %v3504, %v1883
    %v3509 = vmul.f32 %v3507, %v1883
    %v3510 = vsub.f32 %v3500, %v3508
    %v3511 = vsub.f32 %v3501, %v3509
    %v3512 = vmul.f32 %v3510, %v3510
    %v3513 = vmul.f32 %v3511, %v3511
    %v3514 = vsel %vm186, %v3512, 0.0
    %3515 = vadd.xlane.f32.xlu0 %v3514
    %v3516 = vpop.xlane.xlu0 %3515
    %v3517 = vsel %vm186, %v3513, 0.0
    %3518 = vadd.xlane.f32.xlu0 %v3517
    %v3519 = vpop.xlane.xlu0 %3518
    %v3520 = vmul.f32 %v3516, %v1883
    %v3521 = vmul.f32 %v3519, %v1883
    %v3522 = vadd.f32 %v3520, 1e-05
    %v3523 = vadd.f32 %v3521, 1e-05
    %v3524 = vrsqrt.pop %v3522
    %v3525 = vrsqrt.pop %v3523
    %v3526 = vmul.f32 %v3510, %v3524
    %v3527 = vmul.f32 %v3511, %v3525
    %v3528 = vmul.f32 %v3526, %v160
    %v3529 = vmul.f32 %v3527, %v160
    %v3530 = vadd.f32 %v3528, %v165
    %v3531 = vadd.f32 %v3529, %v165
    %v3533 = vsel %vm186, %v3530, 0
    %v3536 = vsel %vm186, %v3531, 0
    %3538 = vmatprep.subr.mxu0 0.0
    %3539 = vmatpush1.msra.mxu0 0.0
    %3540 = vmatprep.subr.mxu0 0.0
    %3541 = vmatpush1.msra.mxu0 0.0
    %3542 = vmatprep.subr.mxu0 0.0
    %3543 = vmatpush1.msra.mxu0 0.0
    %3544 = vmatprep.subr.mxu0 0.0
    %3545 = vmatpush1.msra.mxu0 0.0
    %3546 = vmatprep.subr.mxu0 0.0
    %3547 = vmatpush1.msra.mxu0 0.0
    %3548 = vmatprep.subr.mxu0 0.0
    %3549 = vmatpush1.msra.mxu0 0.0
    %3550 = vmatprep.subr.mxu0 0.0
    %3551 = vmatpush1.msra.mxu0 0.0
    %3552 = vmatprep.subr.mxu0 0.0
    %3553 = vmatpush1.msra.mxu0 0.0
    %3554 = vmatprep.subr.mxu0 0.0
    %3555 = vmatpush1.msra.mxu0 0.0
    %3556 = vmatprep.subr.mxu0 0.0
    %3557 = vmatpush1.msra.mxu0 0.0
    %3558 = vmatprep.subr.mxu0 0.0
    %3559 = vmatpush1.msra.mxu0 0.0
    %3560 = vmatprep.subr.mxu0 0.0
    %3561 = vmatpush1.msra.mxu0 0.0
    %3562 = vmatprep.subr.mxu0 0.0
    %3563 = vmatpush1.msra.mxu0 %v102
    %3564 = vmatprep.subr.mxu0 0.0
    %3565 = vmatpush1.msra.mxu0 %v101
    %3566 = vmatprep.subr.mxu0 0.0
    %3567 = vmatpush1.msra.mxu0 %v100
    %3568 = vmatprep.subr.mxu0 0.0
    %3569 = vmatpush1.msra.mxu0 %v99
    %3570 = vmatprep.subr.mxu0 0.0
    %3571 = vmatpush2.msra.mxu0 0.0
    %3572 = vmatprep.subr.mxu0 0.0
    %3573 = vmatpush2.msra.mxu0 0.0
    %3574 = vmatprep.subr.mxu0 0.0
    %3575 = vmatpush2.msra.mxu0 0.0
    %3576 = vmatprep.subr.mxu0 0.0
    %3577 = vmatpush2.msra.mxu0 0.0
    %3578 = vmatprep.subr.mxu0 0.0
    %3579 = vmatpush2.msra.mxu0 0.0
    %3580 = vmatprep.subr.mxu0 0.0
    %3581 = vmatpush2.msra.mxu0 0.0
    %3582 = vmatprep.subr.mxu0 0.0
    %3583 = vmatpush2.msra.mxu0 0.0
    %3584 = vmatprep.subr.mxu0 0.0
    %3585 = vmatpush2.msra.mxu0 0.0
    %3586 = vmatprep.subr.mxu0 0.0
    %3587 = vmatpush2.msra.mxu0 0.0
    %3588 = vmatprep.subr.mxu0 0.0
    %3589 = vmatpush2.msra.mxu0 0.0
    %3590 = vmatprep.subr.mxu0 0.0
    %3591 = vmatpush2.msra.mxu0 0.0
    %3592 = vmatprep.subr.mxu0 0.0
    %3593 = vmatpush2.msra.mxu0 0.0
    %3594 = vmatprep.subr.mxu0 0.0
    %3595 = vmatpush2.msra.mxu0 0.0
    %3596 = vmatprep.subr.mxu0 0.0
    %3597 = vmatpush2.msra.mxu0 0.0
    %3598 = vmatprep.subr.mxu0 0.0
    %3599 = vmatpush2.msra.mxu0 0.0
    %3600 = vmatprep.subr.mxu0 0.0
    %3601 = vmatpush2.msra.mxu0 0.0
    %3602 = vmatprep.mubr.f32.mxu0 0.0
    %3603 = vmatmul.mubr.f32.gmra.mxu0 %v3533
    %v3604 = vpop.f32.mrf.mxu0
    %v3605 = vadd.f32 %v140, %v3604
    %v3606 = vpop.f32.mrf.mxu0
    %3607 = vmatprep.mubr.f32.mxu0 0.0
    %3608 = vmatmul.mubr.f32.gmra.mxu0 %v3536
    %v3609 = vpop.f32.mrf.mxu0
    %v3610 = vadd.f32 %v140, %v3609
    %v3611 = vpop.f32.mrf.mxu0
    %3612 = vdwg.mxu0
    %v3613 = vmax.f32 %v3605, 0.0
    %v3614 = vmax.f32 %v3610, 0.0
    %vm3615 = vcmask 523264
    %v3617 = vsel %vm3615, %v3613, 0
    %v3620 = vsel %vm3615, %v3614, 0
    %3622 = vmatprep.subr.mxu0 0.0
    %3623 = vmatpush1.msra.mxu0 0.0
    %3624 = vmatprep.subr.mxu0 0.0
    %3625 = vmatpush1.msra.mxu0 0.0
    %3626 = vmatprep.subr.mxu0 0.0
    %3627 = vmatpush1.msra.mxu0 0.0
    %3628 = vmatprep.subr.mxu0 0.0
    %3629 = vmatpush1.msra.mxu0 0.0
    %3630 = vmatprep.subr.mxu0 0.0
    %3631 = vmatpush1.msra.mxu0 0.0
    %3632 = vmatprep.subr.mxu0 0.0
    %3633 = vmatpush1.msra.mxu0 0.0
    %3634 = vmatprep.subr.mxu0 0.0
    %3635 = vmatpush1.msra.mxu0 0.0
    %3636 = vmatprep.subr.mxu0 0.0
    %3637 = vmatpush1.msra.mxu0 0.0
    %3638 = vmatprep.subr.mxu0 0.0
    %3639 = vmatpush1.msra.mxu0 %v110
    %3640 = vmatprep.subr.mxu0 0.0
    %3641 = vmatpush1.msra.mxu0 %v109
    %3642 = vmatprep.subr.mxu0 0.0
    %3643 = vmatpush1.msra.mxu0 %v108
    %3644 = vmatprep.subr.mxu0 0.0
    %3645 = vmatpush1.msra.mxu0 %v107
    %3646 = vmatprep.subr.mxu0 0.0
    %3647 = vmatpush1.msra.mxu0 %v106
    %3648 = vmatprep.subr.mxu0 0.0
    %3649 = vmatpush1.msra.mxu0 %v105
    %3650 = vmatprep.subr.mxu0 0.0
    %3651 = vmatpush1.msra.mxu0 %v104
    %3652 = vmatprep.subr.mxu0 0.0
    %3653 = vmatpush1.msra.mxu0 %v103
    %3654 = vmatprep.subr.mxu0 0.0
    %3655 = vmatpush2.msra.mxu0 0.0
    %3656 = vmatprep.subr.mxu0 0.0
    %3657 = vmatpush2.msra.mxu0 0.0
    %3658 = vmatprep.subr.mxu0 0.0
    %3659 = vmatpush2.msra.mxu0 0.0
    %3660 = vmatprep.subr.mxu0 0.0
    %3661 = vmatpush2.msra.mxu0 0.0
    %3662 = vmatprep.subr.mxu0 0.0
    %3663 = vmatpush2.msra.mxu0 0.0
    %3664 = vmatprep.subr.mxu0 0.0
    %3665 = vmatpush2.msra.mxu0 0.0
    %3666 = vmatprep.subr.mxu0 0.0
    %3667 = vmatpush2.msra.mxu0 0.0
    %3668 = vmatprep.subr.mxu0 0.0
    %3669 = vmatpush2.msra.mxu0 0.0
    %3670 = vmatprep.subr.mxu0 0.0
    %3671 = vmatpush2.msra.mxu0 0.0
    %3672 = vmatprep.subr.mxu0 0.0
    %3673 = vmatpush2.msra.mxu0 0.0
    %3674 = vmatprep.subr.mxu0 0.0
    %3675 = vmatpush2.msra.mxu0 0.0
    %3676 = vmatprep.subr.mxu0 0.0
    %3677 = vmatpush2.msra.mxu0 0.0
    %3678 = vmatprep.subr.mxu0 0.0
    %3679 = vmatpush2.msra.mxu0 0.0
    %3680 = vmatprep.subr.mxu0 0.0
    %3681 = vmatpush2.msra.mxu0 0.0
    %3682 = vmatprep.subr.mxu0 0.0
    %3683 = vmatpush2.msra.mxu0 0.0
    %3684 = vmatprep.subr.mxu0 0.0
    %3685 = vmatpush2.msra.mxu0 0.0
    %3686 = vmatprep.mubr.f32.mxu0 0.0
    %3687 = vmatmul.mubr.f32.gmra.mxu0 %v3617
    %v3688 = vpop.f32.mrf.mxu0
    %v3689 = vadd.f32 %v145, %v3688
    %v3690 = vpop.f32.mrf.mxu0
    %3691 = vmatprep.mubr.f32.mxu0 0.0
    %3692 = vmatmul.mubr.f32.gmra.mxu0 %v3620
    %v3693 = vpop.f32.mrf.mxu0
    %v3694 = vadd.f32 %v145, %v3693
    %v3695 = vpop.f32.mrf.mxu0
    %3696 = vdwg.mxu0
    %v3697 = vadd.f32 %v3530, %v3689
    %v3698 = vadd.f32 %v3531, %v3694
    %v3699 = vsel %vm186, %v3697, 0.0
    %3700 = vadd.xlane.f32.xlu0 %v3699
    %v3701 = vpop.xlane.xlu0 %3700
    %v3702 = vsel %vm186, %v3698, 0.0
    %3703 = vadd.xlane.f32.xlu0 %v3702
    %v3704 = vpop.xlane.xlu0 %3703
    %v3705 = vmul.f32 %v3701, %v1883
    %v3706 = vmul.f32 %v3704, %v1883
    %v3707 = vsub.f32 %v3697, %v3705
    %v3708 = vsub.f32 %v3698, %v3706
    %v3709 = vmul.f32 %v3707, %v3707
    %v3710 = vmul.f32 %v3708, %v3708
    %v3711 = vsel %vm186, %v3709, 0.0
    %3712 = vadd.xlane.f32.xlu0 %v3711
    %v3713 = vpop.xlane.xlu0 %3712
    %v3714 = vsel %vm186, %v3710, 0.0
    %3715 = vadd.xlane.f32.xlu0 %v3714
    %v3716 = vpop.xlane.xlu0 %3715
    %v3717 = vmul.f32 %v3713, %v1883
    %v3718 = vmul.f32 %v3716, %v1883
    %v3719 = vadd.f32 %v3717, 1e-05
    %v3720 = vadd.f32 %v3718, 1e-05
    %v3721 = vrsqrt.pop %v3719
    %v3722 = vrsqrt.pop %v3720
    %v3723 = vmul.f32 %v3707, %v3721
    %v3724 = vmul.f32 %v3708, %v3722
    %v3725 = vmul.f32 %v3723, %v170
    %v3726 = vmul.f32 %v3724, %v170
    %v3727 = vadd.f32 %v3725, %v175
    %v3728 = vadd.f32 %v3726, %v175
    %v3730 = vsel %vm186, %v3727, 0
    %v3733 = vsel %vm186, %v3728, 0
    %3735 = vmatprep.subr.mxu0 0.0
    %3736 = vmatpush1.msra.mxu0 0.0
    %3737 = vmatprep.subr.mxu0 0.0
    %3738 = vmatpush1.msra.mxu0 0.0
    %3739 = vmatprep.subr.mxu0 0.0
    %3740 = vmatpush1.msra.mxu0 0.0
    %3741 = vmatprep.subr.mxu0 0.0
    %3742 = vmatpush1.msra.mxu0 0.0
    %3743 = vmatprep.subr.mxu0 0.0
    %3744 = vmatpush1.msra.mxu0 0.0
    %3745 = vmatprep.subr.mxu0 0.0
    %3746 = vmatpush1.msra.mxu0 0.0
    %3747 = vmatprep.subr.mxu0 0.0
    %3748 = vmatpush1.msra.mxu0 0.0
    %3749 = vmatprep.subr.mxu0 0.0
    %3750 = vmatpush1.msra.mxu0 0.0
    %3751 = vmatprep.subr.mxu0 0.0
    %3752 = vmatpush1.msra.mxu0 0.0
    %3753 = vmatprep.subr.mxu0 0.0
    %3754 = vmatpush1.msra.mxu0 0.0
    %3755 = vmatprep.subr.mxu0 0.0
    %3756 = vmatpush1.msra.mxu0 0.0
    %3757 = vmatprep.subr.mxu0 0.0
    %3758 = vmatpush1.msra.mxu0 0.0
    %3759 = vmatprep.subr.mxu0 0.0
    %3760 = vmatpush1.msra.mxu0 %v86
    %3761 = vmatprep.subr.mxu0 0.0
    %3762 = vmatpush1.msra.mxu0 %v85
    %3763 = vmatprep.subr.mxu0 0.0
    %3764 = vmatpush1.msra.mxu0 %v84
    %3765 = vmatprep.subr.mxu0 0.0
    %3766 = vmatpush1.msra.mxu0 %v83
    %3767 = vmatprep.subr.mxu0 0.0
    %3768 = vmatpush2.msra.mxu0 0.0
    %3769 = vmatprep.subr.mxu0 0.0
    %3770 = vmatpush2.msra.mxu0 0.0
    %3771 = vmatprep.subr.mxu0 0.0
    %3772 = vmatpush2.msra.mxu0 0.0
    %3773 = vmatprep.subr.mxu0 0.0
    %3774 = vmatpush2.msra.mxu0 0.0
    %3775 = vmatprep.subr.mxu0 0.0
    %3776 = vmatpush2.msra.mxu0 0.0
    %3777 = vmatprep.subr.mxu0 0.0
    %3778 = vmatpush2.msra.mxu0 0.0
    %3779 = vmatprep.subr.mxu0 0.0
    %3780 = vmatpush2.msra.mxu0 0.0
    %3781 = vmatprep.subr.mxu0 0.0
    %3782 = vmatpush2.msra.mxu0 0.0
    %3783 = vmatprep.subr.mxu0 0.0
    %3784 = vmatpush2.msra.mxu0 0.0
    %3785 = vmatprep.subr.mxu0 0.0
    %3786 = vmatpush2.msra.mxu0 0.0
    %3787 = vmatprep.subr.mxu0 0.0
    %3788 = vmatpush2.msra.mxu0 0.0
    %3789 = vmatprep.subr.mxu0 0.0
    %3790 = vmatpush2.msra.mxu0 0.0
    %3791 = vmatprep.subr.mxu0 0.0
    %3792 = vmatpush2.msra.mxu0 0.0
    %3793 = vmatprep.subr.mxu0 0.0
    %3794 = vmatpush2.msra.mxu0 0.0
    %3795 = vmatprep.subr.mxu0 0.0
    %3796 = vmatpush2.msra.mxu0 0.0
    %3797 = vmatprep.subr.mxu0 0.0
    %3798 = vmatpush2.msra.mxu0 0.0
    %3799 = vmatprep.mubr.f32.mxu0 0.0
    %3800 = vmatmul.mubr.f32.gmra.mxu0 %v3730
    %v3801 = vpop.f32.mrf.mxu0
    %v3802 = vadd.f32 %v120, %v3801
    %v3803 = vpop.f32.mrf.mxu0
    %3804 = vmatprep.mubr.f32.mxu0 0.0
    %3805 = vmatmul.mubr.f32.gmra.mxu0 %v3733
    %v3806 = vpop.f32.mrf.mxu0
    %v3807 = vadd.f32 %v120, %v3806
    %v3808 = vpop.f32.mrf.mxu0
    %3809 = vdwg.mxu0
    %v3810 = vmul.f32 %v3802, 0.35355338
    %v3811 = vmul.f32 %v3807, 0.35355338
    %v3813 = vsel %vm367, %v3810, 0
    %3815 = vmatprep.subr.mxu0 0.0
    %3816 = vmatpush1.xpose.msra.mxu0 0.0
    %3817 = vmatprep.subr.mxu0 0.0
    %3818 = vmatpush1.xpose.msra.mxu0 0.0
    %3819 = vmatprep.subr.mxu0 0.0
    %3820 = vmatpush1.xpose.msra.mxu0 0.0
    %3821 = vmatprep.subr.mxu0 0.0
    %3822 = vmatpush1.xpose.msra.mxu0 0.0
    %3823 = vmatprep.subr.mxu0 0.0
    %3824 = vmatpush1.xpose.msra.mxu0 0.0
    %3825 = vmatprep.subr.mxu0 0.0
    %3826 = vmatpush1.xpose.msra.mxu0 0.0
    %3827 = vmatprep.subr.mxu0 0.0
    %3828 = vmatpush1.xpose.msra.mxu0 0.0
    %3829 = vmatprep.subr.mxu0 0.0
    %3830 = vmatpush1.xpose.msra.mxu0 0.0
    %3831 = vmatprep.subr.mxu0 0.0
    %3832 = vmatpush1.xpose.msra.mxu0 0.0
    %3833 = vmatprep.subr.mxu0 0.0
    %3834 = vmatpush1.xpose.msra.mxu0 0.0
    %3835 = vmatprep.subr.mxu0 0.0
    %3836 = vmatpush1.xpose.msra.mxu0 0.0
    %3837 = vmatprep.subr.mxu0 0.0
    %3838 = vmatpush1.xpose.msra.mxu0 0.0
    %3839 = vmatprep.subr.mxu0 0.0
    %3840 = vmatpush1.xpose.msra.mxu0 0.0
    %3841 = vmatprep.subr.mxu0 0.0
    %3842 = vmatpush1.xpose.msra.mxu0 0.0
    %3843 = vmatprep.subr.mxu0 0.0
    %3844 = vmatpush1.xpose.msra.mxu0 %v375
    %3845 = vmatprep.subr.mxu0 0.0
    %3846 = vmatpush1.xpose.msra.mxu0 %v372
    %3847 = vmatprep.subr.mxu0 0.0
    %3848 = vmatpush2.xpose.msra.mxu0 0.0
    %3849 = vmatprep.subr.mxu0 0.0
    %3850 = vmatpush2.xpose.msra.mxu0 0.0
    %3851 = vmatprep.subr.mxu0 0.0
    %3852 = vmatpush2.xpose.msra.mxu0 0.0
    %3853 = vmatprep.subr.mxu0 0.0
    %3854 = vmatpush2.xpose.msra.mxu0 0.0
    %3855 = vmatprep.subr.mxu0 0.0
    %3856 = vmatpush2.xpose.msra.mxu0 0.0
    %3857 = vmatprep.subr.mxu0 0.0
    %3858 = vmatpush2.xpose.msra.mxu0 0.0
    %3859 = vmatprep.subr.mxu0 0.0
    %3860 = vmatpush2.xpose.msra.mxu0 0.0
    %3861 = vmatprep.subr.mxu0 0.0
    %3862 = vmatpush2.xpose.msra.mxu0 0.0
    %3863 = vmatprep.subr.mxu0 0.0
    %3864 = vmatpush2.xpose.msra.mxu0 0.0
    %3865 = vmatprep.subr.mxu0 0.0
    %3866 = vmatpush2.xpose.msra.mxu0 0.0
    %3867 = vmatprep.subr.mxu0 0.0
    %3868 = vmatpush2.xpose.msra.mxu0 0.0
    %3869 = vmatprep.subr.mxu0 0.0
    %3870 = vmatpush2.xpose.msra.mxu0 0.0
    %3871 = vmatprep.subr.mxu0 0.0
    %3872 = vmatpush2.xpose.msra.mxu0 0.0
    %3873 = vmatprep.subr.mxu0 0.0
    %3874 = vmatpush2.xpose.msra.mxu0 0.0
    %3875 = vmatprep.subr.mxu0 0.0
    %3876 = vmatpush2.xpose.msra.mxu0 0.0
    %3877 = vmatprep.subr.mxu0 0.0
    %3878 = vmatpush2.xpose.msra.mxu0 0.0
    %3879 = vmatprep.mubr.f32.mxu0 0.0
    %3880 = vmatmul.mubr.f32.gmra.mxu0 %v3813
    %v3881 = vpop.f32.mrf.mxu0
    %v3882 = vadd.f32 0.0, %v3881
    %v3883 = vpop.f32.mrf.mxu0
    %3884 = vdwg.mxu0
    %v3886 = vsel %vm367, %v3811, 0
    %3888 = vmatprep.subr.mxu0 0.0
    %3889 = vmatpush1.xpose.msra.mxu0 0.0
    %3890 = vmatprep.subr.mxu0 0.0
    %3891 = vmatpush1.xpose.msra.mxu0 0.0
    %3892 = vmatprep.subr.mxu0 0.0
    %3893 = vmatpush1.xpose.msra.mxu0 0.0
    %3894 = vmatprep.subr.mxu0 0.0
    %3895 = vmatpush1.xpose.msra.mxu0 0.0
    %3896 = vmatprep.subr.mxu0 0.0
    %3897 = vmatpush1.xpose.msra.mxu0 0.0
    %3898 = vmatprep.subr.mxu0 0.0
    %3899 = vmatpush1.xpose.msra.mxu0 0.0
    %3900 = vmatprep.subr.mxu0 0.0
    %3901 = vmatpush1.xpose.msra.mxu0 0.0
    %3902 = vmatprep.subr.mxu0 0.0
    %3903 = vmatpush1.xpose.msra.mxu0 0.0
    %3904 = vmatprep.subr.mxu0 0.0
    %3905 = vmatpush1.xpose.msra.mxu0 0.0
    %3906 = vmatprep.subr.mxu0 0.0
    %3907 = vmatpush1.xpose.msra.mxu0 0.0
    %3908 = vmatprep.subr.mxu0 0.0
    %3909 = vmatpush1.xpose.msra.mxu0 0.0
    %3910 = vmatprep.subr.mxu0 0.0
    %3911 = vmatpush1.xpose.msra.mxu0 0.0
    %3912 = vmatprep.subr.mxu0 0.0
    %3913 = vmatpush1.xpose.msra.mxu0 0.0
    %3914 = vmatprep.subr.mxu0 0.0
    %3915 = vmatpush1.xpose.msra.mxu0 0.0
    %3916 = vmatprep.subr.mxu0 0.0
    %3917 = vmatpush1.xpose.msra.mxu0 %v454
    %3918 = vmatprep.subr.mxu0 0.0
    %3919 = vmatpush1.xpose.msra.mxu0 %v451
    %3920 = vmatprep.subr.mxu0 0.0
    %3921 = vmatpush2.xpose.msra.mxu0 0.0
    %3922 = vmatprep.subr.mxu0 0.0
    %3923 = vmatpush2.xpose.msra.mxu0 0.0
    %3924 = vmatprep.subr.mxu0 0.0
    %3925 = vmatpush2.xpose.msra.mxu0 0.0
    %3926 = vmatprep.subr.mxu0 0.0
    %3927 = vmatpush2.xpose.msra.mxu0 0.0
    %3928 = vmatprep.subr.mxu0 0.0
    %3929 = vmatpush2.xpose.msra.mxu0 0.0
    %3930 = vmatprep.subr.mxu0 0.0
    %3931 = vmatpush2.xpose.msra.mxu0 0.0
    %3932 = vmatprep.subr.mxu0 0.0
    %3933 = vmatpush2.xpose.msra.mxu0 0.0
    %3934 = vmatprep.subr.mxu0 0.0
    %3935 = vmatpush2.xpose.msra.mxu0 0.0
    %3936 = vmatprep.subr.mxu0 0.0
    %3937 = vmatpush2.xpose.msra.mxu0 0.0
    %3938 = vmatprep.subr.mxu0 0.0
    %3939 = vmatpush2.xpose.msra.mxu0 0.0
    %3940 = vmatprep.subr.mxu0 0.0
    %3941 = vmatpush2.xpose.msra.mxu0 0.0
    %3942 = vmatprep.subr.mxu0 0.0
    %3943 = vmatpush2.xpose.msra.mxu0 0.0
    %3944 = vmatprep.subr.mxu0 0.0
    %3945 = vmatpush2.xpose.msra.mxu0 0.0
    %3946 = vmatprep.subr.mxu0 0.0
    %3947 = vmatpush2.xpose.msra.mxu0 0.0
    %3948 = vmatprep.subr.mxu0 0.0
    %3949 = vmatpush2.xpose.msra.mxu0 0.0
    %3950 = vmatprep.subr.mxu0 0.0
    %3951 = vmatpush2.xpose.msra.mxu0 0.0
    %3952 = vmatprep.mubr.f32.mxu0 0.0
    %3953 = vmatmul.mubr.f32.gmra.mxu0 %v3886
    %v3954 = vpop.f32.mrf.mxu0
    %v3955 = vadd.f32 0.0, %v3954
    %v3956 = vpop.f32.mrf.mxu0
    %3957 = vdwg.mxu0
    %v3958 = vsel %vm526, %v3882, -inf
    %3959 = vmax.xlane.f32.xlu0 %v3958
    %v3960 = vpop.xlane.xlu0 %3959
    %v3961 = vsel %vm526, %v3955, -inf
    %3962 = vmax.xlane.f32.xlu0 %v3961
    %v3963 = vpop.xlane.xlu0 %3962
    %v3964 = vsub.f32 %v3882, %v3960
    %v3965 = vsub.f32 %v3955, %v3963
    %v3966 = vmul.f32 %v3964, 1.442695
    %v3967 = vpow.pop %v3966
    %v3968 = vmul.f32 %v3965, 1.442695
    %v3969 = vpow.pop %v3968
    %v3970 = vsel %vm526, %v3967, 0.0
    %3971 = vadd.xlane.f32.xlu0 %v3970
    %v3972 = vpop.xlane.xlu0 %3971
    %v3973 = vsel %vm526, %v3969, 0.0
    %3974 = vadd.xlane.f32.xlu0 %v3973
    %v3975 = vpop.xlane.xlu0 %3974
    %v3976 = vrcp.pop %v3972
    %v3977 = vrcp.pop %v3975
    %v3978 = vmul.f32 %v3972, %v3976
    %v3979 = vmul.f32 %v3975, %v3977
    %v3980 = vsub.f32 2.0, %v3978
    %v3981 = vsub.f32 2.0, %v3979
    %v3982 = vmul.f32 %v3976, %v3980
    %v3983 = vmul.f32 %v3977, %v3981
    %v3985 = vsel %vm526, %v3967, 0
    %3987 = vmatprep.subr.mxu0 0.0
    %3988 = vmatpush1.msra.mxu0 0.0
    %3989 = vmatprep.subr.mxu0 0.0
    %3990 = vmatpush1.msra.mxu0 0.0
    %3991 = vmatprep.subr.mxu0 0.0
    %3992 = vmatpush1.msra.mxu0 0.0
    %3993 = vmatprep.subr.mxu0 0.0
    %3994 = vmatpush1.msra.mxu0 0.0
    %3995 = vmatprep.subr.mxu0 0.0
    %3996 = vmatpush1.msra.mxu0 0.0
    %3997 = vmatprep.subr.mxu0 0.0
    %3998 = vmatpush1.msra.mxu0 0.0
    %3999 = vmatprep.subr.mxu0 0.0
    %4000 = vmatpush1.msra.mxu0 0.0
    %4001 = vmatprep.subr.mxu0 0.0
    %4002 = vmatpush1.msra.mxu0 0.0
    %4003 = vmatprep.subr.mxu0 0.0
    %4004 = vmatpush1.msra.mxu0 0.0
    %4005 = vmatprep.subr.mxu0 0.0
    %4006 = vmatpush1.msra.mxu0 0.0
    %4007 = vmatprep.subr.mxu0 0.0
    %4008 = vmatpush1.msra.mxu0 0.0
    %4009 = vmatprep.subr.mxu0 0.0
    %4010 = vmatpush1.msra.mxu0 0.0
    %4011 = vmatprep.subr.mxu0 0.0
    %4012 = vmatpush1.msra.mxu0 0.0
    %4013 = vmatprep.subr.mxu0 0.0
    %4014 = vmatpush1.msra.mxu0 0.0
    %4015 = vmatprep.subr.mxu0 0.0
    %4016 = vmatpush1.msra.mxu0 %v556
    %4017 = vmatprep.subr.mxu0 0.0
    %4018 = vmatpush1.msra.mxu0 %v554
    %4019 = vmatprep.subr.mxu0 0.0
    %4020 = vmatpush2.msra.mxu0 0.0
    %4021 = vmatprep.subr.mxu0 0.0
    %4022 = vmatpush2.msra.mxu0 0.0
    %4023 = vmatprep.subr.mxu0 0.0
    %4024 = vmatpush2.msra.mxu0 0.0
    %4025 = vmatprep.subr.mxu0 0.0
    %4026 = vmatpush2.msra.mxu0 0.0
    %4027 = vmatprep.subr.mxu0 0.0
    %4028 = vmatpush2.msra.mxu0 0.0
    %4029 = vmatprep.subr.mxu0 0.0
    %4030 = vmatpush2.msra.mxu0 0.0
    %4031 = vmatprep.subr.mxu0 0.0
    %4032 = vmatpush2.msra.mxu0 0.0
    %4033 = vmatprep.subr.mxu0 0.0
    %4034 = vmatpush2.msra.mxu0 0.0
    %4035 = vmatprep.subr.mxu0 0.0
    %4036 = vmatpush2.msra.mxu0 0.0
    %4037 = vmatprep.subr.mxu0 0.0
    %4038 = vmatpush2.msra.mxu0 0.0
    %4039 = vmatprep.subr.mxu0 0.0
    %4040 = vmatpush2.msra.mxu0 0.0
    %4041 = vmatprep.subr.mxu0 0.0
    %4042 = vmatpush2.msra.mxu0 0.0
    %4043 = vmatprep.subr.mxu0 0.0
    %4044 = vmatpush2.msra.mxu0 0.0
    %4045 = vmatprep.subr.mxu0 0.0
    %4046 = vmatpush2.msra.mxu0 0.0
    %4047 = vmatprep.subr.mxu0 0.0
    %4048 = vmatpush2.msra.mxu0 0.0
    %4049 = vmatprep.subr.mxu0 0.0
    %4050 = vmatpush2.msra.mxu0 0.0
    %4051 = vmatprep.mubr.f32.mxu0 0.0
    %4052 = vmatmul.mubr.f32.gmra.mxu0 %v3985
    %v4053 = vpop.f32.mrf.mxu0
    %v4054 = vadd.f32 0.0, %v4053
    %v4055 = vpop.f32.mrf.mxu0
    %4056 = vdwg.mxu0
    %v4058 = vsel %vm526, %v3969, 0
    %4060 = vmatprep.subr.mxu0 0.0
    %4061 = vmatpush1.msra.mxu0 0.0
    %4062 = vmatprep.subr.mxu0 0.0
    %4063 = vmatpush1.msra.mxu0 0.0
    %4064 = vmatprep.subr.mxu0 0.0
    %4065 = vmatpush1.msra.mxu0 0.0
    %4066 = vmatprep.subr.mxu0 0.0
    %4067 = vmatpush1.msra.mxu0 0.0
    %4068 = vmatprep.subr.mxu0 0.0
    %4069 = vmatpush1.msra.mxu0 0.0
    %4070 = vmatprep.subr.mxu0 0.0
    %4071 = vmatpush1.msra.mxu0 0.0
    %4072 = vmatprep.subr.mxu0 0.0
    %4073 = vmatpush1.msra.mxu0 0.0
    %4074 = vmatprep.subr.mxu0 0.0
    %4075 = vmatpush1.msra.mxu0 0.0
    %4076 = vmatprep.subr.mxu0 0.0
    %4077 = vmatpush1.msra.mxu0 0.0
    %4078 = vmatprep.subr.mxu0 0.0
    %4079 = vmatpush1.msra.mxu0 0.0
    %4080 = vmatprep.subr.mxu0 0.0
    %4081 = vmatpush1.msra.mxu0 0.0
    %4082 = vmatprep.subr.mxu0 0.0
    %4083 = vmatpush1.msra.mxu0 0.0
    %4084 = vmatprep.subr.mxu0 0.0
    %4085 = vmatpush1.msra.mxu0 0.0
    %4086 = vmatprep.subr.mxu0 0.0
    %4087 = vmatpush1.msra.mxu0 0.0
    %4088 = vmatprep.subr.mxu0 0.0
    %4089 = vmatpush1.msra.mxu0 %v635
    %4090 = vmatprep.subr.mxu0 0.0
    %4091 = vmatpush1.msra.mxu0 %v633
    %4092 = vmatprep.subr.mxu0 0.0
    %4093 = vmatpush2.msra.mxu0 0.0
    %4094 = vmatprep.subr.mxu0 0.0
    %4095 = vmatpush2.msra.mxu0 0.0
    %4096 = vmatprep.subr.mxu0 0.0
    %4097 = vmatpush2.msra.mxu0 0.0
    %4098 = vmatprep.subr.mxu0 0.0
    %4099 = vmatpush2.msra.mxu0 0.0
    %4100 = vmatprep.subr.mxu0 0.0
    %4101 = vmatpush2.msra.mxu0 0.0
    %4102 = vmatprep.subr.mxu0 0.0
    %4103 = vmatpush2.msra.mxu0 0.0
    %4104 = vmatprep.subr.mxu0 0.0
    %4105 = vmatpush2.msra.mxu0 0.0
    %4106 = vmatprep.subr.mxu0 0.0
    %4107 = vmatpush2.msra.mxu0 0.0
    %4108 = vmatprep.subr.mxu0 0.0
    %4109 = vmatpush2.msra.mxu0 0.0
    %4110 = vmatprep.subr.mxu0 0.0
    %4111 = vmatpush2.msra.mxu0 0.0
    %4112 = vmatprep.subr.mxu0 0.0
    %4113 = vmatpush2.msra.mxu0 0.0
    %4114 = vmatprep.subr.mxu0 0.0
    %4115 = vmatpush2.msra.mxu0 0.0
    %4116 = vmatprep.subr.mxu0 0.0
    %4117 = vmatpush2.msra.mxu0 0.0
    %4118 = vmatprep.subr.mxu0 0.0
    %4119 = vmatpush2.msra.mxu0 0.0
    %4120 = vmatprep.subr.mxu0 0.0
    %4121 = vmatpush2.msra.mxu0 0.0
    %4122 = vmatprep.subr.mxu0 0.0
    %4123 = vmatpush2.msra.mxu0 0.0
    %4124 = vmatprep.mubr.f32.mxu0 0.0
    %4125 = vmatmul.mubr.f32.gmra.mxu0 %v4058
    %v4126 = vpop.f32.mrf.mxu0
    %v4127 = vadd.f32 0.0, %v4126
    %v4128 = vpop.f32.mrf.mxu0
    %4129 = vdwg.mxu0
    %v4130 = vmul.f32 %v4054, %v3982
    %v4131 = vmul.f32 %v4127, %v3983
    %4132 = vrot.lane.b32.xlu0 %v3810, 120
    %v4133 = vpop.permute.xlu0 %4132
    %v4134 = vsel %vm367, %v4133, 0
    %4136 = vmatprep.subr.mxu0 0.0
    %4137 = vmatpush1.xpose.msra.mxu0 0.0
    %4138 = vmatprep.subr.mxu0 0.0
    %4139 = vmatpush1.xpose.msra.mxu0 0.0
    %4140 = vmatprep.subr.mxu0 0.0
    %4141 = vmatpush1.xpose.msra.mxu0 0.0
    %4142 = vmatprep.subr.mxu0 0.0
    %4143 = vmatpush1.xpose.msra.mxu0 0.0
    %4144 = vmatprep.subr.mxu0 0.0
    %4145 = vmatpush1.xpose.msra.mxu0 0.0
    %4146 = vmatprep.subr.mxu0 0.0
    %4147 = vmatpush1.xpose.msra.mxu0 0.0
    %4148 = vmatprep.subr.mxu0 0.0
    %4149 = vmatpush1.xpose.msra.mxu0 0.0
    %4150 = vmatprep.subr.mxu0 0.0
    %4151 = vmatpush1.xpose.msra.mxu0 0.0
    %4152 = vmatprep.subr.mxu0 0.0
    %4153 = vmatpush1.xpose.msra.mxu0 0.0
    %4154 = vmatprep.subr.mxu0 0.0
    %4155 = vmatpush1.xpose.msra.mxu0 0.0
    %4156 = vmatprep.subr.mxu0 0.0
    %4157 = vmatpush1.xpose.msra.mxu0 0.0
    %4158 = vmatprep.subr.mxu0 0.0
    %4159 = vmatpush1.xpose.msra.mxu0 0.0
    %4160 = vmatprep.subr.mxu0 0.0
    %4161 = vmatpush1.xpose.msra.mxu0 0.0
    %4162 = vmatprep.subr.mxu0 0.0
    %4163 = vmatpush1.xpose.msra.mxu0 0.0
    %4164 = vmatprep.subr.mxu0 0.0
    %4165 = vmatpush1.xpose.msra.mxu0 %v723
    %4166 = vmatprep.subr.mxu0 0.0
    %4167 = vmatpush1.xpose.msra.mxu0 %v721
    %4168 = vmatprep.subr.mxu0 0.0
    %4169 = vmatpush2.xpose.msra.mxu0 0.0
    %4170 = vmatprep.subr.mxu0 0.0
    %4171 = vmatpush2.xpose.msra.mxu0 0.0
    %4172 = vmatprep.subr.mxu0 0.0
    %4173 = vmatpush2.xpose.msra.mxu0 0.0
    %4174 = vmatprep.subr.mxu0 0.0
    %4175 = vmatpush2.xpose.msra.mxu0 0.0
    %4176 = vmatprep.subr.mxu0 0.0
    %4177 = vmatpush2.xpose.msra.mxu0 0.0
    %4178 = vmatprep.subr.mxu0 0.0
    %4179 = vmatpush2.xpose.msra.mxu0 0.0
    %4180 = vmatprep.subr.mxu0 0.0
    %4181 = vmatpush2.xpose.msra.mxu0 0.0
    %4182 = vmatprep.subr.mxu0 0.0
    %4183 = vmatpush2.xpose.msra.mxu0 0.0
    %4184 = vmatprep.subr.mxu0 0.0
    %4185 = vmatpush2.xpose.msra.mxu0 0.0
    %4186 = vmatprep.subr.mxu0 0.0
    %4187 = vmatpush2.xpose.msra.mxu0 0.0
    %4188 = vmatprep.subr.mxu0 0.0
    %4189 = vmatpush2.xpose.msra.mxu0 0.0
    %4190 = vmatprep.subr.mxu0 0.0
    %4191 = vmatpush2.xpose.msra.mxu0 0.0
    %4192 = vmatprep.subr.mxu0 0.0
    %4193 = vmatpush2.xpose.msra.mxu0 0.0
    %4194 = vmatprep.subr.mxu0 0.0
    %4195 = vmatpush2.xpose.msra.mxu0 0.0
    %4196 = vmatprep.subr.mxu0 0.0
    %4197 = vmatpush2.xpose.msra.mxu0 0.0
    %4198 = vmatprep.subr.mxu0 0.0
    %4199 = vmatpush2.xpose.msra.mxu0 0.0
    %4200 = vmatprep.mubr.f32.mxu0 0.0
    %4201 = vmatmul.mubr.f32.gmra.mxu0 %v4134
    %v4202 = vpop.f32.mrf.mxu0
    %v4203 = vadd.f32 0.0, %v4202
    %v4204 = vpop.f32.mrf.mxu0
    %4205 = vdwg.mxu0
    %4206 = vrot.lane.b32.xlu0 %v3811, 120
    %v4207 = vpop.permute.xlu0 %4206
    %v4208 = vsel %vm367, %v4207, 0
    %4210 = vmatprep.subr.mxu0 0.0
    %4211 = vmatpush1.xpose.msra.mxu0 0.0
    %4212 = vmatprep.subr.mxu0 0.0
    %4213 = vmatpush1.xpose.msra.mxu0 0.0
    %4214 = vmatprep.subr.mxu0 0.0
    %4215 = vmatpush1.xpose.msra.mxu0 0.0
    %4216 = vmatprep.subr.mxu0 0.0
    %4217 = vmatpush1.xpose.msra.mxu0 0.0
    %4218 = vmatprep.subr.mxu0 0.0
    %4219 = vmatpush1.xpose.msra.mxu0 0.0
    %4220 = vmatprep.subr.mxu0 0.0
    %4221 = vmatpush1.xpose.msra.mxu0 0.0
    %4222 = vmatprep.subr.mxu0 0.0
    %4223 = vmatpush1.xpose.msra.mxu0 0.0
    %4224 = vmatprep.subr.mxu0 0.0
    %4225 = vmatpush1.xpose.msra.mxu0 0.0
    %4226 = vmatprep.subr.mxu0 0.0
    %4227 = vmatpush1.xpose.msra.mxu0 0.0
    %4228 = vmatprep.subr.mxu0 0.0
    %4229 = vmatpush1.xpose.msra.mxu0 0.0
    %4230 = vmatprep.subr.mxu0 0.0
    %4231 = vmatpush1.xpose.msra.mxu0 0.0
    %4232 = vmatprep.subr.mxu0 0.0
    %4233 = vmatpush1.xpose.msra.mxu0 0.0
    %4234 = vmatprep.subr.mxu0 0.0
    %4235 = vmatpush1.xpose.msra.mxu0 0.0
    %4236 = vmatprep.subr.mxu0 0.0
    %4237 = vmatpush1.xpose.msra.mxu0 0.0
    %4238 = vmatprep.subr.mxu0 0.0
    %4239 = vmatpush1.xpose.msra.mxu0 %v805
    %4240 = vmatprep.subr.mxu0 0.0
    %4241 = vmatpush1.xpose.msra.mxu0 %v803
    %4242 = vmatprep.subr.mxu0 0.0
    %4243 = vmatpush2.xpose.msra.mxu0 0.0
    %4244 = vmatprep.subr.mxu0 0.0
    %4245 = vmatpush2.xpose.msra.mxu0 0.0
    %4246 = vmatprep.subr.mxu0 0.0
    %4247 = vmatpush2.xpose.msra.mxu0 0.0
    %4248 = vmatprep.subr.mxu0 0.0
    %4249 = vmatpush2.xpose.msra.mxu0 0.0
    %4250 = vmatprep.subr.mxu0 0.0
    %4251 = vmatpush2.xpose.msra.mxu0 0.0
    %4252 = vmatprep.subr.mxu0 0.0
    %4253 = vmatpush2.xpose.msra.mxu0 0.0
    %4254 = vmatprep.subr.mxu0 0.0
    %4255 = vmatpush2.xpose.msra.mxu0 0.0
    %4256 = vmatprep.subr.mxu0 0.0
    %4257 = vmatpush2.xpose.msra.mxu0 0.0
    %4258 = vmatprep.subr.mxu0 0.0
    %4259 = vmatpush2.xpose.msra.mxu0 0.0
    %4260 = vmatprep.subr.mxu0 0.0
    %4261 = vmatpush2.xpose.msra.mxu0 0.0
    %4262 = vmatprep.subr.mxu0 0.0
    %4263 = vmatpush2.xpose.msra.mxu0 0.0
    %4264 = vmatprep.subr.mxu0 0.0
    %4265 = vmatpush2.xpose.msra.mxu0 0.0
    %4266 = vmatprep.subr.mxu0 0.0
    %4267 = vmatpush2.xpose.msra.mxu0 0.0
    %4268 = vmatprep.subr.mxu0 0.0
    %4269 = vmatpush2.xpose.msra.mxu0 0.0
    %4270 = vmatprep.subr.mxu0 0.0
    %4271 = vmatpush2.xpose.msra.mxu0 0.0
    %4272 = vmatprep.subr.mxu0 0.0
    %4273 = vmatpush2.xpose.msra.mxu0 0.0
    %4274 = vmatprep.mubr.f32.mxu0 0.0
    %4275 = vmatmul.mubr.f32.gmra.mxu0 %v4208
    %v4276 = vpop.f32.mrf.mxu0
    %v4277 = vadd.f32 0.0, %v4276
    %v4278 = vpop.f32.mrf.mxu0
    %4279 = vdwg.mxu0
    %v4280 = vsel %vm526, %v4203, -inf
    %4281 = vmax.xlane.f32.xlu0 %v4280
    %v4282 = vpop.xlane.xlu0 %4281
    %v4283 = vsel %vm526, %v4277, -inf
    %4284 = vmax.xlane.f32.xlu0 %v4283
    %v4285 = vpop.xlane.xlu0 %4284
    %v4286 = vsub.f32 %v4203, %v4282
    %v4287 = vsub.f32 %v4277, %v4285
    %v4288 = vmul.f32 %v4286, 1.442695
    %v4289 = vpow.pop %v4288
    %v4290 = vmul.f32 %v4287, 1.442695
    %v4291 = vpow.pop %v4290
    %v4292 = vsel %vm526, %v4289, 0.0
    %4293 = vadd.xlane.f32.xlu0 %v4292
    %v4294 = vpop.xlane.xlu0 %4293
    %v4295 = vsel %vm526, %v4291, 0.0
    %4296 = vadd.xlane.f32.xlu0 %v4295
    %v4297 = vpop.xlane.xlu0 %4296
    %v4298 = vrcp.pop %v4294
    %v4299 = vrcp.pop %v4297
    %v4300 = vmul.f32 %v4294, %v4298
    %v4301 = vmul.f32 %v4297, %v4299
    %v4302 = vsub.f32 2.0, %v4300
    %v4303 = vsub.f32 2.0, %v4301
    %v4304 = vmul.f32 %v4298, %v4302
    %v4305 = vmul.f32 %v4299, %v4303
    %v4307 = vsel %vm526, %v4289, 0
    %4309 = vmatprep.subr.mxu0 0.0
    %4310 = vmatpush1.msra.mxu0 0.0
    %4311 = vmatprep.subr.mxu0 0.0
    %4312 = vmatpush1.msra.mxu0 0.0
    %4313 = vmatprep.subr.mxu0 0.0
    %4314 = vmatpush1.msra.mxu0 0.0
    %4315 = vmatprep.subr.mxu0 0.0
    %4316 = vmatpush1.msra.mxu0 0.0
    %4317 = vmatprep.subr.mxu0 0.0
    %4318 = vmatpush1.msra.mxu0 0.0
    %4319 = vmatprep.subr.mxu0 0.0
    %4320 = vmatpush1.msra.mxu0 0.0
    %4321 = vmatprep.subr.mxu0 0.0
    %4322 = vmatpush1.msra.mxu0 0.0
    %4323 = vmatprep.subr.mxu0 0.0
    %4324 = vmatpush1.msra.mxu0 0.0
    %4325 = vmatprep.subr.mxu0 0.0
    %4326 = vmatpush1.msra.mxu0 0.0
    %4327 = vmatprep.subr.mxu0 0.0
    %4328 = vmatpush1.msra.mxu0 0.0
    %4329 = vmatprep.subr.mxu0 0.0
    %4330 = vmatpush1.msra.mxu0 0.0
    %4331 = vmatprep.subr.mxu0 0.0
    %4332 = vmatpush1.msra.mxu0 0.0
    %4333 = vmatprep.subr.mxu0 0.0
    %4334 = vmatpush1.msra.mxu0 0.0
    %4335 = vmatprep.subr.mxu0 0.0
    %4336 = vmatpush1.msra.mxu0 0.0
    %4337 = vmatprep.subr.mxu0 0.0
    %4338 = vmatpush1.msra.mxu0 %v906
    %4339 = vmatprep.subr.mxu0 0.0
    %4340 = vmatpush1.msra.mxu0 %v904
    %4341 = vmatprep.subr.mxu0 0.0
    %4342 = vmatpush2.msra.mxu0 0.0
    %4343 = vmatprep.subr.mxu0 0.0
    %4344 = vmatpush2.msra.mxu0 0.0
    %4345 = vmatprep.subr.mxu0 0.0
    %4346 = vmatpush2.msra.mxu0 0.0
    %4347 = vmatprep.subr.mxu0 0.0
    %4348 = vmatpush2.msra.mxu0 0.0
    %4349 = vmatprep.subr.mxu0 0.0
    %4350 = vmatpush2.msra.mxu0 0.0
    %4351 = vmatprep.subr.mxu0 0.0
    %4352 = vmatpush2.msra.mxu0 0.0
    %4353 = vmatprep.subr.mxu0 0.0
    %4354 = vmatpush2.msra.mxu0 0.0
    %4355 = vmatprep.subr.mxu0 0.0
    %4356 = vmatpush2.msra.mxu0 0.0
    %4357 = vmatprep.subr.mxu0 0.0
    %4358 = vmatpush2.msra.mxu0 0.0
    %4359 = vmatprep.subr.mxu0 0.0
    %4360 = vmatpush2.msra.mxu0 0.0
    %4361 = vmatprep.subr.mxu0 0.0
    %4362 = vmatpush2.msra.mxu0 0.0
    %4363 = vmatprep.subr.mxu0 0.0
    %4364 = vmatpush2.msra.mxu0 0.0
    %4365 = vmatprep.subr.mxu0 0.0
    %4366 = vmatpush2.msra.mxu0 0.0
    %4367 = vmatprep.subr.mxu0 0.0
    %4368 = vmatpush2.msra.mxu0 0.0
    %4369 = vmatprep.subr.mxu0 0.0
    %4370 = vmatpush2.msra.mxu0 0.0
    %4371 = vmatprep.subr.mxu0 0.0
    %4372 = vmatpush2.msra.mxu0 0.0
    %4373 = vmatprep.mubr.f32.mxu0 0.0
    %4374 = vmatmul.mubr.f32.gmra.mxu0 %v4307
    %v4375 = vpop.f32.mrf.mxu0
    %v4376 = vadd.f32 0.0, %v4375
    %v4377 = vpop.f32.mrf.mxu0
    %4378 = vdwg.mxu0
    %v4380 = vsel %vm526, %v4291, 0
    %4382 = vmatprep.subr.mxu0 0.0
    %4383 = vmatpush1.msra.mxu0 0.0
    %4384 = vmatprep.subr.mxu0 0.0
    %4385 = vmatpush1.msra.mxu0 0.0
    %4386 = vmatprep.subr.mxu0 0.0
    %4387 = vmatpush1.msra.mxu0 0.0
    %4388 = vmatprep.subr.mxu0 0.0
    %4389 = vmatpush1.msra.mxu0 0.0
    %4390 = vmatprep.subr.mxu0 0.0
    %4391 = vmatpush1.msra.mxu0 0.0
    %4392 = vmatprep.subr.mxu0 0.0
    %4393 = vmatpush1.msra.mxu0 0.0
    %4394 = vmatprep.subr.mxu0 0.0
    %4395 = vmatpush1.msra.mxu0 0.0
    %4396 = vmatprep.subr.mxu0 0.0
    %4397 = vmatpush1.msra.mxu0 0.0
    %4398 = vmatprep.subr.mxu0 0.0
    %4399 = vmatpush1.msra.mxu0 0.0
    %4400 = vmatprep.subr.mxu0 0.0
    %4401 = vmatpush1.msra.mxu0 0.0
    %4402 = vmatprep.subr.mxu0 0.0
    %4403 = vmatpush1.msra.mxu0 0.0
    %4404 = vmatprep.subr.mxu0 0.0
    %4405 = vmatpush1.msra.mxu0 0.0
    %4406 = vmatprep.subr.mxu0 0.0
    %4407 = vmatpush1.msra.mxu0 0.0
    %4408 = vmatprep.subr.mxu0 0.0
    %4409 = vmatpush1.msra.mxu0 0.0
    %4410 = vmatprep.subr.mxu0 0.0
    %4411 = vmatpush1.msra.mxu0 %v985
    %4412 = vmatprep.subr.mxu0 0.0
    %4413 = vmatpush1.msra.mxu0 %v983
    %4414 = vmatprep.subr.mxu0 0.0
    %4415 = vmatpush2.msra.mxu0 0.0
    %4416 = vmatprep.subr.mxu0 0.0
    %4417 = vmatpush2.msra.mxu0 0.0
    %4418 = vmatprep.subr.mxu0 0.0
    %4419 = vmatpush2.msra.mxu0 0.0
    %4420 = vmatprep.subr.mxu0 0.0
    %4421 = vmatpush2.msra.mxu0 0.0
    %4422 = vmatprep.subr.mxu0 0.0
    %4423 = vmatpush2.msra.mxu0 0.0
    %4424 = vmatprep.subr.mxu0 0.0
    %4425 = vmatpush2.msra.mxu0 0.0
    %4426 = vmatprep.subr.mxu0 0.0
    %4427 = vmatpush2.msra.mxu0 0.0
    %4428 = vmatprep.subr.mxu0 0.0
    %4429 = vmatpush2.msra.mxu0 0.0
    %4430 = vmatprep.subr.mxu0 0.0
    %4431 = vmatpush2.msra.mxu0 0.0
    %4432 = vmatprep.subr.mxu0 0.0
    %4433 = vmatpush2.msra.mxu0 0.0
    %4434 = vmatprep.subr.mxu0 0.0
    %4435 = vmatpush2.msra.mxu0 0.0
    %4436 = vmatprep.subr.mxu0 0.0
    %4437 = vmatpush2.msra.mxu0 0.0
    %4438 = vmatprep.subr.mxu0 0.0
    %4439 = vmatpush2.msra.mxu0 0.0
    %4440 = vmatprep.subr.mxu0 0.0
    %4441 = vmatpush2.msra.mxu0 0.0
    %4442 = vmatprep.subr.mxu0 0.0
    %4443 = vmatpush2.msra.mxu0 0.0
    %4444 = vmatprep.subr.mxu0 0.0
    %4445 = vmatpush2.msra.mxu0 0.0
    %4446 = vmatprep.mubr.f32.mxu0 0.0
    %4447 = vmatmul.mubr.f32.gmra.mxu0 %v4380
    %v4448 = vpop.f32.mrf.mxu0
    %v4449 = vadd.f32 0.0, %v4448
    %v4450 = vpop.f32.mrf.mxu0
    %4451 = vdwg.mxu0
    %v4452 = vmul.f32 %v4376, %v4304
    %v4453 = vmul.f32 %v4449, %v4305
    %4454 = vrot.lane.b32.xlu0 %v3810, 112
    %v4455 = vpop.permute.xlu0 %4454
    %v4456 = vsel %vm367, %v4455, 0
    %4458 = vmatprep.subr.mxu0 0.0
    %4459 = vmatpush1.xpose.msra.mxu0 0.0
    %4460 = vmatprep.subr.mxu0 0.0
    %4461 = vmatpush1.xpose.msra.mxu0 0.0
    %4462 = vmatprep.subr.mxu0 0.0
    %4463 = vmatpush1.xpose.msra.mxu0 0.0
    %4464 = vmatprep.subr.mxu0 0.0
    %4465 = vmatpush1.xpose.msra.mxu0 0.0
    %4466 = vmatprep.subr.mxu0 0.0
    %4467 = vmatpush1.xpose.msra.mxu0 0.0
    %4468 = vmatprep.subr.mxu0 0.0
    %4469 = vmatpush1.xpose.msra.mxu0 0.0
    %4470 = vmatprep.subr.mxu0 0.0
    %4471 = vmatpush1.xpose.msra.mxu0 0.0
    %4472 = vmatprep.subr.mxu0 0.0
    %4473 = vmatpush1.xpose.msra.mxu0 0.0
    %4474 = vmatprep.subr.mxu0 0.0
    %4475 = vmatpush1.xpose.msra.mxu0 0.0
    %4476 = vmatprep.subr.mxu0 0.0
    %4477 = vmatpush1.xpose.msra.mxu0 0.0
    %4478 = vmatprep.subr.mxu0 0.0
    %4479 = vmatpush1.xpose.msra.mxu0 0.0
    %4480 = vmatprep.subr.mxu0 0.0
    %4481 = vmatpush1.xpose.msra.mxu0 0.0
    %4482 = vmatprep.subr.mxu0 0.0
    %4483 = vmatpush1.xpose.msra.mxu0 0.0
    %4484 = vmatprep.subr.mxu0 0.0
    %4485 = vmatpush1.xpose.msra.mxu0 0.0
    %4486 = vmatprep.subr.mxu0 0.0
    %4487 = vmatpush1.xpose.msra.mxu0 %v1073
    %4488 = vmatprep.subr.mxu0 0.0
    %4489 = vmatpush1.xpose.msra.mxu0 %v1071
    %4490 = vmatprep.subr.mxu0 0.0
    %4491 = vmatpush2.xpose.msra.mxu0 0.0
    %4492 = vmatprep.subr.mxu0 0.0
    %4493 = vmatpush2.xpose.msra.mxu0 0.0
    %4494 = vmatprep.subr.mxu0 0.0
    %4495 = vmatpush2.xpose.msra.mxu0 0.0
    %4496 = vmatprep.subr.mxu0 0.0
    %4497 = vmatpush2.xpose.msra.mxu0 0.0
    %4498 = vmatprep.subr.mxu0 0.0
    %4499 = vmatpush2.xpose.msra.mxu0 0.0
    %4500 = vmatprep.subr.mxu0 0.0
    %4501 = vmatpush2.xpose.msra.mxu0 0.0
    %4502 = vmatprep.subr.mxu0 0.0
    %4503 = vmatpush2.xpose.msra.mxu0 0.0
    %4504 = vmatprep.subr.mxu0 0.0
    %4505 = vmatpush2.xpose.msra.mxu0 0.0
    %4506 = vmatprep.subr.mxu0 0.0
    %4507 = vmatpush2.xpose.msra.mxu0 0.0
    %4508 = vmatprep.subr.mxu0 0.0
    %4509 = vmatpush2.xpose.msra.mxu0 0.0
    %4510 = vmatprep.subr.mxu0 0.0
    %4511 = vmatpush2.xpose.msra.mxu0 0.0
    %4512 = vmatprep.subr.mxu0 0.0
    %4513 = vmatpush2.xpose.msra.mxu0 0.0
    %4514 = vmatprep.subr.mxu0 0.0
    %4515 = vmatpush2.xpose.msra.mxu0 0.0
    %4516 = vmatprep.subr.mxu0 0.0
    %4517 = vmatpush2.xpose.msra.mxu0 0.0
    %4518 = vmatprep.subr.mxu0 0.0
    %4519 = vmatpush2.xpose.msra.mxu0 0.0
    %4520 = vmatprep.subr.mxu0 0.0
    %4521 = vmatpush2.xpose.msra.mxu0 0.0
    %4522 = vmatprep.mubr.f32.mxu0 0.0
    %4523 = vmatmul.mubr.f32.gmra.mxu0 %v4456
    %v4524 = vpop.f32.mrf.mxu0
    %v4525 = vadd.f32 0.0, %v4524
    %v4526 = vpop.f32.mrf.mxu0
    %4527 = vdwg.mxu0
    %4528 = vrot.lane.b32.xlu0 %v3811, 112
    %v4529 = vpop.permute.xlu0 %4528
    %v4530 = vsel %vm367, %v4529, 0
    %4532 = vmatprep.subr.mxu0 0.0
    %4533 = vmatpush1.xpose.msra.mxu0 0.0
    %4534 = vmatprep.subr.mxu0 0.0
    %4535 = vmatpush1.xpose.msra.mxu0 0.0
    %4536 = vmatprep.subr.mxu0 0.0
    %4537 = vmatpush1.xpose.msra.mxu0 0.0
    %4538 = vmatprep.subr.mxu0 0.0
    %4539 = vmatpush1.xpose.msra.mxu0 0.0
    %4540 = vmatprep.subr.mxu0 0.0
    %4541 = vmatpush1.xpose.msra.mxu0 0.0
    %4542 = vmatprep.subr.mxu0 0.0
    %4543 = vmatpush1.xpose.msra.mxu0 0.0
    %4544 = vmatprep.subr.mxu0 0.0
    %4545 = vmatpush1.xpose.msra.mxu0 0.0
    %4546 = vmatprep.subr.mxu0 0.0
    %4547 = vmatpush1.xpose.msra.mxu0 0.0
    %4548 = vmatprep.subr.mxu0 0.0
    %4549 = vmatpush1.xpose.msra.mxu0 0.0
    %4550 = vmatprep.subr.mxu0 0.0
    %4551 = vmatpush1.xpose.msra.mxu0 0.0
    %4552 = vmatprep.subr.mxu0 0.0
    %4553 = vmatpush1.xpose.msra.mxu0 0.0
    %4554 = vmatprep.subr.mxu0 0.0
    %4555 = vmatpush1.xpose.msra.mxu0 0.0
    %4556 = vmatprep.subr.mxu0 0.0
    %4557 = vmatpush1.xpose.msra.mxu0 0.0
    %4558 = vmatprep.subr.mxu0 0.0
    %4559 = vmatpush1.xpose.msra.mxu0 0.0
    %4560 = vmatprep.subr.mxu0 0.0
    %4561 = vmatpush1.xpose.msra.mxu0 %v1155
    %4562 = vmatprep.subr.mxu0 0.0
    %4563 = vmatpush1.xpose.msra.mxu0 %v1153
    %4564 = vmatprep.subr.mxu0 0.0
    %4565 = vmatpush2.xpose.msra.mxu0 0.0
    %4566 = vmatprep.subr.mxu0 0.0
    %4567 = vmatpush2.xpose.msra.mxu0 0.0
    %4568 = vmatprep.subr.mxu0 0.0
    %4569 = vmatpush2.xpose.msra.mxu0 0.0
    %4570 = vmatprep.subr.mxu0 0.0
    %4571 = vmatpush2.xpose.msra.mxu0 0.0
    %4572 = vmatprep.subr.mxu0 0.0
    %4573 = vmatpush2.xpose.msra.mxu0 0.0
    %4574 = vmatprep.subr.mxu0 0.0
    %4575 = vmatpush2.xpose.msra.mxu0 0.0
    %4576 = vmatprep.subr.mxu0 0.0
    %4577 = vmatpush2.xpose.msra.mxu0 0.0
    %4578 = vmatprep.subr.mxu0 0.0
    %4579 = vmatpush2.xpose.msra.mxu0 0.0
    %4580 = vmatprep.subr.mxu0 0.0
    %4581 = vmatpush2.xpose.msra.mxu0 0.0
    %4582 = vmatprep.subr.mxu0 0.0
    %4583 = vmatpush2.xpose.msra.mxu0 0.0
    %4584 = vmatprep.subr.mxu0 0.0
    %4585 = vmatpush2.xpose.msra.mxu0 0.0
    %4586 = vmatprep.subr.mxu0 0.0
    %4587 = vmatpush2.xpose.msra.mxu0 0.0
    %4588 = vmatprep.subr.mxu0 0.0
    %4589 = vmatpush2.xpose.msra.mxu0 0.0
    %4590 = vmatprep.subr.mxu0 0.0
    %4591 = vmatpush2.xpose.msra.mxu0 0.0
    %4592 = vmatprep.subr.mxu0 0.0
    %4593 = vmatpush2.xpose.msra.mxu0 0.0
    %4594 = vmatprep.subr.mxu0 0.0
    %4595 = vmatpush2.xpose.msra.mxu0 0.0
    %4596 = vmatprep.mubr.f32.mxu0 0.0
    %4597 = vmatmul.mubr.f32.gmra.mxu0 %v4530
    %v4598 = vpop.f32.mrf.mxu0
    %v4599 = vadd.f32 0.0, %v4598
    %v4600 = vpop.f32.mrf.mxu0
    %4601 = vdwg.mxu0
    %v4602 = vsel %vm526, %v4525, -inf
    %4603 = vmax.xlane.f32.xlu0 %v4602
    %v4604 = vpop.xlane.xlu0 %4603
    %v4605 = vsel %vm526, %v4599, -inf
    %4606 = vmax.xlane.f32.xlu0 %v4605
    %v4607 = vpop.xlane.xlu0 %4606
    %v4608 = vsub.f32 %v4525, %v4604
    %v4609 = vsub.f32 %v4599, %v4607
    %v4610 = vmul.f32 %v4608, 1.442695
    %v4611 = vpow.pop %v4610
    %v4612 = vmul.f32 %v4609, 1.442695
    %v4613 = vpow.pop %v4612
    %v4614 = vsel %vm526, %v4611, 0.0
    %4615 = vadd.xlane.f32.xlu0 %v4614
    %v4616 = vpop.xlane.xlu0 %4615
    %v4617 = vsel %vm526, %v4613, 0.0
    %4618 = vadd.xlane.f32.xlu0 %v4617
    %v4619 = vpop.xlane.xlu0 %4618
    %v4620 = vrcp.pop %v4616
    %v4621 = vrcp.pop %v4619
    %v4622 = vmul.f32 %v4616, %v4620
    %v4623 = vmul.f32 %v4619, %v4621
    %v4624 = vsub.f32 2.0, %v4622
    %v4625 = vsub.f32 2.0, %v4623
    %v4626 = vmul.f32 %v4620, %v4624
    %v4627 = vmul.f32 %v4621, %v4625
    %v4629 = vsel %vm526, %v4611, 0
    %4631 = vmatprep.subr.mxu0 0.0
    %4632 = vmatpush1.msra.mxu0 0.0
    %4633 = vmatprep.subr.mxu0 0.0
    %4634 = vmatpush1.msra.mxu0 0.0
    %4635 = vmatprep.subr.mxu0 0.0
    %4636 = vmatpush1.msra.mxu0 0.0
    %4637 = vmatprep.subr.mxu0 0.0
    %4638 = vmatpush1.msra.mxu0 0.0
    %4639 = vmatprep.subr.mxu0 0.0
    %4640 = vmatpush1.msra.mxu0 0.0
    %4641 = vmatprep.subr.mxu0 0.0
    %4642 = vmatpush1.msra.mxu0 0.0
    %4643 = vmatprep.subr.mxu0 0.0
    %4644 = vmatpush1.msra.mxu0 0.0
    %4645 = vmatprep.subr.mxu0 0.0
    %4646 = vmatpush1.msra.mxu0 0.0
    %4647 = vmatprep.subr.mxu0 0.0
    %4648 = vmatpush1.msra.mxu0 0.0
    %4649 = vmatprep.subr.mxu0 0.0
    %4650 = vmatpush1.msra.mxu0 0.0
    %4651 = vmatprep.subr.mxu0 0.0
    %4652 = vmatpush1.msra.mxu0 0.0
    %4653 = vmatprep.subr.mxu0 0.0
    %4654 = vmatpush1.msra.mxu0 0.0
    %4655 = vmatprep.subr.mxu0 0.0
    %4656 = vmatpush1.msra.mxu0 0.0
    %4657 = vmatprep.subr.mxu0 0.0
    %4658 = vmatpush1.msra.mxu0 0.0
    %4659 = vmatprep.subr.mxu0 0.0
    %4660 = vmatpush1.msra.mxu0 %v1256
    %4661 = vmatprep.subr.mxu0 0.0
    %4662 = vmatpush1.msra.mxu0 %v1254
    %4663 = vmatprep.subr.mxu0 0.0
    %4664 = vmatpush2.msra.mxu0 0.0
    %4665 = vmatprep.subr.mxu0 0.0
    %4666 = vmatpush2.msra.mxu0 0.0
    %4667 = vmatprep.subr.mxu0 0.0
    %4668 = vmatpush2.msra.mxu0 0.0
    %4669 = vmatprep.subr.mxu0 0.0
    %4670 = vmatpush2.msra.mxu0 0.0
    %4671 = vmatprep.subr.mxu0 0.0
    %4672 = vmatpush2.msra.mxu0 0.0
    %4673 = vmatprep.subr.mxu0 0.0
    %4674 = vmatpush2.msra.mxu0 0.0
    %4675 = vmatprep.subr.mxu0 0.0
    %4676 = vmatpush2.msra.mxu0 0.0
    %4677 = vmatprep.subr.mxu0 0.0
    %4678 = vmatpush2.msra.mxu0 0.0
    %4679 = vmatprep.subr.mxu0 0.0
    %4680 = vmatpush2.msra.mxu0 0.0
    %4681 = vmatprep.subr.mxu0 0.0
    %4682 = vmatpush2.msra.mxu0 0.0
    %4683 = vmatprep.subr.mxu0 0.0
    %4684 = vmatpush2.msra.mxu0 0.0
    %4685 = vmatprep.subr.mxu0 0.0
    %4686 = vmatpush2.msra.mxu0 0.0
    %4687 = vmatprep.subr.mxu0 0.0
    %4688 = vmatpush2.msra.mxu0 0.0
    %4689 = vmatprep.subr.mxu0 0.0
    %4690 = vmatpush2.msra.mxu0 0.0
    %4691 = vmatprep.subr.mxu0 0.0
    %4692 = vmatpush2.msra.mxu0 0.0
    %4693 = vmatprep.subr.mxu0 0.0
    %4694 = vmatpush2.msra.mxu0 0.0
    %4695 = vmatprep.mubr.f32.mxu0 0.0
    %4696 = vmatmul.mubr.f32.gmra.mxu0 %v4629
    %v4697 = vpop.f32.mrf.mxu0
    %v4698 = vadd.f32 0.0, %v4697
    %v4699 = vpop.f32.mrf.mxu0
    %4700 = vdwg.mxu0
    %v4702 = vsel %vm526, %v4613, 0
    %4704 = vmatprep.subr.mxu0 0.0
    %4705 = vmatpush1.msra.mxu0 0.0
    %4706 = vmatprep.subr.mxu0 0.0
    %4707 = vmatpush1.msra.mxu0 0.0
    %4708 = vmatprep.subr.mxu0 0.0
    %4709 = vmatpush1.msra.mxu0 0.0
    %4710 = vmatprep.subr.mxu0 0.0
    %4711 = vmatpush1.msra.mxu0 0.0
    %4712 = vmatprep.subr.mxu0 0.0
    %4713 = vmatpush1.msra.mxu0 0.0
    %4714 = vmatprep.subr.mxu0 0.0
    %4715 = vmatpush1.msra.mxu0 0.0
    %4716 = vmatprep.subr.mxu0 0.0
    %4717 = vmatpush1.msra.mxu0 0.0
    %4718 = vmatprep.subr.mxu0 0.0
    %4719 = vmatpush1.msra.mxu0 0.0
    %4720 = vmatprep.subr.mxu0 0.0
    %4721 = vmatpush1.msra.mxu0 0.0
    %4722 = vmatprep.subr.mxu0 0.0
    %4723 = vmatpush1.msra.mxu0 0.0
    %4724 = vmatprep.subr.mxu0 0.0
    %4725 = vmatpush1.msra.mxu0 0.0
    %4726 = vmatprep.subr.mxu0 0.0
    %4727 = vmatpush1.msra.mxu0 0.0
    %4728 = vmatprep.subr.mxu0 0.0
    %4729 = vmatpush1.msra.mxu0 0.0
    %4730 = vmatprep.subr.mxu0 0.0
    %4731 = vmatpush1.msra.mxu0 0.0
    %4732 = vmatprep.subr.mxu0 0.0
    %4733 = vmatpush1.msra.mxu0 %v1335
    %4734 = vmatprep.subr.mxu0 0.0
    %4735 = vmatpush1.msra.mxu0 %v1333
    %4736 = vmatprep.subr.mxu0 0.0
    %4737 = vmatpush2.msra.mxu0 0.0
    %4738 = vmatprep.subr.mxu0 0.0
    %4739 = vmatpush2.msra.mxu0 0.0
    %4740 = vmatprep.subr.mxu0 0.0
    %4741 = vmatpush2.msra.mxu0 0.0
    %4742 = vmatprep.subr.mxu0 0.0
    %4743 = vmatpush2.msra.mxu0 0.0
    %4744 = vmatprep.subr.mxu0 0.0
    %4745 = vmatpush2.msra.mxu0 0.0
    %4746 = vmatprep.subr.mxu0 0.0
    %4747 = vmatpush2.msra.mxu0 0.0
    %4748 = vmatprep.subr.mxu0 0.0
    %4749 = vmatpush2.msra.mxu0 0.0
    %4750 = vmatprep.subr.mxu0 0.0
    %4751 = vmatpush2.msra.mxu0 0.0
    %4752 = vmatprep.subr.mxu0 0.0
    %4753 = vmatpush2.msra.mxu0 0.0
    %4754 = vmatprep.subr.mxu0 0.0
    %4755 = vmatpush2.msra.mxu0 0.0
    %4756 = vmatprep.subr.mxu0 0.0
    %4757 = vmatpush2.msra.mxu0 0.0
    %4758 = vmatprep.subr.mxu0 0.0
    %4759 = vmatpush2.msra.mxu0 0.0
    %4760 = vmatprep.subr.mxu0 0.0
    %4761 = vmatpush2.msra.mxu0 0.0
    %4762 = vmatprep.subr.mxu0 0.0
    %4763 = vmatpush2.msra.mxu0 0.0
    %4764 = vmatprep.subr.mxu0 0.0
    %4765 = vmatpush2.msra.mxu0 0.0
    %4766 = vmatprep.subr.mxu0 0.0
    %4767 = vmatpush2.msra.mxu0 0.0
    %4768 = vmatprep.mubr.f32.mxu0 0.0
    %4769 = vmatmul.mubr.f32.gmra.mxu0 %v4702
    %v4770 = vpop.f32.mrf.mxu0
    %v4771 = vadd.f32 0.0, %v4770
    %v4772 = vpop.f32.mrf.mxu0
    %4773 = vdwg.mxu0
    %v4774 = vmul.f32 %v4698, %v4626
    %v4775 = vmul.f32 %v4771, %v4627
    %4776 = vrot.lane.b32.xlu0 %v3810, 104
    %v4777 = vpop.permute.xlu0 %4776
    %v4778 = vsel %vm367, %v4777, 0
    %4780 = vmatprep.subr.mxu0 0.0
    %4781 = vmatpush1.xpose.msra.mxu0 0.0
    %4782 = vmatprep.subr.mxu0 0.0
    %4783 = vmatpush1.xpose.msra.mxu0 0.0
    %4784 = vmatprep.subr.mxu0 0.0
    %4785 = vmatpush1.xpose.msra.mxu0 0.0
    %4786 = vmatprep.subr.mxu0 0.0
    %4787 = vmatpush1.xpose.msra.mxu0 0.0
    %4788 = vmatprep.subr.mxu0 0.0
    %4789 = vmatpush1.xpose.msra.mxu0 0.0
    %4790 = vmatprep.subr.mxu0 0.0
    %4791 = vmatpush1.xpose.msra.mxu0 0.0
    %4792 = vmatprep.subr.mxu0 0.0
    %4793 = vmatpush1.xpose.msra.mxu0 0.0
    %4794 = vmatprep.subr.mxu0 0.0
    %4795 = vmatpush1.xpose.msra.mxu0 0.0
    %4796 = vmatprep.subr.mxu0 0.0
    %4797 = vmatpush1.xpose.msra.mxu0 0.0
    %4798 = vmatprep.subr.mxu0 0.0
    %4799 = vmatpush1.xpose.msra.mxu0 0.0
    %4800 = vmatprep.subr.mxu0 0.0
    %4801 = vmatpush1.xpose.msra.mxu0 0.0
    %4802 = vmatprep.subr.mxu0 0.0
    %4803 = vmatpush1.xpose.msra.mxu0 0.0
    %4804 = vmatprep.subr.mxu0 0.0
    %4805 = vmatpush1.xpose.msra.mxu0 0.0
    %4806 = vmatprep.subr.mxu0 0.0
    %4807 = vmatpush1.xpose.msra.mxu0 0.0
    %4808 = vmatprep.subr.mxu0 0.0
    %4809 = vmatpush1.xpose.msra.mxu0 %v1423
    %4810 = vmatprep.subr.mxu0 0.0
    %4811 = vmatpush1.xpose.msra.mxu0 %v1421
    %4812 = vmatprep.subr.mxu0 0.0
    %4813 = vmatpush2.xpose.msra.mxu0 0.0
    %4814 = vmatprep.subr.mxu0 0.0
    %4815 = vmatpush2.xpose.msra.mxu0 0.0
    %4816 = vmatprep.subr.mxu0 0.0
    %4817 = vmatpush2.xpose.msra.mxu0 0.0
    %4818 = vmatprep.subr.mxu0 0.0
    %4819 = vmatpush2.xpose.msra.mxu0 0.0
    %4820 = vmatprep.subr.mxu0 0.0
    %4821 = vmatpush2.xpose.msra.mxu0 0.0
    %4822 = vmatprep.subr.mxu0 0.0
    %4823 = vmatpush2.xpose.msra.mxu0 0.0
    %4824 = vmatprep.subr.mxu0 0.0
    %4825 = vmatpush2.xpose.msra.mxu0 0.0
    %4826 = vmatprep.subr.mxu0 0.0
    %4827 = vmatpush2.xpose.msra.mxu0 0.0
    %4828 = vmatprep.subr.mxu0 0.0
    %4829 = vmatpush2.xpose.msra.mxu0 0.0
    %4830 = vmatprep.subr.mxu0 0.0
    %4831 = vmatpush2.xpose.msra.mxu0 0.0
    %4832 = vmatprep.subr.mxu0 0.0
    %4833 = vmatpush2.xpose.msra.mxu0 0.0
    %4834 = vmatprep.subr.mxu0 0.0
    %4835 = vmatpush2.xpose.msra.mxu0 0.0
    %4836 = vmatprep.subr.mxu0 0.0
    %4837 = vmatpush2.xpose.msra.mxu0 0.0
    %4838 = vmatprep.subr.mxu0 0.0
    %4839 = vmatpush2.xpose.msra.mxu0 0.0
    %4840 = vmatprep.subr.mxu0 0.0
    %4841 = vmatpush2.xpose.msra.mxu0 0.0
    %4842 = vmatprep.subr.mxu0 0.0
    %4843 = vmatpush2.xpose.msra.mxu0 0.0
    %4844 = vmatprep.mubr.f32.mxu0 0.0
    %4845 = vmatmul.mubr.f32.gmra.mxu0 %v4778
    %v4846 = vpop.f32.mrf.mxu0
    %v4847 = vadd.f32 0.0, %v4846
    %v4848 = vpop.f32.mrf.mxu0
    %4849 = vdwg.mxu0
    %4850 = vrot.lane.b32.xlu0 %v3811, 104
    %v4851 = vpop.permute.xlu0 %4850
    %v4852 = vsel %vm367, %v4851, 0
    %4854 = vmatprep.subr.mxu0 0.0
    %4855 = vmatpush1.xpose.msra.mxu0 0.0
    %4856 = vmatprep.subr.mxu0 0.0
    %4857 = vmatpush1.xpose.msra.mxu0 0.0
    %4858 = vmatprep.subr.mxu0 0.0
    %4859 = vmatpush1.xpose.msra.mxu0 0.0
    %4860 = vmatprep.subr.mxu0 0.0
    %4861 = vmatpush1.xpose.msra.mxu0 0.0
    %4862 = vmatprep.subr.mxu0 0.0
    %4863 = vmatpush1.xpose.msra.mxu0 0.0
    %4864 = vmatprep.subr.mxu0 0.0
    %4865 = vmatpush1.xpose.msra.mxu0 0.0
    %4866 = vmatprep.subr.mxu0 0.0
    %4867 = vmatpush1.xpose.msra.mxu0 0.0
    %4868 = vmatprep.subr.mxu0 0.0
    %4869 = vmatpush1.xpose.msra.mxu0 0.0
    %4870 = vmatprep.subr.mxu0 0.0
    %4871 = vmatpush1.xpose.msra.mxu0 0.0
    %4872 = vmatprep.subr.mxu0 0.0
    %4873 = vmatpush1.xpose.msra.mxu0 0.0
    %4874 = vmatprep.subr.mxu0 0.0
    %4875 = vmatpush1.xpose.msra.mxu0 0.0
    %4876 = vmatprep.subr.mxu0 0.0
    %4877 = vmatpush1.xpose.msra.mxu0 0.0
    %4878 = vmatprep.subr.mxu0 0.0
    %4879 = vmatpush1.xpose.msra.mxu0 0.0
    %4880 = vmatprep.subr.mxu0 0.0
    %4881 = vmatpush1.xpose.msra.mxu0 0.0
    %4882 = vmatprep.subr.mxu0 0.0
    %4883 = vmatpush1.xpose.msra.mxu0 %v1505
    %4884 = vmatprep.subr.mxu0 0.0
    %4885 = vmatpush1.xpose.msra.mxu0 %v1503
    %4886 = vmatprep.subr.mxu0 0.0
    %4887 = vmatpush2.xpose.msra.mxu0 0.0
    %4888 = vmatprep.subr.mxu0 0.0
    %4889 = vmatpush2.xpose.msra.mxu0 0.0
    %4890 = vmatprep.subr.mxu0 0.0
    %4891 = vmatpush2.xpose.msra.mxu0 0.0
    %4892 = vmatprep.subr.mxu0 0.0
    %4893 = vmatpush2.xpose.msra.mxu0 0.0
    %4894 = vmatprep.subr.mxu0 0.0
    %4895 = vmatpush2.xpose.msra.mxu0 0.0
    %4896 = vmatprep.subr.mxu0 0.0
    %4897 = vmatpush2.xpose.msra.mxu0 0.0
    %4898 = vmatprep.subr.mxu0 0.0
    %4899 = vmatpush2.xpose.msra.mxu0 0.0
    %4900 = vmatprep.subr.mxu0 0.0
    %4901 = vmatpush2.xpose.msra.mxu0 0.0
    %4902 = vmatprep.subr.mxu0 0.0
    %4903 = vmatpush2.xpose.msra.mxu0 0.0
    %4904 = vmatprep.subr.mxu0 0.0
    %4905 = vmatpush2.xpose.msra.mxu0 0.0
    %4906 = vmatprep.subr.mxu0 0.0
    %4907 = vmatpush2.xpose.msra.mxu0 0.0
    %4908 = vmatprep.subr.mxu0 0.0
    %4909 = vmatpush2.xpose.msra.mxu0 0.0
    %4910 = vmatprep.subr.mxu0 0.0
    %4911 = vmatpush2.xpose.msra.mxu0 0.0
    %4912 = vmatprep.subr.mxu0 0.0
    %4913 = vmatpush2.xpose.msra.mxu0 0.0
    %4914 = vmatprep.subr.mxu0 0.0
    %4915 = vmatpush2.xpose.msra.mxu0 0.0
    %4916 = vmatprep.subr.mxu0 0.0
    %4917 = vmatpush2.xpose.msra.mxu0 0.0
    %4918 = vmatprep.mubr.f32.mxu0 0.0
    %4919 = vmatmul.mubr.f32.gmra.mxu0 %v4852
    %v4920 = vpop.f32.mrf.mxu0
    %v4921 = vadd.f32 0.0, %v4920
    %v4922 = vpop.f32.mrf.mxu0
    %4923 = vdwg.mxu0
    %v4924 = vsel %vm526, %v4847, -inf
    %4925 = vmax.xlane.f32.xlu0 %v4924
    %v4926 = vpop.xlane.xlu0 %4925
    %v4927 = vsel %vm526, %v4921, -inf
    %4928 = vmax.xlane.f32.xlu0 %v4927
    %v4929 = vpop.xlane.xlu0 %4928
    %v4930 = vsub.f32 %v4847, %v4926
    %v4931 = vsub.f32 %v4921, %v4929
    %v4932 = vmul.f32 %v4930, 1.442695
    %v4933 = vpow.pop %v4932
    %v4934 = vmul.f32 %v4931, 1.442695
    %v4935 = vpow.pop %v4934
    %v4936 = vsel %vm526, %v4933, 0.0
    %4937 = vadd.xlane.f32.xlu0 %v4936
    %v4938 = vpop.xlane.xlu0 %4937
    %v4939 = vsel %vm526, %v4935, 0.0
    %4940 = vadd.xlane.f32.xlu0 %v4939
    %v4941 = vpop.xlane.xlu0 %4940
    %v4942 = vrcp.pop %v4938
    %v4943 = vrcp.pop %v4941
    %v4944 = vmul.f32 %v4938, %v4942
    %v4945 = vmul.f32 %v4941, %v4943
    %v4946 = vsub.f32 2.0, %v4944
    %v4947 = vsub.f32 2.0, %v4945
    %v4948 = vmul.f32 %v4942, %v4946
    %v4949 = vmul.f32 %v4943, %v4947
    %v4951 = vsel %vm526, %v4933, 0
    %4953 = vmatprep.subr.mxu0 0.0
    %4954 = vmatpush1.msra.mxu0 0.0
    %4955 = vmatprep.subr.mxu0 0.0
    %4956 = vmatpush1.msra.mxu0 0.0
    %4957 = vmatprep.subr.mxu0 0.0
    %4958 = vmatpush1.msra.mxu0 0.0
    %4959 = vmatprep.subr.mxu0 0.0
    %4960 = vmatpush1.msra.mxu0 0.0
    %4961 = vmatprep.subr.mxu0 0.0
    %4962 = vmatpush1.msra.mxu0 0.0
    %4963 = vmatprep.subr.mxu0 0.0
    %4964 = vmatpush1.msra.mxu0 0.0
    %4965 = vmatprep.subr.mxu0 0.0
    %4966 = vmatpush1.msra.mxu0 0.0
    %4967 = vmatprep.subr.mxu0 0.0
    %4968 = vmatpush1.msra.mxu0 0.0
    %4969 = vmatprep.subr.mxu0 0.0
    %4970 = vmatpush1.msra.mxu0 0.0
    %4971 = vmatprep.subr.mxu0 0.0
    %4972 = vmatpush1.msra.mxu0 0.0
    %4973 = vmatprep.subr.mxu0 0.0
    %4974 = vmatpush1.msra.mxu0 0.0
    %4975 = vmatprep.subr.mxu0 0.0
    %4976 = vmatpush1.msra.mxu0 0.0
    %4977 = vmatprep.subr.mxu0 0.0
    %4978 = vmatpush1.msra.mxu0 0.0
    %4979 = vmatprep.subr.mxu0 0.0
    %4980 = vmatpush1.msra.mxu0 0.0
    %4981 = vmatprep.subr.mxu0 0.0
    %4982 = vmatpush1.msra.mxu0 %v1606
    %4983 = vmatprep.subr.mxu0 0.0
    %4984 = vmatpush1.msra.mxu0 %v1604
    %4985 = vmatprep.subr.mxu0 0.0
    %4986 = vmatpush2.msra.mxu0 0.0
    %4987 = vmatprep.subr.mxu0 0.0
    %4988 = vmatpush2.msra.mxu0 0.0
    %4989 = vmatprep.subr.mxu0 0.0
    %4990 = vmatpush2.msra.mxu0 0.0
    %4991 = vmatprep.subr.mxu0 0.0
    %4992 = vmatpush2.msra.mxu0 0.0
    %4993 = vmatprep.subr.mxu0 0.0
    %4994 = vmatpush2.msra.mxu0 0.0
    %4995 = vmatprep.subr.mxu0 0.0
    %4996 = vmatpush2.msra.mxu0 0.0
    %4997 = vmatprep.subr.mxu0 0.0
    %4998 = vmatpush2.msra.mxu0 0.0
    %4999 = vmatprep.subr.mxu0 0.0
    %5000 = vmatpush2.msra.mxu0 0.0
    %5001 = vmatprep.subr.mxu0 0.0
    %5002 = vmatpush2.msra.mxu0 0.0
    %5003 = vmatprep.subr.mxu0 0.0
    %5004 = vmatpush2.msra.mxu0 0.0
    %5005 = vmatprep.subr.mxu0 0.0
    %5006 = vmatpush2.msra.mxu0 0.0
    %5007 = vmatprep.subr.mxu0 0.0
    %5008 = vmatpush2.msra.mxu0 0.0
    %5009 = vmatprep.subr.mxu0 0.0
    %5010 = vmatpush2.msra.mxu0 0.0
    %5011 = vmatprep.subr.mxu0 0.0
    %5012 = vmatpush2.msra.mxu0 0.0
    %5013 = vmatprep.subr.mxu0 0.0
    %5014 = vmatpush2.msra.mxu0 0.0
    %5015 = vmatprep.subr.mxu0 0.0
    %5016 = vmatpush2.msra.mxu0 0.0
    %5017 = vmatprep.mubr.f32.mxu0 0.0
    %5018 = vmatmul.mubr.f32.gmra.mxu0 %v4951
    %v5019 = vpop.f32.mrf.mxu0
    %v5020 = vadd.f32 0.0, %v5019
    %v5021 = vpop.f32.mrf.mxu0
    %5022 = vdwg.mxu0
    %v5024 = vsel %vm526, %v4935, 0
    %5026 = vmatprep.subr.mxu0 0.0
    %5027 = vmatpush1.msra.mxu0 0.0
    %5028 = vmatprep.subr.mxu0 0.0
    %5029 = vmatpush1.msra.mxu0 0.0
    %5030 = vmatprep.subr.mxu0 0.0
    %5031 = vmatpush1.msra.mxu0 0.0
    %5032 = vmatprep.subr.mxu0 0.0
    %5033 = vmatpush1.msra.mxu0 0.0
    %5034 = vmatprep.subr.mxu0 0.0
    %5035 = vmatpush1.msra.mxu0 0.0
    %5036 = vmatprep.subr.mxu0 0.0
    %5037 = vmatpush1.msra.mxu0 0.0
    %5038 = vmatprep.subr.mxu0 0.0
    %5039 = vmatpush1.msra.mxu0 0.0
    %5040 = vmatprep.subr.mxu0 0.0
    %5041 = vmatpush1.msra.mxu0 0.0
    %5042 = vmatprep.subr.mxu0 0.0
    %5043 = vmatpush1.msra.mxu0 0.0
    %5044 = vmatprep.subr.mxu0 0.0
    %5045 = vmatpush1.msra.mxu0 0.0
    %5046 = vmatprep.subr.mxu0 0.0
    %5047 = vmatpush1.msra.mxu0 0.0
    %5048 = vmatprep.subr.mxu0 0.0
    %5049 = vmatpush1.msra.mxu0 0.0
    %5050 = vmatprep.subr.mxu0 0.0
    %5051 = vmatpush1.msra.mxu0 0.0
    %5052 = vmatprep.subr.mxu0 0.0
    %5053 = vmatpush1.msra.mxu0 0.0
    %5054 = vmatprep.subr.mxu0 0.0
    %5055 = vmatpush1.msra.mxu0 %v1685
    %5056 = vmatprep.subr.mxu0 0.0
    %5057 = vmatpush1.msra.mxu0 %v1683
    %5058 = vmatprep.subr.mxu0 0.0
    %5059 = vmatpush2.msra.mxu0 0.0
    %5060 = vmatprep.subr.mxu0 0.0
    %5061 = vmatpush2.msra.mxu0 0.0
    %5062 = vmatprep.subr.mxu0 0.0
    %5063 = vmatpush2.msra.mxu0 0.0
    %5064 = vmatprep.subr.mxu0 0.0
    %5065 = vmatpush2.msra.mxu0 0.0
    %5066 = vmatprep.subr.mxu0 0.0
    %5067 = vmatpush2.msra.mxu0 0.0
    %5068 = vmatprep.subr.mxu0 0.0
    %5069 = vmatpush2.msra.mxu0 0.0
    %5070 = vmatprep.subr.mxu0 0.0
    %5071 = vmatpush2.msra.mxu0 0.0
    %5072 = vmatprep.subr.mxu0 0.0
    %5073 = vmatpush2.msra.mxu0 0.0
    %5074 = vmatprep.subr.mxu0 0.0
    %5075 = vmatpush2.msra.mxu0 0.0
    %5076 = vmatprep.subr.mxu0 0.0
    %5077 = vmatpush2.msra.mxu0 0.0
    %5078 = vmatprep.subr.mxu0 0.0
    %5079 = vmatpush2.msra.mxu0 0.0
    %5080 = vmatprep.subr.mxu0 0.0
    %5081 = vmatpush2.msra.mxu0 0.0
    %5082 = vmatprep.subr.mxu0 0.0
    %5083 = vmatpush2.msra.mxu0 0.0
    %5084 = vmatprep.subr.mxu0 0.0
    %5085 = vmatpush2.msra.mxu0 0.0
    %5086 = vmatprep.subr.mxu0 0.0
    %5087 = vmatpush2.msra.mxu0 0.0
    %5088 = vmatprep.subr.mxu0 0.0
    %5089 = vmatpush2.msra.mxu0 0.0
    %5090 = vmatprep.mubr.f32.mxu0 0.0
    %5091 = vmatmul.mubr.f32.gmra.mxu0 %v5024
    %v5092 = vpop.f32.mrf.mxu0
    %v5093 = vadd.f32 0.0, %v5092
    %v5094 = vpop.f32.mrf.mxu0
    %5095 = vdwg.mxu0
    %v5096 = vmul.f32 %v5020, %v4948
    %v5097 = vmul.f32 %v5093, %v4949
    %5100 = vrot.lane.b32.xlu0 %v4452, 8
    %v5101 = vpop.permute.xlu0 %5100
    %5102 = vrot.lane.b32.xlu0 %v4453, 8
    %v5103 = vpop.permute.xlu0 %5102
    %5108 = vrot.lane.b32.xlu0 %v4774, 16
    %v5109 = vpop.permute.xlu0 %5108
    %5110 = vrot.lane.b32.xlu0 %v4775, 16
    %v5111 = vpop.permute.xlu0 %5110
    %5116 = vrot.lane.b32.xlu0 %v5096, 24
    %v5117 = vpop.permute.xlu0 %5116
    %5118 = vrot.lane.b32.xlu0 %v5097, 24
    %v5119 = vpop.permute.xlu0 %5118
    %v5122 = vsel %vm367, %v4130, %v5101
    %v5123 = vsel %vm367, %v4131, %v5103
    %v5124 = vsel %vm526, %v5122, %v5109
    %v5125 = vsel %vm526, %v5123, %v5111
    %v5126 = vsel %vm1791, %v5124, %v5117
    %v5127 = vsel %vm1791, %v5125, %v5119
    %v5129 = vsel %vm186, %v5126, 0
    %v5132 = vsel %vm186, %v5127, 0
    %5134 = vmatprep.subr.mxu0 0.0
    %5135 = vmatpush1.msra.mxu0 0.0
    %5136 = vmatprep.subr.mxu0 0.0
    %5137 = vmatpush1.msra.mxu0 0.0
    %5138 = vmatprep.subr.mxu0 0.0
    %5139 = vmatpush1.msra.mxu0 0.0
    %5140 = vmatprep.subr.mxu0 0.0
    %5141 = vmatpush1.msra.mxu0 0.0
    %5142 = vmatprep.subr.mxu0 0.0
    %5143 = vmatpush1.msra.mxu0 0.0
    %5144 = vmatprep.subr.mxu0 0.0
    %5145 = vmatpush1.msra.mxu0 0.0
    %5146 = vmatprep.subr.mxu0 0.0
    %5147 = vmatpush1.msra.mxu0 0.0
    %5148 = vmatprep.subr.mxu0 0.0
    %5149 = vmatpush1.msra.mxu0 0.0
    %5150 = vmatprep.subr.mxu0 0.0
    %5151 = vmatpush1.msra.mxu0 0.0
    %5152 = vmatprep.subr.mxu0 0.0
    %5153 = vmatpush1.msra.mxu0 0.0
    %5154 = vmatprep.subr.mxu0 0.0
    %5155 = vmatpush1.msra.mxu0 0.0
    %5156 = vmatprep.subr.mxu0 0.0
    %5157 = vmatpush1.msra.mxu0 0.0
    %5158 = vmatprep.subr.mxu0 0.0
    %5159 = vmatpush1.msra.mxu0 %v94
    %5160 = vmatprep.subr.mxu0 0.0
    %5161 = vmatpush1.msra.mxu0 %v93
    %5162 = vmatprep.subr.mxu0 0.0
    %5163 = vmatpush1.msra.mxu0 %v92
    %5164 = vmatprep.subr.mxu0 0.0
    %5165 = vmatpush1.msra.mxu0 %v91
    %5166 = vmatprep.subr.mxu0 0.0
    %5167 = vmatpush2.msra.mxu0 0.0
    %5168 = vmatprep.subr.mxu0 0.0
    %5169 = vmatpush2.msra.mxu0 0.0
    %5170 = vmatprep.subr.mxu0 0.0
    %5171 = vmatpush2.msra.mxu0 0.0
    %5172 = vmatprep.subr.mxu0 0.0
    %5173 = vmatpush2.msra.mxu0 0.0
    %5174 = vmatprep.subr.mxu0 0.0
    %5175 = vmatpush2.msra.mxu0 0.0
    %5176 = vmatprep.subr.mxu0 0.0
    %5177 = vmatpush2.msra.mxu0 0.0
    %5178 = vmatprep.subr.mxu0 0.0
    %5179 = vmatpush2.msra.mxu0 0.0
    %5180 = vmatprep.subr.mxu0 0.0
    %5181 = vmatpush2.msra.mxu0 0.0
    %5182 = vmatprep.subr.mxu0 0.0
    %5183 = vmatpush2.msra.mxu0 0.0
    %5184 = vmatprep.subr.mxu0 0.0
    %5185 = vmatpush2.msra.mxu0 0.0
    %5186 = vmatprep.subr.mxu0 0.0
    %5187 = vmatpush2.msra.mxu0 0.0
    %5188 = vmatprep.subr.mxu0 0.0
    %5189 = vmatpush2.msra.mxu0 0.0
    %5190 = vmatprep.subr.mxu0 0.0
    %5191 = vmatpush2.msra.mxu0 0.0
    %5192 = vmatprep.subr.mxu0 0.0
    %5193 = vmatpush2.msra.mxu0 0.0
    %5194 = vmatprep.subr.mxu0 0.0
    %5195 = vmatpush2.msra.mxu0 0.0
    %5196 = vmatprep.subr.mxu0 0.0
    %5197 = vmatpush2.msra.mxu0 0.0
    %5198 = vmatprep.mubr.f32.mxu0 0.0
    %5199 = vmatmul.mubr.f32.gmra.mxu0 %v5129
    %v5200 = vpop.f32.mrf.mxu0
    %v5201 = vadd.f32 %v130, %v5200
    %v5202 = vpop.f32.mrf.mxu0
    %5203 = vmatprep.mubr.f32.mxu0 0.0
    %5204 = vmatmul.mubr.f32.gmra.mxu0 %v5132
    %v5205 = vpop.f32.mrf.mxu0
    %v5206 = vadd.f32 %v130, %v5205
    %v5207 = vpop.f32.mrf.mxu0
    %5208 = vdwg.mxu0
    %v5209 = vadd.f32 %v3727, %v5201
    %v5210 = vadd.f32 %v3728, %v5206
    %v5211 = vsel %vm186, %v5209, 0.0
    %5212 = vadd.xlane.f32.xlu0 %v5211
    %v5213 = vpop.xlane.xlu0 %5212
    %v5214 = vsel %vm186, %v5210, 0.0
    %5215 = vadd.xlane.f32.xlu0 %v5214
    %v5216 = vpop.xlane.xlu0 %5215
    %v5217 = vmul.f32 %v5213, %v1883
    %v5218 = vmul.f32 %v5216, %v1883
    %v5219 = vsub.f32 %v5209, %v5217
    %v5220 = vsub.f32 %v5210, %v5218
    %v5221 = vmul.f32 %v5219, %v5219
    %v5222 = vmul.f32 %v5220, %v5220
    %v5223 = vsel %vm186, %v5221, 0.0
    %5224 = vadd.xlane.f32.xlu0 %v5223
    %v5225 = vpop.xlane.xlu0 %5224
    %v5226 = vsel %vm186, %v5222, 0.0
    %5227 = vadd.xlane.f32.xlu0 %v5226
    %v5228 = vpop.xlane.xlu0 %5227
    %v5229 = vmul.f32 %v5225, %v1883
    %v5230 = vmul.f32 %v5228, %v1883
    %v5231 = vadd.f32 %v5229, 1e-05
    %v5232 = vadd.f32 %v5230, 1e-05
    %v5233 = vrsqrt.pop %v5231
    %v5234 = vrsqrt.pop %v5232
    %v5235 = vmul.f32 %v5219, %v5233
    %v5236 = vmul.f32 %v5220, %v5234
    %v5237 = vmul.f32 %v5235, %v150
    %v5238 = vmul.f32 %v5236, %v150
    %v5239 = vadd.f32 %v5237, %v155
    %v5240 = vadd.f32 %v5238, %v155
    %v5242 = vsel %vm186, %v5239, 0
    %v5245 = vsel %vm186, %v5240, 0
    %5247 = vmatprep.subr.mxu0 0.0
    %5248 = vmatpush1.msra.mxu0 0.0
    %5249 = vmatprep.subr.mxu0 0.0
    %5250 = vmatpush1.msra.mxu0 0.0
    %5251 = vmatprep.subr.mxu0 0.0
    %5252 = vmatpush1.msra.mxu0 0.0
    %5253 = vmatprep.subr.mxu0 0.0
    %5254 = vmatpush1.msra.mxu0 0.0
    %5255 = vmatprep.subr.mxu0 0.0
    %5256 = vmatpush1.msra.mxu0 0.0
    %5257 = vmatprep.subr.mxu0 0.0
    %5258 = vmatpush1.msra.mxu0 0.0
    %5259 = vmatprep.subr.mxu0 0.0
    %5260 = vmatpush1.msra.mxu0 0.0
    %5261 = vmatprep.subr.mxu0 0.0
    %5262 = vmatpush1.msra.mxu0 0.0
    %5263 = vmatprep.subr.mxu0 0.0
    %5264 = vmatpush1.msra.mxu0 0.0
    %5265 = vmatprep.subr.mxu0 0.0
    %5266 = vmatpush1.msra.mxu0 0.0
    %5267 = vmatprep.subr.mxu0 0.0
    %5268 = vmatpush1.msra.mxu0 0.0
    %5269 = vmatprep.subr.mxu0 0.0
    %5270 = vmatpush1.msra.mxu0 0.0
    %5271 = vmatprep.subr.mxu0 0.0
    %5272 = vmatpush1.msra.mxu0 %v90
    %5273 = vmatprep.subr.mxu0 0.0
    %5274 = vmatpush1.msra.mxu0 %v89
    %5275 = vmatprep.subr.mxu0 0.0
    %5276 = vmatpush1.msra.mxu0 %v88
    %5277 = vmatprep.subr.mxu0 0.0
    %5278 = vmatpush1.msra.mxu0 %v87
    %5279 = vmatprep.subr.mxu0 0.0
    %5280 = vmatpush2.msra.mxu0 0.0
    %5281 = vmatprep.subr.mxu0 0.0
    %5282 = vmatpush2.msra.mxu0 0.0
    %5283 = vmatprep.subr.mxu0 0.0
    %5284 = vmatpush2.msra.mxu0 0.0
    %5285 = vmatprep.subr.mxu0 0.0
    %5286 = vmatpush2.msra.mxu0 0.0
    %5287 = vmatprep.subr.mxu0 0.0
    %5288 = vmatpush2.msra.mxu0 0.0
    %5289 = vmatprep.subr.mxu0 0.0
    %5290 = vmatpush2.msra.mxu0 0.0
    %5291 = vmatprep.subr.mxu0 0.0
    %5292 = vmatpush2.msra.mxu0 0.0
    %5293 = vmatprep.subr.mxu0 0.0
    %5294 = vmatpush2.msra.mxu0 0.0
    %5295 = vmatprep.subr.mxu0 0.0
    %5296 = vmatpush2.msra.mxu0 0.0
    %5297 = vmatprep.subr.mxu0 0.0
    %5298 = vmatpush2.msra.mxu0 0.0
    %5299 = vmatprep.subr.mxu0 0.0
    %5300 = vmatpush2.msra.mxu0 0.0
    %5301 = vmatprep.subr.mxu0 0.0
    %5302 = vmatpush2.msra.mxu0 0.0
    %5303 = vmatprep.subr.mxu0 0.0
    %5304 = vmatpush2.msra.mxu0 0.0
    %5305 = vmatprep.subr.mxu0 0.0
    %5306 = vmatpush2.msra.mxu0 0.0
    %5307 = vmatprep.subr.mxu0 0.0
    %5308 = vmatpush2.msra.mxu0 0.0
    %5309 = vmatprep.subr.mxu0 0.0
    %5310 = vmatpush2.msra.mxu0 0.0
    %5311 = vmatprep.mubr.f32.mxu0 0.0
    %5312 = vmatmul.mubr.f32.gmra.mxu0 %v5242
    %v5313 = vpop.f32.mrf.mxu0
    %v5314 = vadd.f32 %v125, %v5313
    %v5315 = vpop.f32.mrf.mxu0
    %5316 = vmatprep.mubr.f32.mxu0 0.0
    %5317 = vmatmul.mubr.f32.gmra.mxu0 %v5245
    %v5318 = vpop.f32.mrf.mxu0
    %v5319 = vadd.f32 %v125, %v5318
    %v5320 = vpop.f32.mrf.mxu0
    %5321 = vdwg.mxu0
    %v5322 = vmul.f32 %v5314, 0.35355338
    %v5323 = vmul.f32 %v5319, 0.35355338
    %v5325 = vsel %vm367, %v5322, 0
    %5327 = vmatprep.subr.mxu0 0.0
    %5328 = vmatpush1.xpose.msra.mxu0 0.0
    %5329 = vmatprep.subr.mxu0 0.0
    %5330 = vmatpush1.xpose.msra.mxu0 0.0
    %5331 = vmatprep.subr.mxu0 0.0
    %5332 = vmatpush1.xpose.msra.mxu0 0.0
    %5333 = vmatprep.subr.mxu0 0.0
    %5334 = vmatpush1.xpose.msra.mxu0 0.0
    %5335 = vmatprep.subr.mxu0 0.0
    %5336 = vmatpush1.xpose.msra.mxu0 0.0
    %5337 = vmatprep.subr.mxu0 0.0
    %5338 = vmatpush1.xpose.msra.mxu0 0.0
    %5339 = vmatprep.subr.mxu0 0.0
    %5340 = vmatpush1.xpose.msra.mxu0 0.0
    %5341 = vmatprep.subr.mxu0 0.0
    %5342 = vmatpush1.xpose.msra.mxu0 0.0
    %5343 = vmatprep.subr.mxu0 0.0
    %5344 = vmatpush1.xpose.msra.mxu0 0.0
    %5345 = vmatprep.subr.mxu0 0.0
    %5346 = vmatpush1.xpose.msra.mxu0 0.0
    %5347 = vmatprep.subr.mxu0 0.0
    %5348 = vmatpush1.xpose.msra.mxu0 0.0
    %5349 = vmatprep.subr.mxu0 0.0
    %5350 = vmatpush1.xpose.msra.mxu0 0.0
    %5351 = vmatprep.subr.mxu0 0.0
    %5352 = vmatpush1.xpose.msra.mxu0 0.0
    %5353 = vmatprep.subr.mxu0 0.0
    %5354 = vmatpush1.xpose.msra.mxu0 0.0
    %5355 = vmatprep.subr.mxu0 0.0
    %5356 = vmatpush1.xpose.msra.mxu0 %v2000
    %5357 = vmatprep.subr.mxu0 0.0
    %5358 = vmatpush1.xpose.msra.mxu0 %v1998
    %5359 = vmatprep.subr.mxu0 0.0
    %5360 = vmatpush2.xpose.msra.mxu0 0.0
    %5361 = vmatprep.subr.mxu0 0.0
    %5362 = vmatpush2.xpose.msra.mxu0 0.0
    %5363 = vmatprep.subr.mxu0 0.0
    %5364 = vmatpush2.xpose.msra.mxu0 0.0
    %5365 = vmatprep.subr.mxu0 0.0
    %5366 = vmatpush2.xpose.msra.mxu0 0.0
    %5367 = vmatprep.subr.mxu0 0.0
    %5368 = vmatpush2.xpose.msra.mxu0 0.0
    %5369 = vmatprep.subr.mxu0 0.0
    %5370 = vmatpush2.xpose.msra.mxu0 0.0
    %5371 = vmatprep.subr.mxu0 0.0
    %5372 = vmatpush2.xpose.msra.mxu0 0.0
    %5373 = vmatprep.subr.mxu0 0.0
    %5374 = vmatpush2.xpose.msra.mxu0 0.0
    %5375 = vmatprep.subr.mxu0 0.0
    %5376 = vmatpush2.xpose.msra.mxu0 0.0
    %5377 = vmatprep.subr.mxu0 0.0
    %5378 = vmatpush2.xpose.msra.mxu0 0.0
    %5379 = vmatprep.subr.mxu0 0.0
    %5380 = vmatpush2.xpose.msra.mxu0 0.0
    %5381 = vmatprep.subr.mxu0 0.0
    %5382 = vmatpush2.xpose.msra.mxu0 0.0
    %5383 = vmatprep.subr.mxu0 0.0
    %5384 = vmatpush2.xpose.msra.mxu0 0.0
    %5385 = vmatprep.subr.mxu0 0.0
    %5386 = vmatpush2.xpose.msra.mxu0 0.0
    %5387 = vmatprep.subr.mxu0 0.0
    %5388 = vmatpush2.xpose.msra.mxu0 0.0
    %5389 = vmatprep.subr.mxu0 0.0
    %5390 = vmatpush2.xpose.msra.mxu0 0.0
    %5391 = vmatprep.mubr.f32.mxu0 0.0
    %5392 = vmatmul.mubr.f32.gmra.mxu0 %v5325
    %v5393 = vpop.f32.mrf.mxu0
    %v5394 = vadd.f32 0.0, %v5393
    %v5395 = vpop.f32.mrf.mxu0
    %5396 = vdwg.mxu0
    %v5398 = vsel %vm367, %v5323, 0
    %5400 = vmatprep.subr.mxu0 0.0
    %5401 = vmatpush1.xpose.msra.mxu0 0.0
    %5402 = vmatprep.subr.mxu0 0.0
    %5403 = vmatpush1.xpose.msra.mxu0 0.0
    %5404 = vmatprep.subr.mxu0 0.0
    %5405 = vmatpush1.xpose.msra.mxu0 0.0
    %5406 = vmatprep.subr.mxu0 0.0
    %5407 = vmatpush1.xpose.msra.mxu0 0.0
    %5408 = vmatprep.subr.mxu0 0.0
    %5409 = vmatpush1.xpose.msra.mxu0 0.0
    %5410 = vmatprep.subr.mxu0 0.0
    %5411 = vmatpush1.xpose.msra.mxu0 0.0
    %5412 = vmatprep.subr.mxu0 0.0
    %5413 = vmatpush1.xpose.msra.mxu0 0.0
    %5414 = vmatprep.subr.mxu0 0.0
    %5415 = vmatpush1.xpose.msra.mxu0 0.0
    %5416 = vmatprep.subr.mxu0 0.0
    %5417 = vmatpush1.xpose.msra.mxu0 0.0
    %5418 = vmatprep.subr.mxu0 0.0
    %5419 = vmatpush1.xpose.msra.mxu0 0.0
    %5420 = vmatprep.subr.mxu0 0.0
    %5421 = vmatpush1.xpose.msra.mxu0 0.0
    %5422 = vmatprep.subr.mxu0 0.0
    %5423 = vmatpush1.xpose.msra.mxu0 0.0
    %5424 = vmatprep.subr.mxu0 0.0
    %5425 = vmatpush1.xpose.msra.mxu0 0.0
    %5426 = vmatprep.subr.mxu0 0.0
    %5427 = vmatpush1.xpose.msra.mxu0 0.0
    %5428 = vmatprep.subr.mxu0 0.0
    %5429 = vmatpush1.xpose.msra.mxu0 %v2081
    %5430 = vmatprep.subr.mxu0 0.0
    %5431 = vmatpush1.xpose.msra.mxu0 %v2079
    %5432 = vmatprep.subr.mxu0 0.0
    %5433 = vmatpush2.xpose.msra.mxu0 0.0
    %5434 = vmatprep.subr.mxu0 0.0
    %5435 = vmatpush2.xpose.msra.mxu0 0.0
    %5436 = vmatprep.subr.mxu0 0.0
    %5437 = vmatpush2.xpose.msra.mxu0 0.0
    %5438 = vmatprep.subr.mxu0 0.0
    %5439 = vmatpush2.xpose.msra.mxu0 0.0
    %5440 = vmatprep.subr.mxu0 0.0
    %5441 = vmatpush2.xpose.msra.mxu0 0.0
    %5442 = vmatprep.subr.mxu0 0.0
    %5443 = vmatpush2.xpose.msra.mxu0 0.0
    %5444 = vmatprep.subr.mxu0 0.0
    %5445 = vmatpush2.xpose.msra.mxu0 0.0
    %5446 = vmatprep.subr.mxu0 0.0
    %5447 = vmatpush2.xpose.msra.mxu0 0.0
    %5448 = vmatprep.subr.mxu0 0.0
    %5449 = vmatpush2.xpose.msra.mxu0 0.0
    %5450 = vmatprep.subr.mxu0 0.0
    %5451 = vmatpush2.xpose.msra.mxu0 0.0
    %5452 = vmatprep.subr.mxu0 0.0
    %5453 = vmatpush2.xpose.msra.mxu0 0.0
    %5454 = vmatprep.subr.mxu0 0.0
    %5455 = vmatpush2.xpose.msra.mxu0 0.0
    %5456 = vmatprep.subr.mxu0 0.0
    %5457 = vmatpush2.xpose.msra.mxu0 0.0
    %5458 = vmatprep.subr.mxu0 0.0
    %5459 = vmatpush2.xpose.msra.mxu0 0.0
    %5460 = vmatprep.subr.mxu0 0.0
    %5461 = vmatpush2.xpose.msra.mxu0 0.0
    %5462 = vmatprep.subr.mxu0 0.0
    %5463 = vmatpush2.xpose.msra.mxu0 0.0
    %5464 = vmatprep.mubr.f32.mxu0 0.0
    %5465 = vmatmul.mubr.f32.gmra.mxu0 %v5398
    %v5466 = vpop.f32.mrf.mxu0
    %v5467 = vadd.f32 0.0, %v5466
    %v5468 = vpop.f32.mrf.mxu0
    %5469 = vdwg.mxu0
    %v5470 = vsel %vm526, %v5394, -inf
    %5471 = vmax.xlane.f32.xlu0 %v5470
    %v5472 = vpop.xlane.xlu0 %5471
    %v5473 = vsel %vm526, %v5467, -inf
    %5474 = vmax.xlane.f32.xlu0 %v5473
    %v5475 = vpop.xlane.xlu0 %5474
    %v5476 = vsub.f32 %v5394, %v5472
    %v5477 = vsub.f32 %v5467, %v5475
    %v5478 = vmul.f32 %v5476, 1.442695
    %v5479 = vpow.pop %v5478
    %v5480 = vmul.f32 %v5477, 1.442695
    %v5481 = vpow.pop %v5480
    %v5482 = vsel %vm526, %v5479, 0.0
    %5483 = vadd.xlane.f32.xlu0 %v5482
    %v5484 = vpop.xlane.xlu0 %5483
    %v5485 = vsel %vm526, %v5481, 0.0
    %5486 = vadd.xlane.f32.xlu0 %v5485
    %v5487 = vpop.xlane.xlu0 %5486
    %v5488 = vrcp.pop %v5484
    %v5489 = vrcp.pop %v5487
    %v5490 = vmul.f32 %v5484, %v5488
    %v5491 = vmul.f32 %v5487, %v5489
    %v5492 = vsub.f32 2.0, %v5490
    %v5493 = vsub.f32 2.0, %v5491
    %v5494 = vmul.f32 %v5488, %v5492
    %v5495 = vmul.f32 %v5489, %v5493
    %v5497 = vsel %vm526, %v5479, 0
    %5499 = vmatprep.subr.mxu0 0.0
    %5500 = vmatpush1.msra.mxu0 0.0
    %5501 = vmatprep.subr.mxu0 0.0
    %5502 = vmatpush1.msra.mxu0 0.0
    %5503 = vmatprep.subr.mxu0 0.0
    %5504 = vmatpush1.msra.mxu0 0.0
    %5505 = vmatprep.subr.mxu0 0.0
    %5506 = vmatpush1.msra.mxu0 0.0
    %5507 = vmatprep.subr.mxu0 0.0
    %5508 = vmatpush1.msra.mxu0 0.0
    %5509 = vmatprep.subr.mxu0 0.0
    %5510 = vmatpush1.msra.mxu0 0.0
    %5511 = vmatprep.subr.mxu0 0.0
    %5512 = vmatpush1.msra.mxu0 0.0
    %5513 = vmatprep.subr.mxu0 0.0
    %5514 = vmatpush1.msra.mxu0 0.0
    %5515 = vmatprep.subr.mxu0 0.0
    %5516 = vmatpush1.msra.mxu0 0.0
    %5517 = vmatprep.subr.mxu0 0.0
    %5518 = vmatpush1.msra.mxu0 0.0
    %5519 = vmatprep.subr.mxu0 0.0
    %5520 = vmatpush1.msra.mxu0 0.0
    %5521 = vmatprep.subr.mxu0 0.0
    %5522 = vmatpush1.msra.mxu0 0.0
    %5523 = vmatprep.subr.mxu0 0.0
    %5524 = vmatpush1.msra.mxu0 0.0
    %5525 = vmatprep.subr.mxu0 0.0
    %5526 = vmatpush1.msra.mxu0 0.0
    %5527 = vmatprep.subr.mxu0 0.0
    %5528 = vmatpush1.msra.mxu0 %v2182
    %5529 = vmatprep.subr.mxu0 0.0
    %5530 = vmatpush1.msra.mxu0 %v2180
    %5531 = vmatprep.subr.mxu0 0.0
    %5532 = vmatpush2.msra.mxu0 0.0
    %5533 = vmatprep.subr.mxu0 0.0
    %5534 = vmatpush2.msra.mxu0 0.0
    %5535 = vmatprep.subr.mxu0 0.0
    %5536 = vmatpush2.msra.mxu0 0.0
    %5537 = vmatprep.subr.mxu0 0.0
    %5538 = vmatpush2.msra.mxu0 0.0
    %5539 = vmatprep.subr.mxu0 0.0
    %5540 = vmatpush2.msra.mxu0 0.0
    %5541 = vmatprep.subr.mxu0 0.0
    %5542 = vmatpush2.msra.mxu0 0.0
    %5543 = vmatprep.subr.mxu0 0.0
    %5544 = vmatpush2.msra.mxu0 0.0
    %5545 = vmatprep.subr.mxu0 0.0
    %5546 = vmatpush2.msra.mxu0 0.0
    %5547 = vmatprep.subr.mxu0 0.0
    %5548 = vmatpush2.msra.mxu0 0.0
    %5549 = vmatprep.subr.mxu0 0.0
    %5550 = vmatpush2.msra.mxu0 0.0
    %5551 = vmatprep.subr.mxu0 0.0
    %5552 = vmatpush2.msra.mxu0 0.0
    %5553 = vmatprep.subr.mxu0 0.0
    %5554 = vmatpush2.msra.mxu0 0.0
    %5555 = vmatprep.subr.mxu0 0.0
    %5556 = vmatpush2.msra.mxu0 0.0
    %5557 = vmatprep.subr.mxu0 0.0
    %5558 = vmatpush2.msra.mxu0 0.0
    %5559 = vmatprep.subr.mxu0 0.0
    %5560 = vmatpush2.msra.mxu0 0.0
    %5561 = vmatprep.subr.mxu0 0.0
    %5562 = vmatpush2.msra.mxu0 0.0
    %5563 = vmatprep.mubr.f32.mxu0 0.0
    %5564 = vmatmul.mubr.f32.gmra.mxu0 %v5497
    %v5565 = vpop.f32.mrf.mxu0
    %v5566 = vadd.f32 0.0, %v5565
    %v5567 = vpop.f32.mrf.mxu0
    %5568 = vdwg.mxu0
    %v5570 = vsel %vm526, %v5481, 0
    %5572 = vmatprep.subr.mxu0 0.0
    %5573 = vmatpush1.msra.mxu0 0.0
    %5574 = vmatprep.subr.mxu0 0.0
    %5575 = vmatpush1.msra.mxu0 0.0
    %5576 = vmatprep.subr.mxu0 0.0
    %5577 = vmatpush1.msra.mxu0 0.0
    %5578 = vmatprep.subr.mxu0 0.0
    %5579 = vmatpush1.msra.mxu0 0.0
    %5580 = vmatprep.subr.mxu0 0.0
    %5581 = vmatpush1.msra.mxu0 0.0
    %5582 = vmatprep.subr.mxu0 0.0
    %5583 = vmatpush1.msra.mxu0 0.0
    %5584 = vmatprep.subr.mxu0 0.0
    %5585 = vmatpush1.msra.mxu0 0.0
    %5586 = vmatprep.subr.mxu0 0.0
    %5587 = vmatpush1.msra.mxu0 0.0
    %5588 = vmatprep.subr.mxu0 0.0
    %5589 = vmatpush1.msra.mxu0 0.0
    %5590 = vmatprep.subr.mxu0 0.0
    %5591 = vmatpush1.msra.mxu0 0.0
    %5592 = vmatprep.subr.mxu0 0.0
    %5593 = vmatpush1.msra.mxu0 0.0
    %5594 = vmatprep.subr.mxu0 0.0
    %5595 = vmatpush1.msra.mxu0 0.0
    %5596 = vmatprep.subr.mxu0 0.0
    %5597 = vmatpush1.msra.mxu0 0.0
    %5598 = vmatprep.subr.mxu0 0.0
    %5599 = vmatpush1.msra.mxu0 0.0
    %5600 = vmatprep.subr.mxu0 0.0
    %5601 = vmatpush1.msra.mxu0 %v2261
    %5602 = vmatprep.subr.mxu0 0.0
    %5603 = vmatpush1.msra.mxu0 %v2259
    %5604 = vmatprep.subr.mxu0 0.0
    %5605 = vmatpush2.msra.mxu0 0.0
    %5606 = vmatprep.subr.mxu0 0.0
    %5607 = vmatpush2.msra.mxu0 0.0
    %5608 = vmatprep.subr.mxu0 0.0
    %5609 = vmatpush2.msra.mxu0 0.0
    %5610 = vmatprep.subr.mxu0 0.0
    %5611 = vmatpush2.msra.mxu0 0.0
    %5612 = vmatprep.subr.mxu0 0.0
    %5613 = vmatpush2.msra.mxu0 0.0
    %5614 = vmatprep.subr.mxu0 0.0
    %5615 = vmatpush2.msra.mxu0 0.0
    %5616 = vmatprep.subr.mxu0 0.0
    %5617 = vmatpush2.msra.mxu0 0.0
    %5618 = vmatprep.subr.mxu0 0.0
    %5619 = vmatpush2.msra.mxu0 0.0
    %5620 = vmatprep.subr.mxu0 0.0
    %5621 = vmatpush2.msra.mxu0 0.0
    %5622 = vmatprep.subr.mxu0 0.0
    %5623 = vmatpush2.msra.mxu0 0.0
    %5624 = vmatprep.subr.mxu0 0.0
    %5625 = vmatpush2.msra.mxu0 0.0
    %5626 = vmatprep.subr.mxu0 0.0
    %5627 = vmatpush2.msra.mxu0 0.0
    %5628 = vmatprep.subr.mxu0 0.0
    %5629 = vmatpush2.msra.mxu0 0.0
    %5630 = vmatprep.subr.mxu0 0.0
    %5631 = vmatpush2.msra.mxu0 0.0
    %5632 = vmatprep.subr.mxu0 0.0
    %5633 = vmatpush2.msra.mxu0 0.0
    %5634 = vmatprep.subr.mxu0 0.0
    %5635 = vmatpush2.msra.mxu0 0.0
    %5636 = vmatprep.mubr.f32.mxu0 0.0
    %5637 = vmatmul.mubr.f32.gmra.mxu0 %v5570
    %v5638 = vpop.f32.mrf.mxu0
    %v5639 = vadd.f32 0.0, %v5638
    %v5640 = vpop.f32.mrf.mxu0
    %5641 = vdwg.mxu0
    %v5642 = vmul.f32 %v5566, %v5494
    %v5643 = vmul.f32 %v5639, %v5495
    %5644 = vrot.lane.b32.xlu0 %v5322, 120
    %v5645 = vpop.permute.xlu0 %5644
    %v5646 = vsel %vm367, %v5645, 0
    %5648 = vmatprep.subr.mxu0 0.0
    %5649 = vmatpush1.xpose.msra.mxu0 0.0
    %5650 = vmatprep.subr.mxu0 0.0
    %5651 = vmatpush1.xpose.msra.mxu0 0.0
    %5652 = vmatprep.subr.mxu0 0.0
    %5653 = vmatpush1.xpose.msra.mxu0 0.0
    %5654 = vmatprep.subr.mxu0 0.0
    %5655 = vmatpush1.xpose.msra.mxu0 0.0
    %5656 = vmatprep.subr.mxu0 0.0
    %5657 = vmatpush1.xpose.msra.mxu0 0.0
    %5658 = vmatprep.subr.mxu0 0.0
    %5659 = vmatpush1.xpose.msra.mxu0 0.0
    %5660 = vmatprep.subr.mxu0 0.0
    %5661 = vmatpush1.xpose.msra.mxu0 0.0
    %5662 = vmatprep.subr.mxu0 0.0
    %5663 = vmatpush1.xpose.msra.mxu0 0.0
    %5664 = vmatprep.subr.mxu0 0.0
    %5665 = vmatpush1.xpose.msra.mxu0 0.0
    %5666 = vmatprep.subr.mxu0 0.0
    %5667 = vmatpush1.xpose.msra.mxu0 0.0
    %5668 = vmatprep.subr.mxu0 0.0
    %5669 = vmatpush1.xpose.msra.mxu0 0.0
    %5670 = vmatprep.subr.mxu0 0.0
    %5671 = vmatpush1.xpose.msra.mxu0 0.0
    %5672 = vmatprep.subr.mxu0 0.0
    %5673 = vmatpush1.xpose.msra.mxu0 0.0
    %5674 = vmatprep.subr.mxu0 0.0
    %5675 = vmatpush1.xpose.msra.mxu0 0.0
    %5676 = vmatprep.subr.mxu0 0.0
    %5677 = vmatpush1.xpose.msra.mxu0 %v2349
    %5678 = vmatprep.subr.mxu0 0.0
    %5679 = vmatpush1.xpose.msra.mxu0 %v2347
    %5680 = vmatprep.subr.mxu0 0.0
    %5681 = vmatpush2.xpose.msra.mxu0 0.0
    %5682 = vmatprep.subr.mxu0 0.0
    %5683 = vmatpush2.xpose.msra.mxu0 0.0
    %5684 = vmatprep.subr.mxu0 0.0
    %5685 = vmatpush2.xpose.msra.mxu0 0.0
    %5686 = vmatprep.subr.mxu0 0.0
    %5687 = vmatpush2.xpose.msra.mxu0 0.0
    %5688 = vmatprep.subr.mxu0 0.0
    %5689 = vmatpush2.xpose.msra.mxu0 0.0
    %5690 = vmatprep.subr.mxu0 0.0
    %5691 = vmatpush2.xpose.msra.mxu0 0.0
    %5692 = vmatprep.subr.mxu0 0.0
    %5693 = vmatpush2.xpose.msra.mxu0 0.0
    %5694 = vmatprep.subr.mxu0 0.0
    %5695 = vmatpush2.xpose.msra.mxu0 0.0
    %5696 = vmatprep.subr.mxu0 0.0
    %5697 = vmatpush2.xpose.msra.mxu0 0.0
    %5698 = vmatprep.subr.mxu0 0.0
    %5699 = vmatpush2.xpose.msra.mxu0 0.0
    %5700 = vmatprep.subr.mxu0 0.0
    %5701 = vmatpush2.xpose.msra.mxu0 0.0
    %5702 = vmatprep.subr.mxu0 0.0
    %5703 = vmatpush2.xpose.msra.mxu0 0.0
    %5704 = vmatprep.subr.mxu0 0.0
    %5705 = vmatpush2.xpose.msra.mxu0 0.0
    %5706 = vmatprep.subr.mxu0 0.0
    %5707 = vmatpush2.xpose.msra.mxu0 0.0
    %5708 = vmatprep.subr.mxu0 0.0
    %5709 = vmatpush2.xpose.msra.mxu0 0.0
    %5710 = vmatprep.subr.mxu0 0.0
    %5711 = vmatpush2.xpose.msra.mxu0 0.0
    %5712 = vmatprep.mubr.f32.mxu0 0.0
    %5713 = vmatmul.mubr.f32.gmra.mxu0 %v5646
    %v5714 = vpop.f32.mrf.mxu0
    %v5715 = vadd.f32 0.0, %v5714
    %v5716 = vpop.f32.mrf.mxu0
    %5717 = vdwg.mxu0
    %5718 = vrot.lane.b32.xlu0 %v5323, 120
    %v5719 = vpop.permute.xlu0 %5718
    %v5720 = vsel %vm367, %v5719, 0
    %5722 = vmatprep.subr.mxu0 0.0
    %5723 = vmatpush1.xpose.msra.mxu0 0.0
    %5724 = vmatprep.subr.mxu0 0.0
    %5725 = vmatpush1.xpose.msra.mxu0 0.0
    %5726 = vmatprep.subr.mxu0 0.0
    %5727 = vmatpush1.xpose.msra.mxu0 0.0
    %5728 = vmatprep.subr.mxu0 0.0
    %5729 = vmatpush1.xpose.msra.mxu0 0.0
    %5730 = vmatprep.subr.mxu0 0.0
    %5731 = vmatpush1.xpose.msra.mxu0 0.0
    %5732 = vmatprep.subr.mxu0 0.0
    %5733 = vmatpush1.xpose.msra.mxu0 0.0
    %5734 = vmatprep.subr.mxu0 0.0
    %5735 = vmatpush1.xpose.msra.mxu0 0.0
    %5736 = vmatprep.subr.mxu0 0.0
    %5737 = vmatpush1.xpose.msra.mxu0 0.0
    %5738 = vmatprep.subr.mxu0 0.0
    %5739 = vmatpush1.xpose.msra.mxu0 0.0
    %5740 = vmatprep.subr.mxu0 0.0
    %5741 = vmatpush1.xpose.msra.mxu0 0.0
    %5742 = vmatprep.subr.mxu0 0.0
    %5743 = vmatpush1.xpose.msra.mxu0 0.0
    %5744 = vmatprep.subr.mxu0 0.0
    %5745 = vmatpush1.xpose.msra.mxu0 0.0
    %5746 = vmatprep.subr.mxu0 0.0
    %5747 = vmatpush1.xpose.msra.mxu0 0.0
    %5748 = vmatprep.subr.mxu0 0.0
    %5749 = vmatpush1.xpose.msra.mxu0 0.0
    %5750 = vmatprep.subr.mxu0 0.0
    %5751 = vmatpush1.xpose.msra.mxu0 %v2431
    %5752 = vmatprep.subr.mxu0 0.0
    %5753 = vmatpush1.xpose.msra.mxu0 %v2429
    %5754 = vmatprep.subr.mxu0 0.0
    %5755 = vmatpush2.xpose.msra.mxu0 0.0
    %5756 = vmatprep.subr.mxu0 0.0
    %5757 = vmatpush2.xpose.msra.mxu0 0.0
    %5758 = vmatprep.subr.mxu0 0.0
    %5759 = vmatpush2.xpose.msra.mxu0 0.0
    %5760 = vmatprep.subr.mxu0 0.0
    %5761 = vmatpush2.xpose.msra.mxu0 0.0
    %5762 = vmatprep.subr.mxu0 0.0
    %5763 = vmatpush2.xpose.msra.mxu0 0.0
    %5764 = vmatprep.subr.mxu0 0.0
    %5765 = vmatpush2.xpose.msra.mxu0 0.0
    %5766 = vmatprep.subr.mxu0 0.0
    %5767 = vmatpush2.xpose.msra.mxu0 0.0
    %5768 = vmatprep.subr.mxu0 0.0
    %5769 = vmatpush2.xpose.msra.mxu0 0.0
    %5770 = vmatprep.subr.mxu0 0.0
    %5771 = vmatpush2.xpose.msra.mxu0 0.0
    %5772 = vmatprep.subr.mxu0 0.0
    %5773 = vmatpush2.xpose.msra.mxu0 0.0
    %5774 = vmatprep.subr.mxu0 0.0
    %5775 = vmatpush2.xpose.msra.mxu0 0.0
    %5776 = vmatprep.subr.mxu0 0.0
    %5777 = vmatpush2.xpose.msra.mxu0 0.0
    %5778 = vmatprep.subr.mxu0 0.0
    %5779 = vmatpush2.xpose.msra.mxu0 0.0
    %5780 = vmatprep.subr.mxu0 0.0
    %5781 = vmatpush2.xpose.msra.mxu0 0.0
    %5782 = vmatprep.subr.mxu0 0.0
    %5783 = vmatpush2.xpose.msra.mxu0 0.0
    %5784 = vmatprep.subr.mxu0 0.0
    %5785 = vmatpush2.xpose.msra.mxu0 0.0
    %5786 = vmatprep.mubr.f32.mxu0 0.0
    %5787 = vmatmul.mubr.f32.gmra.mxu0 %v5720
    %v5788 = vpop.f32.mrf.mxu0
    %v5789 = vadd.f32 0.0, %v5788
    %v5790 = vpop.f32.mrf.mxu0
    %5791 = vdwg.mxu0
    %v5792 = vsel %vm526, %v5715, -inf
    %5793 = vmax.xlane.f32.xlu0 %v5792
    %v5794 = vpop.xlane.xlu0 %5793
    %v5795 = vsel %vm526, %v5789, -inf
    %5796 = vmax.xlane.f32.xlu0 %v5795
    %v5797 = vpop.xlane.xlu0 %5796
    %v5798 = vsub.f32 %v5715, %v5794
    %v5799 = vsub.f32 %v5789, %v5797
    %v5800 = vmul.f32 %v5798, 1.442695
    %v5801 = vpow.pop %v5800
    %v5802 = vmul.f32 %v5799, 1.442695
    %v5803 = vpow.pop %v5802
    %v5804 = vsel %vm526, %v5801, 0.0
    %5805 = vadd.xlane.f32.xlu0 %v5804
    %v5806 = vpop.xlane.xlu0 %5805
    %v5807 = vsel %vm526, %v5803, 0.0
    %5808 = vadd.xlane.f32.xlu0 %v5807
    %v5809 = vpop.xlane.xlu0 %5808
    %v5810 = vrcp.pop %v5806
    %v5811 = vrcp.pop %v5809
    %v5812 = vmul.f32 %v5806, %v5810
    %v5813 = vmul.f32 %v5809, %v5811
    %v5814 = vsub.f32 2.0, %v5812
    %v5815 = vsub.f32 2.0, %v5813
    %v5816 = vmul.f32 %v5810, %v5814
    %v5817 = vmul.f32 %v5811, %v5815
    %v5819 = vsel %vm526, %v5801, 0
    %5821 = vmatprep.subr.mxu0 0.0
    %5822 = vmatpush1.msra.mxu0 0.0
    %5823 = vmatprep.subr.mxu0 0.0
    %5824 = vmatpush1.msra.mxu0 0.0
    %5825 = vmatprep.subr.mxu0 0.0
    %5826 = vmatpush1.msra.mxu0 0.0
    %5827 = vmatprep.subr.mxu0 0.0
    %5828 = vmatpush1.msra.mxu0 0.0
    %5829 = vmatprep.subr.mxu0 0.0
    %5830 = vmatpush1.msra.mxu0 0.0
    %5831 = vmatprep.subr.mxu0 0.0
    %5832 = vmatpush1.msra.mxu0 0.0
    %5833 = vmatprep.subr.mxu0 0.0
    %5834 = vmatpush1.msra.mxu0 0.0
    %5835 = vmatprep.subr.mxu0 0.0
    %5836 = vmatpush1.msra.mxu0 0.0
    %5837 = vmatprep.subr.mxu0 0.0
    %5838 = vmatpush1.msra.mxu0 0.0
    %5839 = vmatprep.subr.mxu0 0.0
    %5840 = vmatpush1.msra.mxu0 0.0
    %5841 = vmatprep.subr.mxu0 0.0
    %5842 = vmatpush1.msra.mxu0 0.0
    %5843 = vmatprep.subr.mxu0 0.0
    %5844 = vmatpush1.msra.mxu0 0.0
    %5845 = vmatprep.subr.mxu0 0.0
    %5846 = vmatpush1.msra.mxu0 0.0
    %5847 = vmatprep.subr.mxu0 0.0
    %5848 = vmatpush1.msra.mxu0 0.0
    %5849 = vmatprep.subr.mxu0 0.0
    %5850 = vmatpush1.msra.mxu0 %v2532
    %5851 = vmatprep.subr.mxu0 0.0
    %5852 = vmatpush1.msra.mxu0 %v2530
    %5853 = vmatprep.subr.mxu0 0.0
    %5854 = vmatpush2.msra.mxu0 0.0
    %5855 = vmatprep.subr.mxu0 0.0
    %5856 = vmatpush2.msra.mxu0 0.0
    %5857 = vmatprep.subr.mxu0 0.0
    %5858 = vmatpush2.msra.mxu0 0.0
    %5859 = vmatprep.subr.mxu0 0.0
    %5860 = vmatpush2.msra.mxu0 0.0
    %5861 = vmatprep.subr.mxu0 0.0
    %5862 = vmatpush2.msra.mxu0 0.0
    %5863 = vmatprep.subr.mxu0 0.0
    %5864 = vmatpush2.msra.mxu0 0.0
    %5865 = vmatprep.subr.mxu0 0.0
    %5866 = vmatpush2.msra.mxu0 0.0
    %5867 = vmatprep.subr.mxu0 0.0
    %5868 = vmatpush2.msra.mxu0 0.0
    %5869 = vmatprep.subr.mxu0 0.0
    %5870 = vmatpush2.msra.mxu0 0.0
    %5871 = vmatprep.subr.mxu0 0.0
    %5872 = vmatpush2.msra.mxu0 0.0
    %5873 = vmatprep.subr.mxu0 0.0
    %5874 = vmatpush2.msra.mxu0 0.0
    %5875 = vmatprep.subr.mxu0 0.0
    %5876 = vmatpush2.msra.mxu0 0.0
    %5877 = vmatprep.subr.mxu0 0.0
    %5878 = vmatpush2.msra.mxu0 0.0
    %5879 = vmatprep.subr.mxu0 0.0
    %5880 = vmatpush2.msra.mxu0 0.0
    %5881 = vmatprep.subr.mxu0 0.0
    %5882 = vmatpush2.msra.mxu0 0.0
    %5883 = vmatprep.subr.mxu0 0.0
    %5884 = vmatpush2.msra.mxu0 0.0
    %5885 = vmatprep.mubr.f32.mxu0 0.0
    %5886 = vmatmul.mubr.f32.gmra.mxu0 %v5819
    %v5887 = vpop.f32.mrf.mxu0
    %v5888 = vadd.f32 0.0, %v5887
    %v5889 = vpop.f32.mrf.mxu0
    %5890 = vdwg.mxu0
    %v5892 = vsel %vm526, %v5803, 0
    %5894 = vmatprep.subr.mxu0 0.0
    %5895 = vmatpush1.msra.mxu0 0.0
    %5896 = vmatprep.subr.mxu0 0.0
    %5897 = vmatpush1.msra.mxu0 0.0
    %5898 = vmatprep.subr.mxu0 0.0
    %5899 = vmatpush1.msra.mxu0 0.0
    %5900 = vmatprep.subr.mxu0 0.0
    %5901 = vmatpush1.msra.mxu0 0.0
    %5902 = vmatprep.subr.mxu0 0.0
    %5903 = vmatpush1.msra.mxu0 0.0
    %5904 = vmatprep.subr.mxu0 0.0
    %5905 = vmatpush1.msra.mxu0 0.0
    %5906 = vmatprep.subr.mxu0 0.0
    %5907 = vmatpush1.msra.mxu0 0.0
    %5908 = vmatprep.subr.mxu0 0.0
    %5909 = vmatpush1.msra.mxu0 0.0
    %5910 = vmatprep.subr.mxu0 0.0
    %5911 = vmatpush1.msra.mxu0 0.0
    %5912 = vmatprep.subr.mxu0 0.0
    %5913 = vmatpush1.msra.mxu0 0.0
    %5914 = vmatprep.subr.mxu0 0.0
    %5915 = vmatpush1.msra.mxu0 0.0
    %5916 = vmatprep.subr.mxu0 0.0
    %5917 = vmatpush1.msra.mxu0 0.0
    %5918 = vmatprep.subr.mxu0 0.0
    %5919 = vmatpush1.msra.mxu0 0.0
    %5920 = vmatprep.subr.mxu0 0.0
    %5921 = vmatpush1.msra.mxu0 0.0
    %5922 = vmatprep.subr.mxu0 0.0
    %5923 = vmatpush1.msra.mxu0 %v2611
    %5924 = vmatprep.subr.mxu0 0.0
    %5925 = vmatpush1.msra.mxu0 %v2609
    %5926 = vmatprep.subr.mxu0 0.0
    %5927 = vmatpush2.msra.mxu0 0.0
    %5928 = vmatprep.subr.mxu0 0.0
    %5929 = vmatpush2.msra.mxu0 0.0
    %5930 = vmatprep.subr.mxu0 0.0
    %5931 = vmatpush2.msra.mxu0 0.0
    %5932 = vmatprep.subr.mxu0 0.0
    %5933 = vmatpush2.msra.mxu0 0.0
    %5934 = vmatprep.subr.mxu0 0.0
    %5935 = vmatpush2.msra.mxu0 0.0
    %5936 = vmatprep.subr.mxu0 0.0
    %5937 = vmatpush2.msra.mxu0 0.0
    %5938 = vmatprep.subr.mxu0 0.0
    %5939 = vmatpush2.msra.mxu0 0.0
    %5940 = vmatprep.subr.mxu0 0.0
    %5941 = vmatpush2.msra.mxu0 0.0
    %5942 = vmatprep.subr.mxu0 0.0
    %5943 = vmatpush2.msra.mxu0 0.0
    %5944 = vmatprep.subr.mxu0 0.0
    %5945 = vmatpush2.msra.mxu0 0.0
    %5946 = vmatprep.subr.mxu0 0.0
    %5947 = vmatpush2.msra.mxu0 0.0
    %5948 = vmatprep.subr.mxu0 0.0
    %5949 = vmatpush2.msra.mxu0 0.0
    %5950 = vmatprep.subr.mxu0 0.0
    %5951 = vmatpush2.msra.mxu0 0.0
    %5952 = vmatprep.subr.mxu0 0.0
    %5953 = vmatpush2.msra.mxu0 0.0
    %5954 = vmatprep.subr.mxu0 0.0
    %5955 = vmatpush2.msra.mxu0 0.0
    %5956 = vmatprep.subr.mxu0 0.0
    %5957 = vmatpush2.msra.mxu0 0.0
    %5958 = vmatprep.mubr.f32.mxu0 0.0
    %5959 = vmatmul.mubr.f32.gmra.mxu0 %v5892
    %v5960 = vpop.f32.mrf.mxu0
    %v5961 = vadd.f32 0.0, %v5960
    %v5962 = vpop.f32.mrf.mxu0
    %5963 = vdwg.mxu0
    %v5964 = vmul.f32 %v5888, %v5816
    %v5965 = vmul.f32 %v5961, %v5817
    %5966 = vrot.lane.b32.xlu0 %v5322, 112
    %v5967 = vpop.permute.xlu0 %5966
    %v5968 = vsel %vm367, %v5967, 0
    %5970 = vmatprep.subr.mxu0 0.0
    %5971 = vmatpush1.xpose.msra.mxu0 0.0
    %5972 = vmatprep.subr.mxu0 0.0
    %5973 = vmatpush1.xpose.msra.mxu0 0.0
    %5974 = vmatprep.subr.mxu0 0.0
    %5975 = vmatpush1.xpose.msra.mxu0 0.0
    %5976 = vmatprep.subr.mxu0 0.0
    %5977 = vmatpush1.xpose.msra.mxu0 0.0
    %5978 = vmatprep.subr.mxu0 0.0
    %5979 = vmatpush1.xpose.msra.mxu0 0.0
    %5980 = vmatprep.subr.mxu0 0.0
    %5981 = vmatpush1.xpose.msra.mxu0 0.0
    %5982 = vmatprep.subr.mxu0 0.0
    %5983 = vmatpush1.xpose.msra.mxu0 0.0
    %5984 = vmatprep.subr.mxu0 0.0
    %5985 = vmatpush1.xpose.msra.mxu0 0.0
    %5986 = vmatprep.subr.mxu0 0.0
    %5987 = vmatpush1.xpose.msra.mxu0 0.0
    %5988 = vmatprep.subr.mxu0 0.0
    %5989 = vmatpush1.xpose.msra.mxu0 0.0
    %5990 = vmatprep.subr.mxu0 0.0
    %5991 = vmatpush1.xpose.msra.mxu0 0.0
    %5992 = vmatprep.subr.mxu0 0.0
    %5993 = vmatpush1.xpose.msra.mxu0 0.0
    %5994 = vmatprep.subr.mxu0 0.0
    %5995 = vmatpush1.xpose.msra.mxu0 0.0
    %5996 = vmatprep.subr.mxu0 0.0
    %5997 = vmatpush1.xpose.msra.mxu0 0.0
    %5998 = vmatprep.subr.mxu0 0.0
    %5999 = vmatpush1.xpose.msra.mxu0 %v2699
    %6000 = vmatprep.subr.mxu0 0.0
    %6001 = vmatpush1.xpose.msra.mxu0 %v2697
    %6002 = vmatprep.subr.mxu0 0.0
    %6003 = vmatpush2.xpose.msra.mxu0 0.0
    %6004 = vmatprep.subr.mxu0 0.0
    %6005 = vmatpush2.xpose.msra.mxu0 0.0
    %6006 = vmatprep.subr.mxu0 0.0
    %6007 = vmatpush2.xpose.msra.mxu0 0.0
    %6008 = vmatprep.subr.mxu0 0.0
    %6009 = vmatpush2.xpose.msra.mxu0 0.0
    %6010 = vmatprep.subr.mxu0 0.0
    %6011 = vmatpush2.xpose.msra.mxu0 0.0
    %6012 = vmatprep.subr.mxu0 0.0
    %6013 = vmatpush2.xpose.msra.mxu0 0.0
    %6014 = vmatprep.subr.mxu0 0.0
    %6015 = vmatpush2.xpose.msra.mxu0 0.0
    %6016 = vmatprep.subr.mxu0 0.0
    %6017 = vmatpush2.xpose.msra.mxu0 0.0
    %6018 = vmatprep.subr.mxu0 0.0
    %6019 = vmatpush2.xpose.msra.mxu0 0.0
    %6020 = vmatprep.subr.mxu0 0.0
    %6021 = vmatpush2.xpose.msra.mxu0 0.0
    %6022 = vmatprep.subr.mxu0 0.0
    %6023 = vmatpush2.xpose.msra.mxu0 0.0
    %6024 = vmatprep.subr.mxu0 0.0
    %6025 = vmatpush2.xpose.msra.mxu0 0.0
    %6026 = vmatprep.subr.mxu0 0.0
    %6027 = vmatpush2.xpose.msra.mxu0 0.0
    %6028 = vmatprep.subr.mxu0 0.0
    %6029 = vmatpush2.xpose.msra.mxu0 0.0
    %6030 = vmatprep.subr.mxu0 0.0
    %6031 = vmatpush2.xpose.msra.mxu0 0.0
    %6032 = vmatprep.subr.mxu0 0.0
    %6033 = vmatpush2.xpose.msra.mxu0 0.0
    %6034 = vmatprep.mubr.f32.mxu0 0.0
    %6035 = vmatmul.mubr.f32.gmra.mxu0 %v5968
    %v6036 = vpop.f32.mrf.mxu0
    %v6037 = vadd.f32 0.0, %v6036
    %v6038 = vpop.f32.mrf.mxu0
    %6039 = vdwg.mxu0
    %6040 = vrot.lane.b32.xlu0 %v5323, 112
    %v6041 = vpop.permute.xlu0 %6040
    %v6042 = vsel %vm367, %v6041, 0
    %6044 = vmatprep.subr.mxu0 0.0
    %6045 = vmatpush1.xpose.msra.mxu0 0.0
    %6046 = vmatprep.subr.mxu0 0.0
    %6047 = vmatpush1.xpose.msra.mxu0 0.0
    %6048 = vmatprep.subr.mxu0 0.0
    %6049 = vmatpush1.xpose.msra.mxu0 0.0
    %6050 = vmatprep.subr.mxu0 0.0
    %6051 = vmatpush1.xpose.msra.mxu0 0.0
    %6052 = vmatprep.subr.mxu0 0.0
    %6053 = vmatpush1.xpose.msra.mxu0 0.0
    %6054 = vmatprep.subr.mxu0 0.0
    %6055 = vmatpush1.xpose.msra.mxu0 0.0
    %6056 = vmatprep.subr.mxu0 0.0
    %6057 = vmatpush1.xpose.msra.mxu0 0.0
    %6058 = vmatprep.subr.mxu0 0.0
    %6059 = vmatpush1.xpose.msra.mxu0 0.0
    %6060 = vmatprep.subr.mxu0 0.0
    %6061 = vmatpush1.xpose.msra.mxu0 0.0
    %6062 = vmatprep.subr.mxu0 0.0
    %6063 = vmatpush1.xpose.msra.mxu0 0.0
    %6064 = vmatprep.subr.mxu0 0.0
    %6065 = vmatpush1.xpose.msra.mxu0 0.0
    %6066 = vmatprep.subr.mxu0 0.0
    %6067 = vmatpush1.xpose.msra.mxu0 0.0
    %6068 = vmatprep.subr.mxu0 0.0
    %6069 = vmatpush1.xpose.msra.mxu0 0.0
    %6070 = vmatprep.subr.mxu0 0.0
    %6071 = vmatpush1.xpose.msra.mxu0 0.0
    %6072 = vmatprep.subr.mxu0 0.0
    %6073 = vmatpush1.xpose.msra.mxu0 %v2781
    %6074 = vmatprep.subr.mxu0 0.0
    %6075 = vmatpush1.xpose.msra.mxu0 %v2779
    %6076 = vmatprep.subr.mxu0 0.0
    %6077 = vmatpush2.xpose.msra.mxu0 0.0
    %6078 = vmatprep.subr.mxu0 0.0
    %6079 = vmatpush2.xpose.msra.mxu0 0.0
    %6080 = vmatprep.subr.mxu0 0.0
    %6081 = vmatpush2.xpose.msra.mxu0 0.0
    %6082 = vmatprep.subr.mxu0 0.0
    %6083 = vmatpush2.xpose.msra.mxu0 0.0
    %6084 = vmatprep.subr.mxu0 0.0
    %6085 = vmatpush2.xpose.msra.mxu0 0.0
    %6086 = vmatprep.subr.mxu0 0.0
    %6087 = vmatpush2.xpose.msra.mxu0 0.0
    %6088 = vmatprep.subr.mxu0 0.0
    %6089 = vmatpush2.xpose.msra.mxu0 0.0
    %6090 = vmatprep.subr.mxu0 0.0
    %6091 = vmatpush2.xpose.msra.mxu0 0.0
    %6092 = vmatprep.subr.mxu0 0.0
    %6093 = vmatpush2.xpose.msra.mxu0 0.0
    %6094 = vmatprep.subr.mxu0 0.0
    %6095 = vmatpush2.xpose.msra.mxu0 0.0
    %6096 = vmatprep.subr.mxu0 0.0
    %6097 = vmatpush2.xpose.msra.mxu0 0.0
    %6098 = vmatprep.subr.mxu0 0.0
    %6099 = vmatpush2.xpose.msra.mxu0 0.0
    %6100 = vmatprep.subr.mxu0 0.0
    %6101 = vmatpush2.xpose.msra.mxu0 0.0
    %6102 = vmatprep.subr.mxu0 0.0
    %6103 = vmatpush2.xpose.msra.mxu0 0.0
    %6104 = vmatprep.subr.mxu0 0.0
    %6105 = vmatpush2.xpose.msra.mxu0 0.0
    %6106 = vmatprep.subr.mxu0 0.0
    %6107 = vmatpush2.xpose.msra.mxu0 0.0
    %6108 = vmatprep.mubr.f32.mxu0 0.0
    %6109 = vmatmul.mubr.f32.gmra.mxu0 %v6042
    %v6110 = vpop.f32.mrf.mxu0
    %v6111 = vadd.f32 0.0, %v6110
    %v6112 = vpop.f32.mrf.mxu0
    %6113 = vdwg.mxu0
    %v6114 = vsel %vm526, %v6037, -inf
    %6115 = vmax.xlane.f32.xlu0 %v6114
    %v6116 = vpop.xlane.xlu0 %6115
    %v6117 = vsel %vm526, %v6111, -inf
    %6118 = vmax.xlane.f32.xlu0 %v6117
    %v6119 = vpop.xlane.xlu0 %6118
    %v6120 = vsub.f32 %v6037, %v6116
    %v6121 = vsub.f32 %v6111, %v6119
    %v6122 = vmul.f32 %v6120, 1.442695
    %v6123 = vpow.pop %v6122
    %v6124 = vmul.f32 %v6121, 1.442695
    %v6125 = vpow.pop %v6124
    %v6126 = vsel %vm526, %v6123, 0.0
    %6127 = vadd.xlane.f32.xlu0 %v6126
    %v6128 = vpop.xlane.xlu0 %6127
    %v6129 = vsel %vm526, %v6125, 0.0
    %6130 = vadd.xlane.f32.xlu0 %v6129
    %v6131 = vpop.xlane.xlu0 %6130
    %v6132 = vrcp.pop %v6128
    %v6133 = vrcp.pop %v6131
    %v6134 = vmul.f32 %v6128, %v6132
    %v6135 = vmul.f32 %v6131, %v6133
    %v6136 = vsub.f32 2.0, %v6134
    %v6137 = vsub.f32 2.0, %v6135
    %v6138 = vmul.f32 %v6132, %v6136
    %v6139 = vmul.f32 %v6133, %v6137
    %v6141 = vsel %vm526, %v6123, 0
    %6143 = vmatprep.subr.mxu0 0.0
    %6144 = vmatpush1.msra.mxu0 0.0
    %6145 = vmatprep.subr.mxu0 0.0
    %6146 = vmatpush1.msra.mxu0 0.0
    %6147 = vmatprep.subr.mxu0 0.0
    %6148 = vmatpush1.msra.mxu0 0.0
    %6149 = vmatprep.subr.mxu0 0.0
    %6150 = vmatpush1.msra.mxu0 0.0
    %6151 = vmatprep.subr.mxu0 0.0
    %6152 = vmatpush1.msra.mxu0 0.0
    %6153 = vmatprep.subr.mxu0 0.0
    %6154 = vmatpush1.msra.mxu0 0.0
    %6155 = vmatprep.subr.mxu0 0.0
    %6156 = vmatpush1.msra.mxu0 0.0
    %6157 = vmatprep.subr.mxu0 0.0
    %6158 = vmatpush1.msra.mxu0 0.0
    %6159 = vmatprep.subr.mxu0 0.0
    %6160 = vmatpush1.msra.mxu0 0.0
    %6161 = vmatprep.subr.mxu0 0.0
    %6162 = vmatpush1.msra.mxu0 0.0
    %6163 = vmatprep.subr.mxu0 0.0
    %6164 = vmatpush1.msra.mxu0 0.0
    %6165 = vmatprep.subr.mxu0 0.0
    %6166 = vmatpush1.msra.mxu0 0.0
    %6167 = vmatprep.subr.mxu0 0.0
    %6168 = vmatpush1.msra.mxu0 0.0
    %6169 = vmatprep.subr.mxu0 0.0
    %6170 = vmatpush1.msra.mxu0 0.0
    %6171 = vmatprep.subr.mxu0 0.0
    %6172 = vmatpush1.msra.mxu0 %v2882
    %6173 = vmatprep.subr.mxu0 0.0
    %6174 = vmatpush1.msra.mxu0 %v2880
    %6175 = vmatprep.subr.mxu0 0.0
    %6176 = vmatpush2.msra.mxu0 0.0
    %6177 = vmatprep.subr.mxu0 0.0
    %6178 = vmatpush2.msra.mxu0 0.0
    %6179 = vmatprep.subr.mxu0 0.0
    %6180 = vmatpush2.msra.mxu0 0.0
    %6181 = vmatprep.subr.mxu0 0.0
    %6182 = vmatpush2.msra.mxu0 0.0
    %6183 = vmatprep.subr.mxu0 0.0
    %6184 = vmatpush2.msra.mxu0 0.0
    %6185 = vmatprep.subr.mxu0 0.0
    %6186 = vmatpush2.msra.mxu0 0.0
    %6187 = vmatprep.subr.mxu0 0.0
    %6188 = vmatpush2.msra.mxu0 0.0
    %6189 = vmatprep.subr.mxu0 0.0
    %6190 = vmatpush2.msra.mxu0 0.0
    %6191 = vmatprep.subr.mxu0 0.0
    %6192 = vmatpush2.msra.mxu0 0.0
    %6193 = vmatprep.subr.mxu0 0.0
    %6194 = vmatpush2.msra.mxu0 0.0
    %6195 = vmatprep.subr.mxu0 0.0
    %6196 = vmatpush2.msra.mxu0 0.0
    %6197 = vmatprep.subr.mxu0 0.0
    %6198 = vmatpush2.msra.mxu0 0.0
    %6199 = vmatprep.subr.mxu0 0.0
    %6200 = vmatpush2.msra.mxu0 0.0
    %6201 = vmatprep.subr.mxu0 0.0
    %6202 = vmatpush2.msra.mxu0 0.0
    %6203 = vmatprep.subr.mxu0 0.0
    %6204 = vmatpush2.msra.mxu0 0.0
    %6205 = vmatprep.subr.mxu0 0.0
    %6206 = vmatpush2.msra.mxu0 0.0
    %6207 = vmatprep.mubr.f32.mxu0 0.0
    %6208 = vmatmul.mubr.f32.gmra.mxu0 %v6141
    %v6209 = vpop.f32.mrf.mxu0
    %v6210 = vadd.f32 0.0, %v6209
    %v6211 = vpop.f32.mrf.mxu0
    %6212 = vdwg.mxu0
    %v6214 = vsel %vm526, %v6125, 0
    %6216 = vmatprep.subr.mxu0 0.0
    %6217 = vmatpush1.msra.mxu0 0.0
    %6218 = vmatprep.subr.mxu0 0.0
    %6219 = vmatpush1.msra.mxu0 0.0
    %6220 = vmatprep.subr.mxu0 0.0
    %6221 = vmatpush1.msra.mxu0 0.0
    %6222 = vmatprep.subr.mxu0 0.0
    %6223 = vmatpush1.msra.mxu0 0.0
    %6224 = vmatprep.subr.mxu0 0.0
    %6225 = vmatpush1.msra.mxu0 0.0
    %6226 = vmatprep.subr.mxu0 0.0
    %6227 = vmatpush1.msra.mxu0 0.0
    %6228 = vmatprep.subr.mxu0 0.0
    %6229 = vmatpush1.msra.mxu0 0.0
    %6230 = vmatprep.subr.mxu0 0.0
    %6231 = vmatpush1.msra.mxu0 0.0
    %6232 = vmatprep.subr.mxu0 0.0
    %6233 = vmatpush1.msra.mxu0 0.0
    %6234 = vmatprep.subr.mxu0 0.0
    %6235 = vmatpush1.msra.mxu0 0.0
    %6236 = vmatprep.subr.mxu0 0.0
    %6237 = vmatpush1.msra.mxu0 0.0
    %6238 = vmatprep.subr.mxu0 0.0
    %6239 = vmatpush1.msra.mxu0 0.0
    %6240 = vmatprep.subr.mxu0 0.0
    %6241 = vmatpush1.msra.mxu0 0.0
    %6242 = vmatprep.subr.mxu0 0.0
    %6243 = vmatpush1.msra.mxu0 0.0
    %6244 = vmatprep.subr.mxu0 0.0
    %6245 = vmatpush1.msra.mxu0 %v2961
    %6246 = vmatprep.subr.mxu0 0.0
    %6247 = vmatpush1.msra.mxu0 %v2959
    %6248 = vmatprep.subr.mxu0 0.0
    %6249 = vmatpush2.msra.mxu0 0.0
    %6250 = vmatprep.subr.mxu0 0.0
    %6251 = vmatpush2.msra.mxu0 0.0
    %6252 = vmatprep.subr.mxu0 0.0
    %6253 = vmatpush2.msra.mxu0 0.0
    %6254 = vmatprep.subr.mxu0 0.0
    %6255 = vmatpush2.msra.mxu0 0.0
    %6256 = vmatprep.subr.mxu0 0.0
    %6257 = vmatpush2.msra.mxu0 0.0
    %6258 = vmatprep.subr.mxu0 0.0
    %6259 = vmatpush2.msra.mxu0 0.0
    %6260 = vmatprep.subr.mxu0 0.0
    %6261 = vmatpush2.msra.mxu0 0.0
    %6262 = vmatprep.subr.mxu0 0.0
    %6263 = vmatpush2.msra.mxu0 0.0
    %6264 = vmatprep.subr.mxu0 0.0
    %6265 = vmatpush2.msra.mxu0 0.0
    %6266 = vmatprep.subr.mxu0 0.0
    %6267 = vmatpush2.msra.mxu0 0.0
    %6268 = vmatprep.subr.mxu0 0.0
    %6269 = vmatpush2.msra.mxu0 0.0
    %6270 = vmatprep.subr.mxu0 0.0
    %6271 = vmatpush2.msra.mxu0 0.0
    %6272 = vmatprep.subr.mxu0 0.0
    %6273 = vmatpush2.msra.mxu0 0.0
    %6274 = vmatprep.subr.mxu0 0.0
    %6275 = vmatpush2.msra.mxu0 0.0
    %6276 = vmatprep.subr.mxu0 0.0
    %6277 = vmatpush2.msra.mxu0 0.0
    %6278 = vmatprep.subr.mxu0 0.0
    %6279 = vmatpush2.msra.mxu0 0.0
    %6280 = vmatprep.mubr.f32.mxu0 0.0
    %6281 = vmatmul.mubr.f32.gmra.mxu0 %v6214
    %v6282 = vpop.f32.mrf.mxu0
    %v6283 = vadd.f32 0.0, %v6282
    %v6284 = vpop.f32.mrf.mxu0
    %6285 = vdwg.mxu0
    %v6286 = vmul.f32 %v6210, %v6138
    %v6287 = vmul.f32 %v6283, %v6139
    %6288 = vrot.lane.b32.xlu0 %v5322, 104
    %v6289 = vpop.permute.xlu0 %6288
    %v6290 = vsel %vm367, %v6289, 0
    %6292 = vmatprep.subr.mxu0 0.0
    %6293 = vmatpush1.xpose.msra.mxu0 0.0
    %6294 = vmatprep.subr.mxu0 0.0
    %6295 = vmatpush1.xpose.msra.mxu0 0.0
    %6296 = vmatprep.subr.mxu0 0.0
    %6297 = vmatpush1.xpose.msra.mxu0 0.0
    %6298 = vmatprep.subr.mxu0 0.0
    %6299 = vmatpush1.xpose.msra.mxu0 0.0
    %6300 = vmatprep.subr.mxu0 0.0
    %6301 = vmatpush1.xpose.msra.mxu0 0.0
    %6302 = vmatprep.subr.mxu0 0.0
    %6303 = vmatpush1.xpose.msra.mxu0 0.0
    %6304 = vmatprep.subr.mxu0 0.0
    %6305 = vmatpush1.xpose.msra.mxu0 0.0
    %6306 = vmatprep.subr.mxu0 0.0
    %6307 = vmatpush1.xpose.msra.mxu0 0.0
    %6308 = vmatprep.subr.mxu0 0.0
    %6309 = vmatpush1.xpose.msra.mxu0 0.0
    %6310 = vmatprep.subr.mxu0 0.0
    %6311 = vmatpush1.xpose.msra.mxu0 0.0
    %6312 = vmatprep.subr.mxu0 0.0
    %6313 = vmatpush1.xpose.msra.mxu0 0.0
    %6314 = vmatprep.subr.mxu0 0.0
    %6315 = vmatpush1.xpose.msra.mxu0 0.0
    %6316 = vmatprep.subr.mxu0 0.0
    %6317 = vmatpush1.xpose.msra.mxu0 0.0
    %6318 = vmatprep.subr.mxu0 0.0
    %6319 = vmatpush1.xpose.msra.mxu0 0.0
    %6320 = vmatprep.subr.mxu0 0.0
    %6321 = vmatpush1.xpose.msra.mxu0 %v3049
    %6322 = vmatprep.subr.mxu0 0.0
    %6323 = vmatpush1.xpose.msra.mxu0 %v3047
    %6324 = vmatprep.subr.mxu0 0.0
    %6325 = vmatpush2.xpose.msra.mxu0 0.0
    %6326 = vmatprep.subr.mxu0 0.0
    %6327 = vmatpush2.xpose.msra.mxu0 0.0
    %6328 = vmatprep.subr.mxu0 0.0
    %6329 = vmatpush2.xpose.msra.mxu0 0.0
    %6330 = vmatprep.subr.mxu0 0.0
    %6331 = vmatpush2.xpose.msra.mxu0 0.0
    %6332 = vmatprep.subr.mxu0 0.0
    %6333 = vmatpush2.xpose.msra.mxu0 0.0
    %6334 = vmatprep.subr.mxu0 0.0
    %6335 = vmatpush2.xpose.msra.mxu0 0.0
    %6336 = vmatprep.subr.mxu0 0.0
    %6337 = vmatpush2.xpose.msra.mxu0 0.0
    %6338 = vmatprep.subr.mxu0 0.0
    %6339 = vmatpush2.xpose.msra.mxu0 0.0
    %6340 = vmatprep.subr.mxu0 0.0
    %6341 = vmatpush2.xpose.msra.mxu0 0.0
    %6342 = vmatprep.subr.mxu0 0.0
    %6343 = vmatpush2.xpose.msra.mxu0 0.0
    %6344 = vmatprep.subr.mxu0 0.0
    %6345 = vmatpush2.xpose.msra.mxu0 0.0
    %6346 = vmatprep.subr.mxu0 0.0
    %6347 = vmatpush2.xpose.msra.mxu0 0.0
    %6348 = vmatprep.subr.mxu0 0.0
    %6349 = vmatpush2.xpose.msra.mxu0 0.0
    %6350 = vmatprep.subr.mxu0 0.0
    %6351 = vmatpush2.xpose.msra.mxu0 0.0
    %6352 = vmatprep.subr.mxu0 0.0
    %6353 = vmatpush2.xpose.msra.mxu0 0.0
    %6354 = vmatprep.subr.mxu0 0.0
    %6355 = vmatpush2.xpose.msra.mxu0 0.0
    %6356 = vmatprep.mubr.f32.mxu0 0.0
    %6357 = vmatmul.mubr.f32.gmra.mxu0 %v6290
    %v6358 = vpop.f32.mrf.mxu0
    %v6359 = vadd.f32 0.0, %v6358
    %v6360 = vpop.f32.mrf.mxu0
    %6361 = vdwg.mxu0
    %6362 = vrot.lane.b32.xlu0 %v5323, 104
    %v6363 = vpop.permute.xlu0 %6362
    %v6364 = vsel %vm367, %v6363, 0
    %6366 = vmatprep.subr.mxu0 0.0
    %6367 = vmatpush1.xpose.msra.mxu0 0.0
    %6368 = vmatprep.subr.mxu0 0.0
    %6369 = vmatpush1.xpose.msra.mxu0 0.0
    %6370 = vmatprep.subr.mxu0 0.0
    %6371 = vmatpush1.xpose.msra.mxu0 0.0
    %6372 = vmatprep.subr.mxu0 0.0
    %6373 = vmatpush1.xpose.msra.mxu0 0.0
    %6374 = vmatprep.subr.mxu0 0.0
    %6375 = vmatpush1.xpose.msra.mxu0 0.0
    %6376 = vmatprep.subr.mxu0 0.0
    %6377 = vmatpush1.xpose.msra.mxu0 0.0
    %6378 = vmatprep.subr.mxu0 0.0
    %6379 = vmatpush1.xpose.msra.mxu0 0.0
    %6380 = vmatprep.subr.mxu0 0.0
    %6381 = vmatpush1.xpose.msra.mxu0 0.0
    %6382 = vmatprep.subr.mxu0 0.0
    %6383 = vmatpush1.xpose.msra.mxu0 0.0
    %6384 = vmatprep.subr.mxu0 0.0
    %6385 = vmatpush1.xpose.msra.mxu0 0.0
    %6386 = vmatprep.subr.mxu0 0.0
    %6387 = vmatpush1.xpose.msra.mxu0 0.0
    %6388 = vmatprep.subr.mxu0 0.0
    %6389 = vmatpush1.xpose.msra.mxu0 0.0
    %6390 = vmatprep.subr.mxu0 0.0
    %6391 = vmatpush1.xpose.msra.mxu0 0.0
    %6392 = vmatprep.subr.mxu0 0.0
    %6393 = vmatpush1.xpose.msra.mxu0 0.0
    %6394 = vmatprep.subr.mxu0 0.0
    %6395 = vmatpush1.xpose.msra.mxu0 %v3131
    %6396 = vmatprep.subr.mxu0 0.0
    %6397 = vmatpush1.xpose.msra.mxu0 %v3129
    %6398 = vmatprep.subr.mxu0 0.0
    %6399 = vmatpush2.xpose.msra.mxu0 0.0
    %6400 = vmatprep.subr.mxu0 0.0
    %6401 = vmatpush2.xpose.msra.mxu0 0.0
    %6402 = vmatprep.subr.mxu0 0.0
    %6403 = vmatpush2.xpose.msra.mxu0 0.0
    %6404 = vmatprep.subr.mxu0 0.0
    %6405 = vmatpush2.xpose.msra.mxu0 0.0
    %6406 = vmatprep.subr.mxu0 0.0
    %6407 = vmatpush2.xpose.msra.mxu0 0.0
    %6408 = vmatprep.subr.mxu0 0.0
    %6409 = vmatpush2.xpose.msra.mxu0 0.0
    %6410 = vmatprep.subr.mxu0 0.0
    %6411 = vmatpush2.xpose.msra.mxu0 0.0
    %6412 = vmatprep.subr.mxu0 0.0
    %6413 = vmatpush2.xpose.msra.mxu0 0.0
    %6414 = vmatprep.subr.mxu0 0.0
    %6415 = vmatpush2.xpose.msra.mxu0 0.0
    %6416 = vmatprep.subr.mxu0 0.0
    %6417 = vmatpush2.xpose.msra.mxu0 0.0
    %6418 = vmatprep.subr.mxu0 0.0
    %6419 = vmatpush2.xpose.msra.mxu0 0.0
    %6420 = vmatprep.subr.mxu0 0.0
    %6421 = vmatpush2.xpose.msra.mxu0 0.0
    %6422 = vmatprep.subr.mxu0 0.0
    %6423 = vmatpush2.xpose.msra.mxu0 0.0
    %6424 = vmatprep.subr.mxu0 0.0
    %6425 = vmatpush2.xpose.msra.mxu0 0.0
    %6426 = vmatprep.subr.mxu0 0.0
    %6427 = vmatpush2.xpose.msra.mxu0 0.0
    %6428 = vmatprep.subr.mxu0 0.0
    %6429 = vmatpush2.xpose.msra.mxu0 0.0
    %6430 = vmatprep.mubr.f32.mxu0 0.0
    %6431 = vmatmul.mubr.f32.gmra.mxu0 %v6364
    %v6432 = vpop.f32.mrf.mxu0
    %v6433 = vadd.f32 0.0, %v6432
    %v6434 = vpop.f32.mrf.mxu0
    %6435 = vdwg.mxu0
    %v6436 = vsel %vm526, %v6359, -inf
    %6437 = vmax.xlane.f32.xlu0 %v6436
    %v6438 = vpop.xlane.xlu0 %6437
    %v6439 = vsel %vm526, %v6433, -inf
    %6440 = vmax.xlane.f32.xlu0 %v6439
    %v6441 = vpop.xlane.xlu0 %6440
    %v6442 = vsub.f32 %v6359, %v6438
    %v6443 = vsub.f32 %v6433, %v6441
    %v6444 = vmul.f32 %v6442, 1.442695
    %v6445 = vpow.pop %v6444
    %v6446 = vmul.f32 %v6443, 1.442695
    %v6447 = vpow.pop %v6446
    %v6448 = vsel %vm526, %v6445, 0.0
    %6449 = vadd.xlane.f32.xlu0 %v6448
    %v6450 = vpop.xlane.xlu0 %6449
    %v6451 = vsel %vm526, %v6447, 0.0
    %6452 = vadd.xlane.f32.xlu0 %v6451
    %v6453 = vpop.xlane.xlu0 %6452
    %v6454 = vrcp.pop %v6450
    %v6455 = vrcp.pop %v6453
    %v6456 = vmul.f32 %v6450, %v6454
    %v6457 = vmul.f32 %v6453, %v6455
    %v6458 = vsub.f32 2.0, %v6456
    %v6459 = vsub.f32 2.0, %v6457
    %v6460 = vmul.f32 %v6454, %v6458
    %v6461 = vmul.f32 %v6455, %v6459
    %v6463 = vsel %vm526, %v6445, 0
    %6465 = vmatprep.subr.mxu0 0.0
    %6466 = vmatpush1.msra.mxu0 0.0
    %6467 = vmatprep.subr.mxu0 0.0
    %6468 = vmatpush1.msra.mxu0 0.0
    %6469 = vmatprep.subr.mxu0 0.0
    %6470 = vmatpush1.msra.mxu0 0.0
    %6471 = vmatprep.subr.mxu0 0.0
    %6472 = vmatpush1.msra.mxu0 0.0
    %6473 = vmatprep.subr.mxu0 0.0
    %6474 = vmatpush1.msra.mxu0 0.0
    %6475 = vmatprep.subr.mxu0 0.0
    %6476 = vmatpush1.msra.mxu0 0.0
    %6477 = vmatprep.subr.mxu0 0.0
    %6478 = vmatpush1.msra.mxu0 0.0
    %6479 = vmatprep.subr.mxu0 0.0
    %6480 = vmatpush1.msra.mxu0 0.0
    %6481 = vmatprep.subr.mxu0 0.0
    %6482 = vmatpush1.msra.mxu0 0.0
    %6483 = vmatprep.subr.mxu0 0.0
    %6484 = vmatpush1.msra.mxu0 0.0
    %6485 = vmatprep.subr.mxu0 0.0
    %6486 = vmatpush1.msra.mxu0 0.0
    %6487 = vmatprep.subr.mxu0 0.0
    %6488 = vmatpush1.msra.mxu0 0.0
    %6489 = vmatprep.subr.mxu0 0.0
    %6490 = vmatpush1.msra.mxu0 0.0
    %6491 = vmatprep.subr.mxu0 0.0
    %6492 = vmatpush1.msra.mxu0 0.0
    %6493 = vmatprep.subr.mxu0 0.0
    %6494 = vmatpush1.msra.mxu0 %v3232
    %6495 = vmatprep.subr.mxu0 0.0
    %6496 = vmatpush1.msra.mxu0 %v3230
    %6497 = vmatprep.subr.mxu0 0.0
    %6498 = vmatpush2.msra.mxu0 0.0
    %6499 = vmatprep.subr.mxu0 0.0
    %6500 = vmatpush2.msra.mxu0 0.0
    %6501 = vmatprep.subr.mxu0 0.0
    %6502 = vmatpush2.msra.mxu0 0.0
    %6503 = vmatprep.subr.mxu0 0.0
    %6504 = vmatpush2.msra.mxu0 0.0
    %6505 = vmatprep.subr.mxu0 0.0
    %6506 = vmatpush2.msra.mxu0 0.0
    %6507 = vmatprep.subr.mxu0 0.0
    %6508 = vmatpush2.msra.mxu0 0.0
    %6509 = vmatprep.subr.mxu0 0.0
    %6510 = vmatpush2.msra.mxu0 0.0
    %6511 = vmatprep.subr.mxu0 0.0
    %6512 = vmatpush2.msra.mxu0 0.0
    %6513 = vmatprep.subr.mxu0 0.0
    %6514 = vmatpush2.msra.mxu0 0.0
    %6515 = vmatprep.subr.mxu0 0.0
    %6516 = vmatpush2.msra.mxu0 0.0
    %6517 = vmatprep.subr.mxu0 0.0
    %6518 = vmatpush2.msra.mxu0 0.0
    %6519 = vmatprep.subr.mxu0 0.0
    %6520 = vmatpush2.msra.mxu0 0.0
    %6521 = vmatprep.subr.mxu0 0.0
    %6522 = vmatpush2.msra.mxu0 0.0
    %6523 = vmatprep.subr.mxu0 0.0
    %6524 = vmatpush2.msra.mxu0 0.0
    %6525 = vmatprep.subr.mxu0 0.0
    %6526 = vmatpush2.msra.mxu0 0.0
    %6527 = vmatprep.subr.mxu0 0.0
    %6528 = vmatpush2.msra.mxu0 0.0
    %6529 = vmatprep.mubr.f32.mxu0 0.0
    %6530 = vmatmul.mubr.f32.gmra.mxu0 %v6463
    %v6531 = vpop.f32.mrf.mxu0
    %v6532 = vadd.f32 0.0, %v6531
    %v6533 = vpop.f32.mrf.mxu0
    %6534 = vdwg.mxu0
    %v6536 = vsel %vm526, %v6447, 0
    %6538 = vmatprep.subr.mxu0 0.0
    %6539 = vmatpush1.msra.mxu0 0.0
    %6540 = vmatprep.subr.mxu0 0.0
    %6541 = vmatpush1.msra.mxu0 0.0
    %6542 = vmatprep.subr.mxu0 0.0
    %6543 = vmatpush1.msra.mxu0 0.0
    %6544 = vmatprep.subr.mxu0 0.0
    %6545 = vmatpush1.msra.mxu0 0.0
    %6546 = vmatprep.subr.mxu0 0.0
    %6547 = vmatpush1.msra.mxu0 0.0
    %6548 = vmatprep.subr.mxu0 0.0
    %6549 = vmatpush1.msra.mxu0 0.0
    %6550 = vmatprep.subr.mxu0 0.0
    %6551 = vmatpush1.msra.mxu0 0.0
    %6552 = vmatprep.subr.mxu0 0.0
    %6553 = vmatpush1.msra.mxu0 0.0
    %6554 = vmatprep.subr.mxu0 0.0
    %6555 = vmatpush1.msra.mxu0 0.0
    %6556 = vmatprep.subr.mxu0 0.0
    %6557 = vmatpush1.msra.mxu0 0.0
    %6558 = vmatprep.subr.mxu0 0.0
    %6559 = vmatpush1.msra.mxu0 0.0
    %6560 = vmatprep.subr.mxu0 0.0
    %6561 = vmatpush1.msra.mxu0 0.0
    %6562 = vmatprep.subr.mxu0 0.0
    %6563 = vmatpush1.msra.mxu0 0.0
    %6564 = vmatprep.subr.mxu0 0.0
    %6565 = vmatpush1.msra.mxu0 0.0
    %6566 = vmatprep.subr.mxu0 0.0
    %6567 = vmatpush1.msra.mxu0 %v3311
    %6568 = vmatprep.subr.mxu0 0.0
    %6569 = vmatpush1.msra.mxu0 %v3309
    %6570 = vmatprep.subr.mxu0 0.0
    %6571 = vmatpush2.msra.mxu0 0.0
    %6572 = vmatprep.subr.mxu0 0.0
    %6573 = vmatpush2.msra.mxu0 0.0
    %6574 = vmatprep.subr.mxu0 0.0
    %6575 = vmatpush2.msra.mxu0 0.0
    %6576 = vmatprep.subr.mxu0 0.0
    %6577 = vmatpush2.msra.mxu0 0.0
    %6578 = vmatprep.subr.mxu0 0.0
    %6579 = vmatpush2.msra.mxu0 0.0
    %6580 = vmatprep.subr.mxu0 0.0
    %6581 = vmatpush2.msra.mxu0 0.0
    %6582 = vmatprep.subr.mxu0 0.0
    %6583 = vmatpush2.msra.mxu0 0.0
    %6584 = vmatprep.subr.mxu0 0.0
    %6585 = vmatpush2.msra.mxu0 0.0
    %6586 = vmatprep.subr.mxu0 0.0
    %6587 = vmatpush2.msra.mxu0 0.0
    %6588 = vmatprep.subr.mxu0 0.0
    %6589 = vmatpush2.msra.mxu0 0.0
    %6590 = vmatprep.subr.mxu0 0.0
    %6591 = vmatpush2.msra.mxu0 0.0
    %6592 = vmatprep.subr.mxu0 0.0
    %6593 = vmatpush2.msra.mxu0 0.0
    %6594 = vmatprep.subr.mxu0 0.0
    %6595 = vmatpush2.msra.mxu0 0.0
    %6596 = vmatprep.subr.mxu0 0.0
    %6597 = vmatpush2.msra.mxu0 0.0
    %6598 = vmatprep.subr.mxu0 0.0
    %6599 = vmatpush2.msra.mxu0 0.0
    %6600 = vmatprep.subr.mxu0 0.0
    %6601 = vmatpush2.msra.mxu0 0.0
    %6602 = vmatprep.mubr.f32.mxu0 0.0
    %6603 = vmatmul.mubr.f32.gmra.mxu0 %v6536
    %v6604 = vpop.f32.mrf.mxu0
    %v6605 = vadd.f32 0.0, %v6604
    %v6606 = vpop.f32.mrf.mxu0
    %6607 = vdwg.mxu0
    %v6608 = vmul.f32 %v6532, %v6460
    %v6609 = vmul.f32 %v6605, %v6461
    %6612 = vrot.lane.b32.xlu0 %v5964, 8
    %v6613 = vpop.permute.xlu0 %6612
    %6614 = vrot.lane.b32.xlu0 %v5965, 8
    %v6615 = vpop.permute.xlu0 %6614
    %6620 = vrot.lane.b32.xlu0 %v6286, 16
    %v6621 = vpop.permute.xlu0 %6620
    %6622 = vrot.lane.b32.xlu0 %v6287, 16
    %v6623 = vpop.permute.xlu0 %6622
    %6628 = vrot.lane.b32.xlu0 %v6608, 24
    %v6629 = vpop.permute.xlu0 %6628
    %6630 = vrot.lane.b32.xlu0 %v6609, 24
    %v6631 = vpop.permute.xlu0 %6630
    %v6634 = vsel %vm367, %v5642, %v6613
    %v6635 = vsel %vm367, %v5643, %v6615
    %v6636 = vsel %vm526, %v6634, %v6621
    %v6637 = vsel %vm526, %v6635, %v6623
    %v6638 = vsel %vm1791, %v6636, %v6629
    %v6639 = vsel %vm1791, %v6637, %v6631
    %v6641 = vsel %vm186, %v6638, 0
    %v6644 = vsel %vm186, %v6639, 0
    %6646 = vmatprep.subr.mxu0 0.0
    %6647 = vmatpush1.msra.mxu0 0.0
    %6648 = vmatprep.subr.mxu0 0.0
    %6649 = vmatpush1.msra.mxu0 0.0
    %6650 = vmatprep.subr.mxu0 0.0
    %6651 = vmatpush1.msra.mxu0 0.0
    %6652 = vmatprep.subr.mxu0 0.0
    %6653 = vmatpush1.msra.mxu0 0.0
    %6654 = vmatprep.subr.mxu0 0.0
    %6655 = vmatpush1.msra.mxu0 0.0
    %6656 = vmatprep.subr.mxu0 0.0
    %6657 = vmatpush1.msra.mxu0 0.0
    %6658 = vmatprep.subr.mxu0 0.0
    %6659 = vmatpush1.msra.mxu0 0.0
    %6660 = vmatprep.subr.mxu0 0.0
    %6661 = vmatpush1.msra.mxu0 0.0
    %6662 = vmatprep.subr.mxu0 0.0
    %6663 = vmatpush1.msra.mxu0 0.0
    %6664 = vmatprep.subr.mxu0 0.0
    %6665 = vmatpush1.msra.mxu0 0.0
    %6666 = vmatprep.subr.mxu0 0.0
    %6667 = vmatpush1.msra.mxu0 0.0
    %6668 = vmatprep.subr.mxu0 0.0
    %6669 = vmatpush1.msra.mxu0 0.0
    %6670 = vmatprep.subr.mxu0 0.0
    %6671 = vmatpush1.msra.mxu0 %v98
    %6672 = vmatprep.subr.mxu0 0.0
    %6673 = vmatpush1.msra.mxu0 %v97
    %6674 = vmatprep.subr.mxu0 0.0
    %6675 = vmatpush1.msra.mxu0 %v96
    %6676 = vmatprep.subr.mxu0 0.0
    %6677 = vmatpush1.msra.mxu0 %v95
    %6678 = vmatprep.subr.mxu0 0.0
    %6679 = vmatpush2.msra.mxu0 0.0
    %6680 = vmatprep.subr.mxu0 0.0
    %6681 = vmatpush2.msra.mxu0 0.0
    %6682 = vmatprep.subr.mxu0 0.0
    %6683 = vmatpush2.msra.mxu0 0.0
    %6684 = vmatprep.subr.mxu0 0.0
    %6685 = vmatpush2.msra.mxu0 0.0
    %6686 = vmatprep.subr.mxu0 0.0
    %6687 = vmatpush2.msra.mxu0 0.0
    %6688 = vmatprep.subr.mxu0 0.0
    %6689 = vmatpush2.msra.mxu0 0.0
    %6690 = vmatprep.subr.mxu0 0.0
    %6691 = vmatpush2.msra.mxu0 0.0
    %6692 = vmatprep.subr.mxu0 0.0
    %6693 = vmatpush2.msra.mxu0 0.0
    %6694 = vmatprep.subr.mxu0 0.0
    %6695 = vmatpush2.msra.mxu0 0.0
    %6696 = vmatprep.subr.mxu0 0.0
    %6697 = vmatpush2.msra.mxu0 0.0
    %6698 = vmatprep.subr.mxu0 0.0
    %6699 = vmatpush2.msra.mxu0 0.0
    %6700 = vmatprep.subr.mxu0 0.0
    %6701 = vmatpush2.msra.mxu0 0.0
    %6702 = vmatprep.subr.mxu0 0.0
    %6703 = vmatpush2.msra.mxu0 0.0
    %6704 = vmatprep.subr.mxu0 0.0
    %6705 = vmatpush2.msra.mxu0 0.0
    %6706 = vmatprep.subr.mxu0 0.0
    %6707 = vmatpush2.msra.mxu0 0.0
    %6708 = vmatprep.subr.mxu0 0.0
    %6709 = vmatpush2.msra.mxu0 0.0
    %6710 = vmatprep.mubr.f32.mxu0 0.0
    %6711 = vmatmul.mubr.f32.gmra.mxu0 %v6641
    %v6712 = vpop.f32.mrf.mxu0
    %v6713 = vadd.f32 %v135, %v6712
    %v6714 = vpop.f32.mrf.mxu0
    %6715 = vmatprep.mubr.f32.mxu0 0.0
    %6716 = vmatmul.mubr.f32.gmra.mxu0 %v6644
    %v6717 = vpop.f32.mrf.mxu0
    %v6718 = vadd.f32 %v135, %v6717
    %v6719 = vpop.f32.mrf.mxu0
    %6720 = vdwg.mxu0
    %v6721 = vadd.f32 %v5239, %v6713
    %v6722 = vadd.f32 %v5240, %v6718
    %v6723 = vsel %vm186, %v6721, 0.0
    %6724 = vadd.xlane.f32.xlu0 %v6723
    %v6725 = vpop.xlane.xlu0 %6724
    %v6726 = vsel %vm186, %v6722, 0.0
    %6727 = vadd.xlane.f32.xlu0 %v6726
    %v6728 = vpop.xlane.xlu0 %6727
    %v6729 = vmul.f32 %v6725, %v1883
    %v6730 = vmul.f32 %v6728, %v1883
    %v6731 = vsub.f32 %v6721, %v6729
    %v6732 = vsub.f32 %v6722, %v6730
    %v6733 = vmul.f32 %v6731, %v6731
    %v6734 = vmul.f32 %v6732, %v6732
    %v6735 = vsel %vm186, %v6733, 0.0
    %6736 = vadd.xlane.f32.xlu0 %v6735
    %v6737 = vpop.xlane.xlu0 %6736
    %v6738 = vsel %vm186, %v6734, 0.0
    %6739 = vadd.xlane.f32.xlu0 %v6738
    %v6740 = vpop.xlane.xlu0 %6739
    %v6741 = vmul.f32 %v6737, %v1883
    %v6742 = vmul.f32 %v6740, %v1883
    %v6743 = vadd.f32 %v6741, 1e-05
    %v6744 = vadd.f32 %v6742, 1e-05
    %v6745 = vrsqrt.pop %v6743
    %v6746 = vrsqrt.pop %v6744
    %v6747 = vmul.f32 %v6731, %v6745
    %v6748 = vmul.f32 %v6732, %v6746
    %v6749 = vmul.f32 %v6747, %v160
    %v6750 = vmul.f32 %v6748, %v160
    %v6751 = vadd.f32 %v6749, %v165
    %v6752 = vadd.f32 %v6750, %v165
    %v6754 = vsel %vm186, %v6751, 0
    %v6757 = vsel %vm186, %v6752, 0
    %6759 = vmatprep.subr.mxu0 0.0
    %6760 = vmatpush1.msra.mxu0 0.0
    %6761 = vmatprep.subr.mxu0 0.0
    %6762 = vmatpush1.msra.mxu0 0.0
    %6763 = vmatprep.subr.mxu0 0.0
    %6764 = vmatpush1.msra.mxu0 0.0
    %6765 = vmatprep.subr.mxu0 0.0
    %6766 = vmatpush1.msra.mxu0 0.0
    %6767 = vmatprep.subr.mxu0 0.0
    %6768 = vmatpush1.msra.mxu0 0.0
    %6769 = vmatprep.subr.mxu0 0.0
    %6770 = vmatpush1.msra.mxu0 0.0
    %6771 = vmatprep.subr.mxu0 0.0
    %6772 = vmatpush1.msra.mxu0 0.0
    %6773 = vmatprep.subr.mxu0 0.0
    %6774 = vmatpush1.msra.mxu0 0.0
    %6775 = vmatprep.subr.mxu0 0.0
    %6776 = vmatpush1.msra.mxu0 0.0
    %6777 = vmatprep.subr.mxu0 0.0
    %6778 = vmatpush1.msra.mxu0 0.0
    %6779 = vmatprep.subr.mxu0 0.0
    %6780 = vmatpush1.msra.mxu0 0.0
    %6781 = vmatprep.subr.mxu0 0.0
    %6782 = vmatpush1.msra.mxu0 0.0
    %6783 = vmatprep.subr.mxu0 0.0
    %6784 = vmatpush1.msra.mxu0 %v102
    %6785 = vmatprep.subr.mxu0 0.0
    %6786 = vmatpush1.msra.mxu0 %v101
    %6787 = vmatprep.subr.mxu0 0.0
    %6788 = vmatpush1.msra.mxu0 %v100
    %6789 = vmatprep.subr.mxu0 0.0
    %6790 = vmatpush1.msra.mxu0 %v99
    %6791 = vmatprep.subr.mxu0 0.0
    %6792 = vmatpush2.msra.mxu0 0.0
    %6793 = vmatprep.subr.mxu0 0.0
    %6794 = vmatpush2.msra.mxu0 0.0
    %6795 = vmatprep.subr.mxu0 0.0
    %6796 = vmatpush2.msra.mxu0 0.0
    %6797 = vmatprep.subr.mxu0 0.0
    %6798 = vmatpush2.msra.mxu0 0.0
    %6799 = vmatprep.subr.mxu0 0.0
    %6800 = vmatpush2.msra.mxu0 0.0
    %6801 = vmatprep.subr.mxu0 0.0
    %6802 = vmatpush2.msra.mxu0 0.0
    %6803 = vmatprep.subr.mxu0 0.0
    %6804 = vmatpush2.msra.mxu0 0.0
    %6805 = vmatprep.subr.mxu0 0.0
    %6806 = vmatpush2.msra.mxu0 0.0
    %6807 = vmatprep.subr.mxu0 0.0
    %6808 = vmatpush2.msra.mxu0 0.0
    %6809 = vmatprep.subr.mxu0 0.0
    %6810 = vmatpush2.msra.mxu0 0.0
    %6811 = vmatprep.subr.mxu0 0.0
    %6812 = vmatpush2.msra.mxu0 0.0
    %6813 = vmatprep.subr.mxu0 0.0
    %6814 = vmatpush2.msra.mxu0 0.0
    %6815 = vmatprep.subr.mxu0 0.0
    %6816 = vmatpush2.msra.mxu0 0.0
    %6817 = vmatprep.subr.mxu0 0.0
    %6818 = vmatpush2.msra.mxu0 0.0
    %6819 = vmatprep.subr.mxu0 0.0
    %6820 = vmatpush2.msra.mxu0 0.0
    %6821 = vmatprep.subr.mxu0 0.0
    %6822 = vmatpush2.msra.mxu0 0.0
    %6823 = vmatprep.mubr.f32.mxu0 0.0
    %6824 = vmatmul.mubr.f32.gmra.mxu0 %v6754
    %v6825 = vpop.f32.mrf.mxu0
    %v6826 = vadd.f32 %v140, %v6825
    %v6827 = vpop.f32.mrf.mxu0
    %6828 = vmatprep.mubr.f32.mxu0 0.0
    %6829 = vmatmul.mubr.f32.gmra.mxu0 %v6757
    %v6830 = vpop.f32.mrf.mxu0
    %v6831 = vadd.f32 %v140, %v6830
    %v6832 = vpop.f32.mrf.mxu0
    %6833 = vdwg.mxu0
    %v6834 = vmax.f32 %v6826, 0.0
    %v6835 = vmax.f32 %v6831, 0.0
    %v6837 = vsel %vm3615, %v6834, 0
    %v6840 = vsel %vm3615, %v6835, 0
    %6842 = vmatprep.subr.mxu0 0.0
    %6843 = vmatpush1.msra.mxu0 0.0
    %6844 = vmatprep.subr.mxu0 0.0
    %6845 = vmatpush1.msra.mxu0 0.0
    %6846 = vmatprep.subr.mxu0 0.0
    %6847 = vmatpush1.msra.mxu0 0.0
    %6848 = vmatprep.subr.mxu0 0.0
    %6849 = vmatpush1.msra.mxu0 0.0
    %6850 = vmatprep.subr.mxu0 0.0
    %6851 = vmatpush1.msra.mxu0 0.0
    %6852 = vmatprep.subr.mxu0 0.0
    %6853 = vmatpush1.msra.mxu0 0.0
    %6854 = vmatprep.subr.mxu0 0.0
    %6855 = vmatpush1.msra.mxu0 0.0
    %6856 = vmatprep.subr.mxu0 0.0
    %6857 = vmatpush1.msra.mxu0 0.0
    %6858 = vmatprep.subr.mxu0 0.0
    %6859 = vmatpush1.msra.mxu0 %v110
    %6860 = vmatprep.subr.mxu0 0.0
    %6861 = vmatpush1.msra.mxu0 %v109
    %6862 = vmatprep.subr.mxu0 0.0
    %6863 = vmatpush1.msra.mxu0 %v108
    %6864 = vmatprep.subr.mxu0 0.0
    %6865 = vmatpush1.msra.mxu0 %v107
    %6866 = vmatprep.subr.mxu0 0.0
    %6867 = vmatpush1.msra.mxu0 %v106
    %6868 = vmatprep.subr.mxu0 0.0
    %6869 = vmatpush1.msra.mxu0 %v105
    %6870 = vmatprep.subr.mxu0 0.0
    %6871 = vmatpush1.msra.mxu0 %v104
    %6872 = vmatprep.subr.mxu0 0.0
    %6873 = vmatpush1.msra.mxu0 %v103
    %6874 = vmatprep.subr.mxu0 0.0
    %6875 = vmatpush2.msra.mxu0 0.0
    %6876 = vmatprep.subr.mxu0 0.0
    %6877 = vmatpush2.msra.mxu0 0.0
    %6878 = vmatprep.subr.mxu0 0.0
    %6879 = vmatpush2.msra.mxu0 0.0
    %6880 = vmatprep.subr.mxu0 0.0
    %6881 = vmatpush2.msra.mxu0 0.0
    %6882 = vmatprep.subr.mxu0 0.0
    %6883 = vmatpush2.msra.mxu0 0.0
    %6884 = vmatprep.subr.mxu0 0.0
    %6885 = vmatpush2.msra.mxu0 0.0
    %6886 = vmatprep.subr.mxu0 0.0
    %6887 = vmatpush2.msra.mxu0 0.0
    %6888 = vmatprep.subr.mxu0 0.0
    %6889 = vmatpush2.msra.mxu0 0.0
    %6890 = vmatprep.subr.mxu0 0.0
    %6891 = vmatpush2.msra.mxu0 0.0
    %6892 = vmatprep.subr.mxu0 0.0
    %6893 = vmatpush2.msra.mxu0 0.0
    %6894 = vmatprep.subr.mxu0 0.0
    %6895 = vmatpush2.msra.mxu0 0.0
    %6896 = vmatprep.subr.mxu0 0.0
    %6897 = vmatpush2.msra.mxu0 0.0
    %6898 = vmatprep.subr.mxu0 0.0
    %6899 = vmatpush2.msra.mxu0 0.0
    %6900 = vmatprep.subr.mxu0 0.0
    %6901 = vmatpush2.msra.mxu0 0.0
    %6902 = vmatprep.subr.mxu0 0.0
    %6903 = vmatpush2.msra.mxu0 0.0
    %6904 = vmatprep.subr.mxu0 0.0
    %6905 = vmatpush2.msra.mxu0 0.0
    %6906 = vmatprep.mubr.f32.mxu0 0.0
    %6907 = vmatmul.mubr.f32.gmra.mxu0 %v6837
    %v6908 = vpop.f32.mrf.mxu0
    %v6909 = vadd.f32 %v145, %v6908
    %v6910 = vpop.f32.mrf.mxu0
    %6911 = vmatprep.mubr.f32.mxu0 0.0
    %6912 = vmatmul.mubr.f32.gmra.mxu0 %v6840
    %v6913 = vpop.f32.mrf.mxu0
    %v6914 = vadd.f32 %v145, %v6913
    %v6915 = vpop.f32.mrf.mxu0
    %6916 = vdwg.mxu0
    %v6917 = vadd.f32 %v6751, %v6909
    %v6918 = vadd.f32 %v6752, %v6914
    %v6919 = vsel %vm186, %v6917, 0.0
    %6920 = vadd.xlane.f32.xlu0 %v6919
    %v6921 = vpop.xlane.xlu0 %6920
    %v6922 = vsel %vm186, %v6918, 0.0
    %6923 = vadd.xlane.f32.xlu0 %v6922
    %v6924 = vpop.xlane.xlu0 %6923
    %v6925 = vmul.f32 %v6921, %v1883
    %v6926 = vmul.f32 %v6924, %v1883
    %v6927 = vsub.f32 %v6917, %v6925
    %v6928 = vsub.f32 %v6918, %v6926
    %v6929 = vmul.f32 %v6927, %v6927
    %v6930 = vmul.f32 %v6928, %v6928
    %v6931 = vsel %vm186, %v6929, 0.0
    %6932 = vadd.xlane.f32.xlu0 %v6931
    %v6933 = vpop.xlane.xlu0 %6932
    %v6934 = vsel %vm186, %v6930, 0.0
    %6935 = vadd.xlane.f32.xlu0 %v6934
    %v6936 = vpop.xlane.xlu0 %6935
    %v6937 = vmul.f32 %v6933, %v1883
    %v6938 = vmul.f32 %v6936, %v1883
    %v6939 = vadd.f32 %v6937, 1e-05
    %v6940 = vadd.f32 %v6938, 1e-05
    %v6941 = vrsqrt.pop %v6939
    %v6942 = vrsqrt.pop %v6940
    %v6943 = vmul.f32 %v6927, %v6941
    %v6944 = vmul.f32 %v6928, %v6942
    %v6945 = vmul.f32 %v6943, %v170
    %v6946 = vmul.f32 %v6944, %v170
    %v6947 = vadd.f32 %v6945, %v175
    %v6948 = vadd.f32 %v6946, %v175
    %v6950 = vsel %vm186, %v6947, 0
    %v6953 = vsel %vm186, %v6948, 0
    %6955 = vmatprep.subr.mxu0 0.0
    %6956 = vmatpush1.msra.mxu0 0.0
    %6957 = vmatprep.subr.mxu0 0.0
    %6958 = vmatpush1.msra.mxu0 0.0
    %6959 = vmatprep.subr.mxu0 0.0
    %6960 = vmatpush1.msra.mxu0 0.0
    %6961 = vmatprep.subr.mxu0 0.0
    %6962 = vmatpush1.msra.mxu0 0.0
    %6963 = vmatprep.subr.mxu0 0.0
    %6964 = vmatpush1.msra.mxu0 0.0
    %6965 = vmatprep.subr.mxu0 0.0
    %6966 = vmatpush1.msra.mxu0 0.0
    %6967 = vmatprep.subr.mxu0 0.0
    %6968 = vmatpush1.msra.mxu0 0.0
    %6969 = vmatprep.subr.mxu0 0.0
    %6970 = vmatpush1.msra.mxu0 0.0
    %6971 = vmatprep.subr.mxu0 0.0
    %6972 = vmatpush1.msra.mxu0 0.0
    %6973 = vmatprep.subr.mxu0 0.0
    %6974 = vmatpush1.msra.mxu0 0.0
    %6975 = vmatprep.subr.mxu0 0.0
    %6976 = vmatpush1.msra.mxu0 0.0
    %6977 = vmatprep.subr.mxu0 0.0
    %6978 = vmatpush1.msra.mxu0 0.0
    %6979 = vmatprep.subr.mxu0 0.0
    %6980 = vmatpush1.msra.mxu0 %v86
    %6981 = vmatprep.subr.mxu0 0.0
    %6982 = vmatpush1.msra.mxu0 %v85
    %6983 = vmatprep.subr.mxu0 0.0
    %6984 = vmatpush1.msra.mxu0 %v84
    %6985 = vmatprep.subr.mxu0 0.0
    %6986 = vmatpush1.msra.mxu0 %v83
    %6987 = vmatprep.subr.mxu0 0.0
    %6988 = vmatpush2.msra.mxu0 0.0
    %6989 = vmatprep.subr.mxu0 0.0
    %6990 = vmatpush2.msra.mxu0 0.0
    %6991 = vmatprep.subr.mxu0 0.0
    %6992 = vmatpush2.msra.mxu0 0.0
    %6993 = vmatprep.subr.mxu0 0.0
    %6994 = vmatpush2.msra.mxu0 0.0
    %6995 = vmatprep.subr.mxu0 0.0
    %6996 = vmatpush2.msra.mxu0 0.0
    %6997 = vmatprep.subr.mxu0 0.0
    %6998 = vmatpush2.msra.mxu0 0.0
    %6999 = vmatprep.subr.mxu0 0.0
    %7000 = vmatpush2.msra.mxu0 0.0
    %7001 = vmatprep.subr.mxu0 0.0
    %7002 = vmatpush2.msra.mxu0 0.0
    %7003 = vmatprep.subr.mxu0 0.0
    %7004 = vmatpush2.msra.mxu0 0.0
    %7005 = vmatprep.subr.mxu0 0.0
    %7006 = vmatpush2.msra.mxu0 0.0
    %7007 = vmatprep.subr.mxu0 0.0
    %7008 = vmatpush2.msra.mxu0 0.0
    %7009 = vmatprep.subr.mxu0 0.0
    %7010 = vmatpush2.msra.mxu0 0.0
    %7011 = vmatprep.subr.mxu0 0.0
    %7012 = vmatpush2.msra.mxu0 0.0
    %7013 = vmatprep.subr.mxu0 0.0
    %7014 = vmatpush2.msra.mxu0 0.0
    %7015 = vmatprep.subr.mxu0 0.0
    %7016 = vmatpush2.msra.mxu0 0.0
    %7017 = vmatprep.subr.mxu0 0.0
    %7018 = vmatpush2.msra.mxu0 0.0
    %7019 = vmatprep.mubr.f32.mxu0 0.0
    %7020 = vmatmul.mubr.f32.gmra.mxu0 %v6950
    %v7021 = vpop.f32.mrf.mxu0
    %v7022 = vadd.f32 %v120, %v7021
    %v7023 = vpop.f32.mrf.mxu0
    %7024 = vmatprep.mubr.f32.mxu0 0.0
    %7025 = vmatmul.mubr.f32.gmra.mxu0 %v6953
    %v7026 = vpop.f32.mrf.mxu0
    %v7027 = vadd.f32 %v120, %v7026
    %v7028 = vpop.f32.mrf.mxu0
    %7029 = vdwg.mxu0
    %v7030 = vmul.f32 %v7022, 0.35355338
    %v7031 = vmul.f32 %v7027, 0.35355338
    %v7033 = vsel %vm367, %v7030, 0
    %7035 = vmatprep.subr.mxu0 0.0
    %7036 = vmatpush1.xpose.msra.mxu0 0.0
    %7037 = vmatprep.subr.mxu0 0.0
    %7038 = vmatpush1.xpose.msra.mxu0 0.0
    %7039 = vmatprep.subr.mxu0 0.0
    %7040 = vmatpush1.xpose.msra.mxu0 0.0
    %7041 = vmatprep.subr.mxu0 0.0
    %7042 = vmatpush1.xpose.msra.mxu0 0.0
    %7043 = vmatprep.subr.mxu0 0.0
    %7044 = vmatpush1.xpose.msra.mxu0 0.0
    %7045 = vmatprep.subr.mxu0 0.0
    %7046 = vmatpush1.xpose.msra.mxu0 0.0
    %7047 = vmatprep.subr.mxu0 0.0
    %7048 = vmatpush1.xpose.msra.mxu0 0.0
    %7049 = vmatprep.subr.mxu0 0.0
    %7050 = vmatpush1.xpose.msra.mxu0 0.0
    %7051 = vmatprep.subr.mxu0 0.0
    %7052 = vmatpush1.xpose.msra.mxu0 0.0
    %7053 = vmatprep.subr.mxu0 0.0
    %7054 = vmatpush1.xpose.msra.mxu0 0.0
    %7055 = vmatprep.subr.mxu0 0.0
    %7056 = vmatpush1.xpose.msra.mxu0 0.0
    %7057 = vmatprep.subr.mxu0 0.0
    %7058 = vmatpush1.xpose.msra.mxu0 0.0
    %7059 = vmatprep.subr.mxu0 0.0
    %7060 = vmatpush1.xpose.msra.mxu0 0.0
    %7061 = vmatprep.subr.mxu0 0.0
    %7062 = vmatpush1.xpose.msra.mxu0 0.0
    %7063 = vmatprep.subr.mxu0 0.0
    %7064 = vmatpush1.xpose.msra.mxu0 %v375
    %7065 = vmatprep.subr.mxu0 0.0
    %7066 = vmatpush1.xpose.msra.mxu0 %v372
    %7067 = vmatprep.subr.mxu0 0.0
    %7068 = vmatpush2.xpose.msra.mxu0 0.0
    %7069 = vmatprep.subr.mxu0 0.0
    %7070 = vmatpush2.xpose.msra.mxu0 0.0
    %7071 = vmatprep.subr.mxu0 0.0
    %7072 = vmatpush2.xpose.msra.mxu0 0.0
    %7073 = vmatprep.subr.mxu0 0.0
    %7074 = vmatpush2.xpose.msra.mxu0 0.0
    %7075 = vmatprep.subr.mxu0 0.0
    %7076 = vmatpush2.xpose.msra.mxu0 0.0
    %7077 = vmatprep.subr.mxu0 0.0
    %7078 = vmatpush2.xpose.msra.mxu0 0.0
    %7079 = vmatprep.subr.mxu0 0.0
    %7080 = vmatpush2.xpose.msra.mxu0 0.0
    %7081 = vmatprep.subr.mxu0 0.0
    %7082 = vmatpush2.xpose.msra.mxu0 0.0
    %7083 = vmatprep.subr.mxu0 0.0
    %7084 = vmatpush2.xpose.msra.mxu0 0.0
    %7085 = vmatprep.subr.mxu0 0.0
    %7086 = vmatpush2.xpose.msra.mxu0 0.0
    %7087 = vmatprep.subr.mxu0 0.0
    %7088 = vmatpush2.xpose.msra.mxu0 0.0
    %7089 = vmatprep.subr.mxu0 0.0
    %7090 = vmatpush2.xpose.msra.mxu0 0.0
    %7091 = vmatprep.subr.mxu0 0.0
    %7092 = vmatpush2.xpose.msra.mxu0 0.0
    %7093 = vmatprep.subr.mxu0 0.0
    %7094 = vmatpush2.xpose.msra.mxu0 0.0
    %7095 = vmatprep.subr.mxu0 0.0
    %7096 = vmatpush2.xpose.msra.mxu0 0.0
    %7097 = vmatprep.subr.mxu0 0.0
    %7098 = vmatpush2.xpose.msra.mxu0 0.0
    %7099 = vmatprep.mubr.f32.mxu0 0.0
    %7100 = vmatmul.mubr.f32.gmra.mxu0 %v7033
    %v7101 = vpop.f32.mrf.mxu0
    %v7102 = vadd.f32 0.0, %v7101
    %v7103 = vpop.f32.mrf.mxu0
    %7104 = vdwg.mxu0
    %v7106 = vsel %vm367, %v7031, 0
    %7108 = vmatprep.subr.mxu0 0.0
    %7109 = vmatpush1.xpose.msra.mxu0 0.0
    %7110 = vmatprep.subr.mxu0 0.0
    %7111 = vmatpush1.xpose.msra.mxu0 0.0
    %7112 = vmatprep.subr.mxu0 0.0
    %7113 = vmatpush1.xpose.msra.mxu0 0.0
    %7114 = vmatprep.subr.mxu0 0.0
    %7115 = vmatpush1.xpose.msra.mxu0 0.0
    %7116 = vmatprep.subr.mxu0 0.0
    %7117 = vmatpush1.xpose.msra.mxu0 0.0
    %7118 = vmatprep.subr.mxu0 0.0
    %7119 = vmatpush1.xpose.msra.mxu0 0.0
    %7120 = vmatprep.subr.mxu0 0.0
    %7121 = vmatpush1.xpose.msra.mxu0 0.0
    %7122 = vmatprep.subr.mxu0 0.0
    %7123 = vmatpush1.xpose.msra.mxu0 0.0
    %7124 = vmatprep.subr.mxu0 0.0
    %7125 = vmatpush1.xpose.msra.mxu0 0.0
    %7126 = vmatprep.subr.mxu0 0.0
    %7127 = vmatpush1.xpose.msra.mxu0 0.0
    %7128 = vmatprep.subr.mxu0 0.0
    %7129 = vmatpush1.xpose.msra.mxu0 0.0
    %7130 = vmatprep.subr.mxu0 0.0
    %7131 = vmatpush1.xpose.msra.mxu0 0.0
    %7132 = vmatprep.subr.mxu0 0.0
    %7133 = vmatpush1.xpose.msra.mxu0 0.0
    %7134 = vmatprep.subr.mxu0 0.0
    %7135 = vmatpush1.xpose.msra.mxu0 0.0
    %7136 = vmatprep.subr.mxu0 0.0
    %7137 = vmatpush1.xpose.msra.mxu0 %v454
    %7138 = vmatprep.subr.mxu0 0.0
    %7139 = vmatpush1.xpose.msra.mxu0 %v451
    %7140 = vmatprep.subr.mxu0 0.0
    %7141 = vmatpush2.xpose.msra.mxu0 0.0
    %7142 = vmatprep.subr.mxu0 0.0
    %7143 = vmatpush2.xpose.msra.mxu0 0.0
    %7144 = vmatprep.subr.mxu0 0.0
    %7145 = vmatpush2.xpose.msra.mxu0 0.0
    %7146 = vmatprep.subr.mxu0 0.0
    %7147 = vmatpush2.xpose.msra.mxu0 0.0
    %7148 = vmatprep.subr.mxu0 0.0
    %7149 = vmatpush2.xpose.msra.mxu0 0.0
    %7150 = vmatprep.subr.mxu0 0.0
    %7151 = vmatpush2.xpose.msra.mxu0 0.0
    %7152 = vmatprep.subr.mxu0 0.0
    %7153 = vmatpush2.xpose.msra.mxu0 0.0
    %7154 = vmatprep.subr.mxu0 0.0
    %7155 = vmatpush2.xpose.msra.mxu0 0.0
    %7156 = vmatprep.subr.mxu0 0.0
    %7157 = vmatpush2.xpose.msra.mxu0 0.0
    %7158 = vmatprep.subr.mxu0 0.0
    %7159 = vmatpush2.xpose.msra.mxu0 0.0
    %7160 = vmatprep.subr.mxu0 0.0
    %7161 = vmatpush2.xpose.msra.mxu0 0.0
    %7162 = vmatprep.subr.mxu0 0.0
    %7163 = vmatpush2.xpose.msra.mxu0 0.0
    %7164 = vmatprep.subr.mxu0 0.0
    %7165 = vmatpush2.xpose.msra.mxu0 0.0
    %7166 = vmatprep.subr.mxu0 0.0
    %7167 = vmatpush2.xpose.msra.mxu0 0.0
    %7168 = vmatprep.subr.mxu0 0.0
    %7169 = vmatpush2.xpose.msra.mxu0 0.0
    %7170 = vmatprep.subr.mxu0 0.0
    %7171 = vmatpush2.xpose.msra.mxu0 0.0
    %7172 = vmatprep.mubr.f32.mxu0 0.0
    %7173 = vmatmul.mubr.f32.gmra.mxu0 %v7106
    %v7174 = vpop.f32.mrf.mxu0
    %v7175 = vadd.f32 0.0, %v7174
    %v7176 = vpop.f32.mrf.mxu0
    %7177 = vdwg.mxu0
    %v7178 = vsel %vm526, %v7102, -inf
    %7179 = vmax.xlane.f32.xlu0 %v7178
    %v7180 = vpop.xlane.xlu0 %7179
    %v7181 = vsel %vm526, %v7175, -inf
    %7182 = vmax.xlane.f32.xlu0 %v7181
    %v7183 = vpop.xlane.xlu0 %7182
    %v7184 = vsub.f32 %v7102, %v7180
    %v7185 = vsub.f32 %v7175, %v7183
    %v7186 = vmul.f32 %v7184, 1.442695
    %v7187 = vpow.pop %v7186
    %v7188 = vmul.f32 %v7185, 1.442695
    %v7189 = vpow.pop %v7188
    %v7190 = vsel %vm526, %v7187, 0.0
    %7191 = vadd.xlane.f32.xlu0 %v7190
    %v7192 = vpop.xlane.xlu0 %7191
    %v7193 = vsel %vm526, %v7189, 0.0
    %7194 = vadd.xlane.f32.xlu0 %v7193
    %v7195 = vpop.xlane.xlu0 %7194
    %v7196 = vrcp.pop %v7192
    %v7197 = vrcp.pop %v7195
    %v7198 = vmul.f32 %v7192, %v7196
    %v7199 = vmul.f32 %v7195, %v7197
    %v7200 = vsub.f32 2.0, %v7198
    %v7201 = vsub.f32 2.0, %v7199
    %v7202 = vmul.f32 %v7196, %v7200
    %v7203 = vmul.f32 %v7197, %v7201
    %v7205 = vsel %vm526, %v7187, 0
    %7207 = vmatprep.subr.mxu0 0.0
    %7208 = vmatpush1.msra.mxu0 0.0
    %7209 = vmatprep.subr.mxu0 0.0
    %7210 = vmatpush1.msra.mxu0 0.0
    %7211 = vmatprep.subr.mxu0 0.0
    %7212 = vmatpush1.msra.mxu0 0.0
    %7213 = vmatprep.subr.mxu0 0.0
    %7214 = vmatpush1.msra.mxu0 0.0
    %7215 = vmatprep.subr.mxu0 0.0
    %7216 = vmatpush1.msra.mxu0 0.0
    %7217 = vmatprep.subr.mxu0 0.0
    %7218 = vmatpush1.msra.mxu0 0.0
    %7219 = vmatprep.subr.mxu0 0.0
    %7220 = vmatpush1.msra.mxu0 0.0
    %7221 = vmatprep.subr.mxu0 0.0
    %7222 = vmatpush1.msra.mxu0 0.0
    %7223 = vmatprep.subr.mxu0 0.0
    %7224 = vmatpush1.msra.mxu0 0.0
    %7225 = vmatprep.subr.mxu0 0.0
    %7226 = vmatpush1.msra.mxu0 0.0
    %7227 = vmatprep.subr.mxu0 0.0
    %7228 = vmatpush1.msra.mxu0 0.0
    %7229 = vmatprep.subr.mxu0 0.0
    %7230 = vmatpush1.msra.mxu0 0.0
    %7231 = vmatprep.subr.mxu0 0.0
    %7232 = vmatpush1.msra.mxu0 0.0
    %7233 = vmatprep.subr.mxu0 0.0
    %7234 = vmatpush1.msra.mxu0 0.0
    %7235 = vmatprep.subr.mxu0 0.0
    %7236 = vmatpush1.msra.mxu0 %v556
    %7237 = vmatprep.subr.mxu0 0.0
    %7238 = vmatpush1.msra.mxu0 %v554
    %7239 = vmatprep.subr.mxu0 0.0
    %7240 = vmatpush2.msra.mxu0 0.0
    %7241 = vmatprep.subr.mxu0 0.0
    %7242 = vmatpush2.msra.mxu0 0.0
    %7243 = vmatprep.subr.mxu0 0.0
    %7244 = vmatpush2.msra.mxu0 0.0
    %7245 = vmatprep.subr.mxu0 0.0
    %7246 = vmatpush2.msra.mxu0 0.0
    %7247 = vmatprep.subr.mxu0 0.0
    %7248 = vmatpush2.msra.mxu0 0.0
    %7249 = vmatprep.subr.mxu0 0.0
    %7250 = vmatpush2.msra.mxu0 0.0
    %7251 = vmatprep.subr.mxu0 0.0
    %7252 = vmatpush2.msra.mxu0 0.0
    %7253 = vmatprep.subr.mxu0 0.0
    %7254 = vmatpush2.msra.mxu0 0.0
    %7255 = vmatprep.subr.mxu0 0.0
    %7256 = vmatpush2.msra.mxu0 0.0
    %7257 = vmatprep.subr.mxu0 0.0
    %7258 = vmatpush2.msra.mxu0 0.0
    %7259 = vmatprep.subr.mxu0 0.0
    %7260 = vmatpush2.msra.mxu0 0.0
    %7261 = vmatprep.subr.mxu0 0.0
    %7262 = vmatpush2.msra.mxu0 0.0
    %7263 = vmatprep.subr.mxu0 0.0
    %7264 = vmatpush2.msra.mxu0 0.0
    %7265 = vmatprep.subr.mxu0 0.0
    %7266 = vmatpush2.msra.mxu0 0.0
    %7267 = vmatprep.subr.mxu0 0.0
    %7268 = vmatpush2.msra.mxu0 0.0
    %7269 = vmatprep.subr.mxu0 0.0
    %7270 = vmatpush2.msra.mxu0 0.0
    %7271 = vmatprep.mubr.f32.mxu0 0.0
    %7272 = vmatmul.mubr.f32.gmra.mxu0 %v7205
    %v7273 = vpop.f32.mrf.mxu0
    %v7274 = vadd.f32 0.0, %v7273
    %v7275 = vpop.f32.mrf.mxu0
    %7276 = vdwg.mxu0
    %v7278 = vsel %vm526, %v7189, 0
    %7280 = vmatprep.subr.mxu0 0.0
    %7281 = vmatpush1.msra.mxu0 0.0
    %7282 = vmatprep.subr.mxu0 0.0
    %7283 = vmatpush1.msra.mxu0 0.0
    %7284 = vmatprep.subr.mxu0 0.0
    %7285 = vmatpush1.msra.mxu0 0.0
    %7286 = vmatprep.subr.mxu0 0.0
    %7287 = vmatpush1.msra.mxu0 0.0
    %7288 = vmatprep.subr.mxu0 0.0
    %7289 = vmatpush1.msra.mxu0 0.0
    %7290 = vmatprep.subr.mxu0 0.0
    %7291 = vmatpush1.msra.mxu0 0.0
    %7292 = vmatprep.subr.mxu0 0.0
    %7293 = vmatpush1.msra.mxu0 0.0
    %7294 = vmatprep.subr.mxu0 0.0
    %7295 = vmatpush1.msra.mxu0 0.0
    %7296 = vmatprep.subr.mxu0 0.0
    %7297 = vmatpush1.msra.mxu0 0.0
    %7298 = vmatprep.subr.mxu0 0.0
    %7299 = vmatpush1.msra.mxu0 0.0
    %7300 = vmatprep.subr.mxu0 0.0
    %7301 = vmatpush1.msra.mxu0 0.0
    %7302 = vmatprep.subr.mxu0 0.0
    %7303 = vmatpush1.msra.mxu0 0.0
    %7304 = vmatprep.subr.mxu0 0.0
    %7305 = vmatpush1.msra.mxu0 0.0
    %7306 = vmatprep.subr.mxu0 0.0
    %7307 = vmatpush1.msra.mxu0 0.0
    %7308 = vmatprep.subr.mxu0 0.0
    %7309 = vmatpush1.msra.mxu0 %v635
    %7310 = vmatprep.subr.mxu0 0.0
    %7311 = vmatpush1.msra.mxu0 %v633
    %7312 = vmatprep.subr.mxu0 0.0
    %7313 = vmatpush2.msra.mxu0 0.0
    %7314 = vmatprep.subr.mxu0 0.0
    %7315 = vmatpush2.msra.mxu0 0.0
    %7316 = vmatprep.subr.mxu0 0.0
    %7317 = vmatpush2.msra.mxu0 0.0
    %7318 = vmatprep.subr.mxu0 0.0
    %7319 = vmatpush2.msra.mxu0 0.0
    %7320 = vmatprep.subr.mxu0 0.0
    %7321 = vmatpush2.msra.mxu0 0.0
    %7322 = vmatprep.subr.mxu0 0.0
    %7323 = vmatpush2.msra.mxu0 0.0
    %7324 = vmatprep.subr.mxu0 0.0
    %7325 = vmatpush2.msra.mxu0 0.0
    %7326 = vmatprep.subr.mxu0 0.0
    %7327 = vmatpush2.msra.mxu0 0.0
    %7328 = vmatprep.subr.mxu0 0.0
    %7329 = vmatpush2.msra.mxu0 0.0
    %7330 = vmatprep.subr.mxu0 0.0
    %7331 = vmatpush2.msra.mxu0 0.0
    %7332 = vmatprep.subr.mxu0 0.0
    %7333 = vmatpush2.msra.mxu0 0.0
    %7334 = vmatprep.subr.mxu0 0.0
    %7335 = vmatpush2.msra.mxu0 0.0
    %7336 = vmatprep.subr.mxu0 0.0
    %7337 = vmatpush2.msra.mxu0 0.0
    %7338 = vmatprep.subr.mxu0 0.0
    %7339 = vmatpush2.msra.mxu0 0.0
    %7340 = vmatprep.subr.mxu0 0.0
    %7341 = vmatpush2.msra.mxu0 0.0
    %7342 = vmatprep.subr.mxu0 0.0
    %7343 = vmatpush2.msra.mxu0 0.0
    %7344 = vmatprep.mubr.f32.mxu0 0.0
    %7345 = vmatmul.mubr.f32.gmra.mxu0 %v7278
    %v7346 = vpop.f32.mrf.mxu0
    %v7347 = vadd.f32 0.0, %v7346
    %v7348 = vpop.f32.mrf.mxu0
    %7349 = vdwg.mxu0
    %v7350 = vmul.f32 %v7274, %v7202
    %v7351 = vmul.f32 %v7347, %v7203
    %7352 = vrot.lane.b32.xlu0 %v7030, 120
    %v7353 = vpop.permute.xlu0 %7352
    %v7354 = vsel %vm367, %v7353, 0
    %7356 = vmatprep.subr.mxu0 0.0
    %7357 = vmatpush1.xpose.msra.mxu0 0.0
    %7358 = vmatprep.subr.mxu0 0.0
    %7359 = vmatpush1.xpose.msra.mxu0 0.0
    %7360 = vmatprep.subr.mxu0 0.0
    %7361 = vmatpush1.xpose.msra.mxu0 0.0
    %7362 = vmatprep.subr.mxu0 0.0
    %7363 = vmatpush1.xpose.msra.mxu0 0.0
    %7364 = vmatprep.subr.mxu0 0.0
    %7365 = vmatpush1.xpose.msra.mxu0 0.0
    %7366 = vmatprep.subr.mxu0 0.0
    %7367 = vmatpush1.xpose.msra.mxu0 0.0
    %7368 = vmatprep.subr.mxu0 0.0
    %7369 = vmatpush1.xpose.msra.mxu0 0.0
    %7370 = vmatprep.subr.mxu0 0.0
    %7371 = vmatpush1.xpose.msra.mxu0 0.0
    %7372 = vmatprep.subr.mxu0 0.0
    %7373 = vmatpush1.xpose.msra.mxu0 0.0
    %7374 = vmatprep.subr.mxu0 0.0
    %7375 = vmatpush1.xpose.msra.mxu0 0.0
    %7376 = vmatprep.subr.mxu0 0.0
    %7377 = vmatpush1.xpose.msra.mxu0 0.0
    %7378 = vmatprep.subr.mxu0 0.0
    %7379 = vmatpush1.xpose.msra.mxu0 0.0
    %7380 = vmatprep.subr.mxu0 0.0
    %7381 = vmatpush1.xpose.msra.mxu0 0.0
    %7382 = vmatprep.subr.mxu0 0.0
    %7383 = vmatpush1.xpose.msra.mxu0 0.0
    %7384 = vmatprep.subr.mxu0 0.0
    %7385 = vmatpush1.xpose.msra.mxu0 %v723
    %7386 = vmatprep.subr.mxu0 0.0
    %7387 = vmatpush1.xpose.msra.mxu0 %v721
    %7388 = vmatprep.subr.mxu0 0.0
    %7389 = vmatpush2.xpose.msra.mxu0 0.0
    %7390 = vmatprep.subr.mxu0 0.0
    %7391 = vmatpush2.xpose.msra.mxu0 0.0
    %7392 = vmatprep.subr.mxu0 0.0
    %7393 = vmatpush2.xpose.msra.mxu0 0.0
    %7394 = vmatprep.subr.mxu0 0.0
    %7395 = vmatpush2.xpose.msra.mxu0 0.0
    %7396 = vmatprep.subr.mxu0 0.0
    %7397 = vmatpush2.xpose.msra.mxu0 0.0
    %7398 = vmatprep.subr.mxu0 0.0
    %7399 = vmatpush2.xpose.msra.mxu0 0.0
    %7400 = vmatprep.subr.mxu0 0.0
    %7401 = vmatpush2.xpose.msra.mxu0 0.0
    %7402 = vmatprep.subr.mxu0 0.0
    %7403 = vmatpush2.xpose.msra.mxu0 0.0
    %7404 = vmatprep.subr.mxu0 0.0
    %7405 = vmatpush2.xpose.msra.mxu0 0.0
    %7406 = vmatprep.subr.mxu0 0.0
    %7407 = vmatpush2.xpose.msra.mxu0 0.0
    %7408 = vmatprep.subr.mxu0 0.0
    %7409 = vmatpush2.xpose.msra.mxu0 0.0
    %7410 = vmatprep.subr.mxu0 0.0
    %7411 = vmatpush2.xpose.msra.mxu0 0.0
    %7412 = vmatprep.subr.mxu0 0.0
    %7413 = vmatpush2.xpose.msra.mxu0 0.0
    %7414 = vmatprep.subr.mxu0 0.0
    %7415 = vmatpush2.xpose.msra.mxu0 0.0
    %7416 = vmatprep.subr.mxu0 0.0
    %7417 = vmatpush2.xpose.msra.mxu0 0.0
    %7418 = vmatprep.subr.mxu0 0.0
    %7419 = vmatpush2.xpose.msra.mxu0 0.0
    %7420 = vmatprep.mubr.f32.mxu0 0.0
    %7421 = vmatmul.mubr.f32.gmra.mxu0 %v7354
    %v7422 = vpop.f32.mrf.mxu0
    %v7423 = vadd.f32 0.0, %v7422
    %v7424 = vpop.f32.mrf.mxu0
    %7425 = vdwg.mxu0
    %7426 = vrot.lane.b32.xlu0 %v7031, 120
    %v7427 = vpop.permute.xlu0 %7426
    %v7428 = vsel %vm367, %v7427, 0
    %7430 = vmatprep.subr.mxu0 0.0
    %7431 = vmatpush1.xpose.msra.mxu0 0.0
    %7432 = vmatprep.subr.mxu0 0.0
    %7433 = vmatpush1.xpose.msra.mxu0 0.0
    %7434 = vmatprep.subr.mxu0 0.0
    %7435 = vmatpush1.xpose.msra.mxu0 0.0
    %7436 = vmatprep.subr.mxu0 0.0
    %7437 = vmatpush1.xpose.msra.mxu0 0.0
    %7438 = vmatprep.subr.mxu0 0.0
    %7439 = vmatpush1.xpose.msra.mxu0 0.0
    %7440 = vmatprep.subr.mxu0 0.0
    %7441 = vmatpush1.xpose.msra.mxu0 0.0
    %7442 = vmatprep.subr.mxu0 0.0
    %7443 = vmatpush1.xpose.msra.mxu0 0.0
    %7444 = vmatprep.subr.mxu0 0.0
    %7445 = vmatpush1.xpose.msra.mxu0 0.0
    %7446 = vmatprep.subr.mxu0 0.0
    %7447 = vmatpush1.xpose.msra.mxu0 0.0
    %7448 = vmatprep.subr.mxu0 0.0
    %7449 = vmatpush1.xpose.msra.mxu0 0.0
    %7450 = vmatprep.subr.mxu0 0.0
    %7451 = vmatpush1.xpose.msra.mxu0 0.0
    %7452 = vmatprep.subr.mxu0 0.0
    %7453 = vmatpush1.xpose.msra.mxu0 0.0
    %7454 = vmatprep.subr.mxu0 0.0
    %7455 = vmatpush1.xpose.msra.mxu0 0.0
    %7456 = vmatprep.subr.mxu0 0.0
    %7457 = vmatpush1.xpose.msra.mxu0 0.0
    %7458 = vmatprep.subr.mxu0 0.0
    %7459 = vmatpush1.xpose.msra.mxu0 %v805
    %7460 = vmatprep.subr.mxu0 0.0
    %7461 = vmatpush1.xpose.msra.mxu0 %v803
    %7462 = vmatprep.subr.mxu0 0.0
    %7463 = vmatpush2.xpose.msra.mxu0 0.0
    %7464 = vmatprep.subr.mxu0 0.0
    %7465 = vmatpush2.xpose.msra.mxu0 0.0
    %7466 = vmatprep.subr.mxu0 0.0
    %7467 = vmatpush2.xpose.msra.mxu0 0.0
    %7468 = vmatprep.subr.mxu0 0.0
    %7469 = vmatpush2.xpose.msra.mxu0 0.0
    %7470 = vmatprep.subr.mxu0 0.0
    %7471 = vmatpush2.xpose.msra.mxu0 0.0
    %7472 = vmatprep.subr.mxu0 0.0
    %7473 = vmatpush2.xpose.msra.mxu0 0.0
    %7474 = vmatprep.subr.mxu0 0.0
    %7475 = vmatpush2.xpose.msra.mxu0 0.0
    %7476 = vmatprep.subr.mxu0 0.0
    %7477 = vmatpush2.xpose.msra.mxu0 0.0
    %7478 = vmatprep.subr.mxu0 0.0
    %7479 = vmatpush2.xpose.msra.mxu0 0.0
    %7480 = vmatprep.subr.mxu0 0.0
    %7481 = vmatpush2.xpose.msra.mxu0 0.0
    %7482 = vmatprep.subr.mxu0 0.0
    %7483 = vmatpush2.xpose.msra.mxu0 0.0
    %7484 = vmatprep.subr.mxu0 0.0
    %7485 = vmatpush2.xpose.msra.mxu0 0.0
    %7486 = vmatprep.subr.mxu0 0.0
    %7487 = vmatpush2.xpose.msra.mxu0 0.0
    %7488 = vmatprep.subr.mxu0 0.0
    %7489 = vmatpush2.xpose.msra.mxu0 0.0
    %7490 = vmatprep.subr.mxu0 0.0
    %7491 = vmatpush2.xpose.msra.mxu0 0.0
    %7492 = vmatprep.subr.mxu0 0.0
    %7493 = vmatpush2.xpose.msra.mxu0 0.0
    %7494 = vmatprep.mubr.f32.mxu0 0.0
    %7495 = vmatmul.mubr.f32.gmra.mxu0 %v7428
    %v7496 = vpop.f32.mrf.mxu0
    %v7497 = vadd.f32 0.0, %v7496
    %v7498 = vpop.f32.mrf.mxu0
    %7499 = vdwg.mxu0
    %v7500 = vsel %vm526, %v7423, -inf
    %7501 = vmax.xlane.f32.xlu0 %v7500
    %v7502 = vpop.xlane.xlu0 %7501
    %v7503 = vsel %vm526, %v7497, -inf
    %7504 = vmax.xlane.f32.xlu0 %v7503
    %v7505 = vpop.xlane.xlu0 %7504
    %v7506 = vsub.f32 %v7423, %v7502
    %v7507 = vsub.f32 %v7497, %v7505
    %v7508 = vmul.f32 %v7506, 1.442695
    %v7509 = vpow.pop %v7508
    %v7510 = vmul.f32 %v7507, 1.442695
    %v7511 = vpow.pop %v7510
    %v7512 = vsel %vm526, %v7509, 0.0
    %7513 = vadd.xlane.f32.xlu0 %v7512
    %v7514 = vpop.xlane.xlu0 %7513
    %v7515 = vsel %vm526, %v7511, 0.0
    %7516 = vadd.xlane.f32.xlu0 %v7515
    %v7517 = vpop.xlane.xlu0 %7516
    %v7518 = vrcp.pop %v7514
    %v7519 = vrcp.pop %v7517
    %v7520 = vmul.f32 %v7514, %v7518
    %v7521 = vmul.f32 %v7517, %v7519
    %v7522 = vsub.f32 2.0, %v7520
    %v7523 = vsub.f32 2.0, %v7521
    %v7524 = vmul.f32 %v7518, %v7522
    %v7525 = vmul.f32 %v7519, %v7523
    %v7527 = vsel %vm526, %v7509, 0
    %7529 = vmatprep.subr.mxu0 0.0
    %7530 = vmatpush1.msra.mxu0 0.0
    %7531 = vmatprep.subr.mxu0 0.0
    %7532 = vmatpush1.msra.mxu0 0.0
    %7533 = vmatprep.subr.mxu0 0.0
    %7534 = vmatpush1.msra.mxu0 0.0
    %7535 = vmatprep.subr.mxu0 0.0
    %7536 = vmatpush1.msra.mxu0 0.0
    %7537 = vmatprep.subr.mxu0 0.0
    %7538 = vmatpush1.msra.mxu0 0.0
    %7539 = vmatprep.subr.mxu0 0.0
    %7540 = vmatpush1.msra.mxu0 0.0
    %7541 = vmatprep.subr.mxu0 0.0
    %7542 = vmatpush1.msra.mxu0 0.0
    %7543 = vmatprep.subr.mxu0 0.0
    %7544 = vmatpush1.msra.mxu0 0.0
    %7545 = vmatprep.subr.mxu0 0.0
    %7546 = vmatpush1.msra.mxu0 0.0
    %7547 = vmatprep.subr.mxu0 0.0
    %7548 = vmatpush1.msra.mxu0 0.0
    %7549 = vmatprep.subr.mxu0 0.0
    %7550 = vmatpush1.msra.mxu0 0.0
    %7551 = vmatprep.subr.mxu0 0.0
    %7552 = vmatpush1.msra.mxu0 0.0
    %7553 = vmatprep.subr.mxu0 0.0
    %7554 = vmatpush1.msra.mxu0 0.0
    %7555 = vmatprep.subr.mxu0 0.0
    %7556 = vmatpush1.msra.mxu0 0.0
    %7557 = vmatprep.subr.mxu0 0.0
    %7558 = vmatpush1.msra.mxu0 %v906
    %7559 = vmatprep.subr.mxu0 0.0
    %7560 = vmatpush1.msra.mxu0 %v904
    %7561 = vmatprep.subr.mxu0 0.0
    %7562 = vmatpush2.msra.mxu0 0.0
    %7563 = vmatprep.subr.mxu0 0.0
    %7564 = vmatpush2.msra.mxu0 0.0
    %7565 = vmatprep.subr.mxu0 0.0
    %7566 = vmatpush2.msra.mxu0 0.0
    %7567 = vmatprep.subr.mxu0 0.0
    %7568 = vmatpush2.msra.mxu0 0.0
    %7569 = vmatprep.subr.mxu0 0.0
    %7570 = vmatpush2.msra.mxu0 0.0
    %7571 = vmatprep.subr.mxu0 0.0
    %7572 = vmatpush2.msra.mxu0 0.0
    %7573 = vmatprep.subr.mxu0 0.0
    %7574 = vmatpush2.msra.mxu0 0.0
    %7575 = vmatprep.subr.mxu0 0.0
    %7576 = vmatpush2.msra.mxu0 0.0
    %7577 = vmatprep.subr.mxu0 0.0
    %7578 = vmatpush2.msra.mxu0 0.0
    %7579 = vmatprep.subr.mxu0 0.0
    %7580 = vmatpush2.msra.mxu0 0.0
    %7581 = vmatprep.subr.mxu0 0.0
    %7582 = vmatpush2.msra.mxu0 0.0
    %7583 = vmatprep.subr.mxu0 0.0
    %7584 = vmatpush2.msra.mxu0 0.0
    %7585 = vmatprep.subr.mxu0 0.0
    %7586 = vmatpush2.msra.mxu0 0.0
    %7587 = vmatprep.subr.mxu0 0.0
    %7588 = vmatpush2.msra.mxu0 0.0
    %7589 = vmatprep.subr.mxu0 0.0
    %7590 = vmatpush2.msra.mxu0 0.0
    %7591 = vmatprep.subr.mxu0 0.0
    %7592 = vmatpush2.msra.mxu0 0.0
    %7593 = vmatprep.mubr.f32.mxu0 0.0
    %7594 = vmatmul.mubr.f32.gmra.mxu0 %v7527
    %v7595 = vpop.f32.mrf.mxu0
    %v7596 = vadd.f32 0.0, %v7595
    %v7597 = vpop.f32.mrf.mxu0
    %7598 = vdwg.mxu0
    %v7600 = vsel %vm526, %v7511, 0
    %7602 = vmatprep.subr.mxu0 0.0
    %7603 = vmatpush1.msra.mxu0 0.0
    %7604 = vmatprep.subr.mxu0 0.0
    %7605 = vmatpush1.msra.mxu0 0.0
    %7606 = vmatprep.subr.mxu0 0.0
    %7607 = vmatpush1.msra.mxu0 0.0
    %7608 = vmatprep.subr.mxu0 0.0
    %7609 = vmatpush1.msra.mxu0 0.0
    %7610 = vmatprep.subr.mxu0 0.0
    %7611 = vmatpush1.msra.mxu0 0.0
    %7612 = vmatprep.subr.mxu0 0.0
    %7613 = vmatpush1.msra.mxu0 0.0
    %7614 = vmatprep.subr.mxu0 0.0
    %7615 = vmatpush1.msra.mxu0 0.0
    %7616 = vmatprep.subr.mxu0 0.0
    %7617 = vmatpush1.msra.mxu0 0.0
    %7618 = vmatprep.subr.mxu0 0.0
    %7619 = vmatpush1.msra.mxu0 0.0
    %7620 = vmatprep.subr.mxu0 0.0
    %7621 = vmatpush1.msra.mxu0 0.0
    %7622 = vmatprep.subr.mxu0 0.0
    %7623 = vmatpush1.msra.mxu0 0.0
    %7624 = vmatprep.subr.mxu0 0.0
    %7625 = vmatpush1.msra.mxu0 0.0
    %7626 = vmatprep.subr.mxu0 0.0
    %7627 = vmatpush1.msra.mxu0 0.0
    %7628 = vmatprep.subr.mxu0 0.0
    %7629 = vmatpush1.msra.mxu0 0.0
    %7630 = vmatprep.subr.mxu0 0.0
    %7631 = vmatpush1.msra.mxu0 %v985
    %7632 = vmatprep.subr.mxu0 0.0
    %7633 = vmatpush1.msra.mxu0 %v983
    %7634 = vmatprep.subr.mxu0 0.0
    %7635 = vmatpush2.msra.mxu0 0.0
    %7636 = vmatprep.subr.mxu0 0.0
    %7637 = vmatpush2.msra.mxu0 0.0
    %7638 = vmatprep.subr.mxu0 0.0
    %7639 = vmatpush2.msra.mxu0 0.0
    %7640 = vmatprep.subr.mxu0 0.0
    %7641 = vmatpush2.msra.mxu0 0.0
    %7642 = vmatprep.subr.mxu0 0.0
    %7643 = vmatpush2.msra.mxu0 0.0
    %7644 = vmatprep.subr.mxu0 0.0
    %7645 = vmatpush2.msra.mxu0 0.0
    %7646 = vmatprep.subr.mxu0 0.0
    %7647 = vmatpush2.msra.mxu0 0.0
    %7648 = vmatprep.subr.mxu0 0.0
    %7649 = vmatpush2.msra.mxu0 0.0
    %7650 = vmatprep.subr.mxu0 0.0
    %7651 = vmatpush2.msra.mxu0 0.0
    %7652 = vmatprep.subr.mxu0 0.0
    %7653 = vmatpush2.msra.mxu0 0.0
    %7654 = vmatprep.subr.mxu0 0.0
    %7655 = vmatpush2.msra.mxu0 0.0
    %7656 = vmatprep.subr.mxu0 0.0
    %7657 = vmatpush2.msra.mxu0 0.0
    %7658 = vmatprep.subr.mxu0 0.0
    %7659 = vmatpush2.msra.mxu0 0.0
    %7660 = vmatprep.subr.mxu0 0.0
    %7661 = vmatpush2.msra.mxu0 0.0
    %7662 = vmatprep.subr.mxu0 0.0
    %7663 = vmatpush2.msra.mxu0 0.0
    %7664 = vmatprep.subr.mxu0 0.0
    %7665 = vmatpush2.msra.mxu0 0.0
    %7666 = vmatprep.mubr.f32.mxu0 0.0
    %7667 = vmatmul.mubr.f32.gmra.mxu0 %v7600
    %v7668 = vpop.f32.mrf.mxu0
    %v7669 = vadd.f32 0.0, %v7668
    %v7670 = vpop.f32.mrf.mxu0
    %7671 = vdwg.mxu0
    %v7672 = vmul.f32 %v7596, %v7524
    %v7673 = vmul.f32 %v7669, %v7525
    %7674 = vrot.lane.b32.xlu0 %v7030, 112
    %v7675 = vpop.permute.xlu0 %7674
    %v7676 = vsel %vm367, %v7675, 0
    %7678 = vmatprep.subr.mxu0 0.0
    %7679 = vmatpush1.xpose.msra.mxu0 0.0
    %7680 = vmatprep.subr.mxu0 0.0
    %7681 = vmatpush1.xpose.msra.mxu0 0.0
    %7682 = vmatprep.subr.mxu0 0.0
    %7683 = vmatpush1.xpose.msra.mxu0 0.0
    %7684 = vmatprep.subr.mxu0 0.0
    %7685 = vmatpush1.xpose.msra.mxu0 0.0
    %7686 = vmatprep.subr.mxu0 0.0
    %7687 = vmatpush1.xpose.msra.mxu0 0.0
    %7688 = vmatprep.subr.mxu0 0.0
    %7689 = vmatpush1.xpose.msra.mxu0 0.0
    %7690 = vmatprep.subr.mxu0 0.0
    %7691 = vmatpush1.xpose.msra.mxu0 0.0
    %7692 = vmatprep.subr.mxu0 0.0
    %7693 = vmatpush1.xpose.msra.mxu0 0.0
    %7694 = vmatprep.subr.mxu0 0.0
    %7695 = vmatpush1.xpose.msra.mxu0 0.0
    %7696 = vmatprep.subr.mxu0 0.0
    %7697 = vmatpush1.xpose.msra.mxu0 0.0
    %7698 = vmatprep.subr.mxu0 0.0
    %7699 = vmatpush1.xpose.msra.mxu0 0.0
    %7700 = vmatprep.subr.mxu0 0.0
    %7701 = vmatpush1.xpose.msra.mxu0 0.0
    %7702 = vmatprep.subr.mxu0 0.0
    %7703 = vmatpush1.xpose.msra.mxu0 0.0
    %7704 = vmatprep.subr.mxu0 0.0
    %7705 = vmatpush1.xpose.msra.mxu0 0.0
    %7706 = vmatprep.subr.mxu0 0.0
    %7707 = vmatpush1.xpose.msra.mxu0 %v1073
    %7708 = vmatprep.subr.mxu0 0.0
    %7709 = vmatpush1.xpose.msra.mxu0 %v1071
    %7710 = vmatprep.subr.mxu0 0.0
    %7711 = vmatpush2.xpose.msra.mxu0 0.0
    %7712 = vmatprep.subr.mxu0 0.0
    %7713 = vmatpush2.xpose.msra.mxu0 0.0
    %7714 = vmatprep.subr.mxu0 0.0
    %7715 = vmatpush2.xpose.msra.mxu0 0.0
    %7716 = vmatprep.subr.mxu0 0.0
    %7717 = vmatpush2.xpose.msra.mxu0 0.0
    %7718 = vmatprep.subr.mxu0 0.0
    %7719 = vmatpush2.xpose.msra.mxu0 0.0
    %7720 = vmatprep.subr.mxu0 0.0
    %7721 = vmatpush2.xpose.msra.mxu0 0.0
    %7722 = vmatprep.subr.mxu0 0.0
    %7723 = vmatpush2.xpose.msra.mxu0 0.0
    %7724 = vmatprep.subr.mxu0 0.0
    %7725 = vmatpush2.xpose.msra.mxu0 0.0
    %7726 = vmatprep.subr.mxu0 0.0
    %7727 = vmatpush2.xpose.msra.mxu0 0.0
    %7728 = vmatprep.subr.mxu0 0.0
    %7729 = vmatpush2.xpose.msra.mxu0 0.0
    %7730 = vmatprep.subr.mxu0 0.0
    %7731 = vmatpush2.xpose.msra.mxu0 0.0
    %7732 = vmatprep.subr.mxu0 0.0
    %7733 = vmatpush2.xpose.msra.mxu0 0.0
    %7734 = vmatprep.subr.mxu0 0.0
    %7735 = vmatpush2.xpose.msra.mxu0 0.0
    %7736 = vmatprep.subr.mxu0 0.0
    %7737 = vmatpush2.xpose.msra.mxu0 0.0
    %7738 = vmatprep.subr.mxu0 0.0
    %7739 = vmatpush2.xpose.msra.mxu0 0.0
    %7740 = vmatprep.subr.mxu0 0.0
    %7741 = vmatpush2.xpose.msra.mxu0 0.0
    %7742 = vmatprep.mubr.f32.mxu0 0.0
    %7743 = vmatmul.mubr.f32.gmra.mxu0 %v7676
    %v7744 = vpop.f32.mrf.mxu0
    %v7745 = vadd.f32 0.0, %v7744
    %v7746 = vpop.f32.mrf.mxu0
    %7747 = vdwg.mxu0
    %7748 = vrot.lane.b32.xlu0 %v7031, 112
    %v7749 = vpop.permute.xlu0 %7748
    %v7750 = vsel %vm367, %v7749, 0
    %7752 = vmatprep.subr.mxu0 0.0
    %7753 = vmatpush1.xpose.msra.mxu0 0.0
    %7754 = vmatprep.subr.mxu0 0.0
    %7755 = vmatpush1.xpose.msra.mxu0 0.0
    %7756 = vmatprep.subr.mxu0 0.0
    %7757 = vmatpush1.xpose.msra.mxu0 0.0
    %7758 = vmatprep.subr.mxu0 0.0
    %7759 = vmatpush1.xpose.msra.mxu0 0.0
    %7760 = vmatprep.subr.mxu0 0.0
    %7761 = vmatpush1.xpose.msra.mxu0 0.0
    %7762 = vmatprep.subr.mxu0 0.0
    %7763 = vmatpush1.xpose.msra.mxu0 0.0
    %7764 = vmatprep.subr.mxu0 0.0
    %7765 = vmatpush1.xpose.msra.mxu0 0.0
    %7766 = vmatprep.subr.mxu0 0.0
    %7767 = vmatpush1.xpose.msra.mxu0 0.0
    %7768 = vmatprep.subr.mxu0 0.0
    %7769 = vmatpush1.xpose.msra.mxu0 0.0
    %7770 = vmatprep.subr.mxu0 0.0
    %7771 = vmatpush1.xpose.msra.mxu0 0.0
    %7772 = vmatprep.subr.mxu0 0.0
    %7773 = vmatpush1.xpose.msra.mxu0 0.0
    %7774 = vmatprep.subr.mxu0 0.0
    %7775 = vmatpush1.xpose.msra.mxu0 0.0
    %7776 = vmatprep.subr.mxu0 0.0
    %7777 = vmatpush1.xpose.msra.mxu0 0.0
    %7778 = vmatprep.subr.mxu0 0.0
    %7779 = vmatpush1.xpose.msra.mxu0 0.0
    %7780 = vmatprep.subr.mxu0 0.0
    %7781 = vmatpush1.xpose.msra.mxu0 %v1155
    %7782 = vmatprep.subr.mxu0 0.0
    %7783 = vmatpush1.xpose.msra.mxu0 %v1153
    %7784 = vmatprep.subr.mxu0 0.0
    %7785 = vmatpush2.xpose.msra.mxu0 0.0
    %7786 = vmatprep.subr.mxu0 0.0
    %7787 = vmatpush2.xpose.msra.mxu0 0.0
    %7788 = vmatprep.subr.mxu0 0.0
    %7789 = vmatpush2.xpose.msra.mxu0 0.0
    %7790 = vmatprep.subr.mxu0 0.0
    %7791 = vmatpush2.xpose.msra.mxu0 0.0
    %7792 = vmatprep.subr.mxu0 0.0
    %7793 = vmatpush2.xpose.msra.mxu0 0.0
    %7794 = vmatprep.subr.mxu0 0.0
    %7795 = vmatpush2.xpose.msra.mxu0 0.0
    %7796 = vmatprep.subr.mxu0 0.0
    %7797 = vmatpush2.xpose.msra.mxu0 0.0
    %7798 = vmatprep.subr.mxu0 0.0
    %7799 = vmatpush2.xpose.msra.mxu0 0.0
    %7800 = vmatprep.subr.mxu0 0.0
    %7801 = vmatpush2.xpose.msra.mxu0 0.0
    %7802 = vmatprep.subr.mxu0 0.0
    %7803 = vmatpush2.xpose.msra.mxu0 0.0
    %7804 = vmatprep.subr.mxu0 0.0
    %7805 = vmatpush2.xpose.msra.mxu0 0.0
    %7806 = vmatprep.subr.mxu0 0.0
    %7807 = vmatpush2.xpose.msra.mxu0 0.0
    %7808 = vmatprep.subr.mxu0 0.0
    %7809 = vmatpush2.xpose.msra.mxu0 0.0
    %7810 = vmatprep.subr.mxu0 0.0
    %7811 = vmatpush2.xpose.msra.mxu0 0.0
    %7812 = vmatprep.subr.mxu0 0.0
    %7813 = vmatpush2.xpose.msra.mxu0 0.0
    %7814 = vmatprep.subr.mxu0 0.0
    %7815 = vmatpush2.xpose.msra.mxu0 0.0
    %7816 = vmatprep.mubr.f32.mxu0 0.0
    %7817 = vmatmul.mubr.f32.gmra.mxu0 %v7750
    %v7818 = vpop.f32.mrf.mxu0
    %v7819 = vadd.f32 0.0, %v7818
    %v7820 = vpop.f32.mrf.mxu0
    %7821 = vdwg.mxu0
    %v7822 = vsel %vm526, %v7745, -inf
    %7823 = vmax.xlane.f32.xlu0 %v7822
    %v7824 = vpop.xlane.xlu0 %7823
    %v7825 = vsel %vm526, %v7819, -inf
    %7826 = vmax.xlane.f32.xlu0 %v7825
    %v7827 = vpop.xlane.xlu0 %7826
    %v7828 = vsub.f32 %v7745, %v7824
    %v7829 = vsub.f32 %v7819, %v7827
    %v7830 = vmul.f32 %v7828, 1.442695
    %v7831 = vpow.pop %v7830
    %v7832 = vmul.f32 %v7829, 1.442695
    %v7833 = vpow.pop %v7832
    %v7834 = vsel %vm526, %v7831, 0.0
    %7835 = vadd.xlane.f32.xlu0 %v7834
    %v7836 = vpop.xlane.xlu0 %7835
    %v7837 = vsel %vm526, %v7833, 0.0
    %7838 = vadd.xlane.f32.xlu0 %v7837
    %v7839 = vpop.xlane.xlu0 %7838
    %v7840 = vrcp.pop %v7836
    %v7841 = vrcp.pop %v7839
    %v7842 = vmul.f32 %v7836, %v7840
    %v7843 = vmul.f32 %v7839, %v7841
    %v7844 = vsub.f32 2.0, %v7842
    %v7845 = vsub.f32 2.0, %v7843
    %v7846 = vmul.f32 %v7840, %v7844
    %v7847 = vmul.f32 %v7841, %v7845
    %v7849 = vsel %vm526, %v7831, 0
    %7851 = vmatprep.subr.mxu0 0.0
    %7852 = vmatpush1.msra.mxu0 0.0
    %7853 = vmatprep.subr.mxu0 0.0
    %7854 = vmatpush1.msra.mxu0 0.0
    %7855 = vmatprep.subr.mxu0 0.0
    %7856 = vmatpush1.msra.mxu0 0.0
    %7857 = vmatprep.subr.mxu0 0.0
    %7858 = vmatpush1.msra.mxu0 0.0
    %7859 = vmatprep.subr.mxu0 0.0
    %7860 = vmatpush1.msra.mxu0 0.0
    %7861 = vmatprep.subr.mxu0 0.0
    %7862 = vmatpush1.msra.mxu0 0.0
    %7863 = vmatprep.subr.mxu0 0.0
    %7864 = vmatpush1.msra.mxu0 0.0
    %7865 = vmatprep.subr.mxu0 0.0
    %7866 = vmatpush1.msra.mxu0 0.0
    %7867 = vmatprep.subr.mxu0 0.0
    %7868 = vmatpush1.msra.mxu0 0.0
    %7869 = vmatprep.subr.mxu0 0.0
    %7870 = vmatpush1.msra.mxu0 0.0
    %7871 = vmatprep.subr.mxu0 0.0
    %7872 = vmatpush1.msra.mxu0 0.0
    %7873 = vmatprep.subr.mxu0 0.0
    %7874 = vmatpush1.msra.mxu0 0.0
    %7875 = vmatprep.subr.mxu0 0.0
    %7876 = vmatpush1.msra.mxu0 0.0
    %7877 = vmatprep.subr.mxu0 0.0
    %7878 = vmatpush1.msra.mxu0 0.0
    %7879 = vmatprep.subr.mxu0 0.0
    %7880 = vmatpush1.msra.mxu0 %v1256
    %7881 = vmatprep.subr.mxu0 0.0
    %7882 = vmatpush1.msra.mxu0 %v1254
    %7883 = vmatprep.subr.mxu0 0.0
    %7884 = vmatpush2.msra.mxu0 0.0
    %7885 = vmatprep.subr.mxu0 0.0
    %7886 = vmatpush2.msra.mxu0 0.0
    %7887 = vmatprep.subr.mxu0 0.0
    %7888 = vmatpush2.msra.mxu0 0.0
    %7889 = vmatprep.subr.mxu0 0.0
    %7890 = vmatpush2.msra.mxu0 0.0
    %7891 = vmatprep.subr.mxu0 0.0
    %7892 = vmatpush2.msra.mxu0 0.0
    %7893 = vmatprep.subr.mxu0 0.0
    %7894 = vmatpush2.msra.mxu0 0.0
    %7895 = vmatprep.subr.mxu0 0.0
    %7896 = vmatpush2.msra.mxu0 0.0
    %7897 = vmatprep.subr.mxu0 0.0
    %7898 = vmatpush2.msra.mxu0 0.0
    %7899 = vmatprep.subr.mxu0 0.0
    %7900 = vmatpush2.msra.mxu0 0.0
    %7901 = vmatprep.subr.mxu0 0.0
    %7902 = vmatpush2.msra.mxu0 0.0
    %7903 = vmatprep.subr.mxu0 0.0
    %7904 = vmatpush2.msra.mxu0 0.0
    %7905 = vmatprep.subr.mxu0 0.0
    %7906 = vmatpush2.msra.mxu0 0.0
    %7907 = vmatprep.subr.mxu0 0.0
    %7908 = vmatpush2.msra.mxu0 0.0
    %7909 = vmatprep.subr.mxu0 0.0
    %7910 = vmatpush2.msra.mxu0 0.0
    %7911 = vmatprep.subr.mxu0 0.0
    %7912 = vmatpush2.msra.mxu0 0.0
    %7913 = vmatprep.subr.mxu0 0.0
    %7914 = vmatpush2.msra.mxu0 0.0
    %7915 = vmatprep.mubr.f32.mxu0 0.0
    %7916 = vmatmul.mubr.f32.gmra.mxu0 %v7849
    %v7917 = vpop.f32.mrf.mxu0
    %v7918 = vadd.f32 0.0, %v7917
    %v7919 = vpop.f32.mrf.mxu0
    %7920 = vdwg.mxu0
    %v7922 = vsel %vm526, %v7833, 0
    %7924 = vmatprep.subr.mxu0 0.0
    %7925 = vmatpush1.msra.mxu0 0.0
    %7926 = vmatprep.subr.mxu0 0.0
    %7927 = vmatpush1.msra.mxu0 0.0
    %7928 = vmatprep.subr.mxu0 0.0
    %7929 = vmatpush1.msra.mxu0 0.0
    %7930 = vmatprep.subr.mxu0 0.0
    %7931 = vmatpush1.msra.mxu0 0.0
    %7932 = vmatprep.subr.mxu0 0.0
    %7933 = vmatpush1.msra.mxu0 0.0
    %7934 = vmatprep.subr.mxu0 0.0
    %7935 = vmatpush1.msra.mxu0 0.0
    %7936 = vmatprep.subr.mxu0 0.0
    %7937 = vmatpush1.msra.mxu0 0.0
    %7938 = vmatprep.subr.mxu0 0.0
    %7939 = vmatpush1.msra.mxu0 0.0
    %7940 = vmatprep.subr.mxu0 0.0
    %7941 = vmatpush1.msra.mxu0 0.0
    %7942 = vmatprep.subr.mxu0 0.0
    %7943 = vmatpush1.msra.mxu0 0.0
    %7944 = vmatprep.subr.mxu0 0.0
    %7945 = vmatpush1.msra.mxu0 0.0
    %7946 = vmatprep.subr.mxu0 0.0
    %7947 = vmatpush1.msra.mxu0 0.0
    %7948 = vmatprep.subr.mxu0 0.0
    %7949 = vmatpush1.msra.mxu0 0.0
    %7950 = vmatprep.subr.mxu0 0.0
    %7951 = vmatpush1.msra.mxu0 0.0
    %7952 = vmatprep.subr.mxu0 0.0
    %7953 = vmatpush1.msra.mxu0 %v1335
    %7954 = vmatprep.subr.mxu0 0.0
    %7955 = vmatpush1.msra.mxu0 %v1333
    %7956 = vmatprep.subr.mxu0 0.0
    %7957 = vmatpush2.msra.mxu0 0.0
    %7958 = vmatprep.subr.mxu0 0.0
    %7959 = vmatpush2.msra.mxu0 0.0
    %7960 = vmatprep.subr.mxu0 0.0
    %7961 = vmatpush2.msra.mxu0 0.0
    %7962 = vmatprep.subr.mxu0 0.0
    %7963 = vmatpush2.msra.mxu0 0.0
    %7964 = vmatprep.subr.mxu0 0.0
    %7965 = vmatpush2.msra.mxu0 0.0
    %7966 = vmatprep.subr.mxu0 0.0
    %7967 = vmatpush2.msra.mxu0 0.0
    %7968 = vmatprep.subr.mxu0 0.0
    %7969 = vmatpush2.msra.mxu0 0.0
    %7970 = vmatprep.subr.mxu0 0.0
    %7971 = vmatpush2.msra.mxu0 0.0
    %7972 = vmatprep.subr.mxu0 0.0
    %7973 = vmatpush2.msra.mxu0 0.0
    %7974 = vmatprep.subr.mxu0 0.0
    %7975 = vmatpush2.msra.mxu0 0.0
    %7976 = vmatprep.subr.mxu0 0.0
    %7977 = vmatpush2.msra.mxu0 0.0
    %7978 = vmatprep.subr.mxu0 0.0
    %7979 = vmatpush2.msra.mxu0 0.0
    %7980 = vmatprep.subr.mxu0 0.0
    %7981 = vmatpush2.msra.mxu0 0.0
    %7982 = vmatprep.subr.mxu0 0.0
    %7983 = vmatpush2.msra.mxu0 0.0
    %7984 = vmatprep.subr.mxu0 0.0
    %7985 = vmatpush2.msra.mxu0 0.0
    %7986 = vmatprep.subr.mxu0 0.0
    %7987 = vmatpush2.msra.mxu0 0.0
    %7988 = vmatprep.mubr.f32.mxu0 0.0
    %7989 = vmatmul.mubr.f32.gmra.mxu0 %v7922
    %v7990 = vpop.f32.mrf.mxu0
    %v7991 = vadd.f32 0.0, %v7990
    %v7992 = vpop.f32.mrf.mxu0
    %7993 = vdwg.mxu0
    %v7994 = vmul.f32 %v7918, %v7846
    %v7995 = vmul.f32 %v7991, %v7847
    %7996 = vrot.lane.b32.xlu0 %v7030, 104
    %v7997 = vpop.permute.xlu0 %7996
    %v7998 = vsel %vm367, %v7997, 0
    %8000 = vmatprep.subr.mxu0 0.0
    %8001 = vmatpush1.xpose.msra.mxu0 0.0
    %8002 = vmatprep.subr.mxu0 0.0
    %8003 = vmatpush1.xpose.msra.mxu0 0.0
    %8004 = vmatprep.subr.mxu0 0.0
    %8005 = vmatpush1.xpose.msra.mxu0 0.0
    %8006 = vmatprep.subr.mxu0 0.0
    %8007 = vmatpush1.xpose.msra.mxu0 0.0
    %8008 = vmatprep.subr.mxu0 0.0
    %8009 = vmatpush1.xpose.msra.mxu0 0.0
    %8010 = vmatprep.subr.mxu0 0.0
    %8011 = vmatpush1.xpose.msra.mxu0 0.0
    %8012 = vmatprep.subr.mxu0 0.0
    %8013 = vmatpush1.xpose.msra.mxu0 0.0
    %8014 = vmatprep.subr.mxu0 0.0
    %8015 = vmatpush1.xpose.msra.mxu0 0.0
    %8016 = vmatprep.subr.mxu0 0.0
    %8017 = vmatpush1.xpose.msra.mxu0 0.0
    %8018 = vmatprep.subr.mxu0 0.0
    %8019 = vmatpush1.xpose.msra.mxu0 0.0
    %8020 = vmatprep.subr.mxu0 0.0
    %8021 = vmatpush1.xpose.msra.mxu0 0.0
    %8022 = vmatprep.subr.mxu0 0.0
    %8023 = vmatpush1.xpose.msra.mxu0 0.0
    %8024 = vmatprep.subr.mxu0 0.0
    %8025 = vmatpush1.xpose.msra.mxu0 0.0
    %8026 = vmatprep.subr.mxu0 0.0
    %8027 = vmatpush1.xpose.msra.mxu0 0.0
    %8028 = vmatprep.subr.mxu0 0.0
    %8029 = vmatpush1.xpose.msra.mxu0 %v1423
    %8030 = vmatprep.subr.mxu0 0.0
    %8031 = vmatpush1.xpose.msra.mxu0 %v1421
    %8032 = vmatprep.subr.mxu0 0.0
    %8033 = vmatpush2.xpose.msra.mxu0 0.0
    %8034 = vmatprep.subr.mxu0 0.0
    %8035 = vmatpush2.xpose.msra.mxu0 0.0
    %8036 = vmatprep.subr.mxu0 0.0
    %8037 = vmatpush2.xpose.msra.mxu0 0.0
    %8038 = vmatprep.subr.mxu0 0.0
    %8039 = vmatpush2.xpose.msra.mxu0 0.0
    %8040 = vmatprep.subr.mxu0 0.0
    %8041 = vmatpush2.xpose.msra.mxu0 0.0
    %8042 = vmatprep.subr.mxu0 0.0
    %8043 = vmatpush2.xpose.msra.mxu0 0.0
    %8044 = vmatprep.subr.mxu0 0.0
    %8045 = vmatpush2.xpose.msra.mxu0 0.0
    %8046 = vmatprep.subr.mxu0 0.0
    %8047 = vmatpush2.xpose.msra.mxu0 0.0
    %8048 = vmatprep.subr.mxu0 0.0
    %8049 = vmatpush2.xpose.msra.mxu0 0.0
    %8050 = vmatprep.subr.mxu0 0.0
    %8051 = vmatpush2.xpose.msra.mxu0 0.0
    %8052 = vmatprep.subr.mxu0 0.0
    %8053 = vmatpush2.xpose.msra.mxu0 0.0
    %8054 = vmatprep.subr.mxu0 0.0
    %8055 = vmatpush2.xpose.msra.mxu0 0.0
    %8056 = vmatprep.subr.mxu0 0.0
    %8057 = vmatpush2.xpose.msra.mxu0 0.0
    %8058 = vmatprep.subr.mxu0 0.0
    %8059 = vmatpush2.xpose.msra.mxu0 0.0
    %8060 = vmatprep.subr.mxu0 0.0
    %8061 = vmatpush2.xpose.msra.mxu0 0.0
    %8062 = vmatprep.subr.mxu0 0.0
    %8063 = vmatpush2.xpose.msra.mxu0 0.0
    %8064 = vmatprep.mubr.f32.mxu0 0.0
    %8065 = vmatmul.mubr.f32.gmra.mxu0 %v7998
    %v8066 = vpop.f32.mrf.mxu0
    %v8067 = vadd.f32 0.0, %v8066
    %v8068 = vpop.f32.mrf.mxu0
    %8069 = vdwg.mxu0
    %8070 = vrot.lane.b32.xlu0 %v7031, 104
    %v8071 = vpop.permute.xlu0 %8070
    %v8072 = vsel %vm367, %v8071, 0
    %8074 = vmatprep.subr.mxu0 0.0
    %8075 = vmatpush1.xpose.msra.mxu0 0.0
    %8076 = vmatprep.subr.mxu0 0.0
    %8077 = vmatpush1.xpose.msra.mxu0 0.0
    %8078 = vmatprep.subr.mxu0 0.0
    %8079 = vmatpush1.xpose.msra.mxu0 0.0
    %8080 = vmatprep.subr.mxu0 0.0
    %8081 = vmatpush1.xpose.msra.mxu0 0.0
    %8082 = vmatprep.subr.mxu0 0.0
    %8083 = vmatpush1.xpose.msra.mxu0 0.0
    %8084 = vmatprep.subr.mxu0 0.0
    %8085 = vmatpush1.xpose.msra.mxu0 0.0
    %8086 = vmatprep.subr.mxu0 0.0
    %8087 = vmatpush1.xpose.msra.mxu0 0.0
    %8088 = vmatprep.subr.mxu0 0.0
    %8089 = vmatpush1.xpose.msra.mxu0 0.0
    %8090 = vmatprep.subr.mxu0 0.0
    %8091 = vmatpush1.xpose.msra.mxu0 0.0
    %8092 = vmatprep.subr.mxu0 0.0
    %8093 = vmatpush1.xpose.msra.mxu0 0.0
    %8094 = vmatprep.subr.mxu0 0.0
    %8095 = vmatpush1.xpose.msra.mxu0 0.0
    %8096 = vmatprep.subr.mxu0 0.0
    %8097 = vmatpush1.xpose.msra.mxu0 0.0
    %8098 = vmatprep.subr.mxu0 0.0
    %8099 = vmatpush1.xpose.msra.mxu0 0.0
    %8100 = vmatprep.subr.mxu0 0.0
    %8101 = vmatpush1.xpose.msra.mxu0 0.0
    %8102 = vmatprep.subr.mxu0 0.0
    %8103 = vmatpush1.xpose.msra.mxu0 %v1505
    %8104 = vmatprep.subr.mxu0 0.0
    %8105 = vmatpush1.xpose.msra.mxu0 %v1503
    %8106 = vmatprep.subr.mxu0 0.0
    %8107 = vmatpush2.xpose.msra.mxu0 0.0
    %8108 = vmatprep.subr.mxu0 0.0
    %8109 = vmatpush2.xpose.msra.mxu0 0.0
    %8110 = vmatprep.subr.mxu0 0.0
    %8111 = vmatpush2.xpose.msra.mxu0 0.0
    %8112 = vmatprep.subr.mxu0 0.0
    %8113 = vmatpush2.xpose.msra.mxu0 0.0
    %8114 = vmatprep.subr.mxu0 0.0
    %8115 = vmatpush2.xpose.msra.mxu0 0.0
    %8116 = vmatprep.subr.mxu0 0.0
    %8117 = vmatpush2.xpose.msra.mxu0 0.0
    %8118 = vmatprep.subr.mxu0 0.0
    %8119 = vmatpush2.xpose.msra.mxu0 0.0
    %8120 = vmatprep.subr.mxu0 0.0
    %8121 = vmatpush2.xpose.msra.mxu0 0.0
    %8122 = vmatprep.subr.mxu0 0.0
    %8123 = vmatpush2.xpose.msra.mxu0 0.0
    %8124 = vmatprep.subr.mxu0 0.0
    %8125 = vmatpush2.xpose.msra.mxu0 0.0
    %8126 = vmatprep.subr.mxu0 0.0
    %8127 = vmatpush2.xpose.msra.mxu0 0.0
    %8128 = vmatprep.subr.mxu0 0.0
    %8129 = vmatpush2.xpose.msra.mxu0 0.0
    %8130 = vmatprep.subr.mxu0 0.0
    %8131 = vmatpush2.xpose.msra.mxu0 0.0
    %8132 = vmatprep.subr.mxu0 0.0
    %8133 = vmatpush2.xpose.msra.mxu0 0.0
    %8134 = vmatprep.subr.mxu0 0.0
    %8135 = vmatpush2.xpose.msra.mxu0 0.0
    %8136 = vmatprep.subr.mxu0 0.0
    %8137 = vmatpush2.xpose.msra.mxu0 0.0
    %8138 = vmatprep.mubr.f32.mxu0 0.0
    %8139 = vmatmul.mubr.f32.gmra.mxu0 %v8072
    %v8140 = vpop.f32.mrf.mxu0
    %v8141 = vadd.f32 0.0, %v8140
    %v8142 = vpop.f32.mrf.mxu0
    %8143 = vdwg.mxu0
    %v8144 = vsel %vm526, %v8067, -inf
    %8145 = vmax.xlane.f32.xlu0 %v8144
    %v8146 = vpop.xlane.xlu0 %8145
    %v8147 = vsel %vm526, %v8141, -inf
    %8148 = vmax.xlane.f32.xlu0 %v8147
    %v8149 = vpop.xlane.xlu0 %8148
    %v8150 = vsub.f32 %v8067, %v8146
    %v8151 = vsub.f32 %v8141, %v8149
    %v8152 = vmul.f32 %v8150, 1.442695
    %v8153 = vpow.pop %v8152
    %v8154 = vmul.f32 %v8151, 1.442695
    %v8155 = vpow.pop %v8154
    %v8156 = vsel %vm526, %v8153, 0.0
    %8157 = vadd.xlane.f32.xlu0 %v8156
    %v8158 = vpop.xlane.xlu0 %8157
    %v8159 = vsel %vm526, %v8155, 0.0
    %8160 = vadd.xlane.f32.xlu0 %v8159
    %v8161 = vpop.xlane.xlu0 %8160
    %v8162 = vrcp.pop %v8158
    %v8163 = vrcp.pop %v8161
    %v8164 = vmul.f32 %v8158, %v8162
    %v8165 = vmul.f32 %v8161, %v8163
    %v8166 = vsub.f32 2.0, %v8164
    %v8167 = vsub.f32 2.0, %v8165
    %v8168 = vmul.f32 %v8162, %v8166
    %v8169 = vmul.f32 %v8163, %v8167
    %v8171 = vsel %vm526, %v8153, 0
    %8173 = vmatprep.subr.mxu0 0.0
    %8174 = vmatpush1.msra.mxu0 0.0
    %8175 = vmatprep.subr.mxu0 0.0
    %8176 = vmatpush1.msra.mxu0 0.0
    %8177 = vmatprep.subr.mxu0 0.0
    %8178 = vmatpush1.msra.mxu0 0.0
    %8179 = vmatprep.subr.mxu0 0.0
    %8180 = vmatpush1.msra.mxu0 0.0
    %8181 = vmatprep.subr.mxu0 0.0
    %8182 = vmatpush1.msra.mxu0 0.0
    %8183 = vmatprep.subr.mxu0 0.0
    %8184 = vmatpush1.msra.mxu0 0.0
    %8185 = vmatprep.subr.mxu0 0.0
    %8186 = vmatpush1.msra.mxu0 0.0
    %8187 = vmatprep.subr.mxu0 0.0
    %8188 = vmatpush1.msra.mxu0 0.0
    %8189 = vmatprep.subr.mxu0 0.0
    %8190 = vmatpush1.msra.mxu0 0.0
    %8191 = vmatprep.subr.mxu0 0.0
    %8192 = vmatpush1.msra.mxu0 0.0
    %8193 = vmatprep.subr.mxu0 0.0
    %8194 = vmatpush1.msra.mxu0 0.0
    %8195 = vmatprep.subr.mxu0 0.0
    %8196 = vmatpush1.msra.mxu0 0.0
    %8197 = vmatprep.subr.mxu0 0.0
    %8198 = vmatpush1.msra.mxu0 0.0
    %8199 = vmatprep.subr.mxu0 0.0
    %8200 = vmatpush1.msra.mxu0 0.0
    %8201 = vmatprep.subr.mxu0 0.0
    %8202 = vmatpush1.msra.mxu0 %v1606
    %8203 = vmatprep.subr.mxu0 0.0
    %8204 = vmatpush1.msra.mxu0 %v1604
    %8205 = vmatprep.subr.mxu0 0.0
    %8206 = vmatpush2.msra.mxu0 0.0
    %8207 = vmatprep.subr.mxu0 0.0
    %8208 = vmatpush2.msra.mxu0 0.0
    %8209 = vmatprep.subr.mxu0 0.0
    %8210 = vmatpush2.msra.mxu0 0.0
    %8211 = vmatprep.subr.mxu0 0.0
    %8212 = vmatpush2.msra.mxu0 0.0
    %8213 = vmatprep.subr.mxu0 0.0
    %8214 = vmatpush2.msra.mxu0 0.0
    %8215 = vmatprep.subr.mxu0 0.0
    %8216 = vmatpush2.msra.mxu0 0.0
    %8217 = vmatprep.subr.mxu0 0.0
    %8218 = vmatpush2.msra.mxu0 0.0
    %8219 = vmatprep.subr.mxu0 0.0
    %8220 = vmatpush2.msra.mxu0 0.0
    %8221 = vmatprep.subr.mxu0 0.0
    %8222 = vmatpush2.msra.mxu0 0.0
    %8223 = vmatprep.subr.mxu0 0.0
    %8224 = vmatpush2.msra.mxu0 0.0
    %8225 = vmatprep.subr.mxu0 0.0
    %8226 = vmatpush2.msra.mxu0 0.0
    %8227 = vmatprep.subr.mxu0 0.0
    %8228 = vmatpush2.msra.mxu0 0.0
    %8229 = vmatprep.subr.mxu0 0.0
    %8230 = vmatpush2.msra.mxu0 0.0
    %8231 = vmatprep.subr.mxu0 0.0
    %8232 = vmatpush2.msra.mxu0 0.0
    %8233 = vmatprep.subr.mxu0 0.0
    %8234 = vmatpush2.msra.mxu0 0.0
    %8235 = vmatprep.subr.mxu0 0.0
    %8236 = vmatpush2.msra.mxu0 0.0
    %8237 = vmatprep.mubr.f32.mxu0 0.0
    %8238 = vmatmul.mubr.f32.gmra.mxu0 %v8171
    %v8239 = vpop.f32.mrf.mxu0
    %v8240 = vadd.f32 0.0, %v8239
    %v8241 = vpop.f32.mrf.mxu0
    %8242 = vdwg.mxu0
    %v8244 = vsel %vm526, %v8155, 0
    %8246 = vmatprep.subr.mxu0 0.0
    %8247 = vmatpush1.msra.mxu0 0.0
    %8248 = vmatprep.subr.mxu0 0.0
    %8249 = vmatpush1.msra.mxu0 0.0
    %8250 = vmatprep.subr.mxu0 0.0
    %8251 = vmatpush1.msra.mxu0 0.0
    %8252 = vmatprep.subr.mxu0 0.0
    %8253 = vmatpush1.msra.mxu0 0.0
    %8254 = vmatprep.subr.mxu0 0.0
    %8255 = vmatpush1.msra.mxu0 0.0
    %8256 = vmatprep.subr.mxu0 0.0
    %8257 = vmatpush1.msra.mxu0 0.0
    %8258 = vmatprep.subr.mxu0 0.0
    %8259 = vmatpush1.msra.mxu0 0.0
    %8260 = vmatprep.subr.mxu0 0.0
    %8261 = vmatpush1.msra.mxu0 0.0
    %8262 = vmatprep.subr.mxu0 0.0
    %8263 = vmatpush1.msra.mxu0 0.0
    %8264 = vmatprep.subr.mxu0 0.0
    %8265 = vmatpush1.msra.mxu0 0.0
    %8266 = vmatprep.subr.mxu0 0.0
    %8267 = vmatpush1.msra.mxu0 0.0
    %8268 = vmatprep.subr.mxu0 0.0
    %8269 = vmatpush1.msra.mxu0 0.0
    %8270 = vmatprep.subr.mxu0 0.0
    %8271 = vmatpush1.msra.mxu0 0.0
    %8272 = vmatprep.subr.mxu0 0.0
    %8273 = vmatpush1.msra.mxu0 0.0
    %8274 = vmatprep.subr.mxu0 0.0
    %8275 = vmatpush1.msra.mxu0 %v1685
    %8276 = vmatprep.subr.mxu0 0.0
    %8277 = vmatpush1.msra.mxu0 %v1683
    %8278 = vmatprep.subr.mxu0 0.0
    %8279 = vmatpush2.msra.mxu0 0.0
    %8280 = vmatprep.subr.mxu0 0.0
    %8281 = vmatpush2.msra.mxu0 0.0
    %8282 = vmatprep.subr.mxu0 0.0
    %8283 = vmatpush2.msra.mxu0 0.0
    %8284 = vmatprep.subr.mxu0 0.0
    %8285 = vmatpush2.msra.mxu0 0.0
    %8286 = vmatprep.subr.mxu0 0.0
    %8287 = vmatpush2.msra.mxu0 0.0
    %8288 = vmatprep.subr.mxu0 0.0
    %8289 = vmatpush2.msra.mxu0 0.0
    %8290 = vmatprep.subr.mxu0 0.0
    %8291 = vmatpush2.msra.mxu0 0.0
    %8292 = vmatprep.subr.mxu0 0.0
    %8293 = vmatpush2.msra.mxu0 0.0
    %8294 = vmatprep.subr.mxu0 0.0
    %8295 = vmatpush2.msra.mxu0 0.0
    %8296 = vmatprep.subr.mxu0 0.0
    %8297 = vmatpush2.msra.mxu0 0.0
    %8298 = vmatprep.subr.mxu0 0.0
    %8299 = vmatpush2.msra.mxu0 0.0
    %8300 = vmatprep.subr.mxu0 0.0
    %8301 = vmatpush2.msra.mxu0 0.0
    %8302 = vmatprep.subr.mxu0 0.0
    %8303 = vmatpush2.msra.mxu0 0.0
    %8304 = vmatprep.subr.mxu0 0.0
    %8305 = vmatpush2.msra.mxu0 0.0
    %8306 = vmatprep.subr.mxu0 0.0
    %8307 = vmatpush2.msra.mxu0 0.0
    %8308 = vmatprep.subr.mxu0 0.0
    %8309 = vmatpush2.msra.mxu0 0.0
    %8310 = vmatprep.mubr.f32.mxu0 0.0
    %8311 = vmatmul.mubr.f32.gmra.mxu0 %v8244
    %v8312 = vpop.f32.mrf.mxu0
    %v8313 = vadd.f32 0.0, %v8312
    %v8314 = vpop.f32.mrf.mxu0
    %8315 = vdwg.mxu0
    %v8316 = vmul.f32 %v8240, %v8168
    %v8317 = vmul.f32 %v8313, %v8169
    %8320 = vrot.lane.b32.xlu0 %v7672, 8
    %v8321 = vpop.permute.xlu0 %8320
    %8322 = vrot.lane.b32.xlu0 %v7673, 8
    %v8323 = vpop.permute.xlu0 %8322
    %8328 = vrot.lane.b32.xlu0 %v7994, 16
    %v8329 = vpop.permute.xlu0 %8328
    %8330 = vrot.lane.b32.xlu0 %v7995, 16
    %v8331 = vpop.permute.xlu0 %8330
    %8336 = vrot.lane.b32.xlu0 %v8316, 24
    %v8337 = vpop.permute.xlu0 %8336
    %8338 = vrot.lane.b32.xlu0 %v8317, 24
    %v8339 = vpop.permute.xlu0 %8338
    %v8342 = vsel %vm367, %v7350, %v8321
    %v8343 = vsel %vm367, %v7351, %v8323
    %v8344 = vsel %vm526, %v8342, %v8329
    %v8345 = vsel %vm526, %v8343, %v8331
    %v8346 = vsel %vm1791, %v8344, %v8337
    %v8347 = vsel %vm1791, %v8345, %v8339
    %v8349 = vsel %vm186, %v8346, 0
    %v8352 = vsel %vm186, %v8347, 0
    %8354 = vmatprep.subr.mxu0 0.0
    %8355 = vmatpush1.msra.mxu0 0.0
    %8356 = vmatprep.subr.mxu0 0.0
    %8357 = vmatpush1.msra.mxu0 0.0
    %8358 = vmatprep.subr.mxu0 0.0
    %8359 = vmatpush1.msra.mxu0 0.0
    %8360 = vmatprep.subr.mxu0 0.0
    %8361 = vmatpush1.msra.mxu0 0.0
    %8362 = vmatprep.subr.mxu0 0.0
    %8363 = vmatpush1.msra.mxu0 0.0
    %8364 = vmatprep.subr.mxu0 0.0
    %8365 = vmatpush1.msra.mxu0 0.0
    %8366 = vmatprep.subr.mxu0 0.0
    %8367 = vmatpush1.msra.mxu0 0.0
    %8368 = vmatprep.subr.mxu0 0.0
    %8369 = vmatpush1.msra.mxu0 0.0
    %8370 = vmatprep.subr.mxu0 0.0
    %8371 = vmatpush1.msra.mxu0 0.0
    %8372 = vmatprep.subr.mxu0 0.0
    %8373 = vmatpush1.msra.mxu0 0.0
    %8374 = vmatprep.subr.mxu0 0.0
    %8375 = vmatpush1.msra.mxu0 0.0
    %8376 = vmatprep.subr.mxu0 0.0
    %8377 = vmatpush1.msra.mxu0 0.0
    %8378 = vmatprep.subr.mxu0 0.0
    %8379 = vmatpush1.msra.mxu0 %v94
    %8380 = vmatprep.subr.mxu0 0.0
    %8381 = vmatpush1.msra.mxu0 %v93
    %8382 = vmatprep.subr.mxu0 0.0
    %8383 = vmatpush1.msra.mxu0 %v92
    %8384 = vmatprep.subr.mxu0 0.0
    %8385 = vmatpush1.msra.mxu0 %v91
    %8386 = vmatprep.subr.mxu0 0.0
    %8387 = vmatpush2.msra.mxu0 0.0
    %8388 = vmatprep.subr.mxu0 0.0
    %8389 = vmatpush2.msra.mxu0 0.0
    %8390 = vmatprep.subr.mxu0 0.0
    %8391 = vmatpush2.msra.mxu0 0.0
    %8392 = vmatprep.subr.mxu0 0.0
    %8393 = vmatpush2.msra.mxu0 0.0
    %8394 = vmatprep.subr.mxu0 0.0
    %8395 = vmatpush2.msra.mxu0 0.0
    %8396 = vmatprep.subr.mxu0 0.0
    %8397 = vmatpush2.msra.mxu0 0.0
    %8398 = vmatprep.subr.mxu0 0.0
    %8399 = vmatpush2.msra.mxu0 0.0
    %8400 = vmatprep.subr.mxu0 0.0
    %8401 = vmatpush2.msra.mxu0 0.0
    %8402 = vmatprep.subr.mxu0 0.0
    %8403 = vmatpush2.msra.mxu0 0.0
    %8404 = vmatprep.subr.mxu0 0.0
    %8405 = vmatpush2.msra.mxu0 0.0
    %8406 = vmatprep.subr.mxu0 0.0
    %8407 = vmatpush2.msra.mxu0 0.0
    %8408 = vmatprep.subr.mxu0 0.0
    %8409 = vmatpush2.msra.mxu0 0.0
    %8410 = vmatprep.subr.mxu0 0.0
    %8411 = vmatpush2.msra.mxu0 0.0
    %8412 = vmatprep.subr.mxu0 0.0
    %8413 = vmatpush2.msra.mxu0 0.0
    %8414 = vmatprep.subr.mxu0 0.0
    %8415 = vmatpush2.msra.mxu0 0.0
    %8416 = vmatprep.subr.mxu0 0.0
    %8417 = vmatpush2.msra.mxu0 0.0
    %8418 = vmatprep.mubr.f32.mxu0 0.0
    %8419 = vmatmul.mubr.f32.gmra.mxu0 %v8349
    %v8420 = vpop.f32.mrf.mxu0
    %v8421 = vadd.f32 %v130, %v8420
    %v8422 = vpop.f32.mrf.mxu0
    %8423 = vmatprep.mubr.f32.mxu0 0.0
    %8424 = vmatmul.mubr.f32.gmra.mxu0 %v8352
    %v8425 = vpop.f32.mrf.mxu0
    %v8426 = vadd.f32 %v130, %v8425
    %v8427 = vpop.f32.mrf.mxu0
    %8428 = vdwg.mxu0
    %v8429 = vadd.f32 %v6947, %v8421
    %v8430 = vadd.f32 %v6948, %v8426
    %v8431 = vsel %vm186, %v8429, 0.0
    %8432 = vadd.xlane.f32.xlu0 %v8431
    %v8433 = vpop.xlane.xlu0 %8432
    %v8434 = vsel %vm186, %v8430, 0.0
    %8435 = vadd.xlane.f32.xlu0 %v8434
    %v8436 = vpop.xlane.xlu0 %8435
    %v8437 = vmul.f32 %v8433, %v1883
    %v8438 = vmul.f32 %v8436, %v1883
    %v8439 = vsub.f32 %v8429, %v8437
    %v8440 = vsub.f32 %v8430, %v8438
    %v8441 = vmul.f32 %v8439, %v8439
    %v8442 = vmul.f32 %v8440, %v8440
    %v8443 = vsel %vm186, %v8441, 0.0
    %8444 = vadd.xlane.f32.xlu0 %v8443
    %v8445 = vpop.xlane.xlu0 %8444
    %v8446 = vsel %vm186, %v8442, 0.0
    %8447 = vadd.xlane.f32.xlu0 %v8446
    %v8448 = vpop.xlane.xlu0 %8447
    %v8449 = vmul.f32 %v8445, %v1883
    %v8450 = vmul.f32 %v8448, %v1883
    %v8451 = vadd.f32 %v8449, 1e-05
    %v8452 = vadd.f32 %v8450, 1e-05
    %v8453 = vrsqrt.pop %v8451
    %v8454 = vrsqrt.pop %v8452
    %v8455 = vmul.f32 %v8439, %v8453
    %v8456 = vmul.f32 %v8440, %v8454
    %v8457 = vmul.f32 %v8455, %v150
    %v8458 = vmul.f32 %v8456, %v150
    %v8459 = vadd.f32 %v8457, %v155
    %v8460 = vadd.f32 %v8458, %v155
    %v8462 = vsel %vm186, %v8459, 0
    %v8465 = vsel %vm186, %v8460, 0
    %8467 = vmatprep.subr.mxu0 0.0
    %8468 = vmatpush1.msra.mxu0 0.0
    %8469 = vmatprep.subr.mxu0 0.0
    %8470 = vmatpush1.msra.mxu0 0.0
    %8471 = vmatprep.subr.mxu0 0.0
    %8472 = vmatpush1.msra.mxu0 0.0
    %8473 = vmatprep.subr.mxu0 0.0
    %8474 = vmatpush1.msra.mxu0 0.0
    %8475 = vmatprep.subr.mxu0 0.0
    %8476 = vmatpush1.msra.mxu0 0.0
    %8477 = vmatprep.subr.mxu0 0.0
    %8478 = vmatpush1.msra.mxu0 0.0
    %8479 = vmatprep.subr.mxu0 0.0
    %8480 = vmatpush1.msra.mxu0 0.0
    %8481 = vmatprep.subr.mxu0 0.0
    %8482 = vmatpush1.msra.mxu0 0.0
    %8483 = vmatprep.subr.mxu0 0.0
    %8484 = vmatpush1.msra.mxu0 0.0
    %8485 = vmatprep.subr.mxu0 0.0
    %8486 = vmatpush1.msra.mxu0 0.0
    %8487 = vmatprep.subr.mxu0 0.0
    %8488 = vmatpush1.msra.mxu0 0.0
    %8489 = vmatprep.subr.mxu0 0.0
    %8490 = vmatpush1.msra.mxu0 0.0
    %8491 = vmatprep.subr.mxu0 0.0
    %8492 = vmatpush1.msra.mxu0 %v90
    %8493 = vmatprep.subr.mxu0 0.0
    %8494 = vmatpush1.msra.mxu0 %v89
    %8495 = vmatprep.subr.mxu0 0.0
    %8496 = vmatpush1.msra.mxu0 %v88
    %8497 = vmatprep.subr.mxu0 0.0
    %8498 = vmatpush1.msra.mxu0 %v87
    %8499 = vmatprep.subr.mxu0 0.0
    %8500 = vmatpush2.msra.mxu0 0.0
    %8501 = vmatprep.subr.mxu0 0.0
    %8502 = vmatpush2.msra.mxu0 0.0
    %8503 = vmatprep.subr.mxu0 0.0
    %8504 = vmatpush2.msra.mxu0 0.0
    %8505 = vmatprep.subr.mxu0 0.0
    %8506 = vmatpush2.msra.mxu0 0.0
    %8507 = vmatprep.subr.mxu0 0.0
    %8508 = vmatpush2.msra.mxu0 0.0
    %8509 = vmatprep.subr.mxu0 0.0
    %8510 = vmatpush2.msra.mxu0 0.0
    %8511 = vmatprep.subr.mxu0 0.0
    %8512 = vmatpush2.msra.mxu0 0.0
    %8513 = vmatprep.subr.mxu0 0.0
    %8514 = vmatpush2.msra.mxu0 0.0
    %8515 = vmatprep.subr.mxu0 0.0
    %8516 = vmatpush2.msra.mxu0 0.0
    %8517 = vmatprep.subr.mxu0 0.0
    %8518 = vmatpush2.msra.mxu0 0.0
    %8519 = vmatprep.subr.mxu0 0.0
    %8520 = vmatpush2.msra.mxu0 0.0
    %8521 = vmatprep.subr.mxu0 0.0
    %8522 = vmatpush2.msra.mxu0 0.0
    %8523 = vmatprep.subr.mxu0 0.0
    %8524 = vmatpush2.msra.mxu0 0.0
    %8525 = vmatprep.subr.mxu0 0.0
    %8526 = vmatpush2.msra.mxu0 0.0
    %8527 = vmatprep.subr.mxu0 0.0
    %8528 = vmatpush2.msra.mxu0 0.0
    %8529 = vmatprep.subr.mxu0 0.0
    %8530 = vmatpush2.msra.mxu0 0.0
    %8531 = vmatprep.mubr.f32.mxu0 0.0
    %8532 = vmatmul.mubr.f32.gmra.mxu0 %v8462
    %v8533 = vpop.f32.mrf.mxu0
    %v8534 = vadd.f32 %v125, %v8533
    %v8535 = vpop.f32.mrf.mxu0
    %8536 = vmatprep.mubr.f32.mxu0 0.0
    %8537 = vmatmul.mubr.f32.gmra.mxu0 %v8465
    %v8538 = vpop.f32.mrf.mxu0
    %v8539 = vadd.f32 %v125, %v8538
    %v8540 = vpop.f32.mrf.mxu0
    %8541 = vdwg.mxu0
    %v8542 = vmul.f32 %v8534, 0.35355338
    %v8543 = vmul.f32 %v8539, 0.35355338
    %v8545 = vsel %vm367, %v8542, 0
    %8547 = vmatprep.subr.mxu0 0.0
    %8548 = vmatpush1.xpose.msra.mxu0 0.0
    %8549 = vmatprep.subr.mxu0 0.0
    %8550 = vmatpush1.xpose.msra.mxu0 0.0
    %8551 = vmatprep.subr.mxu0 0.0
    %8552 = vmatpush1.xpose.msra.mxu0 0.0
    %8553 = vmatprep.subr.mxu0 0.0
    %8554 = vmatpush1.xpose.msra.mxu0 0.0
    %8555 = vmatprep.subr.mxu0 0.0
    %8556 = vmatpush1.xpose.msra.mxu0 0.0
    %8557 = vmatprep.subr.mxu0 0.0
    %8558 = vmatpush1.xpose.msra.mxu0 0.0
    %8559 = vmatprep.subr.mxu0 0.0
    %8560 = vmatpush1.xpose.msra.mxu0 0.0
    %8561 = vmatprep.subr.mxu0 0.0
    %8562 = vmatpush1.xpose.msra.mxu0 0.0
    %8563 = vmatprep.subr.mxu0 0.0
    %8564 = vmatpush1.xpose.msra.mxu0 0.0
    %8565 = vmatprep.subr.mxu0 0.0
    %8566 = vmatpush1.xpose.msra.mxu0 0.0
    %8567 = vmatprep.subr.mxu0 0.0
    %8568 = vmatpush1.xpose.msra.mxu0 0.0
    %8569 = vmatprep.subr.mxu0 0.0
    %8570 = vmatpush1.xpose.msra.mxu0 0.0
    %8571 = vmatprep.subr.mxu0 0.0
    %8572 = vmatpush1.xpose.msra.mxu0 0.0
    %8573 = vmatprep.subr.mxu0 0.0
    %8574 = vmatpush1.xpose.msra.mxu0 0.0
    %8575 = vmatprep.subr.mxu0 0.0
    %8576 = vmatpush1.xpose.msra.mxu0 %v2000
    %8577 = vmatprep.subr.mxu0 0.0
    %8578 = vmatpush1.xpose.msra.mxu0 %v1998
    %8579 = vmatprep.subr.mxu0 0.0
    %8580 = vmatpush2.xpose.msra.mxu0 0.0
    %8581 = vmatprep.subr.mxu0 0.0
    %8582 = vmatpush2.xpose.msra.mxu0 0.0
    %8583 = vmatprep.subr.mxu0 0.0
    %8584 = vmatpush2.xpose.msra.mxu0 0.0
    %8585 = vmatprep.subr.mxu0 0.0
    %8586 = vmatpush2.xpose.msra.mxu0 0.0
    %8587 = vmatprep.subr.mxu0 0.0
    %8588 = vmatpush2.xpose.msra.mxu0 0.0
    %8589 = vmatprep.subr.mxu0 0.0
    %8590 = vmatpush2.xpose.msra.mxu0 0.0
    %8591 = vmatprep.subr.mxu0 0.0
    %8592 = vmatpush2.xpose.msra.mxu0 0.0
    %8593 = vmatprep.subr.mxu0 0.0
    %8594 = vmatpush2.xpose.msra.mxu0 0.0
    %8595 = vmatprep.subr.mxu0 0.0
    %8596 = vmatpush2.xpose.msra.mxu0 0.0
    %8597 = vmatprep.subr.mxu0 0.0
    %8598 = vmatpush2.xpose.msra.mxu0 0.0
    %8599 = vmatprep.subr.mxu0 0.0
    %8600 = vmatpush2.xpose.msra.mxu0 0.0
    %8601 = vmatprep.subr.mxu0 0.0
    %8602 = vmatpush2.xpose.msra.mxu0 0.0
    %8603 = vmatprep.subr.mxu0 0.0
    %8604 = vmatpush2.xpose.msra.mxu0 0.0
    %8605 = vmatprep.subr.mxu0 0.0
    %8606 = vmatpush2.xpose.msra.mxu0 0.0
    %8607 = vmatprep.subr.mxu0 0.0
    %8608 = vmatpush2.xpose.msra.mxu0 0.0
    %8609 = vmatprep.subr.mxu0 0.0
    %8610 = vmatpush2.xpose.msra.mxu0 0.0
    %8611 = vmatprep.mubr.f32.mxu0 0.0
    %8612 = vmatmul.mubr.f32.gmra.mxu0 %v8545
    %v8613 = vpop.f32.mrf.mxu0
    %v8614 = vadd.f32 0.0, %v8613
    %v8615 = vpop.f32.mrf.mxu0
    %8616 = vdwg.mxu0
    %v8618 = vsel %vm367, %v8543, 0
    %8620 = vmatprep.subr.mxu0 0.0
    %8621 = vmatpush1.xpose.msra.mxu0 0.0
    %8622 = vmatprep.subr.mxu0 0.0
    %8623 = vmatpush1.xpose.msra.mxu0 0.0
    %8624 = vmatprep.subr.mxu0 0.0
    %8625 = vmatpush1.xpose.msra.mxu0 0.0
    %8626 = vmatprep.subr.mxu0 0.0
    %8627 = vmatpush1.xpose.msra.mxu0 0.0
    %8628 = vmatprep.subr.mxu0 0.0
    %8629 = vmatpush1.xpose.msra.mxu0 0.0
    %8630 = vmatprep.subr.mxu0 0.0
    %8631 = vmatpush1.xpose.msra.mxu0 0.0
    %8632 = vmatprep.subr.mxu0 0.0
    %8633 = vmatpush1.xpose.msra.mxu0 0.0
    %8634 = vmatprep.subr.mxu0 0.0
    %8635 = vmatpush1.xpose.msra.mxu0 0.0
    %8636 = vmatprep.subr.mxu0 0.0
    %8637 = vmatpush1.xpose.msra.mxu0 0.0
    %8638 = vmatprep.subr.mxu0 0.0
    %8639 = vmatpush1.xpose.msra.mxu0 0.0
    %8640 = vmatprep.subr.mxu0 0.0
    %8641 = vmatpush1.xpose.msra.mxu0 0.0
    %8642 = vmatprep.subr.mxu0 0.0
    %8643 = vmatpush1.xpose.msra.mxu0 0.0
    %8644 = vmatprep.subr.mxu0 0.0
    %8645 = vmatpush1.xpose.msra.mxu0 0.0
    %8646 = vmatprep.subr.mxu0 0.0
    %8647 = vmatpush1.xpose.msra.mxu0 0.0
    %8648 = vmatprep.subr.mxu0 0.0
    %8649 = vmatpush1.xpose.msra.mxu0 %v2081
    %8650 = vmatprep.subr.mxu0 0.0
    %8651 = vmatpush1.xpose.msra.mxu0 %v2079
    %8652 = vmatprep.subr.mxu0 0.0
    %8653 = vmatpush2.xpose.msra.mxu0 0.0
    %8654 = vmatprep.subr.mxu0 0.0
    %8655 = vmatpush2.xpose.msra.mxu0 0.0
    %8656 = vmatprep.subr.mxu0 0.0
    %8657 = vmatpush2.xpose.msra.mxu0 0.0
    %8658 = vmatprep.subr.mxu0 0.0
    %8659 = vmatpush2.xpose.msra.mxu0 0.0
    %8660 = vmatprep.subr.mxu0 0.0
    %8661 = vmatpush2.xpose.msra.mxu0 0.0
    %8662 = vmatprep.subr.mxu0 0.0
    %8663 = vmatpush2.xpose.msra.mxu0 0.0
    %8664 = vmatprep.subr.mxu0 0.0
    %8665 = vmatpush2.xpose.msra.mxu0 0.0
    %8666 = vmatprep.subr.mxu0 0.0
    %8667 = vmatpush2.xpose.msra.mxu0 0.0
    %8668 = vmatprep.subr.mxu0 0.0
    %8669 = vmatpush2.xpose.msra.mxu0 0.0
    %8670 = vmatprep.subr.mxu0 0.0
    %8671 = vmatpush2.xpose.msra.mxu0 0.0
    %8672 = vmatprep.subr.mxu0 0.0
    %8673 = vmatpush2.xpose.msra.mxu0 0.0
    %8674 = vmatprep.subr.mxu0 0.0
    %8675 = vmatpush2.xpose.msra.mxu0 0.0
    %8676 = vmatprep.subr.mxu0 0.0
    %8677 = vmatpush2.xpose.msra.mxu0 0.0
    %8678 = vmatprep.subr.mxu0 0.0
    %8679 = vmatpush2.xpose.msra.mxu0 0.0
    %8680 = vmatprep.subr.mxu0 0.0
    %8681 = vmatpush2.xpose.msra.mxu0 0.0
    %8682 = vmatprep.subr.mxu0 0.0
    %8683 = vmatpush2.xpose.msra.mxu0 0.0
    %8684 = vmatprep.mubr.f32.mxu0 0.0
    %8685 = vmatmul.mubr.f32.gmra.mxu0 %v8618
    %v8686 = vpop.f32.mrf.mxu0
    %v8687 = vadd.f32 0.0, %v8686
    %v8688 = vpop.f32.mrf.mxu0
    %8689 = vdwg.mxu0
    %v8690 = vsel %vm526, %v8614, -inf
    %8691 = vmax.xlane.f32.xlu0 %v8690
    %v8692 = vpop.xlane.xlu0 %8691
    %v8693 = vsel %vm526, %v8687, -inf
    %8694 = vmax.xlane.f32.xlu0 %v8693
    %v8695 = vpop.xlane.xlu0 %8694
    %v8696 = vsub.f32 %v8614, %v8692
    %v8697 = vsub.f32 %v8687, %v8695
    %v8698 = vmul.f32 %v8696, 1.442695
    %v8699 = vpow.pop %v8698
    %v8700 = vmul.f32 %v8697, 1.442695
    %v8701 = vpow.pop %v8700
    %v8702 = vsel %vm526, %v8699, 0.0
    %8703 = vadd.xlane.f32.xlu0 %v8702
    %v8704 = vpop.xlane.xlu0 %8703
    %v8705 = vsel %vm526, %v8701, 0.0
    %8706 = vadd.xlane.f32.xlu0 %v8705
    %v8707 = vpop.xlane.xlu0 %8706
    %v8708 = vrcp.pop %v8704
    %v8709 = vrcp.pop %v8707
    %v8710 = vmul.f32 %v8704, %v8708
    %v8711 = vmul.f32 %v8707, %v8709
    %v8712 = vsub.f32 2.0, %v8710
    %v8713 = vsub.f32 2.0, %v8711
    %v8714 = vmul.f32 %v8708, %v8712
    %v8715 = vmul.f32 %v8709, %v8713
    %v8717 = vsel %vm526, %v8699, 0
    %8719 = vmatprep.subr.mxu0 0.0
    %8720 = vmatpush1.msra.mxu0 0.0
    %8721 = vmatprep.subr.mxu0 0.0
    %8722 = vmatpush1.msra.mxu0 0.0
    %8723 = vmatprep.subr.mxu0 0.0
    %8724 = vmatpush1.msra.mxu0 0.0
    %8725 = vmatprep.subr.mxu0 0.0
    %8726 = vmatpush1.msra.mxu0 0.0
    %8727 = vmatprep.subr.mxu0 0.0
    %8728 = vmatpush1.msra.mxu0 0.0
    %8729 = vmatprep.subr.mxu0 0.0
    %8730 = vmatpush1.msra.mxu0 0.0
    %8731 = vmatprep.subr.mxu0 0.0
    %8732 = vmatpush1.msra.mxu0 0.0
    %8733 = vmatprep.subr.mxu0 0.0
    %8734 = vmatpush1.msra.mxu0 0.0
    %8735 = vmatprep.subr.mxu0 0.0
    %8736 = vmatpush1.msra.mxu0 0.0
    %8737 = vmatprep.subr.mxu0 0.0
    %8738 = vmatpush1.msra.mxu0 0.0
    %8739 = vmatprep.subr.mxu0 0.0
    %8740 = vmatpush1.msra.mxu0 0.0
    %8741 = vmatprep.subr.mxu0 0.0
    %8742 = vmatpush1.msra.mxu0 0.0
    %8743 = vmatprep.subr.mxu0 0.0
    %8744 = vmatpush1.msra.mxu0 0.0
    %8745 = vmatprep.subr.mxu0 0.0
    %8746 = vmatpush1.msra.mxu0 0.0
    %8747 = vmatprep.subr.mxu0 0.0
    %8748 = vmatpush1.msra.mxu0 %v2182
    %8749 = vmatprep.subr.mxu0 0.0
    %8750 = vmatpush1.msra.mxu0 %v2180
    %8751 = vmatprep.subr.mxu0 0.0
    %8752 = vmatpush2.msra.mxu0 0.0
    %8753 = vmatprep.subr.mxu0 0.0
    %8754 = vmatpush2.msra.mxu0 0.0
    %8755 = vmatprep.subr.mxu0 0.0
    %8756 = vmatpush2.msra.mxu0 0.0
    %8757 = vmatprep.subr.mxu0 0.0
    %8758 = vmatpush2.msra.mxu0 0.0
    %8759 = vmatprep.subr.mxu0 0.0
    %8760 = vmatpush2.msra.mxu0 0.0
    %8761 = vmatprep.subr.mxu0 0.0
    %8762 = vmatpush2.msra.mxu0 0.0
    %8763 = vmatprep.subr.mxu0 0.0
    %8764 = vmatpush2.msra.mxu0 0.0
    %8765 = vmatprep.subr.mxu0 0.0
    %8766 = vmatpush2.msra.mxu0 0.0
    %8767 = vmatprep.subr.mxu0 0.0
    %8768 = vmatpush2.msra.mxu0 0.0
    %8769 = vmatprep.subr.mxu0 0.0
    %8770 = vmatpush2.msra.mxu0 0.0
    %8771 = vmatprep.subr.mxu0 0.0
    %8772 = vmatpush2.msra.mxu0 0.0
    %8773 = vmatprep.subr.mxu0 0.0
    %8774 = vmatpush2.msra.mxu0 0.0
    %8775 = vmatprep.subr.mxu0 0.0
    %8776 = vmatpush2.msra.mxu0 0.0
    %8777 = vmatprep.subr.mxu0 0.0
    %8778 = vmatpush2.msra.mxu0 0.0
    %8779 = vmatprep.subr.mxu0 0.0
    %8780 = vmatpush2.msra.mxu0 0.0
    %8781 = vmatprep.subr.mxu0 0.0
    %8782 = vmatpush2.msra.mxu0 0.0
    %8783 = vmatprep.mubr.f32.mxu0 0.0
    %8784 = vmatmul.mubr.f32.gmra.mxu0 %v8717
    %v8785 = vpop.f32.mrf.mxu0
    %v8786 = vadd.f32 0.0, %v8785
    %v8787 = vpop.f32.mrf.mxu0
    %8788 = vdwg.mxu0
    %v8790 = vsel %vm526, %v8701, 0
    %8792 = vmatprep.subr.mxu0 0.0
    %8793 = vmatpush1.msra.mxu0 0.0
    %8794 = vmatprep.subr.mxu0 0.0
    %8795 = vmatpush1.msra.mxu0 0.0
    %8796 = vmatprep.subr.mxu0 0.0
    %8797 = vmatpush1.msra.mxu0 0.0
    %8798 = vmatprep.subr.mxu0 0.0
    %8799 = vmatpush1.msra.mxu0 0.0
    %8800 = vmatprep.subr.mxu0 0.0
    %8801 = vmatpush1.msra.mxu0 0.0
    %8802 = vmatprep.subr.mxu0 0.0
    %8803 = vmatpush1.msra.mxu0 0.0
    %8804 = vmatprep.subr.mxu0 0.0
    %8805 = vmatpush1.msra.mxu0 0.0
    %8806 = vmatprep.subr.mxu0 0.0
    %8807 = vmatpush1.msra.mxu0 0.0
    %8808 = vmatprep.subr.mxu0 0.0
    %8809 = vmatpush1.msra.mxu0 0.0
    %8810 = vmatprep.subr.mxu0 0.0
    %8811 = vmatpush1.msra.mxu0 0.0
    %8812 = vmatprep.subr.mxu0 0.0
    %8813 = vmatpush1.msra.mxu0 0.0
    %8814 = vmatprep.subr.mxu0 0.0
    %8815 = vmatpush1.msra.mxu0 0.0
    %8816 = vmatprep.subr.mxu0 0.0
    %8817 = vmatpush1.msra.mxu0 0.0
    %8818 = vmatprep.subr.mxu0 0.0
    %8819 = vmatpush1.msra.mxu0 0.0
    %8820 = vmatprep.subr.mxu0 0.0
    %8821 = vmatpush1.msra.mxu0 %v2261
    %8822 = vmatprep.subr.mxu0 0.0
    %8823 = vmatpush1.msra.mxu0 %v2259
    %8824 = vmatprep.subr.mxu0 0.0
    %8825 = vmatpush2.msra.mxu0 0.0
    %8826 = vmatprep.subr.mxu0 0.0
    %8827 = vmatpush2.msra.mxu0 0.0
    %8828 = vmatprep.subr.mxu0 0.0
    %8829 = vmatpush2.msra.mxu0 0.0
    %8830 = vmatprep.subr.mxu0 0.0
    %8831 = vmatpush2.msra.mxu0 0.0
    %8832 = vmatprep.subr.mxu0 0.0
    %8833 = vmatpush2.msra.mxu0 0.0
    %8834 = vmatprep.subr.mxu0 0.0
    %8835 = vmatpush2.msra.mxu0 0.0
    %8836 = vmatprep.subr.mxu0 0.0
    %8837 = vmatpush2.msra.mxu0 0.0
    %8838 = vmatprep.subr.mxu0 0.0
    %8839 = vmatpush2.msra.mxu0 0.0
    %8840 = vmatprep.subr.mxu0 0.0
    %8841 = vmatpush2.msra.mxu0 0.0
    %8842 = vmatprep.subr.mxu0 0.0
    %8843 = vmatpush2.msra.mxu0 0.0
    %8844 = vmatprep.subr.mxu0 0.0
    %8845 = vmatpush2.msra.mxu0 0.0
    %8846 = vmatprep.subr.mxu0 0.0
    %8847 = vmatpush2.msra.mxu0 0.0
    %8848 = vmatprep.subr.mxu0 0.0
    %8849 = vmatpush2.msra.mxu0 0.0
    %8850 = vmatprep.subr.mxu0 0.0
    %8851 = vmatpush2.msra.mxu0 0.0
    %8852 = vmatprep.subr.mxu0 0.0
    %8853 = vmatpush2.msra.mxu0 0.0
    %8854 = vmatprep.subr.mxu0 0.0
    %8855 = vmatpush2.msra.mxu0 0.0
    %8856 = vmatprep.mubr.f32.mxu0 0.0
    %8857 = vmatmul.mubr.f32.gmra.mxu0 %v8790
    %v8858 = vpop.f32.mrf.mxu0
    %v8859 = vadd.f32 0.0, %v8858
    %v8860 = vpop.f32.mrf.mxu0
    %8861 = vdwg.mxu0
    %v8862 = vmul.f32 %v8786, %v8714
    %v8863 = vmul.f32 %v8859, %v8715
    %8864 = vrot.lane.b32.xlu0 %v8542, 120
    %v8865 = vpop.permute.xlu0 %8864
    %v8866 = vsel %vm367, %v8865, 0
    %8868 = vmatprep.subr.mxu0 0.0
    %8869 = vmatpush1.xpose.msra.mxu0 0.0
    %8870 = vmatprep.subr.mxu0 0.0
    %8871 = vmatpush1.xpose.msra.mxu0 0.0
    %8872 = vmatprep.subr.mxu0 0.0
    %8873 = vmatpush1.xpose.msra.mxu0 0.0
    %8874 = vmatprep.subr.mxu0 0.0
    %8875 = vmatpush1.xpose.msra.mxu0 0.0
    %8876 = vmatprep.subr.mxu0 0.0
    %8877 = vmatpush1.xpose.msra.mxu0 0.0
    %8878 = vmatprep.subr.mxu0 0.0
    %8879 = vmatpush1.xpose.msra.mxu0 0.0
    %8880 = vmatprep.subr.mxu0 0.0
    %8881 = vmatpush1.xpose.msra.mxu0 0.0
    %8882 = vmatprep.subr.mxu0 0.0
    %8883 = vmatpush1.xpose.msra.mxu0 0.0
    %8884 = vmatprep.subr.mxu0 0.0
    %8885 = vmatpush1.xpose.msra.mxu0 0.0
    %8886 = vmatprep.subr.mxu0 0.0
    %8887 = vmatpush1.xpose.msra.mxu0 0.0
    %8888 = vmatprep.subr.mxu0 0.0
    %8889 = vmatpush1.xpose.msra.mxu0 0.0
    %8890 = vmatprep.subr.mxu0 0.0
    %8891 = vmatpush1.xpose.msra.mxu0 0.0
    %8892 = vmatprep.subr.mxu0 0.0
    %8893 = vmatpush1.xpose.msra.mxu0 0.0
    %8894 = vmatprep.subr.mxu0 0.0
    %8895 = vmatpush1.xpose.msra.mxu0 0.0
    %8896 = vmatprep.subr.mxu0 0.0
    %8897 = vmatpush1.xpose.msra.mxu0 %v2349
    %8898 = vmatprep.subr.mxu0 0.0
    %8899 = vmatpush1.xpose.msra.mxu0 %v2347
    %8900 = vmatprep.subr.mxu0 0.0
    %8901 = vmatpush2.xpose.msra.mxu0 0.0
    %8902 = vmatprep.subr.mxu0 0.0
    %8903 = vmatpush2.xpose.msra.mxu0 0.0
    %8904 = vmatprep.subr.mxu0 0.0
    %8905 = vmatpush2.xpose.msra.mxu0 0.0
    %8906 = vmatprep.subr.mxu0 0.0
    %8907 = vmatpush2.xpose.msra.mxu0 0.0
    %8908 = vmatprep.subr.mxu0 0.0
    %8909 = vmatpush2.xpose.msra.mxu0 0.0
    %8910 = vmatprep.subr.mxu0 0.0
    %8911 = vmatpush2.xpose.msra.mxu0 0.0
    %8912 = vmatprep.subr.mxu0 0.0
    %8913 = vmatpush2.xpose.msra.mxu0 0.0
    %8914 = vmatprep.subr.mxu0 0.0
    %8915 = vmatpush2.xpose.msra.mxu0 0.0
    %8916 = vmatprep.subr.mxu0 0.0
    %8917 = vmatpush2.xpose.msra.mxu0 0.0
    %8918 = vmatprep.subr.mxu0 0.0
    %8919 = vmatpush2.xpose.msra.mxu0 0.0
    %8920 = vmatprep.subr.mxu0 0.0
    %8921 = vmatpush2.xpose.msra.mxu0 0.0
    %8922 = vmatprep.subr.mxu0 0.0
    %8923 = vmatpush2.xpose.msra.mxu0 0.0
    %8924 = vmatprep.subr.mxu0 0.0
    %8925 = vmatpush2.xpose.msra.mxu0 0.0
    %8926 = vmatprep.subr.mxu0 0.0
    %8927 = vmatpush2.xpose.msra.mxu0 0.0
    %8928 = vmatprep.subr.mxu0 0.0
    %8929 = vmatpush2.xpose.msra.mxu0 0.0
    %8930 = vmatprep.subr.mxu0 0.0
    %8931 = vmatpush2.xpose.msra.mxu0 0.0
    %8932 = vmatprep.mubr.f32.mxu0 0.0
    %8933 = vmatmul.mubr.f32.gmra.mxu0 %v8866
    %v8934 = vpop.f32.mrf.mxu0
    %v8935 = vadd.f32 0.0, %v8934
    %v8936 = vpop.f32.mrf.mxu0
    %8937 = vdwg.mxu0
    %8938 = vrot.lane.b32.xlu0 %v8543, 120
    %v8939 = vpop.permute.xlu0 %8938
    %v8940 = vsel %vm367, %v8939, 0
    %8942 = vmatprep.subr.mxu0 0.0
    %8943 = vmatpush1.xpose.msra.mxu0 0.0
    %8944 = vmatprep.subr.mxu0 0.0
    %8945 = vmatpush1.xpose.msra.mxu0 0.0
    %8946 = vmatprep.subr.mxu0 0.0
    %8947 = vmatpush1.xpose.msra.mxu0 0.0
    %8948 = vmatprep.subr.mxu0 0.0
    %8949 = vmatpush1.xpose.msra.mxu0 0.0
    %8950 = vmatprep.subr.mxu0 0.0
    %8951 = vmatpush1.xpose.msra.mxu0 0.0
    %8952 = vmatprep.subr.mxu0 0.0
    %8953 = vmatpush1.xpose.msra.mxu0 0.0
    %8954 = vmatprep.subr.mxu0 0.0
    %8955 = vmatpush1.xpose.msra.mxu0 0.0
    %8956 = vmatprep.subr.mxu0 0.0
    %8957 = vmatpush1.xpose.msra.mxu0 0.0
    %8958 = vmatprep.subr.mxu0 0.0
    %8959 = vmatpush1.xpose.msra.mxu0 0.0
    %8960 = vmatprep.subr.mxu0 0.0
    %8961 = vmatpush1.xpose.msra.mxu0 0.0
    %8962 = vmatprep.subr.mxu0 0.0
    %8963 = vmatpush1.xpose.msra.mxu0 0.0
    %8964 = vmatprep.subr.mxu0 0.0
    %8965 = vmatpush1.xpose.msra.mxu0 0.0
    %8966 = vmatprep.subr.mxu0 0.0
    %8967 = vmatpush1.xpose.msra.mxu0 0.0
    %8968 = vmatprep.subr.mxu0 0.0
    %8969 = vmatpush1.xpose.msra.mxu0 0.0
    %8970 = vmatprep.subr.mxu0 0.0
    %8971 = vmatpush1.xpose.msra.mxu0 %v2431
    %8972 = vmatprep.subr.mxu0 0.0
    %8973 = vmatpush1.xpose.msra.mxu0 %v2429
    %8974 = vmatprep.subr.mxu0 0.0
    %8975 = vmatpush2.xpose.msra.mxu0 0.0
    %8976 = vmatprep.subr.mxu0 0.0
    %8977 = vmatpush2.xpose.msra.mxu0 0.0
    %8978 = vmatprep.subr.mxu0 0.0
    %8979 = vmatpush2.xpose.msra.mxu0 0.0
    %8980 = vmatprep.subr.mxu0 0.0
    %8981 = vmatpush2.xpose.msra.mxu0 0.0
    %8982 = vmatprep.subr.mxu0 0.0
    %8983 = vmatpush2.xpose.msra.mxu0 0.0
    %8984 = vmatprep.subr.mxu0 0.0
    %8985 = vmatpush2.xpose.msra.mxu0 0.0
    %8986 = vmatprep.subr.mxu0 0.0
    %8987 = vmatpush2.xpose.msra.mxu0 0.0
    %8988 = vmatprep.subr.mxu0 0.0
    %8989 = vmatpush2.xpose.msra.mxu0 0.0
    %8990 = vmatprep.subr.mxu0 0.0
    %8991 = vmatpush2.xpose.msra.mxu0 0.0
    %8992 = vmatprep.subr.mxu0 0.0
    %8993 = vmatpush2.xpose.msra.mxu0 0.0
    %8994 = vmatprep.subr.mxu0 0.0
    %8995 = vmatpush2.xpose.msra.mxu0 0.0
    %8996 = vmatprep.subr.mxu0 0.0
    %8997 = vmatpush2.xpose.msra.mxu0 0.0
    %8998 = vmatprep.subr.mxu0 0.0
    %8999 = vmatpush2.xpose.msra.mxu0 0.0
    %9000 = vmatprep.subr.mxu0 0.0
    %9001 = vmatpush2.xpose.msra.mxu0 0.0
    %9002 = vmatprep.subr.mxu0 0.0
    %9003 = vmatpush2.xpose.msra.mxu0 0.0
    %9004 = vmatprep.subr.mxu0 0.0
    %9005 = vmatpush2.xpose.msra.mxu0 0.0
    %9006 = vmatprep.mubr.f32.mxu0 0.0
    %9007 = vmatmul.mubr.f32.gmra.mxu0 %v8940
    %v9008 = vpop.f32.mrf.mxu0
    %v9009 = vadd.f32 0.0, %v9008
    %v9010 = vpop.f32.mrf.mxu0
    %9011 = vdwg.mxu0
    %v9012 = vsel %vm526, %v8935, -inf
    %9013 = vmax.xlane.f32.xlu0 %v9012
    %v9014 = vpop.xlane.xlu0 %9013
    %v9015 = vsel %vm526, %v9009, -inf
    %9016 = vmax.xlane.f32.xlu0 %v9015
    %v9017 = vpop.xlane.xlu0 %9016
    %v9018 = vsub.f32 %v8935, %v9014
    %v9019 = vsub.f32 %v9009, %v9017
    %v9020 = vmul.f32 %v9018, 1.442695
    %v9021 = vpow.pop %v9020
    %v9022 = vmul.f32 %v9019, 1.442695
    %v9023 = vpow.pop %v9022
    %v9024 = vsel %vm526, %v9021, 0.0
    %9025 = vadd.xlane.f32.xlu0 %v9024
    %v9026 = vpop.xlane.xlu0 %9025
    %v9027 = vsel %vm526, %v9023, 0.0
    %9028 = vadd.xlane.f32.xlu0 %v9027
    %v9029 = vpop.xlane.xlu0 %9028
    %v9030 = vrcp.pop %v9026
    %v9031 = vrcp.pop %v9029
    %v9032 = vmul.f32 %v9026, %v9030
    %v9033 = vmul.f32 %v9029, %v9031
    %v9034 = vsub.f32 2.0, %v9032
    %v9035 = vsub.f32 2.0, %v9033
    %v9036 = vmul.f32 %v9030, %v9034
    %v9037 = vmul.f32 %v9031, %v9035
    %v9039 = vsel %vm526, %v9021, 0
    %9041 = vmatprep.subr.mxu0 0.0
    %9042 = vmatpush1.msra.mxu0 0.0
    %9043 = vmatprep.subr.mxu0 0.0
    %9044 = vmatpush1.msra.mxu0 0.0
    %9045 = vmatprep.subr.mxu0 0.0
    %9046 = vmatpush1.msra.mxu0 0.0
    %9047 = vmatprep.subr.mxu0 0.0
    %9048 = vmatpush1.msra.mxu0 0.0
    %9049 = vmatprep.subr.mxu0 0.0
    %9050 = vmatpush1.msra.mxu0 0.0
    %9051 = vmatprep.subr.mxu0 0.0
    %9052 = vmatpush1.msra.mxu0 0.0
    %9053 = vmatprep.subr.mxu0 0.0
    %9054 = vmatpush1.msra.mxu0 0.0
    %9055 = vmatprep.subr.mxu0 0.0
    %9056 = vmatpush1.msra.mxu0 0.0
    %9057 = vmatprep.subr.mxu0 0.0
    %9058 = vmatpush1.msra.mxu0 0.0
    %9059 = vmatprep.subr.mxu0 0.0
    %9060 = vmatpush1.msra.mxu0 0.0
    %9061 = vmatprep.subr.mxu0 0.0
    %9062 = vmatpush1.msra.mxu0 0.0
    %9063 = vmatprep.subr.mxu0 0.0
    %9064 = vmatpush1.msra.mxu0 0.0
    %9065 = vmatprep.subr.mxu0 0.0
    %9066 = vmatpush1.msra.mxu0 0.0
    %9067 = vmatprep.subr.mxu0 0.0
    %9068 = vmatpush1.msra.mxu0 0.0
    %9069 = vmatprep.subr.mxu0 0.0
    %9070 = vmatpush1.msra.mxu0 %v2532
    %9071 = vmatprep.subr.mxu0 0.0
    %9072 = vmatpush1.msra.mxu0 %v2530
    %9073 = vmatprep.subr.mxu0 0.0
    %9074 = vmatpush2.msra.mxu0 0.0
    %9075 = vmatprep.subr.mxu0 0.0
    %9076 = vmatpush2.msra.mxu0 0.0
    %9077 = vmatprep.subr.mxu0 0.0
    %9078 = vmatpush2.msra.mxu0 0.0
    %9079 = vmatprep.subr.mxu0 0.0
    %9080 = vmatpush2.msra.mxu0 0.0
    %9081 = vmatprep.subr.mxu0 0.0
    %9082 = vmatpush2.msra.mxu0 0.0
    %9083 = vmatprep.subr.mxu0 0.0
    %9084 = vmatpush2.msra.mxu0 0.0
    %9085 = vmatprep.subr.mxu0 0.0
    %9086 = vmatpush2.msra.mxu0 0.0
    %9087 = vmatprep.subr.mxu0 0.0
    %9088 = vmatpush2.msra.mxu0 0.0
    %9089 = vmatprep.subr.mxu0 0.0
    %9090 = vmatpush2.msra.mxu0 0.0
    %9091 = vmatprep.subr.mxu0 0.0
    %9092 = vmatpush2.msra.mxu0 0.0
    %9093 = vmatprep.subr.mxu0 0.0
    %9094 = vmatpush2.msra.mxu0 0.0
    %9095 = vmatprep.subr.mxu0 0.0
    %9096 = vmatpush2.msra.mxu0 0.0
    %9097 = vmatprep.subr.mxu0 0.0
    %9098 = vmatpush2.msra.mxu0 0.0
    %9099 = vmatprep.subr.mxu0 0.0
    %9100 = vmatpush2.msra.mxu0 0.0
    %9101 = vmatprep.subr.mxu0 0.0
    %9102 = vmatpush2.msra.mxu0 0.0
    %9103 = vmatprep.subr.mxu0 0.0
    %9104 = vmatpush2.msra.mxu0 0.0
    %9105 = vmatprep.mubr.f32.mxu0 0.0
    %9106 = vmatmul.mubr.f32.gmra.mxu0 %v9039
    %v9107 = vpop.f32.mrf.mxu0
    %v9108 = vadd.f32 0.0, %v9107
    %v9109 = vpop.f32.mrf.mxu0
    %9110 = vdwg.mxu0
    %v9112 = vsel %vm526, %v9023, 0
    %9114 = vmatprep.subr.mxu0 0.0
    %9115 = vmatpush1.msra.mxu0 0.0
    %9116 = vmatprep.subr.mxu0 0.0
    %9117 = vmatpush1.msra.mxu0 0.0
    %9118 = vmatprep.subr.mxu0 0.0
    %9119 = vmatpush1.msra.mxu0 0.0
    %9120 = vmatprep.subr.mxu0 0.0
    %9121 = vmatpush1.msra.mxu0 0.0
    %9122 = vmatprep.subr.mxu0 0.0
    %9123 = vmatpush1.msra.mxu0 0.0
    %9124 = vmatprep.subr.mxu0 0.0
    %9125 = vmatpush1.msra.mxu0 0.0
    %9126 = vmatprep.subr.mxu0 0.0
    %9127 = vmatpush1.msra.mxu0 0.0
    %9128 = vmatprep.subr.mxu0 0.0
    %9129 = vmatpush1.msra.mxu0 0.0
    %9130 = vmatprep.subr.mxu0 0.0
    %9131 = vmatpush1.msra.mxu0 0.0
    %9132 = vmatprep.subr.mxu0 0.0
    %9133 = vmatpush1.msra.mxu0 0.0
    %9134 = vmatprep.subr.mxu0 0.0
    %9135 = vmatpush1.msra.mxu0 0.0
    %9136 = vmatprep.subr.mxu0 0.0
    %9137 = vmatpush1.msra.mxu0 0.0
    %9138 = vmatprep.subr.mxu0 0.0
    %9139 = vmatpush1.msra.mxu0 0.0
    %9140 = vmatprep.subr.mxu0 0.0
    %9141 = vmatpush1.msra.mxu0 0.0
    %9142 = vmatprep.subr.mxu0 0.0
    %9143 = vmatpush1.msra.mxu0 %v2611
    %9144 = vmatprep.subr.mxu0 0.0
    %9145 = vmatpush1.msra.mxu0 %v2609
    %9146 = vmatprep.subr.mxu0 0.0
    %9147 = vmatpush2.msra.mxu0 0.0
    %9148 = vmatprep.subr.mxu0 0.0
    %9149 = vmatpush2.msra.mxu0 0.0
    %9150 = vmatprep.subr.mxu0 0.0
    %9151 = vmatpush2.msra.mxu0 0.0
    %9152 = vmatprep.subr.mxu0 0.0
    %9153 = vmatpush2.msra.mxu0 0.0
    %9154 = vmatprep.subr.mxu0 0.0
    %9155 = vmatpush2.msra.mxu0 0.0
    %9156 = vmatprep.subr.mxu0 0.0
    %9157 = vmatpush2.msra.mxu0 0.0
    %9158 = vmatprep.subr.mxu0 0.0
    %9159 = vmatpush2.msra.mxu0 0.0
    %9160 = vmatprep.subr.mxu0 0.0
    %9161 = vmatpush2.msra.mxu0 0.0
    %9162 = vmatprep.subr.mxu0 0.0
    %9163 = vmatpush2.msra.mxu0 0.0
    %9164 = vmatprep.subr.mxu0 0.0
    %9165 = vmatpush2.msra.mxu0 0.0
    %9166 = vmatprep.subr.mxu0 0.0
    %9167 = vmatpush2.msra.mxu0 0.0
    %9168 = vmatprep.subr.mxu0 0.0
    %9169 = vmatpush2.msra.mxu0 0.0
    %9170 = vmatprep.subr.mxu0 0.0
    %9171 = vmatpush2.msra.mxu0 0.0
    %9172 = vmatprep.subr.mxu0 0.0
    %9173 = vmatpush2.msra.mxu0 0.0
    %9174 = vmatprep.subr.mxu0 0.0
    %9175 = vmatpush2.msra.mxu0 0.0
    %9176 = vmatprep.subr.mxu0 0.0
    %9177 = vmatpush2.msra.mxu0 0.0
    %9178 = vmatprep.mubr.f32.mxu0 0.0
    %9179 = vmatmul.mubr.f32.gmra.mxu0 %v9112
    %v9180 = vpop.f32.mrf.mxu0
    %v9181 = vadd.f32 0.0, %v9180
    %v9182 = vpop.f32.mrf.mxu0
    %9183 = vdwg.mxu0
    %v9184 = vmul.f32 %v9108, %v9036
    %v9185 = vmul.f32 %v9181, %v9037
    %9186 = vrot.lane.b32.xlu0 %v8542, 112
    %v9187 = vpop.permute.xlu0 %9186
    %v9188 = vsel %vm367, %v9187, 0
    %9190 = vmatprep.subr.mxu0 0.0
    %9191 = vmatpush1.xpose.msra.mxu0 0.0
    %9192 = vmatprep.subr.mxu0 0.0
    %9193 = vmatpush1.xpose.msra.mxu0 0.0
    %9194 = vmatprep.subr.mxu0 0.0
    %9195 = vmatpush1.xpose.msra.mxu0 0.0
    %9196 = vmatprep.subr.mxu0 0.0
    %9197 = vmatpush1.xpose.msra.mxu0 0.0
    %9198 = vmatprep.subr.mxu0 0.0
    %9199 = vmatpush1.xpose.msra.mxu0 0.0
    %9200 = vmatprep.subr.mxu0 0.0
    %9201 = vmatpush1.xpose.msra.mxu0 0.0
    %9202 = vmatprep.subr.mxu0 0.0
    %9203 = vmatpush1.xpose.msra.mxu0 0.0
    %9204 = vmatprep.subr.mxu0 0.0
    %9205 = vmatpush1.xpose.msra.mxu0 0.0
    %9206 = vmatprep.subr.mxu0 0.0
    %9207 = vmatpush1.xpose.msra.mxu0 0.0
    %9208 = vmatprep.subr.mxu0 0.0
    %9209 = vmatpush1.xpose.msra.mxu0 0.0
    %9210 = vmatprep.subr.mxu0 0.0
    %9211 = vmatpush1.xpose.msra.mxu0 0.0
    %9212 = vmatprep.subr.mxu0 0.0
    %9213 = vmatpush1.xpose.msra.mxu0 0.0
    %9214 = vmatprep.subr.mxu0 0.0
    %9215 = vmatpush1.xpose.msra.mxu0 0.0
    %9216 = vmatprep.subr.mxu0 0.0
    %9217 = vmatpush1.xpose.msra.mxu0 0.0
    %9218 = vmatprep.subr.mxu0 0.0
    %9219 = vmatpush1.xpose.msra.mxu0 %v2699
    %9220 = vmatprep.subr.mxu0 0.0
    %9221 = vmatpush1.xpose.msra.mxu0 %v2697
    %9222 = vmatprep.subr.mxu0 0.0
    %9223 = vmatpush2.xpose.msra.mxu0 0.0
    %9224 = vmatprep.subr.mxu0 0.0
    %9225 = vmatpush2.xpose.msra.mxu0 0.0
    %9226 = vmatprep.subr.mxu0 0.0
    %9227 = vmatpush2.xpose.msra.mxu0 0.0
    %9228 = vmatprep.subr.mxu0 0.0
    %9229 = vmatpush2.xpose.msra.mxu0 0.0
    %9230 = vmatprep.subr.mxu0 0.0
    %9231 = vmatpush2.xpose.msra.mxu0 0.0
    %9232 = vmatprep.subr.mxu0 0.0
    %9233 = vmatpush2.xpose.msra.mxu0 0.0
    %9234 = vmatprep.subr.mxu0 0.0
    %9235 = vmatpush2.xpose.msra.mxu0 0.0
    %9236 = vmatprep.subr.mxu0 0.0
    %9237 = vmatpush2.xpose.msra.mxu0 0.0
    %9238 = vmatprep.subr.mxu0 0.0
    %9239 = vmatpush2.xpose.msra.mxu0 0.0
    %9240 = vmatprep.subr.mxu0 0.0
    %9241 = vmatpush2.xpose.msra.mxu0 0.0
    %9242 = vmatprep.subr.mxu0 0.0
    %9243 = vmatpush2.xpose.msra.mxu0 0.0
    %9244 = vmatprep.subr.mxu0 0.0
    %9245 = vmatpush2.xpose.msra.mxu0 0.0
    %9246 = vmatprep.subr.mxu0 0.0
    %9247 = vmatpush2.xpose.msra.mxu0 0.0
    %9248 = vmatprep.subr.mxu0 0.0
    %9249 = vmatpush2.xpose.msra.mxu0 0.0
    %9250 = vmatprep.subr.mxu0 0.0
    %9251 = vmatpush2.xpose.msra.mxu0 0.0
    %9252 = vmatprep.subr.mxu0 0.0
    %9253 = vmatpush2.xpose.msra.mxu0 0.0
    %9254 = vmatprep.mubr.f32.mxu0 0.0
    %9255 = vmatmul.mubr.f32.gmra.mxu0 %v9188
    %v9256 = vpop.f32.mrf.mxu0
    %v9257 = vadd.f32 0.0, %v9256
    %v9258 = vpop.f32.mrf.mxu0
    %9259 = vdwg.mxu0
    %9260 = vrot.lane.b32.xlu0 %v8543, 112
    %v9261 = vpop.permute.xlu0 %9260
    %v9262 = vsel %vm367, %v9261, 0
    %9264 = vmatprep.subr.mxu0 0.0
    %9265 = vmatpush1.xpose.msra.mxu0 0.0
    %9266 = vmatprep.subr.mxu0 0.0
    %9267 = vmatpush1.xpose.msra.mxu0 0.0
    %9268 = vmatprep.subr.mxu0 0.0
    %9269 = vmatpush1.xpose.msra.mxu0 0.0
    %9270 = vmatprep.subr.mxu0 0.0
    %9271 = vmatpush1.xpose.msra.mxu0 0.0
    %9272 = vmatprep.subr.mxu0 0.0
    %9273 = vmatpush1.xpose.msra.mxu0 0.0
    %9274 = vmatprep.subr.mxu0 0.0
    %9275 = vmatpush1.xpose.msra.mxu0 0.0
    %9276 = vmatprep.subr.mxu0 0.0
    %9277 = vmatpush1.xpose.msra.mxu0 0.0
    %9278 = vmatprep.subr.mxu0 0.0
    %9279 = vmatpush1.xpose.msra.mxu0 0.0
    %9280 = vmatprep.subr.mxu0 0.0
    %9281 = vmatpush1.xpose.msra.mxu0 0.0
    %9282 = vmatprep.subr.mxu0 0.0
    %9283 = vmatpush1.xpose.msra.mxu0 0.0
    %9284 = vmatprep.subr.mxu0 0.0
    %9285 = vmatpush1.xpose.msra.mxu0 0.0
    %9286 = vmatprep.subr.mxu0 0.0
    %9287 = vmatpush1.xpose.msra.mxu0 0.0
    %9288 = vmatprep.subr.mxu0 0.0
    %9289 = vmatpush1.xpose.msra.mxu0 0.0
    %9290 = vmatprep.subr.mxu0 0.0
    %9291 = vmatpush1.xpose.msra.mxu0 0.0
    %9292 = vmatprep.subr.mxu0 0.0
    %9293 = vmatpush1.xpose.msra.mxu0 %v2781
    %9294 = vmatprep.subr.mxu0 0.0
    %9295 = vmatpush1.xpose.msra.mxu0 %v2779
    %9296 = vmatprep.subr.mxu0 0.0
    %9297 = vmatpush2.xpose.msra.mxu0 0.0
    %9298 = vmatprep.subr.mxu0 0.0
    %9299 = vmatpush2.xpose.msra.mxu0 0.0
    %9300 = vmatprep.subr.mxu0 0.0
    %9301 = vmatpush2.xpose.msra.mxu0 0.0
    %9302 = vmatprep.subr.mxu0 0.0
    %9303 = vmatpush2.xpose.msra.mxu0 0.0
    %9304 = vmatprep.subr.mxu0 0.0
    %9305 = vmatpush2.xpose.msra.mxu0 0.0
    %9306 = vmatprep.subr.mxu0 0.0
    %9307 = vmatpush2.xpose.msra.mxu0 0.0
    %9308 = vmatprep.subr.mxu0 0.0
    %9309 = vmatpush2.xpose.msra.mxu0 0.0
    %9310 = vmatprep.subr.mxu0 0.0
    %9311 = vmatpush2.xpose.msra.mxu0 0.0
    %9312 = vmatprep.subr.mxu0 0.0
    %9313 = vmatpush2.xpose.msra.mxu0 0.0
    %9314 = vmatprep.subr.mxu0 0.0
    %9315 = vmatpush2.xpose.msra.mxu0 0.0
    %9316 = vmatprep.subr.mxu0 0.0
    %9317 = vmatpush2.xpose.msra.mxu0 0.0
    %9318 = vmatprep.subr.mxu0 0.0
    %9319 = vmatpush2.xpose.msra.mxu0 0.0
    %9320 = vmatprep.subr.mxu0 0.0
    %9321 = vmatpush2.xpose.msra.mxu0 0.0
    %9322 = vmatprep.subr.mxu0 0.0
    %9323 = vmatpush2.xpose.msra.mxu0 0.0
    %9324 = vmatprep.subr.mxu0 0.0
    %9325 = vmatpush2.xpose.msra.mxu0 0.0
    %9326 = vmatprep.subr.mxu0 0.0
    %9327 = vmatpush2.xpose.msra.mxu0 0.0
    %9328 = vmatprep.mubr.f32.mxu0 0.0
    %9329 = vmatmul.mubr.f32.gmra.mxu0 %v9262
    %v9330 = vpop.f32.mrf.mxu0
    %v9331 = vadd.f32 0.0, %v9330
    %v9332 = vpop.f32.mrf.mxu0
    %9333 = vdwg.mxu0
    %v9334 = vsel %vm526, %v9257, -inf
    %9335 = vmax.xlane.f32.xlu0 %v9334
    %v9336 = vpop.xlane.xlu0 %9335
    %v9337 = vsel %vm526, %v9331, -inf
    %9338 = vmax.xlane.f32.xlu0 %v9337
    %v9339 = vpop.xlane.xlu0 %9338
    %v9340 = vsub.f32 %v9257, %v9336
    %v9341 = vsub.f32 %v9331, %v9339
    %v9342 = vmul.f32 %v9340, 1.442695
    %v9343 = vpow.pop %v9342
    %v9344 = vmul.f32 %v9341, 1.442695
    %v9345 = vpow.pop %v9344
    %v9346 = vsel %vm526, %v9343, 0.0
    %9347 = vadd.xlane.f32.xlu0 %v9346
    %v9348 = vpop.xlane.xlu0 %9347
    %v9349 = vsel %vm526, %v9345, 0.0
    %9350 = vadd.xlane.f32.xlu0 %v9349
    %v9351 = vpop.xlane.xlu0 %9350
    %v9352 = vrcp.pop %v9348
    %v9353 = vrcp.pop %v9351
    %v9354 = vmul.f32 %v9348, %v9352
    %v9355 = vmul.f32 %v9351, %v9353
    %v9356 = vsub.f32 2.0, %v9354
    %v9357 = vsub.f32 2.0, %v9355
    %v9358 = vmul.f32 %v9352, %v9356
    %v9359 = vmul.f32 %v9353, %v9357
    %v9361 = vsel %vm526, %v9343, 0
    %9363 = vmatprep.subr.mxu0 0.0
    %9364 = vmatpush1.msra.mxu0 0.0
    %9365 = vmatprep.subr.mxu0 0.0
    %9366 = vmatpush1.msra.mxu0 0.0
    %9367 = vmatprep.subr.mxu0 0.0
    %9368 = vmatpush1.msra.mxu0 0.0
    %9369 = vmatprep.subr.mxu0 0.0
    %9370 = vmatpush1.msra.mxu0 0.0
    %9371 = vmatprep.subr.mxu0 0.0
    %9372 = vmatpush1.msra.mxu0 0.0
    %9373 = vmatprep.subr.mxu0 0.0
    %9374 = vmatpush1.msra.mxu0 0.0
    %9375 = vmatprep.subr.mxu0 0.0
    %9376 = vmatpush1.msra.mxu0 0.0
    %9377 = vmatprep.subr.mxu0 0.0
    %9378 = vmatpush1.msra.mxu0 0.0
    %9379 = vmatprep.subr.mxu0 0.0
    %9380 = vmatpush1.msra.mxu0 0.0
    %9381 = vmatprep.subr.mxu0 0.0
    %9382 = vmatpush1.msra.mxu0 0.0
    %9383 = vmatprep.subr.mxu0 0.0
    %9384 = vmatpush1.msra.mxu0 0.0
    %9385 = vmatprep.subr.mxu0 0.0
    %9386 = vmatpush1.msra.mxu0 0.0
    %9387 = vmatprep.subr.mxu0 0.0
    %9388 = vmatpush1.msra.mxu0 0.0
    %9389 = vmatprep.subr.mxu0 0.0
    %9390 = vmatpush1.msra.mxu0 0.0
    %9391 = vmatprep.subr.mxu0 0.0
    %9392 = vmatpush1.msra.mxu0 %v2882
    %9393 = vmatprep.subr.mxu0 0.0
    %9394 = vmatpush1.msra.mxu0 %v2880
    %9395 = vmatprep.subr.mxu0 0.0
    %9396 = vmatpush2.msra.mxu0 0.0
    %9397 = vmatprep.subr.mxu0 0.0
    %9398 = vmatpush2.msra.mxu0 0.0
    %9399 = vmatprep.subr.mxu0 0.0
    %9400 = vmatpush2.msra.mxu0 0.0
    %9401 = vmatprep.subr.mxu0 0.0
    %9402 = vmatpush2.msra.mxu0 0.0
    %9403 = vmatprep.subr.mxu0 0.0
    %9404 = vmatpush2.msra.mxu0 0.0
    %9405 = vmatprep.subr.mxu0 0.0
    %9406 = vmatpush2.msra.mxu0 0.0
    %9407 = vmatprep.subr.mxu0 0.0
    %9408 = vmatpush2.msra.mxu0 0.0
    %9409 = vmatprep.subr.mxu0 0.0
    %9410 = vmatpush2.msra.mxu0 0.0
    %9411 = vmatprep.subr.mxu0 0.0
    %9412 = vmatpush2.msra.mxu0 0.0
    %9413 = vmatprep.subr.mxu0 0.0
    %9414 = vmatpush2.msra.mxu0 0.0
    %9415 = vmatprep.subr.mxu0 0.0
    %9416 = vmatpush2.msra.mxu0 0.0
    %9417 = vmatprep.subr.mxu0 0.0
    %9418 = vmatpush2.msra.mxu0 0.0
    %9419 = vmatprep.subr.mxu0 0.0
    %9420 = vmatpush2.msra.mxu0 0.0
    %9421 = vmatprep.subr.mxu0 0.0
    %9422 = vmatpush2.msra.mxu0 0.0
    %9423 = vmatprep.subr.mxu0 0.0
    %9424 = vmatpush2.msra.mxu0 0.0
    %9425 = vmatprep.subr.mxu0 0.0
    %9426 = vmatpush2.msra.mxu0 0.0
    %9427 = vmatprep.mubr.f32.mxu0 0.0
    %9428 = vmatmul.mubr.f32.gmra.mxu0 %v9361
    %v9429 = vpop.f32.mrf.mxu0
    %v9430 = vadd.f32 0.0, %v9429
    %v9431 = vpop.f32.mrf.mxu0
    %9432 = vdwg.mxu0
    %v9434 = vsel %vm526, %v9345, 0
    %9436 = vmatprep.subr.mxu0 0.0
    %9437 = vmatpush1.msra.mxu0 0.0
    %9438 = vmatprep.subr.mxu0 0.0
    %9439 = vmatpush1.msra.mxu0 0.0
    %9440 = vmatprep.subr.mxu0 0.0
    %9441 = vmatpush1.msra.mxu0 0.0
    %9442 = vmatprep.subr.mxu0 0.0
    %9443 = vmatpush1.msra.mxu0 0.0
    %9444 = vmatprep.subr.mxu0 0.0
    %9445 = vmatpush1.msra.mxu0 0.0
    %9446 = vmatprep.subr.mxu0 0.0
    %9447 = vmatpush1.msra.mxu0 0.0
    %9448 = vmatprep.subr.mxu0 0.0
    %9449 = vmatpush1.msra.mxu0 0.0
    %9450 = vmatprep.subr.mxu0 0.0
    %9451 = vmatpush1.msra.mxu0 0.0
    %9452 = vmatprep.subr.mxu0 0.0
    %9453 = vmatpush1.msra.mxu0 0.0
    %9454 = vmatprep.subr.mxu0 0.0
    %9455 = vmatpush1.msra.mxu0 0.0
    %9456 = vmatprep.subr.mxu0 0.0
    %9457 = vmatpush1.msra.mxu0 0.0
    %9458 = vmatprep.subr.mxu0 0.0
    %9459 = vmatpush1.msra.mxu0 0.0
    %9460 = vmatprep.subr.mxu0 0.0
    %9461 = vmatpush1.msra.mxu0 0.0
    %9462 = vmatprep.subr.mxu0 0.0
    %9463 = vmatpush1.msra.mxu0 0.0
    %9464 = vmatprep.subr.mxu0 0.0
    %9465 = vmatpush1.msra.mxu0 %v2961
    %9466 = vmatprep.subr.mxu0 0.0
    %9467 = vmatpush1.msra.mxu0 %v2959
    %9468 = vmatprep.subr.mxu0 0.0
    %9469 = vmatpush2.msra.mxu0 0.0
    %9470 = vmatprep.subr.mxu0 0.0
    %9471 = vmatpush2.msra.mxu0 0.0
    %9472 = vmatprep.subr.mxu0 0.0
    %9473 = vmatpush2.msra.mxu0 0.0
    %9474 = vmatprep.subr.mxu0 0.0
    %9475 = vmatpush2.msra.mxu0 0.0
    %9476 = vmatprep.subr.mxu0 0.0
    %9477 = vmatpush2.msra.mxu0 0.0
    %9478 = vmatprep.subr.mxu0 0.0
    %9479 = vmatpush2.msra.mxu0 0.0
    %9480 = vmatprep.subr.mxu0 0.0
    %9481 = vmatpush2.msra.mxu0 0.0
    %9482 = vmatprep.subr.mxu0 0.0
    %9483 = vmatpush2.msra.mxu0 0.0
    %9484 = vmatprep.subr.mxu0 0.0
    %9485 = vmatpush2.msra.mxu0 0.0
    %9486 = vmatprep.subr.mxu0 0.0
    %9487 = vmatpush2.msra.mxu0 0.0
    %9488 = vmatprep.subr.mxu0 0.0
    %9489 = vmatpush2.msra.mxu0 0.0
    %9490 = vmatprep.subr.mxu0 0.0
    %9491 = vmatpush2.msra.mxu0 0.0
    %9492 = vmatprep.subr.mxu0 0.0
    %9493 = vmatpush2.msra.mxu0 0.0
    %9494 = vmatprep.subr.mxu0 0.0
    %9495 = vmatpush2.msra.mxu0 0.0
    %9496 = vmatprep.subr.mxu0 0.0
    %9497 = vmatpush2.msra.mxu0 0.0
    %9498 = vmatprep.subr.mxu0 0.0
    %9499 = vmatpush2.msra.mxu0 0.0
    %9500 = vmatprep.mubr.f32.mxu0 0.0
    %9501 = vmatmul.mubr.f32.gmra.mxu0 %v9434
    %v9502 = vpop.f32.mrf.mxu0
    %v9503 = vadd.f32 0.0, %v9502
    %v9504 = vpop.f32.mrf.mxu0
    %9505 = vdwg.mxu0
    %v9506 = vmul.f32 %v9430, %v9358
    %v9507 = vmul.f32 %v9503, %v9359
    %9508 = vrot.lane.b32.xlu0 %v8542, 104
    %v9509 = vpop.permute.xlu0 %9508
    %v9510 = vsel %vm367, %v9509, 0
    %9512 = vmatprep.subr.mxu0 0.0
    %9513 = vmatpush1.xpose.msra.mxu0 0.0
    %9514 = vmatprep.subr.mxu0 0.0
    %9515 = vmatpush1.xpose.msra.mxu0 0.0
    %9516 = vmatprep.subr.mxu0 0.0
    %9517 = vmatpush1.xpose.msra.mxu0 0.0
    %9518 = vmatprep.subr.mxu0 0.0
    %9519 = vmatpush1.xpose.msra.mxu0 0.0
    %9520 = vmatprep.subr.mxu0 0.0
    %9521 = vmatpush1.xpose.msra.mxu0 0.0
    %9522 = vmatprep.subr.mxu0 0.0
    %9523 = vmatpush1.xpose.msra.mxu0 0.0
    %9524 = vmatprep.subr.mxu0 0.0
    %9525 = vmatpush1.xpose.msra.mxu0 0.0
    %9526 = vmatprep.subr.mxu0 0.0
    %9527 = vmatpush1.xpose.msra.mxu0 0.0
    %9528 = vmatprep.subr.mxu0 0.0
    %9529 = vmatpush1.xpose.msra.mxu0 0.0
    %9530 = vmatprep.subr.mxu0 0.0
    %9531 = vmatpush1.xpose.msra.mxu0 0.0
    %9532 = vmatprep.subr.mxu0 0.0
    %9533 = vmatpush1.xpose.msra.mxu0 0.0
    %9534 = vmatprep.subr.mxu0 0.0
    %9535 = vmatpush1.xpose.msra.mxu0 0.0
    %9536 = vmatprep.subr.mxu0 0.0
    %9537 = vmatpush1.xpose.msra.mxu0 0.0
    %9538 = vmatprep.subr.mxu0 0.0
    %9539 = vmatpush1.xpose.msra.mxu0 0.0
    %9540 = vmatprep.subr.mxu0 0.0
    %9541 = vmatpush1.xpose.msra.mxu0 %v3049
    %9542 = vmatprep.subr.mxu0 0.0
    %9543 = vmatpush1.xpose.msra.mxu0 %v3047
    %9544 = vmatprep.subr.mxu0 0.0
    %9545 = vmatpush2.xpose.msra.mxu0 0.0
    %9546 = vmatprep.subr.mxu0 0.0
    %9547 = vmatpush2.xpose.msra.mxu0 0.0
    %9548 = vmatprep.subr.mxu0 0.0
    %9549 = vmatpush2.xpose.msra.mxu0 0.0
    %9550 = vmatprep.subr.mxu0 0.0
    %9551 = vmatpush2.xpose.msra.mxu0 0.0
    %9552 = vmatprep.subr.mxu0 0.0
    %9553 = vmatpush2.xpose.msra.mxu0 0.0
    %9554 = vmatprep.subr.mxu0 0.0
    %9555 = vmatpush2.xpose.msra.mxu0 0.0
    %9556 = vmatprep.subr.mxu0 0.0
    %9557 = vmatpush2.xpose.msra.mxu0 0.0
    %9558 = vmatprep.subr.mxu0 0.0
    %9559 = vmatpush2.xpose.msra.mxu0 0.0
    %9560 = vmatprep.subr.mxu0 0.0
    %9561 = vmatpush2.xpose.msra.mxu0 0.0
    %9562 = vmatprep.subr.mxu0 0.0
    %9563 = vmatpush2.xpose.msra.mxu0 0.0
    %9564 = vmatprep.subr.mxu0 0.0
    %9565 = vmatpush2.xpose.msra.mxu0 0.0
    %9566 = vmatprep.subr.mxu0 0.0
    %9567 = vmatpush2.xpose.msra.mxu0 0.0
    %9568 = vmatprep.subr.mxu0 0.0
    %9569 = vmatpush2.xpose.msra.mxu0 0.0
    %9570 = vmatprep.subr.mxu0 0.0
    %9571 = vmatpush2.xpose.msra.mxu0 0.0
    %9572 = vmatprep.subr.mxu0 0.0
    %9573 = vmatpush2.xpose.msra.mxu0 0.0
    %9574 = vmatprep.subr.mxu0 0.0
    %9575 = vmatpush2.xpose.msra.mxu0 0.0
    %9576 = vmatprep.mubr.f32.mxu0 0.0
    %9577 = vmatmul.mubr.f32.gmra.mxu0 %v9510
    %v9578 = vpop.f32.mrf.mxu0
    %v9579 = vadd.f32 0.0, %v9578
    %v9580 = vpop.f32.mrf.mxu0
    %9581 = vdwg.mxu0
    %9582 = vrot.lane.b32.xlu0 %v8543, 104
    %v9583 = vpop.permute.xlu0 %9582
    %v9584 = vsel %vm367, %v9583, 0
    %9586 = vmatprep.subr.mxu0 0.0
    %9587 = vmatpush1.xpose.msra.mxu0 0.0
    %9588 = vmatprep.subr.mxu0 0.0
    %9589 = vmatpush1.xpose.msra.mxu0 0.0
    %9590 = vmatprep.subr.mxu0 0.0
    %9591 = vmatpush1.xpose.msra.mxu0 0.0
    %9592 = vmatprep.subr.mxu0 0.0
    %9593 = vmatpush1.xpose.msra.mxu0 0.0
    %9594 = vmatprep.subr.mxu0 0.0
    %9595 = vmatpush1.xpose.msra.mxu0 0.0
    %9596 = vmatprep.subr.mxu0 0.0
    %9597 = vmatpush1.xpose.msra.mxu0 0.0
    %9598 = vmatprep.subr.mxu0 0.0
    %9599 = vmatpush1.xpose.msra.mxu0 0.0
    %9600 = vmatprep.subr.mxu0 0.0
    %9601 = vmatpush1.xpose.msra.mxu0 0.0
    %9602 = vmatprep.subr.mxu0 0.0
    %9603 = vmatpush1.xpose.msra.mxu0 0.0
    %9604 = vmatprep.subr.mxu0 0.0
    %9605 = vmatpush1.xpose.msra.mxu0 0.0
    %9606 = vmatprep.subr.mxu0 0.0
    %9607 = vmatpush1.xpose.msra.mxu0 0.0
    %9608 = vmatprep.subr.mxu0 0.0
    %9609 = vmatpush1.xpose.msra.mxu0 0.0
    %9610 = vmatprep.subr.mxu0 0.0
    %9611 = vmatpush1.xpose.msra.mxu0 0.0
    %9612 = vmatprep.subr.mxu0 0.0
    %9613 = vmatpush1.xpose.msra.mxu0 0.0
    %9614 = vmatprep.subr.mxu0 0.0
    %9615 = vmatpush1.xpose.msra.mxu0 %v3131
    %9616 = vmatprep.subr.mxu0 0.0
    %9617 = vmatpush1.xpose.msra.mxu0 %v3129
    %9618 = vmatprep.subr.mxu0 0.0
    %9619 = vmatpush2.xpose.msra.mxu0 0.0
    %9620 = vmatprep.subr.mxu0 0.0
    %9621 = vmatpush2.xpose.msra.mxu0 0.0
    %9622 = vmatprep.subr.mxu0 0.0
    %9623 = vmatpush2.xpose.msra.mxu0 0.0
    %9624 = vmatprep.subr.mxu0 0.0
    %9625 = vmatpush2.xpose.msra.mxu0 0.0
    %9626 = vmatprep.subr.mxu0 0.0
    %9627 = vmatpush2.xpose.msra.mxu0 0.0
    %9628 = vmatprep.subr.mxu0 0.0
    %9629 = vmatpush2.xpose.msra.mxu0 0.0
    %9630 = vmatprep.subr.mxu0 0.0
    %9631 = vmatpush2.xpose.msra.mxu0 0.0
    %9632 = vmatprep.subr.mxu0 0.0
    %9633 = vmatpush2.xpose.msra.mxu0 0.0
    %9634 = vmatprep.subr.mxu0 0.0
    %9635 = vmatpush2.xpose.msra.mxu0 0.0
    %9636 = vmatprep.subr.mxu0 0.0
    %9637 = vmatpush2.xpose.msra.mxu0 0.0
    %9638 = vmatprep.subr.mxu0 0.0
    %9639 = vmatpush2.xpose.msra.mxu0 0.0
    %9640 = vmatprep.subr.mxu0 0.0
    %9641 = vmatpush2.xpose.msra.mxu0 0.0
    %9642 = vmatprep.subr.mxu0 0.0
    %9643 = vmatpush2.xpose.msra.mxu0 0.0
    %9644 = vmatprep.subr.mxu0 0.0
    %9645 = vmatpush2.xpose.msra.mxu0 0.0
    %9646 = vmatprep.subr.mxu0 0.0
    %9647 = vmatpush2.xpose.msra.mxu0 0.0
    %9648 = vmatprep.subr.mxu0 0.0
    %9649 = vmatpush2.xpose.msra.mxu0 0.0
    %9650 = vmatprep.mubr.f32.mxu0 0.0
    %9651 = vmatmul.mubr.f32.gmra.mxu0 %v9584
    %v9652 = vpop.f32.mrf.mxu0
    %v9653 = vadd.f32 0.0, %v9652
    %v9654 = vpop.f32.mrf.mxu0
    %9655 = vdwg.mxu0
    %v9656 = vsel %vm526, %v9579, -inf
    %9657 = vmax.xlane.f32.xlu0 %v9656
    %v9658 = vpop.xlane.xlu0 %9657
    %v9659 = vsel %vm526, %v9653, -inf
    %9660 = vmax.xlane.f32.xlu0 %v9659
    %v9661 = vpop.xlane.xlu0 %9660
    %v9662 = vsub.f32 %v9579, %v9658
    %v9663 = vsub.f32 %v9653, %v9661
    %v9664 = vmul.f32 %v9662, 1.442695
    %v9665 = vpow.pop %v9664
    %v9666 = vmul.f32 %v9663, 1.442695
    %v9667 = vpow.pop %v9666
    %v9668 = vsel %vm526, %v9665, 0.0
    %9669 = vadd.xlane.f32.xlu0 %v9668
    %v9670 = vpop.xlane.xlu0 %9669
    %v9671 = vsel %vm526, %v9667, 0.0
    %9672 = vadd.xlane.f32.xlu0 %v9671
    %v9673 = vpop.xlane.xlu0 %9672
    %v9674 = vrcp.pop %v9670
    %v9675 = vrcp.pop %v9673
    %v9676 = vmul.f32 %v9670, %v9674
    %v9677 = vmul.f32 %v9673, %v9675
    %v9678 = vsub.f32 2.0, %v9676
    %v9679 = vsub.f32 2.0, %v9677
    %v9680 = vmul.f32 %v9674, %v9678
    %v9681 = vmul.f32 %v9675, %v9679
    %v9683 = vsel %vm526, %v9665, 0
    %9685 = vmatprep.subr.mxu0 0.0
    %9686 = vmatpush1.msra.mxu0 0.0
    %9687 = vmatprep.subr.mxu0 0.0
    %9688 = vmatpush1.msra.mxu0 0.0
    %9689 = vmatprep.subr.mxu0 0.0
    %9690 = vmatpush1.msra.mxu0 0.0
    %9691 = vmatprep.subr.mxu0 0.0
    %9692 = vmatpush1.msra.mxu0 0.0
    %9693 = vmatprep.subr.mxu0 0.0
    %9694 = vmatpush1.msra.mxu0 0.0
    %9695 = vmatprep.subr.mxu0 0.0
    %9696 = vmatpush1.msra.mxu0 0.0
    %9697 = vmatprep.subr.mxu0 0.0
    %9698 = vmatpush1.msra.mxu0 0.0
    %9699 = vmatprep.subr.mxu0 0.0
    %9700 = vmatpush1.msra.mxu0 0.0
    %9701 = vmatprep.subr.mxu0 0.0
    %9702 = vmatpush1.msra.mxu0 0.0
    %9703 = vmatprep.subr.mxu0 0.0
    %9704 = vmatpush1.msra.mxu0 0.0
    %9705 = vmatprep.subr.mxu0 0.0
    %9706 = vmatpush1.msra.mxu0 0.0
    %9707 = vmatprep.subr.mxu0 0.0
    %9708 = vmatpush1.msra.mxu0 0.0
    %9709 = vmatprep.subr.mxu0 0.0
    %9710 = vmatpush1.msra.mxu0 0.0
    %9711 = vmatprep.subr.mxu0 0.0
    %9712 = vmatpush1.msra.mxu0 0.0
    %9713 = vmatprep.subr.mxu0 0.0
    %9714 = vmatpush1.msra.mxu0 %v3232
    %9715 = vmatprep.subr.mxu0 0.0
    %9716 = vmatpush1.msra.mxu0 %v3230
    %9717 = vmatprep.subr.mxu0 0.0
    %9718 = vmatpush2.msra.mxu0 0.0
    %9719 = vmatprep.subr.mxu0 0.0
    %9720 = vmatpush2.msra.mxu0 0.0
    %9721 = vmatprep.subr.mxu0 0.0
    %9722 = vmatpush2.msra.mxu0 0.0
    %9723 = vmatprep.subr.mxu0 0.0
    %9724 = vmatpush2.msra.mxu0 0.0
    %9725 = vmatprep.subr.mxu0 0.0
    %9726 = vmatpush2.msra.mxu0 0.0
    %9727 = vmatprep.subr.mxu0 0.0
    %9728 = vmatpush2.msra.mxu0 0.0
    %9729 = vmatprep.subr.mxu0 0.0
    %9730 = vmatpush2.msra.mxu0 0.0
    %9731 = vmatprep.subr.mxu0 0.0
    %9732 = vmatpush2.msra.mxu0 0.0
    %9733 = vmatprep.subr.mxu0 0.0
    %9734 = vmatpush2.msra.mxu0 0.0
    %9735 = vmatprep.subr.mxu0 0.0
    %9736 = vmatpush2.msra.mxu0 0.0
    %9737 = vmatprep.subr.mxu0 0.0
    %9738 = vmatpush2.msra.mxu0 0.0
    %9739 = vmatprep.subr.mxu0 0.0
    %9740 = vmatpush2.msra.mxu0 0.0
    %9741 = vmatprep.subr.mxu0 0.0
    %9742 = vmatpush2.msra.mxu0 0.0
    %9743 = vmatprep.subr.mxu0 0.0
    %9744 = vmatpush2.msra.mxu0 0.0
    %9745 = vmatprep.subr.mxu0 0.0
    %9746 = vmatpush2.msra.mxu0 0.0
    %9747 = vmatprep.subr.mxu0 0.0
    %9748 = vmatpush2.msra.mxu0 0.0
    %9749 = vmatprep.mubr.f32.mxu0 0.0
    %9750 = vmatmul.mubr.f32.gmra.mxu0 %v9683
    %v9751 = vpop.f32.mrf.mxu0
    %v9752 = vadd.f32 0.0, %v9751
    %v9753 = vpop.f32.mrf.mxu0
    %9754 = vdwg.mxu0
    %v9756 = vsel %vm526, %v9667, 0
    %9758 = vmatprep.subr.mxu0 0.0
    %9759 = vmatpush1.msra.mxu0 0.0
    %9760 = vmatprep.subr.mxu0 0.0
    %9761 = vmatpush1.msra.mxu0 0.0
    %9762 = vmatprep.subr.mxu0 0.0
    %9763 = vmatpush1.msra.mxu0 0.0
    %9764 = vmatprep.subr.mxu0 0.0
    %9765 = vmatpush1.msra.mxu0 0.0
    %9766 = vmatprep.subr.mxu0 0.0
    %9767 = vmatpush1.msra.mxu0 0.0
    %9768 = vmatprep.subr.mxu0 0.0
    %9769 = vmatpush1.msra.mxu0 0.0
    %9770 = vmatprep.subr.mxu0 0.0
    %9771 = vmatpush1.msra.mxu0 0.0
    %9772 = vmatprep.subr.mxu0 0.0
    %9773 = vmatpush1.msra.mxu0 0.0
    %9774 = vmatprep.subr.mxu0 0.0
    %9775 = vmatpush1.msra.mxu0 0.0
    %9776 = vmatprep.subr.mxu0 0.0
    %9777 = vmatpush1.msra.mxu0 0.0
    %9778 = vmatprep.subr.mxu0 0.0
    %9779 = vmatpush1.msra.mxu0 0.0
    %9780 = vmatprep.subr.mxu0 0.0
    %9781 = vmatpush1.msra.mxu0 0.0
    %9782 = vmatprep.subr.mxu0 0.0
    %9783 = vmatpush1.msra.mxu0 0.0
    %9784 = vmatprep.subr.mxu0 0.0
    %9785 = vmatpush1.msra.mxu0 0.0
    %9786 = vmatprep.subr.mxu0 0.0
    %9787 = vmatpush1.msra.mxu0 %v3311
    %9788 = vmatprep.subr.mxu0 0.0
    %9789 = vmatpush1.msra.mxu0 %v3309
    %9790 = vmatprep.subr.mxu0 0.0
    %9791 = vmatpush2.msra.mxu0 0.0
    %9792 = vmatprep.subr.mxu0 0.0
    %9793 = vmatpush2.msra.mxu0 0.0
    %9794 = vmatprep.subr.mxu0 0.0
    %9795 = vmatpush2.msra.mxu0 0.0
    %9796 = vmatprep.subr.mxu0 0.0
    %9797 = vmatpush2.msra.mxu0 0.0
    %9798 = vmatprep.subr.mxu0 0.0
    %9799 = vmatpush2.msra.mxu0 0.0
    %9800 = vmatprep.subr.mxu0 0.0
    %9801 = vmatpush2.msra.mxu0 0.0
    %9802 = vmatprep.subr.mxu0 0.0
    %9803 = vmatpush2.msra.mxu0 0.0
    %9804 = vmatprep.subr.mxu0 0.0
    %9805 = vmatpush2.msra.mxu0 0.0
    %9806 = vmatprep.subr.mxu0 0.0
    %9807 = vmatpush2.msra.mxu0 0.0
    %9808 = vmatprep.subr.mxu0 0.0
    %9809 = vmatpush2.msra.mxu0 0.0
    %9810 = vmatprep.subr.mxu0 0.0
    %9811 = vmatpush2.msra.mxu0 0.0
    %9812 = vmatprep.subr.mxu0 0.0
    %9813 = vmatpush2.msra.mxu0 0.0
    %9814 = vmatprep.subr.mxu0 0.0
    %9815 = vmatpush2.msra.mxu0 0.0
    %9816 = vmatprep.subr.mxu0 0.0
    %9817 = vmatpush2.msra.mxu0 0.0
    %9818 = vmatprep.subr.mxu0 0.0
    %9819 = vmatpush2.msra.mxu0 0.0
    %9820 = vmatprep.subr.mxu0 0.0
    %9821 = vmatpush2.msra.mxu0 0.0
    %9822 = vmatprep.mubr.f32.mxu0 0.0
    %9823 = vmatmul.mubr.f32.gmra.mxu0 %v9756
    %v9824 = vpop.f32.mrf.mxu0
    %v9825 = vadd.f32 0.0, %v9824
    %v9826 = vpop.f32.mrf.mxu0
    %9827 = vdwg.mxu0
    %v9828 = vmul.f32 %v9752, %v9680
    %v9829 = vmul.f32 %v9825, %v9681
    %9832 = vrot.lane.b32.xlu0 %v9184, 8
    %v9833 = vpop.permute.xlu0 %9832
    %9834 = vrot.lane.b32.xlu0 %v9185, 8
    %v9835 = vpop.permute.xlu0 %9834
    %9840 = vrot.lane.b32.xlu0 %v9506, 16
    %v9841 = vpop.permute.xlu0 %9840
    %9842 = vrot.lane.b32.xlu0 %v9507, 16
    %v9843 = vpop.permute.xlu0 %9842
    %9848 = vrot.lane.b32.xlu0 %v9828, 24
    %v9849 = vpop.permute.xlu0 %9848
    %9850 = vrot.lane.b32.xlu0 %v9829, 24
    %v9851 = vpop.permute.xlu0 %9850
    %v9854 = vsel %vm367, %v8862, %v9833
    %v9855 = vsel %vm367, %v8863, %v9835
    %v9856 = vsel %vm526, %v9854, %v9841
    %v9857 = vsel %vm526, %v9855, %v9843
    %v9858 = vsel %vm1791, %v9856, %v9849
    %v9859 = vsel %vm1791, %v9857, %v9851
    %v9861 = vsel %vm186, %v9858, 0
    %v9864 = vsel %vm186, %v9859, 0
    %9866 = vmatprep.subr.mxu0 0.0
    %9867 = vmatpush1.msra.mxu0 0.0
    %9868 = vmatprep.subr.mxu0 0.0
    %9869 = vmatpush1.msra.mxu0 0.0
    %9870 = vmatprep.subr.mxu0 0.0
    %9871 = vmatpush1.msra.mxu0 0.0
    %9872 = vmatprep.subr.mxu0 0.0
    %9873 = vmatpush1.msra.mxu0 0.0
    %9874 = vmatprep.subr.mxu0 0.0
    %9875 = vmatpush1.msra.mxu0 0.0
    %9876 = vmatprep.subr.mxu0 0.0
    %9877 = vmatpush1.msra.mxu0 0.0
    %9878 = vmatprep.subr.mxu0 0.0
    %9879 = vmatpush1.msra.mxu0 0.0
    %9880 = vmatprep.subr.mxu0 0.0
    %9881 = vmatpush1.msra.mxu0 0.0
    %9882 = vmatprep.subr.mxu0 0.0
    %9883 = vmatpush1.msra.mxu0 0.0
    %9884 = vmatprep.subr.mxu0 0.0
    %9885 = vmatpush1.msra.mxu0 0.0
    %9886 = vmatprep.subr.mxu0 0.0
    %9887 = vmatpush1.msra.mxu0 0.0
    %9888 = vmatprep.subr.mxu0 0.0
    %9889 = vmatpush1.msra.mxu0 0.0
    %9890 = vmatprep.subr.mxu0 0.0
    %9891 = vmatpush1.msra.mxu0 %v98
    %9892 = vmatprep.subr.mxu0 0.0
    %9893 = vmatpush1.msra.mxu0 %v97
    %9894 = vmatprep.subr.mxu0 0.0
    %9895 = vmatpush1.msra.mxu0 %v96
    %9896 = vmatprep.subr.mxu0 0.0
    %9897 = vmatpush1.msra.mxu0 %v95
    %9898 = vmatprep.subr.mxu0 0.0
    %9899 = vmatpush2.msra.mxu0 0.0
    %9900 = vmatprep.subr.mxu0 0.0
    %9901 = vmatpush2.msra.mxu0 0.0
    %9902 = vmatprep.subr.mxu0 0.0
    %9903 = vmatpush2.msra.mxu0 0.0
    %9904 = vmatprep.subr.mxu0 0.0
    %9905 = vmatpush2.msra.mxu0 0.0
    %9906 = vmatprep.subr.mxu0 0.0
    %9907 = vmatpush2.msra.mxu0 0.0
    %9908 = vmatprep.subr.mxu0 0.0
    %9909 = vmatpush2.msra.mxu0 0.0
    %9910 = vmatprep.subr.mxu0 0.0
    %9911 = vmatpush2.msra.mxu0 0.0
    %9912 = vmatprep.subr.mxu0 0.0
    %9913 = vmatpush2.msra.mxu0 0.0
    %9914 = vmatprep.subr.mxu0 0.0
    %9915 = vmatpush2.msra.mxu0 0.0
    %9916 = vmatprep.subr.mxu0 0.0
    %9917 = vmatpush2.msra.mxu0 0.0
    %9918 = vmatprep.subr.mxu0 0.0
    %9919 = vmatpush2.msra.mxu0 0.0
    %9920 = vmatprep.subr.mxu0 0.0
    %9921 = vmatpush2.msra.mxu0 0.0
    %9922 = vmatprep.subr.mxu0 0.0
    %9923 = vmatpush2.msra.mxu0 0.0
    %9924 = vmatprep.subr.mxu0 0.0
    %9925 = vmatpush2.msra.mxu0 0.0
    %9926 = vmatprep.subr.mxu0 0.0
    %9927 = vmatpush2.msra.mxu0 0.0
    %9928 = vmatprep.subr.mxu0 0.0
    %9929 = vmatpush2.msra.mxu0 0.0
    %9930 = vmatprep.mubr.f32.mxu0 0.0
    %9931 = vmatmul.mubr.f32.gmra.mxu0 %v9861
    %v9932 = vpop.f32.mrf.mxu0
    %v9933 = vadd.f32 %v135, %v9932
    %v9934 = vpop.f32.mrf.mxu0
    %9935 = vmatprep.mubr.f32.mxu0 0.0
    %9936 = vmatmul.mubr.f32.gmra.mxu0 %v9864
    %v9937 = vpop.f32.mrf.mxu0
    %v9938 = vadd.f32 %v135, %v9937
    %v9939 = vpop.f32.mrf.mxu0
    %9940 = vdwg.mxu0
    %v9941 = vadd.f32 %v8459, %v9933
    %v9942 = vadd.f32 %v8460, %v9938
    %v9943 = vsel %vm186, %v9941, 0.0
    %9944 = vadd.xlane.f32.xlu0 %v9943
    %v9945 = vpop.xlane.xlu0 %9944
    %v9946 = vsel %vm186, %v9942, 0.0
    %9947 = vadd.xlane.f32.xlu0 %v9946
    %v9948 = vpop.xlane.xlu0 %9947
    %v9949 = vmul.f32 %v9945, %v1883
    %v9950 = vmul.f32 %v9948, %v1883
    %v9951 = vsub.f32 %v9941, %v9949
    %v9952 = vsub.f32 %v9942, %v9950
    %v9953 = vmul.f32 %v9951, %v9951
    %v9954 = vmul.f32 %v9952, %v9952
    %v9955 = vsel %vm186, %v9953, 0.0
    %9956 = vadd.xlane.f32.xlu0 %v9955
    %v9957 = vpop.xlane.xlu0 %9956
    %v9958 = vsel %vm186, %v9954, 0.0
    %9959 = vadd.xlane.f32.xlu0 %v9958
    %v9960 = vpop.xlane.xlu0 %9959
    %v9961 = vmul.f32 %v9957, %v1883
    %v9962 = vmul.f32 %v9960, %v1883
    %v9963 = vadd.f32 %v9961, 1e-05
    %v9964 = vadd.f32 %v9962, 1e-05
    %v9965 = vrsqrt.pop %v9963
    %v9966 = vrsqrt.pop %v9964
    %v9967 = vmul.f32 %v9951, %v9965
    %v9968 = vmul.f32 %v9952, %v9966
    %v9969 = vmul.f32 %v9967, %v160
    %v9970 = vmul.f32 %v9968, %v160
    %v9971 = vadd.f32 %v9969, %v165
    %v9972 = vadd.f32 %v9970, %v165
    %v9974 = vsel %vm186, %v9971, 0
    %v9977 = vsel %vm186, %v9972, 0
    %9979 = vmatprep.subr.mxu0 0.0
    %9980 = vmatpush1.msra.mxu0 0.0
    %9981 = vmatprep.subr.mxu0 0.0
    %9982 = vmatpush1.msra.mxu0 0.0
    %9983 = vmatprep.subr.mxu0 0.0
    %9984 = vmatpush1.msra.mxu0 0.0
    %9985 = vmatprep.subr.mxu0 0.0
    %9986 = vmatpush1.msra.mxu0 0.0
    %9987 = vmatprep.subr.mxu0 0.0
    %9988 = vmatpush1.msra.mxu0 0.0
    %9989 = vmatprep.subr.mxu0 0.0
    %9990 = vmatpush1.msra.mxu0 0.0
    %9991 = vmatprep.subr.mxu0 0.0
    %9992 = vmatpush1.msra.mxu0 0.0
    %9993 = vmatprep.subr.mxu0 0.0
    %9994 = vmatpush1.msra.mxu0 0.0
    %9995 = vmatprep.subr.mxu0 0.0
    %9996 = vmatpush1.msra.mxu0 0.0
    %9997 = vmatprep.subr.mxu0 0.0
    %9998 = vmatpush1.msra.mxu0 0.0
    %9999 = vmatprep.subr.mxu0 0.0
    %10000 = vmatpush1.msra.mxu0 0.0
    %10001 = vmatprep.subr.mxu0 0.0
    %10002 = vmatpush1.msra.mxu0 0.0
    %10003 = vmatprep.subr.mxu0 0.0
    %10004 = vmatpush1.msra.mxu0 %v102
    %10005 = vmatprep.subr.mxu0 0.0
    %10006 = vmatpush1.msra.mxu0 %v101
    %10007 = vmatprep.subr.mxu0 0.0
    %10008 = vmatpush1.msra.mxu0 %v100
    %10009 = vmatprep.subr.mxu0 0.0
    %10010 = vmatpush1.msra.mxu0 %v99
    %10011 = vmatprep.subr.mxu0 0.0
    %10012 = vmatpush2.msra.mxu0 0.0
    %10013 = vmatprep.subr.mxu0 0.0
    %10014 = vmatpush2.msra.mxu0 0.0
    %10015 = vmatprep.subr.mxu0 0.0
    %10016 = vmatpush2.msra.mxu0 0.0
    %10017 = vmatprep.subr.mxu0 0.0
    %10018 = vmatpush2.msra.mxu0 0.0
    %10019 = vmatprep.subr.mxu0 0.0
    %10020 = vmatpush2.msra.mxu0 0.0
    %10021 = vmatprep.subr.mxu0 0.0
    %10022 = vmatpush2.msra.mxu0 0.0
    %10023 = vmatprep.subr.mxu0 0.0
    %10024 = vmatpush2.msra.mxu0 0.0
    %10025 = vmatprep.subr.mxu0 0.0
    %10026 = vmatpush2.msra.mxu0 0.0
    %10027 = vmatprep.subr.mxu0 0.0
    %10028 = vmatpush2.msra.mxu0 0.0
    %10029 = vmatprep.subr.mxu0 0.0
    %10030 = vmatpush2.msra.mxu0 0.0
    %10031 = vmatprep.subr.mxu0 0.0
    %10032 = vmatpush2.msra.mxu0 0.0
    %10033 = vmatprep.subr.mxu0 0.0
    %10034 = vmatpush2.msra.mxu0 0.0
    %10035 = vmatprep.subr.mxu0 0.0
    %10036 = vmatpush2.msra.mxu0 0.0
    %10037 = vmatprep.subr.mxu0 0.0
    %10038 = vmatpush2.msra.mxu0 0.0
    %10039 = vmatprep.subr.mxu0 0.0
    %10040 = vmatpush2.msra.mxu0 0.0
    %10041 = vmatprep.subr.mxu0 0.0
    %10042 = vmatpush2.msra.mxu0 0.0
    %10043 = vmatprep.mubr.f32.mxu0 0.0
    %10044 = vmatmul.mubr.f32.gmra.mxu0 %v9974
    %v10045 = vpop.f32.mrf.mxu0
    %v10046 = vadd.f32 %v140, %v10045
    %v10047 = vpop.f32.mrf.mxu0
    %10048 = vmatprep.mubr.f32.mxu0 0.0
    %10049 = vmatmul.mubr.f32.gmra.mxu0 %v9977
    %v10050 = vpop.f32.mrf.mxu0
    %v10051 = vadd.f32 %v140, %v10050
    %v10052 = vpop.f32.mrf.mxu0
    %10053 = vdwg.mxu0
    %v10054 = vmax.f32 %v10046, 0.0
    %v10055 = vmax.f32 %v10051, 0.0
    %v10057 = vsel %vm3615, %v10054, 0
    %v10060 = vsel %vm3615, %v10055, 0
    %10062 = vmatprep.subr.mxu0 0.0
    %10063 = vmatpush1.msra.mxu0 0.0
    %10064 = vmatprep.subr.mxu0 0.0
    %10065 = vmatpush1.msra.mxu0 0.0
    %10066 = vmatprep.subr.mxu0 0.0
    %10067 = vmatpush1.msra.mxu0 0.0
    %10068 = vmatprep.subr.mxu0 0.0
    %10069 = vmatpush1.msra.mxu0 0.0
    %10070 = vmatprep.subr.mxu0 0.0
    %10071 = vmatpush1.msra.mxu0 0.0
    %10072 = vmatprep.subr.mxu0 0.0
    %10073 = vmatpush1.msra.mxu0 0.0
    %10074 = vmatprep.subr.mxu0 0.0
    %10075 = vmatpush1.msra.mxu0 0.0
    %10076 = vmatprep.subr.mxu0 0.0
    %10077 = vmatpush1.msra.mxu0 0.0
    %10078 = vmatprep.subr.mxu0 0.0
    %10079 = vmatpush1.msra.mxu0 %v110
    %10080 = vmatprep.subr.mxu0 0.0
    %10081 = vmatpush1.msra.mxu0 %v109
    %10082 = vmatprep.subr.mxu0 0.0
    %10083 = vmatpush1.msra.mxu0 %v108
    %10084 = vmatprep.subr.mxu0 0.0
    %10085 = vmatpush1.msra.mxu0 %v107
    %10086 = vmatprep.subr.mxu0 0.0
    %10087 = vmatpush1.msra.mxu0 %v106
    %10088 = vmatprep.subr.mxu0 0.0
    %10089 = vmatpush1.msra.mxu0 %v105
    %10090 = vmatprep.subr.mxu0 0.0
    %10091 = vmatpush1.msra.mxu0 %v104
    %10092 = vmatprep.subr.mxu0 0.0
    %10093 = vmatpush1.msra.mxu0 %v103
    %10094 = vmatprep.subr.mxu0 0.0
    %10095 = vmatpush2.msra.mxu0 0.0
    %10096 = vmatprep.subr.mxu0 0.0
    %10097 = vmatpush2.msra.mxu0 0.0
    %10098 = vmatprep.subr.mxu0 0.0
    %10099 = vmatpush2.msra.mxu0 0.0
    %10100 = vmatprep.subr.mxu0 0.0
    %10101 = vmatpush2.msra.mxu0 0.0
    %10102 = vmatprep.subr.mxu0 0.0
    %10103 = vmatpush2.msra.mxu0 0.0
    %10104 = vmatprep.subr.mxu0 0.0
    %10105 = vmatpush2.msra.mxu0 0.0
    %10106 = vmatprep.subr.mxu0 0.0
    %10107 = vmatpush2.msra.mxu0 0.0
    %10108 = vmatprep.subr.mxu0 0.0
    %10109 = vmatpush2.msra.mxu0 0.0
    %10110 = vmatprep.subr.mxu0 0.0
    %10111 = vmatpush2.msra.mxu0 0.0
    %10112 = vmatprep.subr.mxu0 0.0
    %10113 = vmatpush2.msra.mxu0 0.0
    %10114 = vmatprep.subr.mxu0 0.0
    %10115 = vmatpush2.msra.mxu0 0.0
    %10116 = vmatprep.subr.mxu0 0.0
    %10117 = vmatpush2.msra.mxu0 0.0
    %10118 = vmatprep.subr.mxu0 0.0
    %10119 = vmatpush2.msra.mxu0 0.0
    %10120 = vmatprep.subr.mxu0 0.0
    %10121 = vmatpush2.msra.mxu0 0.0
    %10122 = vmatprep.subr.mxu0 0.0
    %10123 = vmatpush2.msra.mxu0 0.0
    %10124 = vmatprep.subr.mxu0 0.0
    %10125 = vmatpush2.msra.mxu0 0.0
    %10126 = vmatprep.mubr.f32.mxu0 0.0
    %10127 = vmatmul.mubr.f32.gmra.mxu0 %v10057
    %v10128 = vpop.f32.mrf.mxu0
    %v10129 = vadd.f32 %v145, %v10128
    %v10130 = vpop.f32.mrf.mxu0
    %10131 = vmatprep.mubr.f32.mxu0 0.0
    %10132 = vmatmul.mubr.f32.gmra.mxu0 %v10060
    %v10133 = vpop.f32.mrf.mxu0
    %v10134 = vadd.f32 %v145, %v10133
    %v10135 = vpop.f32.mrf.mxu0
    %10136 = vdwg.mxu0
    %v10137 = vadd.f32 %v9971, %v10129
    %v10138 = vadd.f32 %v9972, %v10134
    %v10139 = vsel %vm186, %v10137, 0.0
    %10140 = vadd.xlane.f32.xlu0 %v10139
    %v10141 = vpop.xlane.xlu0 %10140
    %v10142 = vsel %vm186, %v10138, 0.0
    %10143 = vadd.xlane.f32.xlu0 %v10142
    %v10144 = vpop.xlane.xlu0 %10143
    %v10145 = vmul.f32 %v10141, %v1883
    %v10146 = vmul.f32 %v10144, %v1883
    %v10147 = vsub.f32 %v10137, %v10145
    %v10148 = vsub.f32 %v10138, %v10146
    %v10149 = vmul.f32 %v10147, %v10147
    %v10150 = vmul.f32 %v10148, %v10148
    %v10151 = vsel %vm186, %v10149, 0.0
    %10152 = vadd.xlane.f32.xlu0 %v10151
    %v10153 = vpop.xlane.xlu0 %10152
    %v10154 = vsel %vm186, %v10150, 0.0
    %10155 = vadd.xlane.f32.xlu0 %v10154
    %v10156 = vpop.xlane.xlu0 %10155
    %v10157 = vmul.f32 %v10153, %v1883
    %v10158 = vmul.f32 %v10156, %v1883
    %v10159 = vadd.f32 %v10157, 1e-05
    %v10160 = vadd.f32 %v10158, 1e-05
    %v10161 = vrsqrt.pop %v10159
    %v10162 = vrsqrt.pop %v10160
    %v10163 = vmul.f32 %v10147, %v10161
    %v10164 = vmul.f32 %v10148, %v10162
    %v10165 = vmul.f32 %v10163, %v170
    %v10166 = vmul.f32 %v10164, %v170
    %v10167 = vadd.f32 %v10165, %v175
    %v10168 = vadd.f32 %v10166, %v175
    %v10169 = vsel %vm186, %v10167, 0.0
    %10170 = vadd.xlane.f32.xlu0 %v10169
    %v10171 = vpop.xlane.xlu0 %10170
    %v10172 = vsel %vm186, %v10168, 0.0
    %10173 = vadd.xlane.f32.xlu0 %v10172
    %v10174 = vpop.xlane.xlu0 %10173
    %v10175 = vmul.f32 %v10171, %v1883
    %v10176 = vmul.f32 %v10174, %v1883
    %v10177 = vsub.f32 %v10167, %v10175
    %v10178 = vsub.f32 %v10168, %v10176
    %v10179 = vmul.f32 %v10177, %v10177
    %v10180 = vmul.f32 %v10178, %v10178
    %v10181 = vsel %vm186, %v10179, 0.0
    %10182 = vadd.xlane.f32.xlu0 %v10181
    %v10183 = vpop.xlane.xlu0 %10182
    %v10184 = vsel %vm186, %v10180, 0.0
    %10185 = vadd.xlane.f32.xlu0 %v10184
    %v10186 = vpop.xlane.xlu0 %10185
    %v10187 = vmul.f32 %v10183, %v1883
    %v10188 = vmul.f32 %v10186, %v1883
    %v10189 = vadd.f32 %v10187, 1e-05
    %v10190 = vadd.f32 %v10188, 1e-05
    %v10191 = vrsqrt.pop %v10189
    %v10192 = vrsqrt.pop %v10190
    %v10193 = vmul.f32 %v10177, %v10191
    %v10194 = vmul.f32 %v10178, %v10192
    %v10195 = vmul.f32 %v10193, %v180
    %v10196 = vmul.f32 %v10194, %v180
    %v10197 = vadd.f32 %v10195, %v185
    %v10198 = vadd.f32 %v10196, %v185
    %10199 = vst.msk [vmem:[#allocation10] sm:$0xff] %vm186, %v10197
    %10200 = vst.msk [vmem:[#allocation10 + $0x8] sm:$0xff] %vm186, %v10198
    // Predicated region
    $region34: #{tpu_custom_call.1} parent=1 // pred_check
      _
    $region35: #{tpu_custom_call.1} parent=1 // pred_check_branch
      %10202 = sbr.rel (0) target = $region37
    $region36: #{tpu_custom_call.1} parent=1 // pred_region
      %s10204 = ssub.s32 256, 256
      %10205 = vsyncadd [#allocation4], %s10204
      %s10206 = sshll.u32 [#allocation10], 4
      %s10207 = int_to_ptr.vmem [resolvable:$true] %s10206
      %10212 = dma.vmem_to_hbm [thread:$0]  %s10207, 256, %s4, [#allocation4], 128, 128, 8
    $region37: #{tpu_custom_call.1} parent=1 // pred_fallthru
      _
    // Predicated region
    $region38: #{tpu_custom_call.1} parent=1 // pred_check
      _
    $region39: #{tpu_custom_call.1} parent=1 // pred_check_branch
      %10214 = sbr.rel (0) target = $region41
    $region40: #{tpu_custom_call.1} parent=1 // pred_region
      %10215 = dma.done [#allocation4], 256
    $region41: #{tpu_custom_call.1} parent=1 // pred_fallthru
      _
    %10216 = vsyncpa [#allocation3], 1
    %10217 = vsyncpa [#allocation6], 1
    %10218 = vsyncpa [#allocation9], 1
    %10219 = vsyncpa [#allocation4], 1

</llo_original>
